<compile_context>
chip_gen: v7x
topology: tpu7x:2x2x1
jax: 0.10.0
libtpu: 0.0.40
codegen_flags: <defaults>
</compile_context>

<pallas_src>
import math

import jax
import jax.numpy as jnp
import numpy as np
from jax import lax
from jax.experimental import pallas as pl
from jax.experimental.pallas import tpu as pltpu


# ------------------------------ fused Pallas kernel ------------------------------ #

def _fused_kernel(g_ref, wk_ref, w1_ref, b1_ref, o_ref, v_scr):
    """Whole forward: convT0 + tanh-GELU + flat view + convT1 + bias.

    g_ref  : (9, 68, 57)   VMEM  pre-gathered conv0 input rows:
                                 g[k, c, kh*19 + s] = xd[b, h+kh, s] for view-row r = 9*c + k
                                 (xd = dilated/edge-padded x1; (b, c0, h) decoded from r)
    wk_ref : (9, 68, 16)   VMEM  per view-row conv0 params: cols 0..8 = flipped 3x3 taps of
                                 that row's conv0 channel, col 9 = its bias, cols 10..15 = 0
    w1_ref : (2, 2, 31, 68) VMEM conv1 weights per tap: [kh, kw, co, c]
    b1_ref : (31, 1)       VMEM  conv1 bias
    o_ref  : (2, 31, 162)  VMEM  out[kw, co, oh*9 + iw]   (epilogue keeps iw = 1..7)
    v_scr  : (68, 153)     VMEM  scratch: the (1,68,17,9) view of the GELU activations,
                                 flattened as the matmul RHS  V[c, ih*9 + iw]
    """
    # ---- ConvTranspose2d(1, 9, 3x3, stride 2) + tanh-GELU (v1..v10), written straight
    #      into the "view" layout: view-row r = 9*c + k  ->  V[c, 17*k : 17*k+17].
    #      Per k, all 68 rows are one (68,17) VPU pass; taps/bias vary per sublane and are
    #      pre-gathered, so there is no per-channel loop and every window slice is used
    #      exactly once (no re-materialisation). ----
    for k in range(9):
        g = g_ref[k]                                   # (68, 57): 3 input rows per view row
        wk = wk_ref[k]                                 # (68, 16): 9 taps + bias per view row
        acc = jnp.broadcast_to(wk[:, 9:10], (68, 17))  # bias
        for kh in range(3):
            for kw in range(3):
                acc = acc + (g[:, 19 * kh + kw: 19 * kh + kw + 17]
                             * wk[:, kh * 3 + kw: kh * 3 + kw + 1])
        # v2..v9: tanh-GELU exactly as written in the reference forward
        y = (acc * 0.5) * (jnp.tanh((acc + (acc * acc * acc) * 0.044715)
                                    * 0.7978845608028654) + 1.0)
        v_scr[:, 17 * k: 17 * (k + 1)] = y

    # ---- ConvTranspose2d(68, 31, 2x2, stride (1,2), padding (0,2)) (v25): one small MXU
    #      matmul per (kh,kw) tap against the full (68,153) activation matrix (K=68, no
    #      zero-padded contraction), then bias + kh shift-add as lane-dense wide stores.
    #      Output columns are s = oh*9 + iw; the ow-parity (= kw) interleave and iw crop
    #      are pure layout and left to the XLA epilogue. ----
    v = v_scr[...]
    p00 = jnp.dot(w1_ref[0, 0], v, preferred_element_type=jnp.float32)   # kh=0, kw=0
    p01 = jnp.dot(w1_ref[0, 1], v, preferred_element_type=jnp.float32)   # kh=0, kw=1
    p10 = jnp.dot(w1_ref[1, 0], v, preferred_element_type=jnp.float32)   # kh=1, kw=0
    p11 = jnp.dot(w1_ref[1, 1], v, preferred_element_type=jnp.float32)   # kh=1, kw=1

    bias = jnp.broadcast_to(b1_ref[...], (31, 162))
    o_ref[0] = bias
    o_ref[1] = bias
    # oh = ih + kh:  kh=0 taps land in columns 0..152, kh=1 taps shifted by one ih row (+9).
    o_ref[0, :, 0:153] = o_ref[0, :, 0:153] + p00
    o_ref[0, :, 9:162] = o_ref[0, :, 9:162] + p10
    o_ref[1, :, 0:153] = o_ref[1, :, 0:153] + p01
    o_ref[1, :, 9:162] = o_ref[1, :, 9:162] + p11


# ------------------------- hoisted weight preprocessing --------------------- #

def prepare_params(w0, b0, w1, b1):
    """Call-invariant weight preprocessing (done once, outside the jitted forward)."""
    w0 = np.asarray(w0, np.float32)
    b0 = np.asarray(b0, np.float32)
    # view-row r = (b*9 + c0)*17 + h of the (1,68,17,9) view; its conv0 channel c0:
    r = np.arange(612)
    c0_of_r = (r % 153) // 17
    w0flip = w0[0, :, ::-1, ::-1].reshape(9, 9)            # [c0, kh*3+kw]: flipped 3x3 taps
    wk = np.zeros((612, 16), np.float32)
    wk[:, 0:9] = w0flip[c0_of_r]
    wk[:, 9] = b0[c0_of_r]
    # regroup rows r -> (k = r % 9, c = r // 9), i.e. the same order the kernel consumes.
    wk2 = jnp.asarray(wk.reshape(68, 9, 16).transpose(1, 0, 2))                  # (9, 68, 16)
    w1blk = jnp.asarray(np.transpose(np.asarray(w1, np.float32), (2, 3, 1, 0)))  # (2,2,31,68)
    b1r = jnp.asarray(np.asarray(b1, np.float32).reshape(31, 1))
    return wk2, w1blk, b1r


# ------------------------------- forward pass ------------------------------- #

def model_forward(x1, wk2, w1blk, b1r):
    B = x1.shape[0]
    # v11..v22 only feed .size(0) arithmetic -> static Python scalar (dead tensor math removed).
    v23 = (B + 1 + 1) // 4
    # TODO(synk): kernel is specialised to the single shape-consistent case
    # (B=4 -> v23=1, 68-channel view); other batches need a different packing.
    assert v23 == 1 and B * 9 * 17 * 17 == 68 * 17 * 9

    # --- XLA prologue (pure layout plumbing, ~140 KB, one small fusion):
    #     xd    : stride-2 interior-dilated + edge-padded(2) input        (B, 19, 19)
    #     rows  : the 3 xd rows feeding each conv0 output row, side by side (B, 17, 57)
    #     g     : replicate per conv0 channel (the taps vary per row, not the data) and
    #             regroup rows to the (1,68,17,9)-view order: row r = 9*c + k.
    xd = lax.pad(x1[:, 0], jnp.float32(0), ((0, 0, 0), (2, 2, 1), (2, 2, 1)))
    rows = jnp.concatenate([xd[:, 0:17, :], xd[:, 1:18, :], xd[:, 2:19, :]], axis=-1)
    g = jnp.broadcast_to(rows[:, None, :, :], (B, 9, 17, 57)).reshape(B * 9 * 17, 57)
    g = g.reshape(68, 9, 57).transpose(1, 0, 2)                                # (9, 68, 57)

    # --- everything else in ONE Pallas kernel (no grid; total live VMEM < 1 MiB) ---
    res = pl.pallas_call(
        _fused_kernel,
        out_shape=jax.ShapeDtypeStruct((2, 31, 162), jnp.float32),
        in_specs=[pl.BlockSpec(memory_space=pltpu.MemorySpace.VMEM)] * 4,
        out_specs=pl.BlockSpec(memory_space=pltpu.MemorySpace.VMEM),
        scratch_shapes=[pltpu.VMEM((68, 153), jnp.float32)],
    )(g, wk2, w1blk, b1r)

    # --- XLA epilogue (pure layout): keep iw = 1..7 (the only iw that reach the output
    #     after padding=2), interleave the two ow parities, final NCHW (1, 31, 18, 14). ---
    out = (res.reshape(2, 31, 18, 9)[:, :, :, 1:8]     # (kw, co, oh, n)
              .transpose(1, 2, 3, 0)                    # (co, oh, n, kw)
              .reshape(v23, 31, 18, 14))                # ow = 2*n + kw
    return out


# ---------------------- pure-JAX reference (validation) -------------------- #

def _convt_ref(x, w, b, stride, padding):
    _, _, KH, KW = w.shape
    sh, sw = stride
    ph, pw = padding
    w_t = jnp.flip(w, (2, 3)).transpose(1, 0, 2, 3)            # (Cout, Cin, KH, KW)
    out = lax.conv_general_dilated(
        x, w_t, window_strides=(1, 1),
        padding=[(KH - 1 - ph, KH - 1 - ph), (KW - 1 - pw, KW - 1 - pw)],
        lhs_dilation=(sh, sw),
        dimension_numbers=("NCHW", "OIHW", "NCHW"),
        precision=lax.Precision.HIGHEST)
    return out + b.reshape(1, -1, 1, 1)


def _reference(x1, w0, b0, w1, b1):
    v1 = _convt_ref(x1, w0, b0, (2, 2), (0, 0))
    v9 = 0.5 * v1 * (1.0 + jnp.tanh(0.7978845608028654 * (v1 + 0.044715 * v1 ** 3)))
    v24 = v9.reshape(1, 68, 17, 9)
    return _convt_ref(v24, w1, b1, (1, 2), (0, 2))


# ----------------------------------- main ----------------------------------- #

if __name__ == "__main__":
    key = jax.random.PRNGKey(0)
    kx, k0, k1, k2, k3 = jax.random.split(key, 5)

    # input (small, shape-consistent with the forward): (B=4, Cin=1, H=8, W=8)
    x1 = jax.random.normal(kx, (4, 1, 8, 8), jnp.float32)

    # deterministic parameter init (PyTorch-style uniform bounds)
    def uinit(k, shape, fan_in):
        bound = 1.0 / math.sqrt(fan_in)
        return jax.random.uniform(k, shape, jnp.float32, -bound, bound)

    w0 = uinit(k0, (1, 9, 3, 3), 1 * 3 * 3)      # ConvTranspose2d(1, 9, (3,3), stride=(2,2))
    b0 = uinit(k1, (9,), 1 * 3 * 3)
    w1 = uinit(k2, (68, 31, 2, 2), 68 * 2 * 2)   # ConvTranspose2d(68, 31, (2,2), stride=(1,2), padding=(0,2))
    b1 = uinit(k3, (31,), 68 * 2 * 2)

    # hoisted, call-invariant weight preprocessing
    wk2, w1blk, b1r = prepare_params(w0, b0, w1, b1)

    fwd = jax.jit(model_forward)
    out = jax.block_until_ready(fwd(x1, wk2, w1blk, b1r))

    ref = jax.block_until_ready(_reference(x1, w0, b0, w1, b1))
    assert out.shape == (1, 31, 18, 14), out.shape
    # tolerance leaves headroom for reduced-precision MXU passes; logic errors are O(0.1+).
    np.testing.assert_allclose(np.asarray(out), np.asarray(ref), rtol=1e-2, atol=1e-2)

    print("KERNEL_OK")
</pallas_src>

<mosaic_0001>
module attributes {stable_mosaic.version = 11 : i64} {
  func.func @_fused_kernel(%arg0: memref<9x68x57xf32, #tpu.memory_space<vmem>>, %arg1: memref<9x68x16xf32, #tpu.memory_space<vmem>>, %arg2: memref<2x2x31x68xf32, #tpu.memory_space<vmem>>, %arg3: memref<31x1xf32, #tpu.memory_space<vmem>>, %arg4: memref<2x31x162xf32, #tpu.memory_space<vmem>>, %arg5: memref<68x153xf32, #tpu.memory_space<vmem>>) attributes {dimension_semantics = [], scalar_prefetch = 0 : i64, scratch_operands = 1 : i64, tpu.core_type = #tpu.core_type<tc>} {
    %c0 = arith.constant 0 : index
    %c0_0 = arith.constant 0 : index
    %c0_1 = arith.constant 0 : index
    %0 = vector.load %arg0[%c0, %c0_0, %c0_1] : memref<9x68x57xf32, #tpu.memory_space<vmem>>, vector<1x68x57xf32>
    %1 = vector.shape_cast %0 : vector<1x68x57xf32> to vector<68x57xf32>
    %c0_2 = arith.constant 0 : index
    %c0_3 = arith.constant 0 : index
    %c0_4 = arith.constant 0 : index
    %2 = vector.load %arg1[%c0_2, %c0_3, %c0_4] : memref<9x68x16xf32, #tpu.memory_space<vmem>>, vector<1x68x16xf32>
    %3 = vector.shape_cast %2 : vector<1x68x16xf32> to vector<68x16xf32>
    %4 = vector.extract_strided_slice %3 {offsets = [0, 9], sizes = [68, 1], strides = [1, 1]} : vector<68x16xf32> to vector<68x1xf32>
    %5 = vector.shape_cast %4 : vector<68x1xf32> to vector<68x1xf32>
    %6 = vector.broadcast %5 : vector<68x1xf32> to vector<68x17xf32>
    %7 = vector.extract_strided_slice %1 {offsets = [0, 0], sizes = [68, 17], strides = [1, 1]} : vector<68x57xf32> to vector<68x17xf32>
    %8 = vector.extract_strided_slice %3 {offsets = [0, 0], sizes = [68, 1], strides = [1, 1]} : vector<68x16xf32> to vector<68x1xf32>
    %9 = vector.broadcast %8 : vector<68x1xf32> to vector<68x17xf32>
    %10 = arith.mulf %7, %9 : vector<68x17xf32>
    %11 = arith.addf %6, %10 : vector<68x17xf32>
    %12 = vector.extract_strided_slice %1 {offsets = [0, 1], sizes = [68, 17], strides = [1, 1]} : vector<68x57xf32> to vector<68x17xf32>
    %13 = vector.extract_strided_slice %3 {offsets = [0, 1], sizes = [68, 1], strides = [1, 1]} : vector<68x16xf32> to vector<68x1xf32>
    %14 = vector.broadcast %13 : vector<68x1xf32> to vector<68x17xf32>
    %15 = arith.mulf %12, %14 : vector<68x17xf32>
    %16 = arith.addf %11, %15 : vector<68x17xf32>
    %17 = vector.extract_strided_slice %1 {offsets = [0, 2], sizes = [68, 17], strides = [1, 1]} : vector<68x57xf32> to vector<68x17xf32>
    %18 = vector.extract_strided_slice %3 {offsets = [0, 2], sizes = [68, 1], strides = [1, 1]} : vector<68x16xf32> to vector<68x1xf32>
    %19 = vector.broadcast %18 : vector<68x1xf32> to vector<68x17xf32>
    %20 = arith.mulf %17, %19 : vector<68x17xf32>
    %21 = arith.addf %16, %20 : vector<68x17xf32>
    %22 = vector.extract_strided_slice %1 {offsets = [0, 19], sizes = [68, 17], strides = [1, 1]} : vector<68x57xf32> to vector<68x17xf32>
    %23 = vector.extract_strided_slice %3 {offsets = [0, 3], sizes = [68, 1], strides = [1, 1]} : vector<68x16xf32> to vector<68x1xf32>
    %24 = vector.broadcast %23 : vector<68x1xf32> to vector<68x17xf32>
    %25 = arith.mulf %22, %24 : vector<68x17xf32>
    %26 = arith.addf %21, %25 : vector<68x17xf32>
    %27 = vector.extract_strided_slice %1 {offsets = [0, 20], sizes = [68, 17], strides = [1, 1]} : vector<68x57xf32> to vector<68x17xf32>
    %28 = vector.extract_strided_slice %3 {offsets = [0, 4], sizes = [68, 1], strides = [1, 1]} : vector<68x16xf32> to vector<68x1xf32>
    %29 = vector.broadcast %28 : vector<68x1xf32> to vector<68x17xf32>
    %30 = arith.mulf %27, %29 : vector<68x17xf32>
    %31 = arith.addf %26, %30 : vector<68x17xf32>
    %32 = vector.extract_strided_slice %1 {offsets = [0, 21], sizes = [68, 17], strides = [1, 1]} : vector<68x57xf32> to vector<68x17xf32>
    %33 = vector.extract_strided_slice %3 {offsets = [0, 5], sizes = [68, 1], strides = [1, 1]} : vector<68x16xf32> to vector<68x1xf32>
    %34 = vector.broadcast %33 : vector<68x1xf32> to vector<68x17xf32>
    %35 = arith.mulf %32, %34 : vector<68x17xf32>
    %36 = arith.addf %31, %35 : vector<68x17xf32>
    %37 = vector.extract_strided_slice %1 {offsets = [0, 38], sizes = [68, 17], strides = [1, 1]} : vector<68x57xf32> to vector<68x17xf32>
    %38 = vector.extract_strided_slice %3 {offsets = [0, 6], sizes = [68, 1], strides = [1, 1]} : vector<68x16xf32> to vector<68x1xf32>
    %39 = vector.broadcast %38 : vector<68x1xf32> to vector<68x17xf32>
    %40 = arith.mulf %37, %39 : vector<68x17xf32>
    %41 = arith.addf %36, %40 : vector<68x17xf32>
    %42 = vector.extract_strided_slice %1 {offsets = [0, 39], sizes = [68, 17], strides = [1, 1]} : vector<68x57xf32> to vector<68x17xf32>
    %43 = vector.extract_strided_slice %3 {offsets = [0, 7], sizes = [68, 1], strides = [1, 1]} : vector<68x16xf32> to vector<68x1xf32>
    %44 = vector.broadcast %43 : vector<68x1xf32> to vector<68x17xf32>
    %45 = arith.mulf %42, %44 : vector<68x17xf32>
    %46 = arith.addf %41, %45 : vector<68x17xf32>
    %47 = vector.extract_strided_slice %1 {offsets = [0, 40], sizes = [68, 17], strides = [1, 1]} : vector<68x57xf32> to vector<68x17xf32>
    %48 = vector.extract_strided_slice %3 {offsets = [0, 8], sizes = [68, 1], strides = [1, 1]} : vector<68x16xf32> to vector<68x1xf32>
    %49 = vector.broadcast %48 : vector<68x1xf32> to vector<68x17xf32>
    %50 = arith.mulf %47, %49 : vector<68x17xf32>
    %51 = arith.addf %46, %50 : vector<68x17xf32>
    %cst = arith.constant 5.000000e-01 : f32
    %52 = vector.broadcast %cst : f32 to vector<68x17xf32>
    %53 = arith.mulf %51, %52 : vector<68x17xf32>
    %54 = arith.mulf %51, %51 : vector<68x17xf32>
    %55 = arith.mulf %54, %51 : vector<68x17xf32>
    %cst_5 = arith.constant 4.471500e-02 : f32
    %56 = vector.broadcast %cst_5 : f32 to vector<68x17xf32>
    %57 = arith.mulf %55, %56 : vector<68x17xf32>
    %58 = arith.addf %51, %57 : vector<68x17xf32>
    %cst_6 = arith.constant 0.797884583 : f32
    %59 = vector.broadcast %cst_6 : f32 to vector<68x17xf32>
    %60 = arith.mulf %58, %59 : vector<68x17xf32>
    %61 = math.tanh %60 : vector<68x17xf32>
    %cst_7 = arith.constant 1.000000e+00 : f32
    %62 = vector.broadcast %cst_7 : f32 to vector<68x17xf32>
    %63 = arith.addf %61, %62 : vector<68x17xf32>
    %64 = arith.mulf %53, %63 : vector<68x17xf32>
    %c0_8 = arith.constant 0 : index
    %c0_9 = arith.constant 0 : index
    %65 = vector.load %arg5[%c0_8, %c0_9] : memref<68x153xf32, #tpu.memory_space<vmem>>, vector<68x17xf32>
    tpu.vector_store %arg5[%c0_8, %c0_9], %64 {strides = array<i32>} : memref<68x153xf32, #tpu.memory_space<vmem>>, vector<68x17xf32>,
    %c1 = arith.constant 1 : index
    %c0_10 = arith.constant 0 : index
    %c0_11 = arith.constant 0 : index
    %66 = vector.load %arg0[%c1, %c0_10, %c0_11] : memref<9x68x57xf32, #tpu.memory_space<vmem>>, vector<1x68x57xf32>
    %67 = vector.shape_cast %66 : vector<1x68x57xf32> to vector<68x57xf32>
    %c1_12 = arith.constant 1 : index
    %c0_13 = arith.constant 0 : index
    %c0_14 = arith.constant 0 : index
    %68 = vector.load %arg1[%c1_12, %c0_13, %c0_14] : memref<9x68x16xf32, #tpu.memory_space<vmem>>, vector<1x68x16xf32>
    %69 = vector.shape_cast %68 : vector<1x68x16xf32> to vector<68x16xf32>
    %70 = vector.extract_strided_slice %69 {offsets = [0, 9], sizes = [68, 1], strides = [1, 1]} : vector<68x16xf32> to vector<68x1xf32>
    %71 = vector.shape_cast %70 : vector<68x1xf32> to vector<68x1xf32>
    %72 = vector.broadcast %71 : vector<68x1xf32> to vector<68x17xf32>
    %73 = vector.extract_strided_slice %67 {offsets = [0, 0], sizes = [68, 17], strides = [1, 1]} : vector<68x57xf32> to vector<68x17xf32>
    %74 = vector.extract_strided_slice %69 {offsets = [0, 0], sizes = [68, 1], strides = [1, 1]} : vector<68x16xf32> to vector<68x1xf32>
    %75 = vector.broadcast %74 : vector<68x1xf32> to vector<68x17xf32>
    %76 = arith.mulf %73, %75 : vector<68x17xf32>
    %77 = arith.addf %72, %76 : vector<68x17xf32>
    %78 = vector.extract_strided_slice %67 {offsets = [0, 1], sizes = [68, 17], strides = [1, 1]} : vector<68x57xf32> to vector<68x17xf32>
    %79 = vector.extract_strided_slice %69 {offsets = [0, 1], sizes = [68, 1], strides = [1, 1]} : vector<68x16xf32> to vector<68x1xf32>
    %80 = vector.broadcast %79 : vector<68x1xf32> to vector<68x17xf32>
    %81 = arith.mulf %78, %80 : vector<68x17xf32>
    %82 = arith.addf %77, %81 : vector<68x17xf32>
    %83 = vector.extract_strided_slice %67 {offsets = [0, 2], sizes = [68, 17], strides = [1, 1]} : vector<68x57xf32> to vector<68x17xf32>
    %84 = vector.extract_strided_slice %69 {offsets = [0, 2], sizes = [68, 1], strides = [1, 1]} : vector<68x16xf32> to vector<68x1xf32>
    %85 = vector.broadcast %84 : vector<68x1xf32> to vector<68x17xf32>
    %86 = arith.mulf %83, %85 : vector<68x17xf32>
    %87 = arith.addf %82, %86 : vector<68x17xf32>
    %88 = vector.extract_strided_slice %67 {offsets = [0, 19], sizes = [68, 17], strides = [1, 1]} : vector<68x57xf32> to vector<68x17xf32>
    %89 = vector.extract_strided_slice %69 {offsets = [0, 3], sizes = [68, 1], strides = [1, 1]} : vector<68x16xf32> to vector<68x1xf32>
    %90 = vector.broadcast %89 : vector<68x1xf32> to vector<68x17xf32>
    %91 = arith.mulf %88, %90 : vector<68x17xf32>
    %92 = arith.addf %87, %91 : vector<68x17xf32>
    %93 = vector.extract_strided_slice %67 {offsets = [0, 20], sizes = [68, 17], strides = [1, 1]} : vector<68x57xf32> to vector<68x17xf32>
    %94 = vector.extract_strided_slice %69 {offsets = [0, 4], sizes = [68, 1], strides = [1, 1]} : vector<68x16xf32> to vector<68x1xf32>
    %95 = vector.broadcast %94 : vector<68x1xf32> to vector<68x17xf32>
    %96 = arith.mulf %93, %95 : vector<68x17xf32>
    %97 = arith.addf %92, %96 : vector<68x17xf32>
    %98 = vector.extract_strided_slice %67 {offsets = [0, 21], sizes = [68, 17], strides = [1, 1]} : vector<68x57xf32> to vector<68x17xf32>
    %99 = vector.extract_strided_slice %69 {offsets = [0, 5], sizes = [68, 1], strides = [1, 1]} : vector<68x16xf32> to vector<68x1xf32>
    %100 = vector.broadcast %99 : vector<68x1xf32> to vector<68x17xf32>
    %101 = arith.mulf %98, %100 : vector<68x17xf32>
    %102 = arith.addf %97, %101 : vector<68x17xf32>
    %103 = vector.extract_strided_slice %67 {offsets = [0, 38], sizes = [68, 17], strides = [1, 1]} : vector<68x57xf32> to vector<68x17xf32>
    %104 = vector.extract_strided_slice %69 {offsets = [0, 6], sizes = [68, 1], strides = [1, 1]} : vector<68x16xf32> to vector<68x1xf32>
    %105 = vector.broadcast %104 : vector<68x1xf32> to vector<68x17xf32>
    %106 = arith.mulf %103, %105 : vector<68x17xf32>
    %107 = arith.addf %102, %106 : vector<68x17xf32>
    %108 = vector.extract_strided_slice %67 {offsets = [0, 39], sizes = [68, 17], strides = [1, 1]} : vector<68x57xf32> to vector<68x17xf32>
    %109 = vector.extract_strided_slice %69 {offsets = [0, 7], sizes = [68, 1], strides = [1, 1]} : vector<68x16xf32> to vector<68x1xf32>
    %110 = vector.broadcast %109 : vector<68x1xf32> to vector<68x17xf32>
    %111 = arith.mulf %108, %110 : vector<68x17xf32>
    %112 = arith.addf %107, %111 : vector<68x17xf32>
    %113 = vector.extract_strided_slice %67 {offsets = [0, 40], sizes = [68, 17], strides = [1, 1]} : vector<68x57xf32> to vector<68x17xf32>
    %114 = vector.extract_strided_slice %69 {offsets = [0, 8], sizes = [68, 1], strides = [1, 1]} : vector<68x16xf32> to vector<68x1xf32>
    %115 = vector.broadcast %114 : vector<68x1xf32> to vector<68x17xf32>
    %116 = arith.mulf %113, %115 : vector<68x17xf32>
    %117 = arith.addf %112, %116 : vector<68x17xf32>
    %cst_15 = arith.constant 5.000000e-01 : f32
    %118 = vector.broadcast %cst_15 : f32 to vector<68x17xf32>
    %119 = arith.mulf %117, %118 : vector<68x17xf32>
    %120 = arith.mulf %117, %117 : vector<68x17xf32>
    %121 = arith.mulf %120, %117 : vector<68x17xf32>
    %cst_16 = arith.constant 4.471500e-02 : f32
    %122 = vector.broadcast %cst_16 : f32 to vector<68x17xf32>
    %123 = arith.mulf %121, %122 : vector<68x17xf32>
    %124 = arith.addf %117, %123 : vector<68x17xf32>
    %cst_17 = arith.constant 0.797884583 : f32
    %125 = vector.broadcast %cst_17 : f32 to vector<68x17xf32>
    %126 = arith.mulf %124, %125 : vector<68x17xf32>
    %127 = math.tanh %126 : vector<68x17xf32>
    %cst_18 = arith.constant 1.000000e+00 : f32
    %128 = vector.broadcast %cst_18 : f32 to vector<68x17xf32>
    %129 = arith.addf %127, %128 : vector<68x17xf32>
    %130 = arith.mulf %119, %129 : vector<68x17xf32>
    %c0_19 = arith.constant 0 : index
    %c17 = arith.constant 17 : index
    %131 = vector.load %arg5[%c0_19, %c17] : memref<68x153xf32, #tpu.memory_space<vmem>>, vector<68x17xf32>
    tpu.vector_store %arg5[%c0_19, %c17], %130 {strides = array<i32>} : memref<68x153xf32, #tpu.memory_space<vmem>>, vector<68x17xf32>,
    %c2 = arith.constant 2 : index
    %c0_20 = arith.constant 0 : index
    %c0_21 = arith.constant 0 : index
    %132 = vector.load %arg0[%c2, %c0_20, %c0_21] : memref<9x68x57xf32, #tpu.memory_space<vmem>>, vector<1x68x57xf32>
    %133 = vector.shape_cast %132 : vector<1x68x57xf32> to vector<68x57xf32>
    %c2_22 = arith.constant 2 : index
    %c0_23 = arith.constant 0 : index
    %c0_24 = arith.constant 0 : index
    %134 = vector.load %arg1[%c2_22, %c0_23, %c0_24] : memref<9x68x16xf32, #tpu.memory_space<vmem>>, vector<1x68x16xf32>
    %135 = vector.shape_cast %134 : vector<1x68x16xf32> to vector<68x16xf32>
    %136 = vector.extract_strided_slice %135 {offsets = [0, 9], sizes = [68, 1], strides = [1, 1]} : vector<68x16xf32> to vector<68x1xf32>
    %137 = vector.shape_cast %136 : vector<68x1xf32> to vector<68x1xf32>
    %138 = vector.broadcast %137 : vector<68x1xf32> to vector<68x17xf32>
    %139 = vector.extract_strided_slice %133 {offsets = [0, 0], sizes = [68, 17], strides = [1, 1]} : vector<68x57xf32> to vector<68x17xf32>
    %140 = vector.extract_strided_slice %135 {offsets = [0, 0], sizes = [68, 1], strides = [1, 1]} : vector<68x16xf32> to vector<68x1xf32>
    %141 = vector.broadcast %140 : vector<68x1xf32> to vector<68x17xf32>
    %142 = arith.mulf %139, %141 : vector<68x17xf32>
    %143 = arith.addf %138, %142 : vector<68x17xf32>
    %144 = vector.extract_strided_slice %133 {offsets = [0, 1], sizes = [68, 17], strides = [1, 1]} : vector<68x57xf32> to vector<68x17xf32>
    %145 = vector.extract_strided_slice %135 {offsets = [0, 1], sizes = [68, 1], strides = [1, 1]} : vector<68x16xf32> to vector<68x1xf32>
    %146 = vector.broadcast %145 : vector<68x1xf32> to vector<68x17xf32>
    %147 = arith.mulf %144, %146 : vector<68x17xf32>
    %148 = arith.addf %143, %147 : vector<68x17xf32>
    %149 = vector.extract_strided_slice %133 {offsets = [0, 2], sizes = [68, 17], strides = [1, 1]} : vector<68x57xf32> to vector<68x17xf32>
    %150 = vector.extract_strided_slice %135 {offsets = [0, 2], sizes = [68, 1], strides = [1, 1]} : vector<68x16xf32> to vector<68x1xf32>
    %151 = vector.broadcast %150 : vector<68x1xf32> to vector<68x17xf32>
    %152 = arith.mulf %149, %151 : vector<68x17xf32>
    %153 = arith.addf %148, %152 : vector<68x17xf32>
    %154 = vector.extract_strided_slice %133 {offsets = [0, 19], sizes = [68, 17], strides = [1, 1]} : vector<68x57xf32> to vector<68x17xf32>
    %155 = vector.extract_strided_slice %135 {offsets = [0, 3], sizes = [68, 1], strides = [1, 1]} : vector<68x16xf32> to vector<68x1xf32>
    %156 = vector.broadcast %155 : vector<68x1xf32> to vector<68x17xf32>
    %157 = arith.mulf %154, %156 : vector<68x17xf32>
    %158 = arith.addf %153, %157 : vector<68x17xf32>
    %159 = vector.extract_strided_slice %133 {offsets = [0, 20], sizes = [68, 17], strides = [1, 1]} : vector<68x57xf32> to vector<68x17xf32>
    %160 = vector.extract_strided_slice %135 {offsets = [0, 4], sizes = [68, 1], strides = [1, 1]} : vector<68x16xf32> to vector<68x1xf32>
    %161 = vector.broadcast %160 : vector<68x1xf32> to vector<68x17xf32>
    %162 = arith.mulf %159, %161 : vector<68x17xf32>
    %163 = arith.addf %158, %162 : vector<68x17xf32>
    %164 = vector.extract_strided_slice %133 {offsets = [0, 21], sizes = [68, 17], strides = [1, 1]} : vector<68x57xf32> to vector<68x17xf32>
    %165 = vector.extract_strided_slice %135 {offsets = [0, 5], sizes = [68, 1], strides = [1, 1]} : vector<68x16xf32> to vector<68x1xf32>
    %166 = vector.broadcast %165 : vector<68x1xf32> to vector<68x17xf32>
    %167 = arith.mulf %164, %166 : vector<68x17xf32>
    %168 = arith.addf %163, %167 : vector<68x17xf32>
    %169 = vector.extract_strided_slice %133 {offsets = [0, 38], sizes = [68, 17], strides = [1, 1]} : vector<68x57xf32> to vector<68x17xf32>
    %170 = vector.extract_strided_slice %135 {offsets = [0, 6], sizes = [68, 1], strides = [1, 1]} : vector<68x16xf32> to vector<68x1xf32>
    %171 = vector.broadcast %170 : vector<68x1xf32> to vector<68x17xf32>
    %172 = arith.mulf %169, %171 : vector<68x17xf32>
    %173 = arith.addf %168, %172 : vector<68x17xf32>
    %174 = vector.extract_strided_slice %133 {offsets = [0, 39], sizes = [68, 17], strides = [1, 1]} : vector<68x57xf32> to vector<68x17xf32>
    %175 = vector.extract_strided_slice %135 {offsets = [0, 7], sizes = [68, 1], strides = [1, 1]} : vector<68x16xf32> to vector<68x1xf32>
    %176 = vector.broadcast %175 : vector<68x1xf32> to vector<68x17xf32>
    %177 = arith.mulf %174, %176 : vector<68x17xf32>
    %178 = arith.addf %173, %177 : vector<68x17xf32>
    %179 = vector.extract_strided_slice %133 {offsets = [0, 40], sizes = [68, 17], strides = [1, 1]} : vector<68x57xf32> to vector<68x17xf32>
    %180 = vector.extract_strided_slice %135 {offsets = [0, 8], sizes = [68, 1], strides = [1, 1]} : vector<68x16xf32> to vector<68x1xf32>
    %181 = vector.broadcast %180 : vector<68x1xf32> to vector<68x17xf32>
    %182 = arith.mulf %179, %181 : vector<68x17xf32>
    %183 = arith.addf %178, %182 : vector<68x17xf32>
    %cst_25 = arith.constant 5.000000e-01 : f32
    %184 = vector.broadcast %cst_25 : f32 to vector<68x17xf32>
    %185 = arith.mulf %183, %184 : vector<68x17xf32>
    %186 = arith.mulf %183, %183 : vector<68x17xf32>
    %187 = arith.mulf %186, %183 : vector<68x17xf32>
    %cst_26 = arith.constant 4.471500e-02 : f32
    %188 = vector.broadcast %cst_26 : f32 to vector<68x17xf32>
    %189 = arith.mulf %187, %188 : vector<68x17xf32>
    %190 = arith.addf %183, %189 : vector<68x17xf32>
    %cst_27 = arith.constant 0.797884583 : f32
    %191 = vector.broadcast %cst_27 : f32 to vector<68x17xf32>
    %192 = arith.mulf %190, %191 : vector<68x17xf32>
    %193 = math.tanh %192 : vector<68x17xf32>
    %cst_28 = arith.constant 1.000000e+00 : f32
    %194 = vector.broadcast %cst_28 : f32 to vector<68x17xf32>
    %195 = arith.addf %193, %194 : vector<68x17xf32>
    %196 = arith.mulf %185, %195 : vector<68x17xf32>
    %c0_29 = arith.constant 0 : index
    %c34 = arith.constant 34 : index
    %197 = vector.load %arg5[%c0_29, %c34] : memref<68x153xf32, #tpu.memory_space<vmem>>, vector<68x17xf32>
    tpu.vector_store %arg5[%c0_29, %c34], %196 {strides = array<i32>} : memref<68x153xf32, #tpu.memory_space<vmem>>, vector<68x17xf32>,
    %c3 = arith.constant 3 : index
    %c0_30 = arith.constant 0 : index
    %c0_31 = arith.constant 0 : index
    %198 = vector.load %arg0[%c3, %c0_30, %c0_31] : memref<9x68x57xf32, #tpu.memory_space<vmem>>, vector<1x68x57xf32>
    %199 = vector.shape_cast %198 : vector<1x68x57xf32> to vector<68x57xf32>
    %c3_32 = arith.constant 3 : index
    %c0_33 = arith.constant 0 : index
    %c0_34 = arith.constant 0 : index
    %200 = vector.load %arg1[%c3_32, %c0_33, %c0_34] : memref<9x68x16xf32, #tpu.memory_space<vmem>>, vector<1x68x16xf32>
    %201 = vector.shape_cast %200 : vector<1x68x16xf32> to vector<68x16xf32>
    %202 = vector.extract_strided_slice %201 {offsets = [0, 9], sizes = [68, 1], strides = [1, 1]} : vector<68x16xf32> to vector<68x1xf32>
    %203 = vector.shape_cast %202 : vector<68x1xf32> to vector<68x1xf32>
    %204 = vector.broadcast %203 : vector<68x1xf32> to vector<68x17xf32>
    %205 = vector.extract_strided_slice %199 {offsets = [0, 0], sizes = [68, 17], strides = [1, 1]} : vector<68x57xf32> to vector<68x17xf32>
    %206 = vector.extract_strided_slice %201 {offsets = [0, 0], sizes = [68, 1], strides = [1, 1]} : vector<68x16xf32> to vector<68x1xf32>
    %207 = vector.broadcast %206 : vector<68x1xf32> to vector<68x17xf32>
    %208 = arith.mulf %205, %207 : vector<68x17xf32>
    %209 = arith.addf %204, %208 : vector<68x17xf32>
    %210 = vector.extract_strided_slice %199 {offsets = [0, 1], sizes = [68, 17], strides = [1, 1]} : vector<68x57xf32> to vector<68x17xf32>
    %211 = vector.extract_strided_slice %201 {offsets = [0, 1], sizes = [68, 1], strides = [1, 1]} : vector<68x16xf32> to vector<68x1xf32>
    %212 = vector.broadcast %211 : vector<68x1xf32> to vector<68x17xf32>
    %213 = arith.mulf %210, %212 : vector<68x17xf32>
    %214 = arith.addf %209, %213 : vector<68x17xf32>
    %215 = vector.extract_strided_slice %199 {offsets = [0, 2], sizes = [68, 17], strides = [1, 1]} : vector<68x57xf32> to vector<68x17xf32>
    %216 = vector.extract_strided_slice %201 {offsets = [0, 2], sizes = [68, 1], strides = [1, 1]} : vector<68x16xf32> to vector<68x1xf32>
    %217 = vector.broadcast %216 : vector<68x1xf32> to vector<68x17xf32>
    %218 = arith.mulf %215, %217 : vector<68x17xf32>
    %219 = arith.addf %214, %218 : vector<68x17xf32>
    %220 = vector.extract_strided_slice %199 {offsets = [0, 19], sizes = [68, 17], strides = [1, 1]} : vector<68x57xf32> to vector<68x17xf32>
    %221 = vector.extract_strided_slice %201 {offsets = [0, 3], sizes = [68, 1], strides = [1, 1]} : vector<68x16xf32> to vector<68x1xf32>
    %222 = vector.broadcast %221 : vector<68x1xf32> to vector<68x17xf32>
    %223 = arith.mulf %220, %222 : vector<68x17xf32>
    %224 = arith.addf %219, %223 : vector<68x17xf32>
    %225 = vector.extract_strided_slice %199 {offsets = [0, 20], sizes = [68, 17], strides = [1, 1]} : vector<68x57xf32> to vector<68x17xf32>
    %226 = vector.extract_strided_slice %201 {offsets = [0, 4], sizes = [68, 1], strides = [1, 1]} : vector<68x16xf32> to vector<68x1xf32>
    %227 = vector.broadcast %226 : vector<68x1xf32> to vector<68x17xf32>
    %228 = arith.mulf %225, %227 : vector<68x17xf32>
    %229 = arith.addf %224, %228 : vector<68x17xf32>
    %230 = vector.extract_strided_slice %199 {offsets = [0, 21], sizes = [68, 17], strides = [1, 1]} : vector<68x57xf32> to vector<68x17xf32>
    %231 = vector.extract_strided_slice %201 {offsets = [0, 5], sizes = [68, 1], strides = [1, 1]} : vector<68x16xf32> to vector<68x1xf32>
    %232 = vector.broadcast %231 : vector<68x1xf32> to vector<68x17xf32>
    %233 = arith.mulf %230, %232 : vector<68x17xf32>
    %234 = arith.addf %229, %233 : vector<68x17xf32>
    %235 = vector.extract_strided_slice %199 {offsets = [0, 38], sizes = [68, 17], strides = [1, 1]} : vector<68x57xf32> to vector<68x17xf32>
    %236 = vector.extract_strided_slice %201 {offsets = [0, 6], sizes = [68, 1], strides = [1, 1]} : vector<68x16xf32> to vector<68x1xf32>
    %237 = vector.broadcast %236 : vector<68x1xf32> to vector<68x17xf32>
    %238 = arith.mulf %235, %237 : vector<68x17xf32>
    %239 = arith.addf %234, %238 : vector<68x17xf32>
    %240 = vector.extract_strided_slice %199 {offsets = [0, 39], sizes = [68, 17], strides = [1, 1]} : vector<68x57xf32> to vector<68x17xf32>
    %241 = vector.extract_strided_slice %201 {offsets = [0, 7], sizes = [68, 1], strides = [1, 1]} : vector<68x16xf32> to vector<68x1xf32>
    %242 = vector.broadcast %241 : vector<68x1xf32> to vector<68x17xf32>
    %243 = arith.mulf %240, %242 : vector<68x17xf32>
    %244 = arith.addf %239, %243 : vector<68x17xf32>
    %245 = vector.extract_strided_slice %199 {offsets = [0, 40], sizes = [68, 17], strides = [1, 1]} : vector<68x57xf32> to vector<68x17xf32>
    %246 = vector.extract_strided_slice %201 {offsets = [0, 8], sizes = [68, 1], strides = [1, 1]} : vector<68x16xf32> to vector<68x1xf32>
    %247 = vector.broadcast %246 : vector<68x1xf32> to vector<68x17xf32>
    %248 = arith.mulf %245, %247 : vector<68x17xf32>
    %249 = arith.addf %244, %248 : vector<68x17xf32>
    %cst_35 = arith.constant 5.000000e-01 : f32
    %250 = vector.broadcast %cst_35 : f32 to vector<68x17xf32>
    %251 = arith.mulf %249, %250 : vector<68x17xf32>
    %252 = arith.mulf %249, %249 : vector<68x17xf32>
    %253 = arith.mulf %252, %249 : vector<68x17xf32>
    %cst_36 = arith.constant 4.471500e-02 : f32
    %254 = vector.broadcast %cst_36 : f32 to vector<68x17xf32>
    %255 = arith.mulf %253, %254 : vector<68x17xf32>
    %256 = arith.addf %249, %255 : vector<68x17xf32>
    %cst_37 = arith.constant 0.797884583 : f32
    %257 = vector.broadcast %cst_37 : f32 to vector<68x17xf32>
    %258 = arith.mulf %256, %257 : vector<68x17xf32>
    %259 = math.tanh %258 : vector<68x17xf32>
    %cst_38 = arith.constant 1.000000e+00 : f32
    %260 = vector.broadcast %cst_38 : f32 to vector<68x17xf32>
    %261 = arith.addf %259, %260 : vector<68x17xf32>
    %262 = arith.mulf %251, %261 : vector<68x17xf32>
    %c0_39 = arith.constant 0 : index
    %c51 = arith.constant 51 : index
    %263 = vector.load %arg5[%c0_39, %c51] : memref<68x153xf32, #tpu.memory_space<vmem>>, vector<68x17xf32>
    tpu.vector_store %arg5[%c0_39, %c51], %262 {strides = array<i32>} : memref<68x153xf32, #tpu.memory_space<vmem>>, vector<68x17xf32>,
    %c4 = arith.constant 4 : index
    %c0_40 = arith.constant 0 : index
    %c0_41 = arith.constant 0 : index
    %264 = vector.load %arg0[%c4, %c0_40, %c0_41] : memref<9x68x57xf32, #tpu.memory_space<vmem>>, vector<1x68x57xf32>
    %265 = vector.shape_cast %264 : vector<1x68x57xf32> to vector<68x57xf32>
    %c4_42 = arith.constant 4 : index
    %c0_43 = arith.constant 0 : index
    %c0_44 = arith.constant 0 : index
    %266 = vector.load %arg1[%c4_42, %c0_43, %c0_44] : memref<9x68x16xf32, #tpu.memory_space<vmem>>, vector<1x68x16xf32>
    %267 = vector.shape_cast %266 : vector<1x68x16xf32> to vector<68x16xf32>
    %268 = vector.extract_strided_slice %267 {offsets = [0, 9], sizes = [68, 1], strides = [1, 1]} : vector<68x16xf32> to vector<68x1xf32>
    %269 = vector.shape_cast %268 : vector<68x1xf32> to vector<68x1xf32>
    %270 = vector.broadcast %269 : vector<68x1xf32> to vector<68x17xf32>
    %271 = vector.extract_strided_slice %265 {offsets = [0, 0], sizes = [68, 17], strides = [1, 1]} : vector<68x57xf32> to vector<68x17xf32>
    %272 = vector.extract_strided_slice %267 {offsets = [0, 0], sizes = [68, 1], strides = [1, 1]} : vector<68x16xf32> to vector<68x1xf32>
    %273 = vector.broadcast %272 : vector<68x1xf32> to vector<68x17xf32>
    %274 = arith.mulf %271, %273 : vector<68x17xf32>
    %275 = arith.addf %270, %274 : vector<68x17xf32>
    %276 = vector.extract_strided_slice %265 {offsets = [0, 1], sizes = [68, 17], strides = [1, 1]} : vector<68x57xf32> to vector<68x17xf32>
    %277 = vector.extract_strided_slice %267 {offsets = [0, 1], sizes = [68, 1], strides = [1, 1]} : vector<68x16xf32> to vector<68x1xf32>
    %278 = vector.broadcast %277 : vector<68x1xf32> to vector<68x17xf32>
    %279 = arith.mulf %276, %278 : vector<68x17xf32>
    %280 = arith.addf %275, %279 : vector<68x17xf32>
    %281 = vector.extract_strided_slice %265 {offsets = [0, 2], sizes = [68, 17], strides = [1, 1]} : vector<68x57xf32> to vector<68x17xf32>
    %282 = vector.extract_strided_slice %267 {offsets = [0, 2], sizes = [68, 1], strides = [1, 1]} : vector<68x16xf32> to vector<68x1xf32>
    %283 = vector.broadcast %282 : vector<68x1xf32> to vector<68x17xf32>
    %284 = arith.mulf %281, %283 : vector<68x17xf32>
    %285 = arith.addf %280, %284 : vector<68x17xf32>
    %286 = vector.extract_strided_slice %265 {offsets = [0, 19], sizes = [68, 17], strides = [1, 1]} : vector<68x57xf32> to vector<68x17xf32>
    %287 = vector.extract_strided_slice %267 {offsets = [0, 3], sizes = [68, 1], strides = [1, 1]} : vector<68x16xf32> to vector<68x1xf32>
    %288 = vector.broadcast %287 : vector<68x1xf32> to vector<68x17xf32>
    %289 = arith.mulf %286, %288 : vector<68x17xf32>
    %290 = arith.addf %285, %289 : vector<68x17xf32>
    %291 = vector.extract_strided_slice %265 {offsets = [0, 20], sizes = [68, 17], strides = [1, 1]} : vector<68x57xf32> to vector<68x17xf32>
    %292 = vector.extract_strided_slice %267 {offsets = [0, 4], sizes = [68, 1], strides = [1, 1]} : vector<68x16xf32> to vector<68x1xf32>
    %293 = vector.broadcast %292 : vector<68x1xf32> to vector<68x17xf32>
    %294 = arith.mulf %291, %293 : vector<68x17xf32>
    %295 = arith.addf %290, %294 : vector<68x17xf32>
    %296 = vector.extract_strided_slice %265 {offsets = [0, 21], sizes = [68, 17], strides = [1, 1]} : vector<68x57xf32> to vector<68x17xf32>
    %297 = vector.extract_strided_slice %267 {offsets = [0, 5], sizes = [68, 1], strides = [1, 1]} : vector<68x16xf32> to vector<68x1xf32>
    %298 = vector.broadcast %297 : vector<68x1xf32> to vector<68x17xf32>
    %299 = arith.mulf %296, %298 : vector<68x17xf32>
    %300 = arith.addf %295, %299 : vector<68x17xf32>
    %301 = vector.extract_strided_slice %265 {offsets = [0, 38], sizes = [68, 17], strides = [1, 1]} : vector<68x57xf32> to vector<68x17xf32>
    %302 = vector.extract_strided_slice %267 {offsets = [0, 6], sizes = [68, 1], strides = [1, 1]} : vector<68x16xf32> to vector<68x1xf32>
    %303 = vector.broadcast %302 : vector<68x1xf32> to vector<68x17xf32>
    %304 = arith.mulf %301, %303 : vector<68x17xf32>
    %305 = arith.addf %300, %304 : vector<68x17xf32>
    %306 = vector.extract_strided_slice %265 {offsets = [0, 39], sizes = [68, 17], strides = [1, 1]} : vector<68x57xf32> to vector<68x17xf32>
    %307 = vector.extract_strided_slice %267 {offsets = [0, 7], sizes = [68, 1], strides = [1, 1]} : vector<68x16xf32> to vector<68x1xf32>
    %308 = vector.broadcast %307 : vector<68x1xf32> to vector<68x17xf32>
    %309 = arith.mulf %306, %308 : vector<68x17xf32>
    %310 = arith.addf %305, %309 : vector<68x17xf32>
    %311 = vector.extract_strided_slice %265 {offsets = [0, 40], sizes = [68, 17], strides = [1, 1]} : vector<68x57xf32> to vector<68x17xf32>
    %312 = vector.extract_strided_slice %267 {offsets = [0, 8], sizes = [68, 1], strides = [1, 1]} : vector<68x16xf32> to vector<68x1xf32>
    %313 = vector.broadcast %312 : vector<68x1xf32> to vector<68x17xf32>
    %314 = arith.mulf %311, %313 : vector<68x17xf32>
    %315 = arith.addf %310, %314 : vector<68x17xf32>
    %cst_45 = arith.constant 5.000000e-01 : f32
    %316 = vector.broadcast %cst_45 : f32 to vector<68x17xf32>
    %317 = arith.mulf %315, %316 : vector<68x17xf32>
    %318 = arith.mulf %315, %315 : vector<68x17xf32>
    %319 = arith.mulf %318, %315 : vector<68x17xf32>
    %cst_46 = arith.constant 4.471500e-02 : f32
    %320 = vector.broadcast %cst_46 : f32 to vector<68x17xf32>
    %321 = arith.mulf %319, %320 : vector<68x17xf32>
    %322 = arith.addf %315, %321 : vector<68x17xf32>
    %cst_47 = arith.constant 0.797884583 : f32
    %323 = vector.broadcast %cst_47 : f32 to vector<68x17xf32>
    %324 = arith.mulf %322, %323 : vector<68x17xf32>
    %325 = math.tanh %324 : vector<68x17xf32>
    %cst_48 = arith.constant 1.000000e+00 : f32
    %326 = vector.broadcast %cst_48 : f32 to vector<68x17xf32>
    %327 = arith.addf %325, %326 : vector<68x17xf32>
    %328 = arith.mulf %317, %327 : vector<68x17xf32>
    %c0_49 = arith.constant 0 : index
    %c68 = arith.constant 68 : index
    %329 = vector.load %arg5[%c0_49, %c68] : memref<68x153xf32, #tpu.memory_space<vmem>>, vector<68x17xf32>
    tpu.vector_store %arg5[%c0_49, %c68], %328 {strides = array<i32>} : memref<68x153xf32, #tpu.memory_space<vmem>>, vector<68x17xf32>,
    %c5 = arith.constant 5 : index
    %c0_50 = arith.constant 0 : index
    %c0_51 = arith.constant 0 : index
    %330 = vector.load %arg0[%c5, %c0_50, %c0_51] : memref<9x68x57xf32, #tpu.memory_space<vmem>>, vector<1x68x57xf32>
    %331 = vector.shape_cast %330 : vector<1x68x57xf32> to vector<68x57xf32>
    %c5_52 = arith.constant 5 : index
    %c0_53 = arith.constant 0 : index
    %c0_54 = arith.constant 0 : index
    %332 = vector.load %arg1[%c5_52, %c0_53, %c0_54] : memref<9x68x16xf32, #tpu.memory_space<vmem>>, vector<1x68x16xf32>
    %333 = vector.shape_cast %332 : vector<1x68x16xf32> to vector<68x16xf32>
    %334 = vector.extract_strided_slice %333 {offsets = [0, 9], sizes = [68, 1], strides = [1, 1]} : vector<68x16xf32> to vector<68x1xf32>
    %335 = vector.shape_cast %334 : vector<68x1xf32> to vector<68x1xf32>
    %336 = vector.broadcast %335 : vector<68x1xf32> to vector<68x17xf32>
    %337 = vector.extract_strided_slice %331 {offsets = [0, 0], sizes = [68, 17], strides = [1, 1]} : vector<68x57xf32> to vector<68x17xf32>
    %338 = vector.extract_strided_slice %333 {offsets = [0, 0], sizes = [68, 1], strides = [1, 1]} : vector<68x16xf32> to vector<68x1xf32>
    %339 = vector.broadcast %338 : vector<68x1xf32> to vector<68x17xf32>
    %340 = arith.mulf %337, %339 : vector<68x17xf32>
    %341 = arith.addf %336, %340 : vector<68x17xf32>
    %342 = vector.extract_strided_slice %331 {offsets = [0, 1], sizes = [68, 17], strides = [1, 1]} : vector<68x57xf32> to vector<68x17xf32>
    %343 = vector.extract_strided_slice %333 {offsets = [0, 1], sizes = [68, 1], strides = [1, 1]} : vector<68x16xf32> to vector<68x1xf32>
    %344 = vector.broadcast %343 : vector<68x1xf32> to vector<68x17xf32>
    %345 = arith.mulf %342, %344 : vector<68x17xf32>
    %346 = arith.addf %341, %345 : vector<68x17xf32>
    %347 = vector.extract_strided_slice %331 {offsets = [0, 2], sizes = [68, 17], strides = [1, 1]} : vector<68x57xf32> to vector<68x17xf32>
    %348 = vector.extract_strided_slice %333 {offsets = [0, 2], sizes = [68, 1], strides = [1, 1]} : vector<68x16xf32> to vector<68x1xf32>
    %349 = vector.broadcast %348 : vector<68x1xf32> to vector<68x17xf32>
    %350 = arith.mulf %347, %349 : vector<68x17xf32>
    %351 = arith.addf %346, %350 : vector<68x17xf32>
    %352 = vector.extract_strided_slice %331 {offsets = [0, 19], sizes = [68, 17], strides = [1, 1]} : vector<68x57xf32> to vector<68x17xf32>
    %353 = vector.extract_strided_slice %333 {offsets = [0, 3], sizes = [68, 1], strides = [1, 1]} : vector<68x16xf32> to vector<68x1xf32>
    %354 = vector.broadcast %353 : vector<68x1xf32> to vector<68x17xf32>
    %355 = arith.mulf %352, %354 : vector<68x17xf32>
    %356 = arith.addf %351, %355 : vector<68x17xf32>
    %357 = vector.extract_strided_slice %331 {offsets = [0, 20], sizes = [68, 17], strides = [1, 1]} : vector<68x57xf32> to vector<68x17xf32>
    %358 = vector.extract_strided_slice %333 {offsets = [0, 4], sizes = [68, 1], strides = [1, 1]} : vector<68x16xf32> to vector<68x1xf32>
    %359 = vector.broadcast %358 : vector<68x1xf32> to vector<68x17xf32>
    %360 = arith.mulf %357, %359 : vector<68x17xf32>
    %361 = arith.addf %356, %360 : vector<68x17xf32>
    %362 = vector.extract_strided_slice %331 {offsets = [0, 21], sizes = [68, 17], strides = [1, 1]} : vector<68x57xf32> to vector<68x17xf32>
    %363 = vector.extract_strided_slice %333 {offsets = [0, 5], sizes = [68, 1], strides = [1, 1]} : vector<68x16xf32> to vector<68x1xf32>
    %364 = vector.broadcast %363 : vector<68x1xf32> to vector<68x17xf32>
    %365 = arith.mulf %362, %364 : vector<68x17xf32>
    %366 = arith.addf %361, %365 : vector<68x17xf32>
    %367 = vector.extract_strided_slice %331 {offsets = [0, 38], sizes = [68, 17], strides = [1, 1]} : vector<68x57xf32> to vector<68x17xf32>
    %368 = vector.extract_strided_slice %333 {offsets = [0, 6], sizes = [68, 1], strides = [1, 1]} : vector<68x16xf32> to vector<68x1xf32>
    %369 = vector.broadcast %368 : vector<68x1xf32> to vector<68x17xf32>
    %370 = arith.mulf %367, %369 : vector<68x17xf32>
    %371 = arith.addf %366, %370 : vector<68x17xf32>
    %372 = vector.extract_strided_slice %331 {offsets = [0, 39], sizes = [68, 17], strides = [1, 1]} : vector<68x57xf32> to vector<68x17xf32>
    %373 = vector.extract_strided_slice %333 {offsets = [0, 7], sizes = [68, 1], strides = [1, 1]} : vector<68x16xf32> to vector<68x1xf32>
    %374 = vector.broadcast %373 : vector<68x1xf32> to vector<68x17xf32>
    %375 = arith.mulf %372, %374 : vector<68x17xf32>
    %376 = arith.addf %371, %375 : vector<68x17xf32>
    %377 = vector.extract_strided_slice %331 {offsets = [0, 40], sizes = [68, 17], strides = [1, 1]} : vector<68x57xf32> to vector<68x17xf32>
    %378 = vector.extract_strided_slice %333 {offsets = [0, 8], sizes = [68, 1], strides = [1, 1]} : vector<68x16xf32> to vector<68x1xf32>
    %379 = vector.broadcast %378 : vector<68x1xf32> to vector<68x17xf32>
    %380 = arith.mulf %377, %379 : vector<68x17xf32>
    %381 = arith.addf %376, %380 : vector<68x17xf32>
    %cst_55 = arith.constant 5.000000e-01 : f32
    %382 = vector.broadcast %cst_55 : f32 to vector<68x17xf32>
    %383 = arith.mulf %381, %382 : vector<68x17xf32>
    %384 = arith.mulf %381, %381 : vector<68x17xf32>
    %385 = arith.mulf %384, %381 : vector<68x17xf32>
    %cst_56 = arith.constant 4.471500e-02 : f32
    %386 = vector.broadcast %cst_56 : f32 to vector<68x17xf32>
    %387 = arith.mulf %385, %386 : vector<68x17xf32>
    %388 = arith.addf %381, %387 : vector<68x17xf32>
    %cst_57 = arith.constant 0.797884583 : f32
    %389 = vector.broadcast %cst_57 : f32 to vector<68x17xf32>
    %390 = arith.mulf %388, %389 : vector<68x17xf32>
    %391 = math.tanh %390 : vector<68x17xf32>
    %cst_58 = arith.constant 1.000000e+00 : f32
    %392 = vector.broadcast %cst_58 : f32 to vector<68x17xf32>
    %393 = arith.addf %391, %392 : vector<68x17xf32>
    %394 = arith.mulf %383, %393 : vector<68x17xf32>
    %c0_59 = arith.constant 0 : index
    %c85 = arith.constant 85 : index
    %395 = vector.load %arg5[%c0_59, %c85] : memref<68x153xf32, #tpu.memory_space<vmem>>, vector<68x17xf32>
    tpu.vector_store %arg5[%c0_59, %c85], %394 {strides = array<i32>} : memref<68x153xf32, #tpu.memory_space<vmem>>, vector<68x17xf32>,
    %c6 = arith.constant 6 : index
    %c0_60 = arith.constant 0 : index
    %c0_61 = arith.constant 0 : index
    %396 = vector.load %arg0[%c6, %c0_60, %c0_61] : memref<9x68x57xf32, #tpu.memory_space<vmem>>, vector<1x68x57xf32>
    %397 = vector.shape_cast %396 : vector<1x68x57xf32> to vector<68x57xf32>
    %c6_62 = arith.constant 6 : index
    %c0_63 = arith.constant 0 : index
    %c0_64 = arith.constant 0 : index
    %398 = vector.load %arg1[%c6_62, %c0_63, %c0_64] : memref<9x68x16xf32, #tpu.memory_space<vmem>>, vector<1x68x16xf32>
    %399 = vector.shape_cast %398 : vector<1x68x16xf32> to vector<68x16xf32>
    %400 = vector.extract_strided_slice %399 {offsets = [0, 9], sizes = [68, 1], strides = [1, 1]} : vector<68x16xf32> to vector<68x1xf32>
    %401 = vector.shape_cast %400 : vector<68x1xf32> to vector<68x1xf32>
    %402 = vector.broadcast %401 : vector<68x1xf32> to vector<68x17xf32>
    %403 = vector.extract_strided_slice %397 {offsets = [0, 0], sizes = [68, 17], strides = [1, 1]} : vector<68x57xf32> to vector<68x17xf32>
    %404 = vector.extract_strided_slice %399 {offsets = [0, 0], sizes = [68, 1], strides = [1, 1]} : vector<68x16xf32> to vector<68x1xf32>
    %405 = vector.broadcast %404 : vector<68x1xf32> to vector<68x17xf32>
    %406 = arith.mulf %403, %405 : vector<68x17xf32>
    %407 = arith.addf %402, %406 : vector<68x17xf32>
    %408 = vector.extract_strided_slice %397 {offsets = [0, 1], sizes = [68, 17], strides = [1, 1]} : vector<68x57xf32> to vector<68x17xf32>
    %409 = vector.extract_strided_slice %399 {offsets = [0, 1], sizes = [68, 1], strides = [1, 1]} : vector<68x16xf32> to vector<68x1xf32>
    %410 = vector.broadcast %409 : vector<68x1xf32> to vector<68x17xf32>
    %411 = arith.mulf %408, %410 : vector<68x17xf32>
    %412 = arith.addf %407, %411 : vector<68x17xf32>
    %413 = vector.extract_strided_slice %397 {offsets = [0, 2], sizes = [68, 17], strides = [1, 1]} : vector<68x57xf32> to vector<68x17xf32>
    %414 = vector.extract_strided_slice %399 {offsets = [0, 2], sizes = [68, 1], strides = [1, 1]} : vector<68x16xf32> to vector<68x1xf32>
    %415 = vector.broadcast %414 : vector<68x1xf32> to vector<68x17xf32>
    %416 = arith.mulf %413, %415 : vector<68x17xf32>
    %417 = arith.addf %412, %416 : vector<68x17xf32>
    %418 = vector.extract_strided_slice %397 {offsets = [0, 19], sizes = [68, 17], strides = [1, 1]} : vector<68x57xf32> to vector<68x17xf32>
    %419 = vector.extract_strided_slice %399 {offsets = [0, 3], sizes = [68, 1], strides = [1, 1]} : vector<68x16xf32> to vector<68x1xf32>
    %420 = vector.broadcast %419 : vector<68x1xf32> to vector<68x17xf32>
    %421 = arith.mulf %418, %420 : vector<68x17xf32>
    %422 = arith.addf %417, %421 : vector<68x17xf32>
    %423 = vector.extract_strided_slice %397 {offsets = [0, 20], sizes = [68, 17], strides = [1, 1]} : vector<68x57xf32> to vector<68x17xf32>
    %424 = vector.extract_strided_slice %399 {offsets = [0, 4], sizes = [68, 1], strides = [1, 1]} : vector<68x16xf32> to vector<68x1xf32>
    %425 = vector.broadcast %424 : vector<68x1xf32> to vector<68x17xf32>
    %426 = arith.mulf %423, %425 : vector<68x17xf32>
    %427 = arith.addf %422, %426 : vector<68x17xf32>
    %428 = vector.extract_strided_slice %397 {offsets = [0, 21], sizes = [68, 17], strides = [1, 1]} : vector<68x57xf32> to vector<68x17xf32>
    %429 = vector.extract_strided_slice %399 {offsets = [0, 5], sizes = [68, 1], strides = [1, 1]} : vector<68x16xf32> to vector<68x1xf32>
    %430 = vector.broadcast %429 : vector<68x1xf32> to vector<68x17xf32>
    %431 = arith.mulf %428, %430 : vector<68x17xf32>
    %432 = arith.addf %427, %431 : vector<68x17xf32>
    %433 = vector.extract_strided_slice %397 {offsets = [0, 38], sizes = [68, 17], strides = [1, 1]} : vector<68x57xf32> to vector<68x17xf32>
    %434 = vector.extract_strided_slice %399 {offsets = [0, 6], sizes = [68, 1], strides = [1, 1]} : vector<68x16xf32> to vector<68x1xf32>
    %435 = vector.broadcast %434 : vector<68x1xf32> to vector<68x17xf32>
    %436 = arith.mulf %433, %435 : vector<68x17xf32>
    %437 = arith.addf %432, %436 : vector<68x17xf32>
    %438 = vector.extract_strided_slice %397 {offsets = [0, 39], sizes = [68, 17], strides = [1, 1]} : vector<68x57xf32> to vector<68x17xf32>
    %439 = vector.extract_strided_slice %399 {offsets = [0, 7], sizes = [68, 1], strides = [1, 1]} : vector<68x16xf32> to vector<68x1xf32>
    %440 = vector.broadcast %439 : vector<68x1xf32> to vector<68x17xf32>
    %441 = arith.mulf %438, %440 : vector<68x17xf32>
    %442 = arith.addf %437, %441 : vector<68x17xf32>
    %443 = vector.extract_strided_slice %397 {offsets = [0, 40], sizes = [68, 17], strides = [1, 1]} : vector<68x57xf32> to vector<68x17xf32>
    %444 = vector.extract_strided_slice %399 {offsets = [0, 8], sizes = [68, 1], strides = [1, 1]} : vector<68x16xf32> to vector<68x1xf32>
    %445 = vector.broadcast %444 : vector<68x1xf32> to vector<68x17xf32>
    %446 = arith.mulf %443, %445 : vector<68x17xf32>
    %447 = arith.addf %442, %446 : vector<68x17xf32>
    %cst_65 = arith.constant 5.000000e-01 : f32
    %448 = vector.broadcast %cst_65 : f32 to vector<68x17xf32>
    %449 = arith.mulf %447, %448 : vector<68x17xf32>
    %450 = arith.mulf %447, %447 : vector<68x17xf32>
    %451 = arith.mulf %450, %447 : vector<68x17xf32>
    %cst_66 = arith.constant 4.471500e-02 : f32
    %452 = vector.broadcast %cst_66 : f32 to vector<68x17xf32>
    %453 = arith.mulf %451, %452 : vector<68x17xf32>
    %454 = arith.addf %447, %453 : vector<68x17xf32>
    %cst_67 = arith.constant 0.797884583 : f32
    %455 = vector.broadcast %cst_67 : f32 to vector<68x17xf32>
    %456 = arith.mulf %454, %455 : vector<68x17xf32>
    %457 = math.tanh %456 : vector<68x17xf32>
    %cst_68 = arith.constant 1.000000e+00 : f32
    %458 = vector.broadcast %cst_68 : f32 to vector<68x17xf32>
    %459 = arith.addf %457, %458 : vector<68x17xf32>
    %460 = arith.mulf %449, %459 : vector<68x17xf32>
    %c0_69 = arith.constant 0 : index
    %c102 = arith.constant 102 : index
    %461 = vector.load %arg5[%c0_69, %c102] : memref<68x153xf32, #tpu.memory_space<vmem>>, vector<68x17xf32>
    tpu.vector_store %arg5[%c0_69, %c102], %460 {strides = array<i32>} : memref<68x153xf32, #tpu.memory_space<vmem>>, vector<68x17xf32>,
    %c7 = arith.constant 7 : index
    %c0_70 = arith.constant 0 : index
    %c0_71 = arith.constant 0 : index
    %462 = vector.load %arg0[%c7, %c0_70, %c0_71] : memref<9x68x57xf32, #tpu.memory_space<vmem>>, vector<1x68x57xf32>
    %463 = vector.shape_cast %462 : vector<1x68x57xf32> to vector<68x57xf32>
    %c7_72 = arith.constant 7 : index
    %c0_73 = arith.constant 0 : index
    %c0_74 = arith.constant 0 : index
    %464 = vector.load %arg1[%c7_72, %c0_73, %c0_74] : memref<9x68x16xf32, #tpu.memory_space<vmem>>, vector<1x68x16xf32>
    %465 = vector.shape_cast %464 : vector<1x68x16xf32> to vector<68x16xf32>
    %466 = vector.extract_strided_slice %465 {offsets = [0, 9], sizes = [68, 1], strides = [1, 1]} : vector<68x16xf32> to vector<68x1xf32>
    %467 = vector.shape_cast %466 : vector<68x1xf32> to vector<68x1xf32>
    %468 = vector.broadcast %467 : vector<68x1xf32> to vector<68x17xf32>
    %469 = vector.extract_strided_slice %463 {offsets = [0, 0], sizes = [68, 17], strides = [1, 1]} : vector<68x57xf32> to vector<68x17xf32>
    %470 = vector.extract_strided_slice %465 {offsets = [0, 0], sizes = [68, 1], strides = [1, 1]} : vector<68x16xf32> to vector<68x1xf32>
    %471 = vector.broadcast %470 : vector<68x1xf32> to vector<68x17xf32>
    %472 = arith.mulf %469, %471 : vector<68x17xf32>
    %473 = arith.addf %468, %472 : vector<68x17xf32>
    %474 = vector.extract_strided_slice %463 {offsets = [0, 1], sizes = [68, 17], strides = [1, 1]} : vector<68x57xf32> to vector<68x17xf32>
    %475 = vector.extract_strided_slice %465 {offsets = [0, 1], sizes = [68, 1], strides = [1, 1]} : vector<68x16xf32> to vector<68x1xf32>
    %476 = vector.broadcast %475 : vector<68x1xf32> to vector<68x17xf32>
    %477 = arith.mulf %474, %476 : vector<68x17xf32>
    %478 = arith.addf %473, %477 : vector<68x17xf32>
    %479 = vector.extract_strided_slice %463 {offsets = [0, 2], sizes = [68, 17], strides = [1, 1]} : vector<68x57xf32> to vector<68x17xf32>
    %480 = vector.extract_strided_slice %465 {offsets = [0, 2], sizes = [68, 1], strides = [1, 1]} : vector<68x16xf32> to vector<68x1xf32>
    %481 = vector.broadcast %480 : vector<68x1xf32> to vector<68x17xf32>
    %482 = arith.mulf %479, %481 : vector<68x17xf32>
    %483 = arith.addf %478, %482 : vector<68x17xf32>
    %484 = vector.extract_strided_slice %463 {offsets = [0, 19], sizes = [68, 17], strides = [1, 1]} : vector<68x57xf32> to vector<68x17xf32>
    %485 = vector.extract_strided_slice %465 {offsets = [0, 3], sizes = [68, 1], strides = [1, 1]} : vector<68x16xf32> to vector<68x1xf32>
    %486 = vector.broadcast %485 : vector<68x1xf32> to vector<68x17xf32>
    %487 = arith.mulf %484, %486 : vector<68x17xf32>
    %488 = arith.addf %483, %487 : vector<68x17xf32>
    %489 = vector.extract_strided_slice %463 {offsets = [0, 20], sizes = [68, 17], strides = [1, 1]} : vector<68x57xf32> to vector<68x17xf32>
    %490 = vector.extract_strided_slice %465 {offsets = [0, 4], sizes = [68, 1], strides = [1, 1]} : vector<68x16xf32> to vector<68x1xf32>
    %491 = vector.broadcast %490 : vector<68x1xf32> to vector<68x17xf32>
    %492 = arith.mulf %489, %491 : vector<68x17xf32>
    %493 = arith.addf %488, %492 : vector<68x17xf32>
    %494 = vector.extract_strided_slice %463 {offsets = [0, 21], sizes = [68, 17], strides = [1, 1]} : vector<68x57xf32> to vector<68x17xf32>
    %495 = vector.extract_strided_slice %465 {offsets = [0, 5], sizes = [68, 1], strides = [1, 1]} : vector<68x16xf32> to vector<68x1xf32>
    %496 = vector.broadcast %495 : vector<68x1xf32> to vector<68x17xf32>
    %497 = arith.mulf %494, %496 : vector<68x17xf32>
    %498 = arith.addf %493, %497 : vector<68x17xf32>
    %499 = vector.extract_strided_slice %463 {offsets = [0, 38], sizes = [68, 17], strides = [1, 1]} : vector<68x57xf32> to vector<68x17xf32>
    %500 = vector.extract_strided_slice %465 {offsets = [0, 6], sizes = [68, 1], strides = [1, 1]} : vector<68x16xf32> to vector<68x1xf32>
    %501 = vector.broadcast %500 : vector<68x1xf32> to vector<68x17xf32>
    %502 = arith.mulf %499, %501 : vector<68x17xf32>
    %503 = arith.addf %498, %502 : vector<68x17xf32>
    %504 = vector.extract_strided_slice %463 {offsets = [0, 39], sizes = [68, 17], strides = [1, 1]} : vector<68x57xf32> to vector<68x17xf32>
    %505 = vector.extract_strided_slice %465 {offsets = [0, 7], sizes = [68, 1], strides = [1, 1]} : vector<68x16xf32> to vector<68x1xf32>
    %506 = vector.broadcast %505 : vector<68x1xf32> to vector<68x17xf32>
    %507 = arith.mulf %504, %506 : vector<68x17xf32>
    %508 = arith.addf %503, %507 : vector<68x17xf32>
    %509 = vector.extract_strided_slice %463 {offsets = [0, 40], sizes = [68, 17], strides = [1, 1]} : vector<68x57xf32> to vector<68x17xf32>
    %510 = vector.extract_strided_slice %465 {offsets = [0, 8], sizes = [68, 1], strides = [1, 1]} : vector<68x16xf32> to vector<68x1xf32>
    %511 = vector.broadcast %510 : vector<68x1xf32> to vector<68x17xf32>
    %512 = arith.mulf %509, %511 : vector<68x17xf32>
    %513 = arith.addf %508, %512 : vector<68x17xf32>
    %cst_75 = arith.constant 5.000000e-01 : f32
    %514 = vector.broadcast %cst_75 : f32 to vector<68x17xf32>
    %515 = arith.mulf %513, %514 : vector<68x17xf32>
    %516 = arith.mulf %513, %513 : vector<68x17xf32>
    %517 = arith.mulf %516, %513 : vector<68x17xf32>
    %cst_76 = arith.constant 4.471500e-02 : f32
    %518 = vector.broadcast %cst_76 : f32 to vector<68x17xf32>
    %519 = arith.mulf %517, %518 : vector<68x17xf32>
    %520 = arith.addf %513, %519 : vector<68x17xf32>
    %cst_77 = arith.constant 0.797884583 : f32
    %521 = vector.broadcast %cst_77 : f32 to vector<68x17xf32>
    %522 = arith.mulf %520, %521 : vector<68x17xf32>
    %523 = math.tanh %522 : vector<68x17xf32>
    %cst_78 = arith.constant 1.000000e+00 : f32
    %524 = vector.broadcast %cst_78 : f32 to vector<68x17xf32>
    %525 = arith.addf %523, %524 : vector<68x17xf32>
    %526 = arith.mulf %515, %525 : vector<68x17xf32>
    %c0_79 = arith.constant 0 : index
    %c119 = arith.constant 119 : index
    %527 = vector.load %arg5[%c0_79, %c119] : memref<68x153xf32, #tpu.memory_space<vmem>>, vector<68x17xf32>
    tpu.vector_store %arg5[%c0_79, %c119], %526 {strides = array<i32>} : memref<68x153xf32, #tpu.memory_space<vmem>>, vector<68x17xf32>,
    %c8 = arith.constant 8 : index
    %c0_80 = arith.constant 0 : index
    %c0_81 = arith.constant 0 : index
    %528 = vector.load %arg0[%c8, %c0_80, %c0_81] : memref<9x68x57xf32, #tpu.memory_space<vmem>>, vector<1x68x57xf32>
    %529 = vector.shape_cast %528 : vector<1x68x57xf32> to vector<68x57xf32>
    %c8_82 = arith.constant 8 : index
    %c0_83 = arith.constant 0 : index
    %c0_84 = arith.constant 0 : index
    %530 = vector.load %arg1[%c8_82, %c0_83, %c0_84] : memref<9x68x16xf32, #tpu.memory_space<vmem>>, vector<1x68x16xf32>
    %531 = vector.shape_cast %530 : vector<1x68x16xf32> to vector<68x16xf32>
    %532 = vector.extract_strided_slice %531 {offsets = [0, 9], sizes = [68, 1], strides = [1, 1]} : vector<68x16xf32> to vector<68x1xf32>
    %533 = vector.shape_cast %532 : vector<68x1xf32> to vector<68x1xf32>
    %534 = vector.broadcast %533 : vector<68x1xf32> to vector<68x17xf32>
    %535 = vector.extract_strided_slice %529 {offsets = [0, 0], sizes = [68, 17], strides = [1, 1]} : vector<68x57xf32> to vector<68x17xf32>
    %536 = vector.extract_strided_slice %531 {offsets = [0, 0], sizes = [68, 1], strides = [1, 1]} : vector<68x16xf32> to vector<68x1xf32>
    %537 = vector.broadcast %536 : vector<68x1xf32> to vector<68x17xf32>
    %538 = arith.mulf %535, %537 : vector<68x17xf32>
    %539 = arith.addf %534, %538 : vector<68x17xf32>
    %540 = vector.extract_strided_slice %529 {offsets = [0, 1], sizes = [68, 17], strides = [1, 1]} : vector<68x57xf32> to vector<68x17xf32>
    %541 = vector.extract_strided_slice %531 {offsets = [0, 1], sizes = [68, 1], strides = [1, 1]} : vector<68x16xf32> to vector<68x1xf32>
    %542 = vector.broadcast %541 : vector<68x1xf32> to vector<68x17xf32>
    %543 = arith.mulf %540, %542 : vector<68x17xf32>
    %544 = arith.addf %539, %543 : vector<68x17xf32>
    %545 = vector.extract_strided_slice %529 {offsets = [0, 2], sizes = [68, 17], strides = [1, 1]} : vector<68x57xf32> to vector<68x17xf32>
    %546 = vector.extract_strided_slice %531 {offsets = [0, 2], sizes = [68, 1], strides = [1, 1]} : vector<68x16xf32> to vector<68x1xf32>
    %547 = vector.broadcast %546 : vector<68x1xf32> to vector<68x17xf32>
    %548 = arith.mulf %545, %547 : vector<68x17xf32>
    %549 = arith.addf %544, %548 : vector<68x17xf32>
    %550 = vector.extract_strided_slice %529 {offsets = [0, 19], sizes = [68, 17], strides = [1, 1]} : vector<68x57xf32> to vector<68x17xf32>
    %551 = vector.extract_strided_slice %531 {offsets = [0, 3], sizes = [68, 1], strides = [1, 1]} : vector<68x16xf32> to vector<68x1xf32>
    %552 = vector.broadcast %551 : vector<68x1xf32> to vector<68x17xf32>
    %553 = arith.mulf %550, %552 : vector<68x17xf32>
    %554 = arith.addf %549, %553 : vector<68x17xf32>
    %555 = vector.extract_strided_slice %529 {offsets = [0, 20], sizes = [68, 17], strides = [1, 1]} : vector<68x57xf32> to vector<68x17xf32>
    %556 = vector.extract_strided_slice %531 {offsets = [0, 4], sizes = [68, 1], strides = [1, 1]} : vector<68x16xf32> to vector<68x1xf32>
    %557 = vector.broadcast %556 : vector<68x1xf32> to vector<68x17xf32>
    %558 = arith.mulf %555, %557 : vector<68x17xf32>
    %559 = arith.addf %554, %558 : vector<68x17xf32>
    %560 = vector.extract_strided_slice %529 {offsets = [0, 21], sizes = [68, 17], strides = [1, 1]} : vector<68x57xf32> to vector<68x17xf32>
    %561 = vector.extract_strided_slice %531 {offsets = [0, 5], sizes = [68, 1], strides = [1, 1]} : vector<68x16xf32> to vector<68x1xf32>
    %562 = vector.broadcast %561 : vector<68x1xf32> to vector<68x17xf32>
    %563 = arith.mulf %560, %562 : vector<68x17xf32>
    %564 = arith.addf %559, %563 : vector<68x17xf32>
    %565 = vector.extract_strided_slice %529 {offsets = [0, 38], sizes = [68, 17], strides = [1, 1]} : vector<68x57xf32> to vector<68x17xf32>
    %566 = vector.extract_strided_slice %531 {offsets = [0, 6], sizes = [68, 1], strides = [1, 1]} : vector<68x16xf32> to vector<68x1xf32>
    %567 = vector.broadcast %566 : vector<68x1xf32> to vector<68x17xf32>
    %568 = arith.mulf %565, %567 : vector<68x17xf32>
    %569 = arith.addf %564, %568 : vector<68x17xf32>
    %570 = vector.extract_strided_slice %529 {offsets = [0, 39], sizes = [68, 17], strides = [1, 1]} : vector<68x57xf32> to vector<68x17xf32>
    %571 = vector.extract_strided_slice %531 {offsets = [0, 7], sizes = [68, 1], strides = [1, 1]} : vector<68x16xf32> to vector<68x1xf32>
    %572 = vector.broadcast %571 : vector<68x1xf32> to vector<68x17xf32>
    %573 = arith.mulf %570, %572 : vector<68x17xf32>
    %574 = arith.addf %569, %573 : vector<68x17xf32>
    %575 = vector.extract_strided_slice %529 {offsets = [0, 40], sizes = [68, 17], strides = [1, 1]} : vector<68x57xf32> to vector<68x17xf32>
    %576 = vector.extract_strided_slice %531 {offsets = [0, 8], sizes = [68, 1], strides = [1, 1]} : vector<68x16xf32> to vector<68x1xf32>
    %577 = vector.broadcast %576 : vector<68x1xf32> to vector<68x17xf32>
    %578 = arith.mulf %575, %577 : vector<68x17xf32>
    %579 = arith.addf %574, %578 : vector<68x17xf32>
    %cst_85 = arith.constant 5.000000e-01 : f32
    %580 = vector.broadcast %cst_85 : f32 to vector<68x17xf32>
    %581 = arith.mulf %579, %580 : vector<68x17xf32>
    %582 = arith.mulf %579, %579 : vector<68x17xf32>
    %583 = arith.mulf %582, %579 : vector<68x17xf32>
    %cst_86 = arith.constant 4.471500e-02 : f32
    %584 = vector.broadcast %cst_86 : f32 to vector<68x17xf32>
    %585 = arith.mulf %583, %584 : vector<68x17xf32>
    %586 = arith.addf %579, %585 : vector<68x17xf32>
    %cst_87 = arith.constant 0.797884583 : f32
    %587 = vector.broadcast %cst_87 : f32 to vector<68x17xf32>
    %588 = arith.mulf %586, %587 : vector<68x17xf32>
    %589 = math.tanh %588 : vector<68x17xf32>
    %cst_88 = arith.constant 1.000000e+00 : f32
    %590 = vector.broadcast %cst_88 : f32 to vector<68x17xf32>
    %591 = arith.addf %589, %590 : vector<68x17xf32>
    %592 = arith.mulf %581, %591 : vector<68x17xf32>
    %c0_89 = arith.constant 0 : index
    %c136 = arith.constant 136 : index
    %593 = vector.load %arg5[%c0_89, %c136] : memref<68x153xf32, #tpu.memory_space<vmem>>, vector<68x17xf32>
    tpu.vector_store %arg5[%c0_89, %c136], %592 {strides = array<i32>} : memref<68x153xf32, #tpu.memory_space<vmem>>, vector<68x17xf32>,
    %c0_90 = arith.constant 0 : index
    %c0_91 = arith.constant 0 : index
    %594 = vector.load %arg5[%c0_90, %c0_91] : memref<68x153xf32, #tpu.memory_space<vmem>>, vector<68x153xf32>
    %c0_92 = arith.constant 0 : index
    %c0_93 = arith.constant 0 : index
    %c0_94 = arith.constant 0 : index
    %c0_95 = arith.constant 0 : index
    %595 = vector.load %arg2[%c0_92, %c0_93, %c0_94, %c0_95] : memref<2x2x31x68xf32, #tpu.memory_space<vmem>>, vector<1x1x31x68xf32>
    %596 = vector.shape_cast %595 : vector<1x1x31x68xf32> to vector<31x68xf32>
    %cst_96 = arith.constant dense<0.000000e+00> : vector<31x153xf32>
    %597 = tpu.matmul %596, %594, %cst_96 {dimension_numbers = #tpu.dot_dimension_numbers<[1], [0], [0], [1], [0, 0, 1, 1], [], []>} : vector<31x68xf32>, vector<68x153xf32>, vector<31x153xf32> -> vector<31x153xf32>
    %c0_97 = arith.constant 0 : index
    %c1_98 = arith.constant 1 : index
    %c0_99 = arith.constant 0 : index
    %c0_100 = arith.constant 0 : index
    %598 = vector.load %arg2[%c0_97, %c1_98, %c0_99, %c0_100] : memref<2x2x31x68xf32, #tpu.memory_space<vmem>>, vector<1x1x31x68xf32>
    %599 = vector.shape_cast %598 : vector<1x1x31x68xf32> to vector<31x68xf32>
    %cst_101 = arith.constant dense<0.000000e+00> : vector<31x153xf32>
    %600 = tpu.matmul %599, %594, %cst_101 {dimension_numbers = #tpu.dot_dimension_numbers<[1], [0], [0], [1], [0, 0, 1, 1], [], []>} : vector<31x68xf32>, vector<68x153xf32>, vector<31x153xf32> -> vector<31x153xf32>
    %c1_102 = arith.constant 1 : index
    %c0_103 = arith.constant 0 : index
    %c0_104 = arith.constant 0 : index
    %c0_105 = arith.constant 0 : index
    %601 = vector.load %arg2[%c1_102, %c0_103, %c0_104, %c0_105] : memref<2x2x31x68xf32, #tpu.memory_space<vmem>>, vector<1x1x31x68xf32>
    %602 = vector.shape_cast %601 : vector<1x1x31x68xf32> to vector<31x68xf32>
    %cst_106 = arith.constant dense<0.000000e+00> : vector<31x153xf32>
    %603 = tpu.matmul %602, %594, %cst_106 {dimension_numbers = #tpu.dot_dimension_numbers<[1], [0], [0], [1], [0, 0, 1, 1], [], []>} : vector<31x68xf32>, vector<68x153xf32>, vector<31x153xf32> -> vector<31x153xf32>
    %c1_107 = arith.constant 1 : index
    %c1_108 = arith.constant 1 : index
    %c0_109 = arith.constant 0 : index
    %c0_110 = arith.constant 0 : index
    %604 = vector.load %arg2[%c1_107, %c1_108, %c0_109, %c0_110] : memref<2x2x31x68xf32, #tpu.memory_space<vmem>>, vector<1x1x31x68xf32>
    %605 = vector.shape_cast %604 : vector<1x1x31x68xf32> to vector<31x68xf32>
    %cst_111 = arith.constant dense<0.000000e+00> : vector<31x153xf32>
    %606 = tpu.matmul %605, %594, %cst_111 {dimension_numbers = #tpu.dot_dimension_numbers<[1], [0], [0], [1], [0, 0, 1, 1], [], []>} : vector<31x68xf32>, vector<68x153xf32>, vector<31x153xf32> -> vector<31x153xf32>
    %c0_112 = arith.constant 0 : index
    %c0_113 = arith.constant 0 : index
    %607 = vector.load %arg3[%c0_112, %c0_113] : memref<31x1xf32, #tpu.memory_space<vmem>>, vector<31x1xf32>
    %608 = vector.shape_cast %607 : vector<31x1xf32> to vector<31x1xf32>
    %609 = vector.broadcast %608 : vector<31x1xf32> to vector<31x162xf32>
    %c0_114 = arith.constant 0 : index
    %c0_115 = arith.constant 0 : index
    %c0_116 = arith.constant 0 : index
    %610 = vector.load %arg4[%c0_114, %c0_115, %c0_116] : memref<2x31x162xf32, #tpu.memory_space<vmem>>, vector<1x31x162xf32>
    %611 = vector.shape_cast %610 : vector<1x31x162xf32> to vector<31x162xf32>
    %612 = vector.shape_cast %609 : vector<31x162xf32> to vector<1x31x162xf32>
    tpu.vector_store %arg4[%c0_114, %c0_115, %c0_116], %612 {strides = array<i32>} : memref<2x31x162xf32, #tpu.memory_space<vmem>>, vector<1x31x162xf32>,
    %c1_117 = arith.constant 1 : index
    %c0_118 = arith.constant 0 : index
    %c0_119 = arith.constant 0 : index
    %613 = vector.load %arg4[%c1_117, %c0_118, %c0_119] : memref<2x31x162xf32, #tpu.memory_space<vmem>>, vector<1x31x162xf32>
    %614 = vector.shape_cast %613 : vector<1x31x162xf32> to vector<31x162xf32>
    %615 = vector.shape_cast %609 : vector<31x162xf32> to vector<1x31x162xf32>
    tpu.vector_store %arg4[%c1_117, %c0_118, %c0_119], %615 {strides = array<i32>} : memref<2x31x162xf32, #tpu.memory_space<vmem>>, vector<1x31x162xf32>,
    %c0_120 = arith.constant 0 : index
    %c0_121 = arith.constant 0 : index
    %c0_122 = arith.constant 0 : index
    %616 = vector.load %arg4[%c0_120, %c0_121, %c0_122] : memref<2x31x162xf32, #tpu.memory_space<vmem>>, vector<1x31x153xf32>
    %617 = vector.shape_cast %616 : vector<1x31x153xf32> to vector<31x153xf32>
    %618 = arith.addf %617, %597 : vector<31x153xf32>
    %c0_123 = arith.constant 0 : index
    %c0_124 = arith.constant 0 : index
    %c0_125 = arith.constant 0 : index
    %619 = vector.load %arg4[%c0_123, %c0_124, %c0_125] : memref<2x31x162xf32, #tpu.memory_space<vmem>>, vector<1x31x153xf32>
    %620 = vector.shape_cast %619 : vector<1x31x153xf32> to vector<31x153xf32>
    %621 = vector.shape_cast %618 : vector<31x153xf32> to vector<1x31x153xf32>
    tpu.vector_store %arg4[%c0_123, %c0_124, %c0_125], %621 {strides = array<i32>} : memref<2x31x162xf32, #tpu.memory_space<vmem>>, vector<1x31x153xf32>,
    %c0_126 = arith.constant 0 : index
    %c0_127 = arith.constant 0 : index
    %c9 = arith.constant 9 : index
    %622 = vector.load %arg4[%c0_126, %c0_127, %c9] : memref<2x31x162xf32, #tpu.memory_space<vmem>>, vector<1x31x153xf32>
    %623 = vector.shape_cast %622 : vector<1x31x153xf32> to vector<31x153xf32>
    %624 = arith.addf %623, %603 : vector<31x153xf32>
    %c0_128 = arith.constant 0 : index
    %c0_129 = arith.constant 0 : index
    %c9_130 = arith.constant 9 : index
    %625 = vector.load %arg4[%c0_128, %c0_129, %c9_130] : memref<2x31x162xf32, #tpu.memory_space<vmem>>, vector<1x31x153xf32>
    %626 = vector.shape_cast %625 : vector<1x31x153xf32> to vector<31x153xf32>
    %627 = vector.shape_cast %624 : vector<31x153xf32> to vector<1x31x153xf32>
    tpu.vector_store %arg4[%c0_128, %c0_129, %c9_130], %627 {strides = array<i32>} : memref<2x31x162xf32, #tpu.memory_space<vmem>>, vector<1x31x153xf32>,
    %c1_131 = arith.constant 1 : index
    %c0_132 = arith.constant 0 : index
    %c0_133 = arith.constant 0 : index
    %628 = vector.load %arg4[%c1_131, %c0_132, %c0_133] : memref<2x31x162xf32, #tpu.memory_space<vmem>>, vector<1x31x153xf32>
    %629 = vector.shape_cast %628 : vector<1x31x153xf32> to vector<31x153xf32>
    %630 = arith.addf %629, %600 : vector<31x153xf32>
    %c1_134 = arith.constant 1 : index
    %c0_135 = arith.constant 0 : index
    %c0_136 = arith.constant 0 : index
    %631 = vector.load %arg4[%c1_134, %c0_135, %c0_136] : memref<2x31x162xf32, #tpu.memory_space<vmem>>, vector<1x31x153xf32>
    %632 = vector.shape_cast %631 : vector<1x31x153xf32> to vector<31x153xf32>
    %633 = vector.shape_cast %630 : vector<31x153xf32> to vector<1x31x153xf32>
    tpu.vector_store %arg4[%c1_134, %c0_135, %c0_136], %633 {strides = array<i32>} : memref<2x31x162xf32, #tpu.memory_space<vmem>>, vector<1x31x153xf32>,
    %c1_137 = arith.constant 1 : index
    %c0_138 = arith.constant 0 : index
    %c9_139 = arith.constant 9 : index
    %634 = vector.load %arg4[%c1_137, %c0_138, %c9_139] : memref<2x31x162xf32, #tpu.memory_space<vmem>>, vector<1x31x153xf32>
    %635 = vector.shape_cast %634 : vector<1x31x153xf32> to vector<31x153xf32>
    %636 = arith.addf %635, %606 : vector<31x153xf32>
    %c1_140 = arith.constant 1 : index
    %c0_141 = arith.constant 0 : index
    %c9_142 = arith.constant 9 : index
    %637 = vector.load %arg4[%c1_140, %c0_141, %c9_142] : memref<2x31x162xf32, #tpu.memory_space<vmem>>, vector<1x31x153xf32>
    %638 = vector.shape_cast %637 : vector<1x31x153xf32> to vector<31x153xf32>
    %639 = vector.shape_cast %636 : vector<31x153xf32> to vector<1x31x153xf32>
    tpu.vector_store %arg4[%c1_140, %c0_141, %c9_142], %639 {strides = array<i32>} : memref<2x31x162xf32, #tpu.memory_space<vmem>>, vector<1x31x153xf32>,
    return
  }
}

</mosaic_0001>

<llo_original>
// kernel: model_forward.1
$region0: #{model_forward.1}
  #allocation0 [shape = 'u32[]', space=smem, size = 0x4, offset = 0x4, fixed_abs, tag = 'smem constant byte address 0x4 - core index']
  #allocation1 [shape = 'u32[144,128]{1,0:T(1,128)}', space=vmem, size = 0x12000, scoped, tag = 'internal scratch']
  #allocation2 [shape = 'f32[68,153]{1,0:T(8,128)}', space=vmem, size = 0x12000, scoped, tag = 'scratch operand']
  %s0 = inlined_call_operand.vmem [shape: f32[9,68,57], index: 0, kind: input, shape index: {}]
  %s1 = inlined_call_operand.vmem [shape: f32[9,68,16], index: 1, kind: input, shape index: {}]
  %s2 = inlined_call_operand.vmem [shape: f32[2,2,31,68], index: 2, kind: input, shape index: {}]
  %s3 = inlined_call_operand.vmem [shape: f32[31,1], index: 3, kind: input, shape index: {}]
  %s4 = inlined_call_operand.vmem [shape: f32[2,31,162], index: 4, kind: output, shape index: {}]
  %s5 = sld [smem:[#allocation0]]
  $region26: #{model_forward.1} parent=0
    _
  %s7 = ssub.s32 1, %s5
  %s8 = scalar_select 0, %s7, %s5
  // Predicated region
  $region2: #{model_forward.1} parent=0 // pred_check
    _
  $region3: #{model_forward.1} parent=0 // pred_check_branch
    %10 = sbr.rel (0) target = $region5
  $region4: #{model_forward.1} parent=0 // pred_region
    _
  $region5: #{model_forward.1} parent=0 // pred_fallthru
    _
  // Predicated region
  $region6: #{model_forward.1} parent=0 // pred_check
    _
  $region7: #{model_forward.1} parent=0 // pred_check_branch
    %12 = sbr.rel (0) target = $region9
  $region8: #{model_forward.1} parent=0 // pred_region
    _
  $region9: #{model_forward.1} parent=0 // pred_fallthru
    _
  // Predicated region
  $region10: #{model_forward.1} parent=0 // pred_check
    _
  $region11: #{model_forward.1} parent=0 // pred_check_branch
    %14 = sbr.rel (0) target = $region13
  $region12: #{model_forward.1} parent=0 // pred_region
    _
  $region13: #{model_forward.1} parent=0 // pred_fallthru
    _
  // Predicated region
  $region14: #{model_forward.1} parent=0 // pred_check
    _
  $region15: #{model_forward.1} parent=0 // pred_check_branch
    %16 = sbr.rel (0) target = $region17
  $region16: #{model_forward.1} parent=0 // pred_region
    _
  $region17: #{model_forward.1} parent=0 // pred_fallthru
    _
  %v17 = vld [vmem:[%s0] sm:$0xff]
  %v18 = vld [vmem:[%s0 + $0x8] sm:$0xff]
  %v19 = vld [vmem:[%s0 + $0x10] sm:$0xff]
  %v20 = vld [vmem:[%s0 + $0x18] sm:$0xff]
  %v21 = vld [vmem:[%s0 + $0x20] sm:$0xff]
  %v22 = vld [vmem:[%s0 + $0x28] sm:$0xff]
  %v23 = vld [vmem:[%s0 + $0x30] sm:$0xff]
  %v24 = vld [vmem:[%s0 + $0x38] sm:$0xff]
  %v25 = vld [vmem:[%s0 + $0x40] sm:$0xf]
  %v26 = vld [vmem:[%s1] sm:$0xff]
  %v27 = vld [vmem:[%s1 + $0x8] sm:$0xff]
  %v28 = vld [vmem:[%s1 + $0x10] sm:$0xff]
  %v29 = vld [vmem:[%s1 + $0x18] sm:$0xff]
  %v30 = vld [vmem:[%s1 + $0x20] sm:$0xff]
  %v31 = vld [vmem:[%s1 + $0x28] sm:$0xff]
  %v32 = vld [vmem:[%s1 + $0x30] sm:$0xff]
  %v33 = vld [vmem:[%s1 + $0x38] sm:$0xff]
  %v34 = vld [vmem:[%s1 + $0x40] sm:$0xf]
  %36 = vset.pattern.permute.xlu0 9
  %37 = vperm.xlu0 %36, %v26
  %v38 = vpop.permute.xlu0 %37
  %41 = vset.pattern.permute.xlu0 9
  %42 = vperm.xlu0 %41, %v27
  %v43 = vpop.permute.xlu0 %42
  %46 = vset.pattern.permute.xlu0 9
  %47 = vperm.xlu0 %46, %v28
  %v48 = vpop.permute.xlu0 %47
  %51 = vset.pattern.permute.xlu0 9
  %52 = vperm.xlu0 %51, %v29
  %v53 = vpop.permute.xlu0 %52
  %56 = vset.pattern.permute.xlu0 9
  %57 = vperm.xlu0 %56, %v30
  %v58 = vpop.permute.xlu0 %57
  %61 = vset.pattern.permute.xlu0 9
  %62 = vperm.xlu0 %61, %v31
  %v63 = vpop.permute.xlu0 %62
  %66 = vset.pattern.permute.xlu0 9
  %67 = vperm.xlu0 %66, %v32
  %v68 = vpop.permute.xlu0 %67
  %71 = vset.pattern.permute.xlu0 9
  %72 = vperm.xlu0 %71, %v33
  %v73 = vpop.permute.xlu0 %72
  %76 = vset.pattern.permute.xlu0 9
  %77 = vperm.xlu0 %76, %v34
  %v78 = vpop.permute.xlu0 %77
  %80 = vset.pattern.permute.xlu0 0
  %81 = vperm.xlu0 %80, %v26
  %v82 = vpop.permute.xlu0 %81
  %84 = vset.pattern.permute.xlu0 0
  %85 = vperm.xlu0 %84, %v27
  %v86 = vpop.permute.xlu0 %85
  %88 = vset.pattern.permute.xlu0 0
  %89 = vperm.xlu0 %88, %v28
  %v90 = vpop.permute.xlu0 %89
  %92 = vset.pattern.permute.xlu0 0
  %93 = vperm.xlu0 %92, %v29
  %v94 = vpop.permute.xlu0 %93
  %96 = vset.pattern.permute.xlu0 0
  %97 = vperm.xlu0 %96, %v30
  %v98 = vpop.permute.xlu0 %97
  %100 = vset.pattern.permute.xlu0 0
  %101 = vperm.xlu0 %100, %v31
  %v102 = vpop.permute.xlu0 %101
  %104 = vset.pattern.permute.xlu0 0
  %105 = vperm.xlu0 %104, %v32
  %v106 = vpop.permute.xlu0 %105
  %108 = vset.pattern.permute.xlu0 0
  %109 = vperm.xlu0 %108, %v33
  %v110 = vpop.permute.xlu0 %109
  %112 = vset.pattern.permute.xlu0 0
  %113 = vperm.xlu0 %112, %v34
  %v114 = vpop.permute.xlu0 %113
  %v116 = vmul.f32 %v17, %v82
  %v117 = vmul.f32 %v18, %v86
  %v118 = vmul.f32 %v19, %v90
  %v119 = vmul.f32 %v20, %v94
  %v120 = vmul.f32 %v21, %v98
  %v121 = vmul.f32 %v22, %v102
  %v122 = vmul.f32 %v23, %v106
  %v123 = vmul.f32 %v24, %v110
  %v124 = vmul.f32 %v25, %v114
  %v125 = vadd.f32 %v38, %v116
  %v126 = vadd.f32 %v43, %v117
  %v127 = vadd.f32 %v48, %v118
  %v128 = vadd.f32 %v53, %v119
  %v129 = vadd.f32 %v58, %v120
  %v130 = vadd.f32 %v63, %v121
  %v131 = vadd.f32 %v68, %v122
  %v132 = vadd.f32 %v73, %v123
  %v133 = vadd.f32 %v78, %v124
  %134 = vset.pattern.permute.xlu0 1
  %135 = vperm.xlu0 %134, %v26
  %v136 = vpop.permute.xlu0 %135
  %138 = vset.pattern.permute.xlu0 1
  %139 = vperm.xlu0 %138, %v27
  %v140 = vpop.permute.xlu0 %139
  %142 = vset.pattern.permute.xlu0 1
  %143 = vperm.xlu0 %142, %v28
  %v144 = vpop.permute.xlu0 %143
  %146 = vset.pattern.permute.xlu0 1
  %147 = vperm.xlu0 %146, %v29
  %v148 = vpop.permute.xlu0 %147
  %150 = vset.pattern.permute.xlu0 1
  %151 = vperm.xlu0 %150, %v30
  %v152 = vpop.permute.xlu0 %151
  %154 = vset.pattern.permute.xlu0 1
  %155 = vperm.xlu0 %154, %v31
  %v156 = vpop.permute.xlu0 %155
  %158 = vset.pattern.permute.xlu0 1
  %159 = vperm.xlu0 %158, %v32
  %v160 = vpop.permute.xlu0 %159
  %162 = vset.pattern.permute.xlu0 1
  %163 = vperm.xlu0 %162, %v33
  %v164 = vpop.permute.xlu0 %163
  %166 = vset.pattern.permute.xlu0 1
  %167 = vperm.xlu0 %166, %v34
  %v168 = vpop.permute.xlu0 %167
  %v170 = vmul.f32 %v17, %v136
  %v171 = vmul.f32 %v18, %v140
  %v172 = vmul.f32 %v19, %v144
  %v173 = vmul.f32 %v20, %v148
  %v174 = vmul.f32 %v21, %v152
  %v175 = vmul.f32 %v22, %v156
  %v176 = vmul.f32 %v23, %v160
  %v177 = vmul.f32 %v24, %v164
  %v178 = vmul.f32 %v25, %v168
  %188 = vrot.lane.b32.xlu0 %v170, 127
  %v189 = vpop.permute.xlu0 %188
  %190 = vrot.lane.b32.xlu0 %v171, 127
  %v191 = vpop.permute.xlu0 %190
  %192 = vrot.lane.b32.xlu0 %v172, 127
  %v193 = vpop.permute.xlu0 %192
  %194 = vrot.lane.b32.xlu0 %v173, 127
  %v195 = vpop.permute.xlu0 %194
  %196 = vrot.lane.b32.xlu0 %v174, 127
  %v197 = vpop.permute.xlu0 %196
  %198 = vrot.lane.b32.xlu0 %v175, 127
  %v199 = vpop.permute.xlu0 %198
  %200 = vrot.lane.b32.xlu0 %v176, 127
  %v201 = vpop.permute.xlu0 %200
  %202 = vrot.lane.b32.xlu0 %v177, 127
  %v203 = vpop.permute.xlu0 %202
  %204 = vrot.lane.b32.xlu0 %v178, 127
  %v205 = vpop.permute.xlu0 %204
  %v215 = vadd.f32 %v125, %v189
  %v216 = vadd.f32 %v126, %v191
  %v217 = vadd.f32 %v127, %v193
  %v218 = vadd.f32 %v128, %v195
  %v219 = vadd.f32 %v129, %v197
  %v220 = vadd.f32 %v130, %v199
  %v221 = vadd.f32 %v131, %v201
  %v222 = vadd.f32 %v132, %v203
  %v223 = vadd.f32 %v133, %v205
  %224 = vset.pattern.permute.xlu0 2
  %225 = vperm.xlu0 %224, %v26
  %v226 = vpop.permute.xlu0 %225
  %228 = vset.pattern.permute.xlu0 2
  %229 = vperm.xlu0 %228, %v27
  %v230 = vpop.permute.xlu0 %229
  %232 = vset.pattern.permute.xlu0 2
  %233 = vperm.xlu0 %232, %v28
  %v234 = vpop.permute.xlu0 %233
  %236 = vset.pattern.permute.xlu0 2
  %237 = vperm.xlu0 %236, %v29
  %v238 = vpop.permute.xlu0 %237
  %240 = vset.pattern.permute.xlu0 2
  %241 = vperm.xlu0 %240, %v30
  %v242 = vpop.permute.xlu0 %241
  %244 = vset.pattern.permute.xlu0 2
  %245 = vperm.xlu0 %244, %v31
  %v246 = vpop.permute.xlu0 %245
  %248 = vset.pattern.permute.xlu0 2
  %249 = vperm.xlu0 %248, %v32
  %v250 = vpop.permute.xlu0 %249
  %252 = vset.pattern.permute.xlu0 2
  %253 = vperm.xlu0 %252, %v33
  %v254 = vpop.permute.xlu0 %253
  %256 = vset.pattern.permute.xlu0 2
  %257 = vperm.xlu0 %256, %v34
  %v258 = vpop.permute.xlu0 %257
  %v260 = vmul.f32 %v17, %v226
  %v261 = vmul.f32 %v18, %v230
  %v262 = vmul.f32 %v19, %v234
  %v263 = vmul.f32 %v20, %v238
  %v264 = vmul.f32 %v21, %v242
  %v265 = vmul.f32 %v22, %v246
  %v266 = vmul.f32 %v23, %v250
  %v267 = vmul.f32 %v24, %v254
  %v268 = vmul.f32 %v25, %v258
  %278 = vrot.lane.b32.xlu0 %v260, 126
  %v279 = vpop.permute.xlu0 %278
  %280 = vrot.lane.b32.xlu0 %v261, 126
  %v281 = vpop.permute.xlu0 %280
  %282 = vrot.lane.b32.xlu0 %v262, 126
  %v283 = vpop.permute.xlu0 %282
  %284 = vrot.lane.b32.xlu0 %v263, 126
  %v285 = vpop.permute.xlu0 %284
  %286 = vrot.lane.b32.xlu0 %v264, 126
  %v287 = vpop.permute.xlu0 %286
  %288 = vrot.lane.b32.xlu0 %v265, 126
  %v289 = vpop.permute.xlu0 %288
  %290 = vrot.lane.b32.xlu0 %v266, 126
  %v291 = vpop.permute.xlu0 %290
  %292 = vrot.lane.b32.xlu0 %v267, 126
  %v293 = vpop.permute.xlu0 %292
  %294 = vrot.lane.b32.xlu0 %v268, 126
  %v295 = vpop.permute.xlu0 %294
  %v305 = vadd.f32 %v215, %v279
  %v306 = vadd.f32 %v216, %v281
  %v307 = vadd.f32 %v217, %v283
  %v308 = vadd.f32 %v218, %v285
  %v309 = vadd.f32 %v219, %v287
  %v310 = vadd.f32 %v220, %v289
  %v311 = vadd.f32 %v221, %v291
  %v312 = vadd.f32 %v222, %v293
  %v313 = vadd.f32 %v223, %v295
  %314 = vset.pattern.permute.xlu0 3
  %315 = vperm.xlu0 %314, %v26
  %v316 = vpop.permute.xlu0 %315
  %318 = vset.pattern.permute.xlu0 3
  %319 = vperm.xlu0 %318, %v27
  %v320 = vpop.permute.xlu0 %319
  %322 = vset.pattern.permute.xlu0 3
  %323 = vperm.xlu0 %322, %v28
  %v324 = vpop.permute.xlu0 %323
  %326 = vset.pattern.permute.xlu0 3
  %327 = vperm.xlu0 %326, %v29
  %v328 = vpop.permute.xlu0 %327
  %330 = vset.pattern.permute.xlu0 3
  %331 = vperm.xlu0 %330, %v30
  %v332 = vpop.permute.xlu0 %331
  %334 = vset.pattern.permute.xlu0 3
  %335 = vperm.xlu0 %334, %v31
  %v336 = vpop.permute.xlu0 %335
  %338 = vset.pattern.permute.xlu0 3
  %339 = vperm.xlu0 %338, %v32
  %v340 = vpop.permute.xlu0 %339
  %342 = vset.pattern.permute.xlu0 3
  %343 = vperm.xlu0 %342, %v33
  %v344 = vpop.permute.xlu0 %343
  %346 = vset.pattern.permute.xlu0 3
  %347 = vperm.xlu0 %346, %v34
  %v348 = vpop.permute.xlu0 %347
  %v350 = vmul.f32 %v17, %v316
  %v351 = vmul.f32 %v18, %v320
  %v352 = vmul.f32 %v19, %v324
  %v353 = vmul.f32 %v20, %v328
  %v354 = vmul.f32 %v21, %v332
  %v355 = vmul.f32 %v22, %v336
  %v356 = vmul.f32 %v23, %v340
  %v357 = vmul.f32 %v24, %v344
  %v358 = vmul.f32 %v25, %v348
  %368 = vrot.lane.b32.xlu0 %v350, 109
  %v369 = vpop.permute.xlu0 %368
  %370 = vrot.lane.b32.xlu0 %v351, 109
  %v371 = vpop.permute.xlu0 %370
  %372 = vrot.lane.b32.xlu0 %v352, 109
  %v373 = vpop.permute.xlu0 %372
  %374 = vrot.lane.b32.xlu0 %v353, 109
  %v375 = vpop.permute.xlu0 %374
  %376 = vrot.lane.b32.xlu0 %v354, 109
  %v377 = vpop.permute.xlu0 %376
  %378 = vrot.lane.b32.xlu0 %v355, 109
  %v379 = vpop.permute.xlu0 %378
  %380 = vrot.lane.b32.xlu0 %v356, 109
  %v381 = vpop.permute.xlu0 %380
  %382 = vrot.lane.b32.xlu0 %v357, 109
  %v383 = vpop.permute.xlu0 %382
  %384 = vrot.lane.b32.xlu0 %v358, 109
  %v385 = vpop.permute.xlu0 %384
  %v395 = vadd.f32 %v305, %v369
  %v396 = vadd.f32 %v306, %v371
  %v397 = vadd.f32 %v307, %v373
  %v398 = vadd.f32 %v308, %v375
  %v399 = vadd.f32 %v309, %v377
  %v400 = vadd.f32 %v310, %v379
  %v401 = vadd.f32 %v311, %v381
  %v402 = vadd.f32 %v312, %v383
  %v403 = vadd.f32 %v313, %v385
  %404 = vset.pattern.permute.xlu0 4
  %405 = vperm.xlu0 %404, %v26
  %v406 = vpop.permute.xlu0 %405
  %408 = vset.pattern.permute.xlu0 4
  %409 = vperm.xlu0 %408, %v27
  %v410 = vpop.permute.xlu0 %409
  %412 = vset.pattern.permute.xlu0 4
  %413 = vperm.xlu0 %412, %v28
  %v414 = vpop.permute.xlu0 %413
  %416 = vset.pattern.permute.xlu0 4
  %417 = vperm.xlu0 %416, %v29
  %v418 = vpop.permute.xlu0 %417
  %420 = vset.pattern.permute.xlu0 4
  %421 = vperm.xlu0 %420, %v30
  %v422 = vpop.permute.xlu0 %421
  %424 = vset.pattern.permute.xlu0 4
  %425 = vperm.xlu0 %424, %v31
  %v426 = vpop.permute.xlu0 %425
  %428 = vset.pattern.permute.xlu0 4
  %429 = vperm.xlu0 %428, %v32
  %v430 = vpop.permute.xlu0 %429
  %432 = vset.pattern.permute.xlu0 4
  %433 = vperm.xlu0 %432, %v33
  %v434 = vpop.permute.xlu0 %433
  %436 = vset.pattern.permute.xlu0 4
  %437 = vperm.xlu0 %436, %v34
  %v438 = vpop.permute.xlu0 %437
  %v440 = vmul.f32 %v17, %v406
  %v441 = vmul.f32 %v18, %v410
  %v442 = vmul.f32 %v19, %v414
  %v443 = vmul.f32 %v20, %v418
  %v444 = vmul.f32 %v21, %v422
  %v445 = vmul.f32 %v22, %v426
  %v446 = vmul.f32 %v23, %v430
  %v447 = vmul.f32 %v24, %v434
  %v448 = vmul.f32 %v25, %v438
  %458 = vrot.lane.b32.xlu0 %v440, 108
  %v459 = vpop.permute.xlu0 %458
  %460 = vrot.lane.b32.xlu0 %v441, 108
  %v461 = vpop.permute.xlu0 %460
  %462 = vrot.lane.b32.xlu0 %v442, 108
  %v463 = vpop.permute.xlu0 %462
  %464 = vrot.lane.b32.xlu0 %v443, 108
  %v465 = vpop.permute.xlu0 %464
  %466 = vrot.lane.b32.xlu0 %v444, 108
  %v467 = vpop.permute.xlu0 %466
  %468 = vrot.lane.b32.xlu0 %v445, 108
  %v469 = vpop.permute.xlu0 %468
  %470 = vrot.lane.b32.xlu0 %v446, 108
  %v471 = vpop.permute.xlu0 %470
  %472 = vrot.lane.b32.xlu0 %v447, 108
  %v473 = vpop.permute.xlu0 %472
  %474 = vrot.lane.b32.xlu0 %v448, 108
  %v475 = vpop.permute.xlu0 %474
  %v485 = vadd.f32 %v395, %v459
  %v486 = vadd.f32 %v396, %v461
  %v487 = vadd.f32 %v397, %v463
  %v488 = vadd.f32 %v398, %v465
  %v489 = vadd.f32 %v399, %v467
  %v490 = vadd.f32 %v400, %v469
  %v491 = vadd.f32 %v401, %v471
  %v492 = vadd.f32 %v402, %v473
  %v493 = vadd.f32 %v403, %v475
  %494 = vset.pattern.permute.xlu0 5
  %495 = vperm.xlu0 %494, %v26
  %v496 = vpop.permute.xlu0 %495
  %498 = vset.pattern.permute.xlu0 5
  %499 = vperm.xlu0 %498, %v27
  %v500 = vpop.permute.xlu0 %499
  %502 = vset.pattern.permute.xlu0 5
  %503 = vperm.xlu0 %502, %v28
  %v504 = vpop.permute.xlu0 %503
  %506 = vset.pattern.permute.xlu0 5
  %507 = vperm.xlu0 %506, %v29
  %v508 = vpop.permute.xlu0 %507
  %510 = vset.pattern.permute.xlu0 5
  %511 = vperm.xlu0 %510, %v30
  %v512 = vpop.permute.xlu0 %511
  %514 = vset.pattern.permute.xlu0 5
  %515 = vperm.xlu0 %514, %v31
  %v516 = vpop.permute.xlu0 %515
  %518 = vset.pattern.permute.xlu0 5
  %519 = vperm.xlu0 %518, %v32
  %v520 = vpop.permute.xlu0 %519
  %522 = vset.pattern.permute.xlu0 5
  %523 = vperm.xlu0 %522, %v33
  %v524 = vpop.permute.xlu0 %523
  %526 = vset.pattern.permute.xlu0 5
  %527 = vperm.xlu0 %526, %v34
  %v528 = vpop.permute.xlu0 %527
  %v530 = vmul.f32 %v17, %v496
  %v531 = vmul.f32 %v18, %v500
  %v532 = vmul.f32 %v19, %v504
  %v533 = vmul.f32 %v20, %v508
  %v534 = vmul.f32 %v21, %v512
  %v535 = vmul.f32 %v22, %v516
  %v536 = vmul.f32 %v23, %v520
  %v537 = vmul.f32 %v24, %v524
  %v538 = vmul.f32 %v25, %v528
  %548 = vrot.lane.b32.xlu0 %v530, 107
  %v549 = vpop.permute.xlu0 %548
  %550 = vrot.lane.b32.xlu0 %v531, 107
  %v551 = vpop.permute.xlu0 %550
  %552 = vrot.lane.b32.xlu0 %v532, 107
  %v553 = vpop.permute.xlu0 %552
  %554 = vrot.lane.b32.xlu0 %v533, 107
  %v555 = vpop.permute.xlu0 %554
  %556 = vrot.lane.b32.xlu0 %v534, 107
  %v557 = vpop.permute.xlu0 %556
  %558 = vrot.lane.b32.xlu0 %v535, 107
  %v559 = vpop.permute.xlu0 %558
  %560 = vrot.lane.b32.xlu0 %v536, 107
  %v561 = vpop.permute.xlu0 %560
  %562 = vrot.lane.b32.xlu0 %v537, 107
  %v563 = vpop.permute.xlu0 %562
  %564 = vrot.lane.b32.xlu0 %v538, 107
  %v565 = vpop.permute.xlu0 %564
  %v575 = vadd.f32 %v485, %v549
  %v576 = vadd.f32 %v486, %v551
  %v577 = vadd.f32 %v487, %v553
  %v578 = vadd.f32 %v488, %v555
  %v579 = vadd.f32 %v489, %v557
  %v580 = vadd.f32 %v490, %v559
  %v581 = vadd.f32 %v491, %v561
  %v582 = vadd.f32 %v492, %v563
  %v583 = vadd.f32 %v493, %v565
  %584 = vset.pattern.permute.xlu0 6
  %585 = vperm.xlu0 %584, %v26
  %v586 = vpop.permute.xlu0 %585
  %588 = vset.pattern.permute.xlu0 6
  %589 = vperm.xlu0 %588, %v27
  %v590 = vpop.permute.xlu0 %589
  %592 = vset.pattern.permute.xlu0 6
  %593 = vperm.xlu0 %592, %v28
  %v594 = vpop.permute.xlu0 %593
  %596 = vset.pattern.permute.xlu0 6
  %597 = vperm.xlu0 %596, %v29
  %v598 = vpop.permute.xlu0 %597
  %600 = vset.pattern.permute.xlu0 6
  %601 = vperm.xlu0 %600, %v30
  %v602 = vpop.permute.xlu0 %601
  %604 = vset.pattern.permute.xlu0 6
  %605 = vperm.xlu0 %604, %v31
  %v606 = vpop.permute.xlu0 %605
  %608 = vset.pattern.permute.xlu0 6
  %609 = vperm.xlu0 %608, %v32
  %v610 = vpop.permute.xlu0 %609
  %612 = vset.pattern.permute.xlu0 6
  %613 = vperm.xlu0 %612, %v33
  %v614 = vpop.permute.xlu0 %613
  %616 = vset.pattern.permute.xlu0 6
  %617 = vperm.xlu0 %616, %v34
  %v618 = vpop.permute.xlu0 %617
  %v620 = vmul.f32 %v17, %v586
  %v621 = vmul.f32 %v18, %v590
  %v622 = vmul.f32 %v19, %v594
  %v623 = vmul.f32 %v20, %v598
  %v624 = vmul.f32 %v21, %v602
  %v625 = vmul.f32 %v22, %v606
  %v626 = vmul.f32 %v23, %v610
  %v627 = vmul.f32 %v24, %v614
  %v628 = vmul.f32 %v25, %v618
  %638 = vrot.lane.b32.xlu0 %v620, 90
  %v639 = vpop.permute.xlu0 %638
  %640 = vrot.lane.b32.xlu0 %v621, 90
  %v641 = vpop.permute.xlu0 %640
  %642 = vrot.lane.b32.xlu0 %v622, 90
  %v643 = vpop.permute.xlu0 %642
  %644 = vrot.lane.b32.xlu0 %v623, 90
  %v645 = vpop.permute.xlu0 %644
  %646 = vrot.lane.b32.xlu0 %v624, 90
  %v647 = vpop.permute.xlu0 %646
  %648 = vrot.lane.b32.xlu0 %v625, 90
  %v649 = vpop.permute.xlu0 %648
  %650 = vrot.lane.b32.xlu0 %v626, 90
  %v651 = vpop.permute.xlu0 %650
  %652 = vrot.lane.b32.xlu0 %v627, 90
  %v653 = vpop.permute.xlu0 %652
  %654 = vrot.lane.b32.xlu0 %v628, 90
  %v655 = vpop.permute.xlu0 %654
  %v665 = vadd.f32 %v575, %v639
  %v666 = vadd.f32 %v576, %v641
  %v667 = vadd.f32 %v577, %v643
  %v668 = vadd.f32 %v578, %v645
  %v669 = vadd.f32 %v579, %v647
  %v670 = vadd.f32 %v580, %v649
  %v671 = vadd.f32 %v581, %v651
  %v672 = vadd.f32 %v582, %v653
  %v673 = vadd.f32 %v583, %v655
  %674 = vset.pattern.permute.xlu0 7
  %675 = vperm.xlu0 %674, %v26
  %v676 = vpop.permute.xlu0 %675
  %678 = vset.pattern.permute.xlu0 7
  %679 = vperm.xlu0 %678, %v27
  %v680 = vpop.permute.xlu0 %679
  %682 = vset.pattern.permute.xlu0 7
  %683 = vperm.xlu0 %682, %v28
  %v684 = vpop.permute.xlu0 %683
  %686 = vset.pattern.permute.xlu0 7
  %687 = vperm.xlu0 %686, %v29
  %v688 = vpop.permute.xlu0 %687
  %690 = vset.pattern.permute.xlu0 7
  %691 = vperm.xlu0 %690, %v30
  %v692 = vpop.permute.xlu0 %691
  %694 = vset.pattern.permute.xlu0 7
  %695 = vperm.xlu0 %694, %v31
  %v696 = vpop.permute.xlu0 %695
  %698 = vset.pattern.permute.xlu0 7
  %699 = vperm.xlu0 %698, %v32
  %v700 = vpop.permute.xlu0 %699
  %702 = vset.pattern.permute.xlu0 7
  %703 = vperm.xlu0 %702, %v33
  %v704 = vpop.permute.xlu0 %703
  %706 = vset.pattern.permute.xlu0 7
  %707 = vperm.xlu0 %706, %v34
  %v708 = vpop.permute.xlu0 %707
  %v710 = vmul.f32 %v17, %v676
  %v711 = vmul.f32 %v18, %v680
  %v712 = vmul.f32 %v19, %v684
  %v713 = vmul.f32 %v20, %v688
  %v714 = vmul.f32 %v21, %v692
  %v715 = vmul.f32 %v22, %v696
  %v716 = vmul.f32 %v23, %v700
  %v717 = vmul.f32 %v24, %v704
  %v718 = vmul.f32 %v25, %v708
  %728 = vrot.lane.b32.xlu0 %v710, 89
  %v729 = vpop.permute.xlu0 %728
  %730 = vrot.lane.b32.xlu0 %v711, 89
  %v731 = vpop.permute.xlu0 %730
  %732 = vrot.lane.b32.xlu0 %v712, 89
  %v733 = vpop.permute.xlu0 %732
  %734 = vrot.lane.b32.xlu0 %v713, 89
  %v735 = vpop.permute.xlu0 %734
  %736 = vrot.lane.b32.xlu0 %v714, 89
  %v737 = vpop.permute.xlu0 %736
  %738 = vrot.lane.b32.xlu0 %v715, 89
  %v739 = vpop.permute.xlu0 %738
  %740 = vrot.lane.b32.xlu0 %v716, 89
  %v741 = vpop.permute.xlu0 %740
  %742 = vrot.lane.b32.xlu0 %v717, 89
  %v743 = vpop.permute.xlu0 %742
  %744 = vrot.lane.b32.xlu0 %v718, 89
  %v745 = vpop.permute.xlu0 %744
  %v755 = vadd.f32 %v665, %v729
  %v756 = vadd.f32 %v666, %v731
  %v757 = vadd.f32 %v667, %v733
  %v758 = vadd.f32 %v668, %v735
  %v759 = vadd.f32 %v669, %v737
  %v760 = vadd.f32 %v670, %v739
  %v761 = vadd.f32 %v671, %v741
  %v762 = vadd.f32 %v672, %v743
  %v763 = vadd.f32 %v673, %v745
  %764 = vset.pattern.permute.xlu0 8
  %765 = vperm.xlu0 %764, %v26
  %v766 = vpop.permute.xlu0 %765
  %768 = vset.pattern.permute.xlu0 8
  %769 = vperm.xlu0 %768, %v27
  %v770 = vpop.permute.xlu0 %769
  %772 = vset.pattern.permute.xlu0 8
  %773 = vperm.xlu0 %772, %v28
  %v774 = vpop.permute.xlu0 %773
  %776 = vset.pattern.permute.xlu0 8
  %777 = vperm.xlu0 %776, %v29
  %v778 = vpop.permute.xlu0 %777
  %780 = vset.pattern.permute.xlu0 8
  %781 = vperm.xlu0 %780, %v30
  %v782 = vpop.permute.xlu0 %781
  %784 = vset.pattern.permute.xlu0 8
  %785 = vperm.xlu0 %784, %v31
  %v786 = vpop.permute.xlu0 %785
  %788 = vset.pattern.permute.xlu0 8
  %789 = vperm.xlu0 %788, %v32
  %v790 = vpop.permute.xlu0 %789
  %792 = vset.pattern.permute.xlu0 8
  %793 = vperm.xlu0 %792, %v33
  %v794 = vpop.permute.xlu0 %793
  %796 = vset.pattern.permute.xlu0 8
  %797 = vperm.xlu0 %796, %v34
  %v798 = vpop.permute.xlu0 %797
  %v800 = vmul.f32 %v17, %v766
  %v801 = vmul.f32 %v18, %v770
  %v802 = vmul.f32 %v19, %v774
  %v803 = vmul.f32 %v20, %v778
  %v804 = vmul.f32 %v21, %v782
  %v805 = vmul.f32 %v22, %v786
  %v806 = vmul.f32 %v23, %v790
  %v807 = vmul.f32 %v24, %v794
  %v808 = vmul.f32 %v25, %v798
  %818 = vrot.lane.b32.xlu0 %v800, 88
  %v819 = vpop.permute.xlu0 %818
  %820 = vrot.lane.b32.xlu0 %v801, 88
  %v821 = vpop.permute.xlu0 %820
  %822 = vrot.lane.b32.xlu0 %v802, 88
  %v823 = vpop.permute.xlu0 %822
  %824 = vrot.lane.b32.xlu0 %v803, 88
  %v825 = vpop.permute.xlu0 %824
  %826 = vrot.lane.b32.xlu0 %v804, 88
  %v827 = vpop.permute.xlu0 %826
  %828 = vrot.lane.b32.xlu0 %v805, 88
  %v829 = vpop.permute.xlu0 %828
  %830 = vrot.lane.b32.xlu0 %v806, 88
  %v831 = vpop.permute.xlu0 %830
  %832 = vrot.lane.b32.xlu0 %v807, 88
  %v833 = vpop.permute.xlu0 %832
  %834 = vrot.lane.b32.xlu0 %v808, 88
  %v835 = vpop.permute.xlu0 %834
  %v845 = vadd.f32 %v755, %v819
  %v846 = vadd.f32 %v756, %v821
  %v847 = vadd.f32 %v757, %v823
  %v848 = vadd.f32 %v758, %v825
  %v849 = vadd.f32 %v759, %v827
  %v850 = vadd.f32 %v760, %v829
  %v851 = vadd.f32 %v761, %v831
  %v852 = vadd.f32 %v762, %v833
  %v853 = vadd.f32 %v763, %v835
  %v854 = vmul.f32 %v845, 0.5
  %v855 = vmul.f32 %v846, 0.5
  %v856 = vmul.f32 %v847, 0.5
  %v857 = vmul.f32 %v848, 0.5
  %v858 = vmul.f32 %v849, 0.5
  %v859 = vmul.f32 %v850, 0.5
  %v860 = vmul.f32 %v851, 0.5
  %v861 = vmul.f32 %v852, 0.5
  %v862 = vmul.f32 %v853, 0.5
  %v863 = vmul.f32 %v845, %v845
  %v864 = vmul.f32 %v846, %v846
  %v865 = vmul.f32 %v847, %v847
  %v866 = vmul.f32 %v848, %v848
  %v867 = vmul.f32 %v849, %v849
  %v868 = vmul.f32 %v850, %v850
  %v869 = vmul.f32 %v851, %v851
  %v870 = vmul.f32 %v852, %v852
  %v871 = vmul.f32 %v853, %v853
  %v872 = vmul.f32 %v863, %v845
  %v873 = vmul.f32 %v864, %v846
  %v874 = vmul.f32 %v865, %v847
  %v875 = vmul.f32 %v866, %v848
  %v876 = vmul.f32 %v867, %v849
  %v877 = vmul.f32 %v868, %v850
  %v878 = vmul.f32 %v869, %v851
  %v879 = vmul.f32 %v870, %v852
  %v880 = vmul.f32 %v871, %v853
  %v881 = vmul.f32 %v872, 0.044715
  %v882 = vmul.f32 %v873, 0.044715
  %v883 = vmul.f32 %v874, 0.044715
  %v884 = vmul.f32 %v875, 0.044715
  %v885 = vmul.f32 %v876, 0.044715
  %v886 = vmul.f32 %v877, 0.044715
  %v887 = vmul.f32 %v878, 0.044715
  %v888 = vmul.f32 %v879, 0.044715
  %v889 = vmul.f32 %v880, 0.044715
  %v890 = vadd.f32 %v845, %v881
  %v891 = vadd.f32 %v846, %v882
  %v892 = vadd.f32 %v847, %v883
  %v893 = vadd.f32 %v848, %v884
  %v894 = vadd.f32 %v849, %v885
  %v895 = vadd.f32 %v850, %v886
  %v896 = vadd.f32 %v851, %v887
  %v897 = vadd.f32 %v852, %v888
  %v898 = vadd.f32 %v853, %v889
  %v899 = vmul.f32 %v890, 0.7978846
  %v900 = vmul.f32 %v891, 0.7978846
  %v901 = vmul.f32 %v892, 0.7978846
  %v902 = vmul.f32 %v893, 0.7978846
  %v903 = vmul.f32 %v894, 0.7978846
  %v904 = vmul.f32 %v895, 0.7978846
  %v905 = vmul.f32 %v896, 0.7978846
  %v906 = vmul.f32 %v897, 0.7978846
  %v907 = vmul.f32 %v898, 0.7978846
  %v908 = vtanh.pop %v899
  %v909 = vtanh.pop %v900
  %v910 = vtanh.pop %v901
  %v911 = vtanh.pop %v902
  %v912 = vtanh.pop %v903
  %v913 = vtanh.pop %v904
  %v914 = vtanh.pop %v905
  %v915 = vtanh.pop %v906
  %v916 = vtanh.pop %v907
  %v917 = vadd.f32 %v908, 1.0
  %v918 = vadd.f32 %v909, 1.0
  %v919 = vadd.f32 %v910, 1.0
  %v920 = vadd.f32 %v911, 1.0
  %v921 = vadd.f32 %v912, 1.0
  %v922 = vadd.f32 %v913, 1.0
  %v923 = vadd.f32 %v914, 1.0
  %v924 = vadd.f32 %v915, 1.0
  %v925 = vadd.f32 %v916, 1.0
  %v926 = vmul.f32 %v854, %v917
  %v927 = vmul.f32 %v855, %v918
  %v928 = vmul.f32 %v856, %v919
  %v929 = vmul.f32 %v857, %v920
  %v930 = vmul.f32 %v858, %v921
  %v931 = vmul.f32 %v859, %v922
  %v932 = vmul.f32 %v860, %v923
  %v933 = vmul.f32 %v861, %v924
  %v934 = vmul.f32 %v862, %v925
  %vm935 = vcmask 138240
  %936 = vst.msk [vmem:[#allocation2] sm:$0xff] %vm935, %v926
  %937 = vst.msk [vmem:[#allocation2 + $0x10] sm:$0xff] %vm935, %v927
  %938 = vst.msk [vmem:[#allocation2 + $0x20] sm:$0xff] %vm935, %v928
  %939 = vst.msk [vmem:[#allocation2 + $0x30] sm:$0xff] %vm935, %v929
  %940 = vst.msk [vmem:[#allocation2 + $0x40] sm:$0xff] %vm935, %v930
  %941 = vst.msk [vmem:[#allocation2 + $0x50] sm:$0xff] %vm935, %v931
  %942 = vst.msk [vmem:[#allocation2 + $0x60] sm:$0xff] %vm935, %v932
  %943 = vst.msk [vmem:[#allocation2 + $0x70] sm:$0xff] %vm935, %v933
  %vm944 = vcmask 134144
  %945 = vst.msk [vmem:[#allocation2 + $0x80] sm:$0xf] %vm944, %v934
  %s946 = scalar_lea.vmem %s0, 72
  %v947 = vld [vmem:[%s946] sm:$0xff]
  %v948 = vld [vmem:[%s946 + $0x8] sm:$0xff]
  %v949 = vld [vmem:[%s946 + $0x10] sm:$0xff]
  %v950 = vld [vmem:[%s946 + $0x18] sm:$0xff]
  %v951 = vld [vmem:[%s946 + $0x20] sm:$0xff]
  %v952 = vld [vmem:[%s946 + $0x28] sm:$0xff]
  %v953 = vld [vmem:[%s946 + $0x30] sm:$0xff]
  %v954 = vld [vmem:[%s946 + $0x38] sm:$0xff]
  %v955 = vld [vmem:[%s946 + $0x40] sm:$0xf]
  %s956 = scalar_lea.vmem %s1, 72
  %v957 = vld [vmem:[%s956] sm:$0xff]
  %v958 = vld [vmem:[%s956 + $0x8] sm:$0xff]
  %v959 = vld [vmem:[%s956 + $0x10] sm:$0xff]
  %v960 = vld [vmem:[%s956 + $0x18] sm:$0xff]
  %v961 = vld [vmem:[%s956 + $0x20] sm:$0xff]
  %v962 = vld [vmem:[%s956 + $0x28] sm:$0xff]
  %v963 = vld [vmem:[%s956 + $0x30] sm:$0xff]
  %v964 = vld [vmem:[%s956 + $0x38] sm:$0xff]
  %v965 = vld [vmem:[%s956 + $0x40] sm:$0xf]
  %967 = vset.pattern.permute.xlu0 9
  %968 = vperm.xlu0 %967, %v957
  %v969 = vpop.permute.xlu0 %968
  %972 = vset.pattern.permute.xlu0 9
  %973 = vperm.xlu0 %972, %v958
  %v974 = vpop.permute.xlu0 %973
  %977 = vset.pattern.permute.xlu0 9
  %978 = vperm.xlu0 %977, %v959
  %v979 = vpop.permute.xlu0 %978
  %982 = vset.pattern.permute.xlu0 9
  %983 = vperm.xlu0 %982, %v960
  %v984 = vpop.permute.xlu0 %983
  %987 = vset.pattern.permute.xlu0 9
  %988 = vperm.xlu0 %987, %v961
  %v989 = vpop.permute.xlu0 %988
  %992 = vset.pattern.permute.xlu0 9
  %993 = vperm.xlu0 %992, %v962
  %v994 = vpop.permute.xlu0 %993
  %997 = vset.pattern.permute.xlu0 9
  %998 = vperm.xlu0 %997, %v963
  %v999 = vpop.permute.xlu0 %998
  %1002 = vset.pattern.permute.xlu0 9
  %1003 = vperm.xlu0 %1002, %v964
  %v1004 = vpop.permute.xlu0 %1003
  %1007 = vset.pattern.permute.xlu0 9
  %1008 = vperm.xlu0 %1007, %v965
  %v1009 = vpop.permute.xlu0 %1008
  %1011 = vset.pattern.permute.xlu0 0
  %1012 = vperm.xlu0 %1011, %v957
  %v1013 = vpop.permute.xlu0 %1012
  %1015 = vset.pattern.permute.xlu0 0
  %1016 = vperm.xlu0 %1015, %v958
  %v1017 = vpop.permute.xlu0 %1016
  %1019 = vset.pattern.permute.xlu0 0
  %1020 = vperm.xlu0 %1019, %v959
  %v1021 = vpop.permute.xlu0 %1020
  %1023 = vset.pattern.permute.xlu0 0
  %1024 = vperm.xlu0 %1023, %v960
  %v1025 = vpop.permute.xlu0 %1024
  %1027 = vset.pattern.permute.xlu0 0
  %1028 = vperm.xlu0 %1027, %v961
  %v1029 = vpop.permute.xlu0 %1028
  %1031 = vset.pattern.permute.xlu0 0
  %1032 = vperm.xlu0 %1031, %v962
  %v1033 = vpop.permute.xlu0 %1032
  %1035 = vset.pattern.permute.xlu0 0
  %1036 = vperm.xlu0 %1035, %v963
  %v1037 = vpop.permute.xlu0 %1036
  %1039 = vset.pattern.permute.xlu0 0
  %1040 = vperm.xlu0 %1039, %v964
  %v1041 = vpop.permute.xlu0 %1040
  %1043 = vset.pattern.permute.xlu0 0
  %1044 = vperm.xlu0 %1043, %v965
  %v1045 = vpop.permute.xlu0 %1044
  %v1047 = vmul.f32 %v947, %v1013
  %v1048 = vmul.f32 %v948, %v1017
  %v1049 = vmul.f32 %v949, %v1021
  %v1050 = vmul.f32 %v950, %v1025
  %v1051 = vmul.f32 %v951, %v1029
  %v1052 = vmul.f32 %v952, %v1033
  %v1053 = vmul.f32 %v953, %v1037
  %v1054 = vmul.f32 %v954, %v1041
  %v1055 = vmul.f32 %v955, %v1045
  %v1056 = vadd.f32 %v969, %v1047
  %v1057 = vadd.f32 %v974, %v1048
  %v1058 = vadd.f32 %v979, %v1049
  %v1059 = vadd.f32 %v984, %v1050
  %v1060 = vadd.f32 %v989, %v1051
  %v1061 = vadd.f32 %v994, %v1052
  %v1062 = vadd.f32 %v999, %v1053
  %v1063 = vadd.f32 %v1004, %v1054
  %v1064 = vadd.f32 %v1009, %v1055
  %1065 = vset.pattern.permute.xlu0 1
  %1066 = vperm.xlu0 %1065, %v957
  %v1067 = vpop.permute.xlu0 %1066
  %1069 = vset.pattern.permute.xlu0 1
  %1070 = vperm.xlu0 %1069, %v958
  %v1071 = vpop.permute.xlu0 %1070
  %1073 = vset.pattern.permute.xlu0 1
  %1074 = vperm.xlu0 %1073, %v959
  %v1075 = vpop.permute.xlu0 %1074
  %1077 = vset.pattern.permute.xlu0 1
  %1078 = vperm.xlu0 %1077, %v960
  %v1079 = vpop.permute.xlu0 %1078
  %1081 = vset.pattern.permute.xlu0 1
  %1082 = vperm.xlu0 %1081, %v961
  %v1083 = vpop.permute.xlu0 %1082
  %1085 = vset.pattern.permute.xlu0 1
  %1086 = vperm.xlu0 %1085, %v962
  %v1087 = vpop.permute.xlu0 %1086
  %1089 = vset.pattern.permute.xlu0 1
  %1090 = vperm.xlu0 %1089, %v963
  %v1091 = vpop.permute.xlu0 %1090
  %1093 = vset.pattern.permute.xlu0 1
  %1094 = vperm.xlu0 %1093, %v964
  %v1095 = vpop.permute.xlu0 %1094
  %1097 = vset.pattern.permute.xlu0 1
  %1098 = vperm.xlu0 %1097, %v965
  %v1099 = vpop.permute.xlu0 %1098
  %v1101 = vmul.f32 %v947, %v1067
  %v1102 = vmul.f32 %v948, %v1071
  %v1103 = vmul.f32 %v949, %v1075
  %v1104 = vmul.f32 %v950, %v1079
  %v1105 = vmul.f32 %v951, %v1083
  %v1106 = vmul.f32 %v952, %v1087
  %v1107 = vmul.f32 %v953, %v1091
  %v1108 = vmul.f32 %v954, %v1095
  %v1109 = vmul.f32 %v955, %v1099
  %1119 = vrot.lane.b32.xlu0 %v1101, 127
  %v1120 = vpop.permute.xlu0 %1119
  %1121 = vrot.lane.b32.xlu0 %v1102, 127
  %v1122 = vpop.permute.xlu0 %1121
  %1123 = vrot.lane.b32.xlu0 %v1103, 127
  %v1124 = vpop.permute.xlu0 %1123
  %1125 = vrot.lane.b32.xlu0 %v1104, 127
  %v1126 = vpop.permute.xlu0 %1125
  %1127 = vrot.lane.b32.xlu0 %v1105, 127
  %v1128 = vpop.permute.xlu0 %1127
  %1129 = vrot.lane.b32.xlu0 %v1106, 127
  %v1130 = vpop.permute.xlu0 %1129
  %1131 = vrot.lane.b32.xlu0 %v1107, 127
  %v1132 = vpop.permute.xlu0 %1131
  %1133 = vrot.lane.b32.xlu0 %v1108, 127
  %v1134 = vpop.permute.xlu0 %1133
  %1135 = vrot.lane.b32.xlu0 %v1109, 127
  %v1136 = vpop.permute.xlu0 %1135
  %v1146 = vadd.f32 %v1056, %v1120
  %v1147 = vadd.f32 %v1057, %v1122
  %v1148 = vadd.f32 %v1058, %v1124
  %v1149 = vadd.f32 %v1059, %v1126
  %v1150 = vadd.f32 %v1060, %v1128
  %v1151 = vadd.f32 %v1061, %v1130
  %v1152 = vadd.f32 %v1062, %v1132
  %v1153 = vadd.f32 %v1063, %v1134
  %v1154 = vadd.f32 %v1064, %v1136
  %1155 = vset.pattern.permute.xlu0 2
  %1156 = vperm.xlu0 %1155, %v957
  %v1157 = vpop.permute.xlu0 %1156
  %1159 = vset.pattern.permute.xlu0 2
  %1160 = vperm.xlu0 %1159, %v958
  %v1161 = vpop.permute.xlu0 %1160
  %1163 = vset.pattern.permute.xlu0 2
  %1164 = vperm.xlu0 %1163, %v959
  %v1165 = vpop.permute.xlu0 %1164
  %1167 = vset.pattern.permute.xlu0 2
  %1168 = vperm.xlu0 %1167, %v960
  %v1169 = vpop.permute.xlu0 %1168
  %1171 = vset.pattern.permute.xlu0 2
  %1172 = vperm.xlu0 %1171, %v961
  %v1173 = vpop.permute.xlu0 %1172
  %1175 = vset.pattern.permute.xlu0 2
  %1176 = vperm.xlu0 %1175, %v962
  %v1177 = vpop.permute.xlu0 %1176
  %1179 = vset.pattern.permute.xlu0 2
  %1180 = vperm.xlu0 %1179, %v963
  %v1181 = vpop.permute.xlu0 %1180
  %1183 = vset.pattern.permute.xlu0 2
  %1184 = vperm.xlu0 %1183, %v964
  %v1185 = vpop.permute.xlu0 %1184
  %1187 = vset.pattern.permute.xlu0 2
  %1188 = vperm.xlu0 %1187, %v965
  %v1189 = vpop.permute.xlu0 %1188
  %v1191 = vmul.f32 %v947, %v1157
  %v1192 = vmul.f32 %v948, %v1161
  %v1193 = vmul.f32 %v949, %v1165
  %v1194 = vmul.f32 %v950, %v1169
  %v1195 = vmul.f32 %v951, %v1173
  %v1196 = vmul.f32 %v952, %v1177
  %v1197 = vmul.f32 %v953, %v1181
  %v1198 = vmul.f32 %v954, %v1185
  %v1199 = vmul.f32 %v955, %v1189
  %1209 = vrot.lane.b32.xlu0 %v1191, 126
  %v1210 = vpop.permute.xlu0 %1209
  %1211 = vrot.lane.b32.xlu0 %v1192, 126
  %v1212 = vpop.permute.xlu0 %1211
  %1213 = vrot.lane.b32.xlu0 %v1193, 126
  %v1214 = vpop.permute.xlu0 %1213
  %1215 = vrot.lane.b32.xlu0 %v1194, 126
  %v1216 = vpop.permute.xlu0 %1215
  %1217 = vrot.lane.b32.xlu0 %v1195, 126
  %v1218 = vpop.permute.xlu0 %1217
  %1219 = vrot.lane.b32.xlu0 %v1196, 126
  %v1220 = vpop.permute.xlu0 %1219
  %1221 = vrot.lane.b32.xlu0 %v1197, 126
  %v1222 = vpop.permute.xlu0 %1221
  %1223 = vrot.lane.b32.xlu0 %v1198, 126
  %v1224 = vpop.permute.xlu0 %1223
  %1225 = vrot.lane.b32.xlu0 %v1199, 126
  %v1226 = vpop.permute.xlu0 %1225
  %v1236 = vadd.f32 %v1146, %v1210
  %v1237 = vadd.f32 %v1147, %v1212
  %v1238 = vadd.f32 %v1148, %v1214
  %v1239 = vadd.f32 %v1149, %v1216
  %v1240 = vadd.f32 %v1150, %v1218
  %v1241 = vadd.f32 %v1151, %v1220
  %v1242 = vadd.f32 %v1152, %v1222
  %v1243 = vadd.f32 %v1153, %v1224
  %v1244 = vadd.f32 %v1154, %v1226
  %1245 = vset.pattern.permute.xlu0 3
  %1246 = vperm.xlu0 %1245, %v957
  %v1247 = vpop.permute.xlu0 %1246
  %1249 = vset.pattern.permute.xlu0 3
  %1250 = vperm.xlu0 %1249, %v958
  %v1251 = vpop.permute.xlu0 %1250
  %1253 = vset.pattern.permute.xlu0 3
  %1254 = vperm.xlu0 %1253, %v959
  %v1255 = vpop.permute.xlu0 %1254
  %1257 = vset.pattern.permute.xlu0 3
  %1258 = vperm.xlu0 %1257, %v960
  %v1259 = vpop.permute.xlu0 %1258
  %1261 = vset.pattern.permute.xlu0 3
  %1262 = vperm.xlu0 %1261, %v961
  %v1263 = vpop.permute.xlu0 %1262
  %1265 = vset.pattern.permute.xlu0 3
  %1266 = vperm.xlu0 %1265, %v962
  %v1267 = vpop.permute.xlu0 %1266
  %1269 = vset.pattern.permute.xlu0 3
  %1270 = vperm.xlu0 %1269, %v963
  %v1271 = vpop.permute.xlu0 %1270
  %1273 = vset.pattern.permute.xlu0 3
  %1274 = vperm.xlu0 %1273, %v964
  %v1275 = vpop.permute.xlu0 %1274
  %1277 = vset.pattern.permute.xlu0 3
  %1278 = vperm.xlu0 %1277, %v965
  %v1279 = vpop.permute.xlu0 %1278
  %v1281 = vmul.f32 %v947, %v1247
  %v1282 = vmul.f32 %v948, %v1251
  %v1283 = vmul.f32 %v949, %v1255
  %v1284 = vmul.f32 %v950, %v1259
  %v1285 = vmul.f32 %v951, %v1263
  %v1286 = vmul.f32 %v952, %v1267
  %v1287 = vmul.f32 %v953, %v1271
  %v1288 = vmul.f32 %v954, %v1275
  %v1289 = vmul.f32 %v955, %v1279
  %1299 = vrot.lane.b32.xlu0 %v1281, 109
  %v1300 = vpop.permute.xlu0 %1299
  %1301 = vrot.lane.b32.xlu0 %v1282, 109
  %v1302 = vpop.permute.xlu0 %1301
  %1303 = vrot.lane.b32.xlu0 %v1283, 109
  %v1304 = vpop.permute.xlu0 %1303
  %1305 = vrot.lane.b32.xlu0 %v1284, 109
  %v1306 = vpop.permute.xlu0 %1305
  %1307 = vrot.lane.b32.xlu0 %v1285, 109
  %v1308 = vpop.permute.xlu0 %1307
  %1309 = vrot.lane.b32.xlu0 %v1286, 109
  %v1310 = vpop.permute.xlu0 %1309
  %1311 = vrot.lane.b32.xlu0 %v1287, 109
  %v1312 = vpop.permute.xlu0 %1311
  %1313 = vrot.lane.b32.xlu0 %v1288, 109
  %v1314 = vpop.permute.xlu0 %1313
  %1315 = vrot.lane.b32.xlu0 %v1289, 109
  %v1316 = vpop.permute.xlu0 %1315
  %v1326 = vadd.f32 %v1236, %v1300
  %v1327 = vadd.f32 %v1237, %v1302
  %v1328 = vadd.f32 %v1238, %v1304
  %v1329 = vadd.f32 %v1239, %v1306
  %v1330 = vadd.f32 %v1240, %v1308
  %v1331 = vadd.f32 %v1241, %v1310
  %v1332 = vadd.f32 %v1242, %v1312
  %v1333 = vadd.f32 %v1243, %v1314
  %v1334 = vadd.f32 %v1244, %v1316
  %1335 = vset.pattern.permute.xlu0 4
  %1336 = vperm.xlu0 %1335, %v957
  %v1337 = vpop.permute.xlu0 %1336
  %1339 = vset.pattern.permute.xlu0 4
  %1340 = vperm.xlu0 %1339, %v958
  %v1341 = vpop.permute.xlu0 %1340
  %1343 = vset.pattern.permute.xlu0 4
  %1344 = vperm.xlu0 %1343, %v959
  %v1345 = vpop.permute.xlu0 %1344
  %1347 = vset.pattern.permute.xlu0 4
  %1348 = vperm.xlu0 %1347, %v960
  %v1349 = vpop.permute.xlu0 %1348
  %1351 = vset.pattern.permute.xlu0 4
  %1352 = vperm.xlu0 %1351, %v961
  %v1353 = vpop.permute.xlu0 %1352
  %1355 = vset.pattern.permute.xlu0 4
  %1356 = vperm.xlu0 %1355, %v962
  %v1357 = vpop.permute.xlu0 %1356
  %1359 = vset.pattern.permute.xlu0 4
  %1360 = vperm.xlu0 %1359, %v963
  %v1361 = vpop.permute.xlu0 %1360
  %1363 = vset.pattern.permute.xlu0 4
  %1364 = vperm.xlu0 %1363, %v964
  %v1365 = vpop.permute.xlu0 %1364
  %1367 = vset.pattern.permute.xlu0 4
  %1368 = vperm.xlu0 %1367, %v965
  %v1369 = vpop.permute.xlu0 %1368
  %v1371 = vmul.f32 %v947, %v1337
  %v1372 = vmul.f32 %v948, %v1341
  %v1373 = vmul.f32 %v949, %v1345
  %v1374 = vmul.f32 %v950, %v1349
  %v1375 = vmul.f32 %v951, %v1353
  %v1376 = vmul.f32 %v952, %v1357
  %v1377 = vmul.f32 %v953, %v1361
  %v1378 = vmul.f32 %v954, %v1365
  %v1379 = vmul.f32 %v955, %v1369
  %1389 = vrot.lane.b32.xlu0 %v1371, 108
  %v1390 = vpop.permute.xlu0 %1389
  %1391 = vrot.lane.b32.xlu0 %v1372, 108
  %v1392 = vpop.permute.xlu0 %1391
  %1393 = vrot.lane.b32.xlu0 %v1373, 108
  %v1394 = vpop.permute.xlu0 %1393
  %1395 = vrot.lane.b32.xlu0 %v1374, 108
  %v1396 = vpop.permute.xlu0 %1395
  %1397 = vrot.lane.b32.xlu0 %v1375, 108
  %v1398 = vpop.permute.xlu0 %1397
  %1399 = vrot.lane.b32.xlu0 %v1376, 108
  %v1400 = vpop.permute.xlu0 %1399
  %1401 = vrot.lane.b32.xlu0 %v1377, 108
  %v1402 = vpop.permute.xlu0 %1401
  %1403 = vrot.lane.b32.xlu0 %v1378, 108
  %v1404 = vpop.permute.xlu0 %1403
  %1405 = vrot.lane.b32.xlu0 %v1379, 108
  %v1406 = vpop.permute.xlu0 %1405
  %v1416 = vadd.f32 %v1326, %v1390
  %v1417 = vadd.f32 %v1327, %v1392
  %v1418 = vadd.f32 %v1328, %v1394
  %v1419 = vadd.f32 %v1329, %v1396
  %v1420 = vadd.f32 %v1330, %v1398
  %v1421 = vadd.f32 %v1331, %v1400
  %v1422 = vadd.f32 %v1332, %v1402
  %v1423 = vadd.f32 %v1333, %v1404
  %v1424 = vadd.f32 %v1334, %v1406
  %1425 = vset.pattern.permute.xlu0 5
  %1426 = vperm.xlu0 %1425, %v957
  %v1427 = vpop.permute.xlu0 %1426
  %1429 = vset.pattern.permute.xlu0 5
  %1430 = vperm.xlu0 %1429, %v958
  %v1431 = vpop.permute.xlu0 %1430
  %1433 = vset.pattern.permute.xlu0 5
  %1434 = vperm.xlu0 %1433, %v959
  %v1435 = vpop.permute.xlu0 %1434
  %1437 = vset.pattern.permute.xlu0 5
  %1438 = vperm.xlu0 %1437, %v960
  %v1439 = vpop.permute.xlu0 %1438
  %1441 = vset.pattern.permute.xlu0 5
  %1442 = vperm.xlu0 %1441, %v961
  %v1443 = vpop.permute.xlu0 %1442
  %1445 = vset.pattern.permute.xlu0 5
  %1446 = vperm.xlu0 %1445, %v962
  %v1447 = vpop.permute.xlu0 %1446
  %1449 = vset.pattern.permute.xlu0 5
  %1450 = vperm.xlu0 %1449, %v963
  %v1451 = vpop.permute.xlu0 %1450
  %1453 = vset.pattern.permute.xlu0 5
  %1454 = vperm.xlu0 %1453, %v964
  %v1455 = vpop.permute.xlu0 %1454
  %1457 = vset.pattern.permute.xlu0 5
  %1458 = vperm.xlu0 %1457, %v965
  %v1459 = vpop.permute.xlu0 %1458
  %v1461 = vmul.f32 %v947, %v1427
  %v1462 = vmul.f32 %v948, %v1431
  %v1463 = vmul.f32 %v949, %v1435
  %v1464 = vmul.f32 %v950, %v1439
  %v1465 = vmul.f32 %v951, %v1443
  %v1466 = vmul.f32 %v952, %v1447
  %v1467 = vmul.f32 %v953, %v1451
  %v1468 = vmul.f32 %v954, %v1455
  %v1469 = vmul.f32 %v955, %v1459
  %1479 = vrot.lane.b32.xlu0 %v1461, 107
  %v1480 = vpop.permute.xlu0 %1479
  %1481 = vrot.lane.b32.xlu0 %v1462, 107
  %v1482 = vpop.permute.xlu0 %1481
  %1483 = vrot.lane.b32.xlu0 %v1463, 107
  %v1484 = vpop.permute.xlu0 %1483
  %1485 = vrot.lane.b32.xlu0 %v1464, 107
  %v1486 = vpop.permute.xlu0 %1485
  %1487 = vrot.lane.b32.xlu0 %v1465, 107
  %v1488 = vpop.permute.xlu0 %1487
  %1489 = vrot.lane.b32.xlu0 %v1466, 107
  %v1490 = vpop.permute.xlu0 %1489
  %1491 = vrot.lane.b32.xlu0 %v1467, 107
  %v1492 = vpop.permute.xlu0 %1491
  %1493 = vrot.lane.b32.xlu0 %v1468, 107
  %v1494 = vpop.permute.xlu0 %1493
  %1495 = vrot.lane.b32.xlu0 %v1469, 107
  %v1496 = vpop.permute.xlu0 %1495
  %v1506 = vadd.f32 %v1416, %v1480
  %v1507 = vadd.f32 %v1417, %v1482
  %v1508 = vadd.f32 %v1418, %v1484
  %v1509 = vadd.f32 %v1419, %v1486
  %v1510 = vadd.f32 %v1420, %v1488
  %v1511 = vadd.f32 %v1421, %v1490
  %v1512 = vadd.f32 %v1422, %v1492
  %v1513 = vadd.f32 %v1423, %v1494
  %v1514 = vadd.f32 %v1424, %v1496
  %1515 = vset.pattern.permute.xlu0 6
  %1516 = vperm.xlu0 %1515, %v957
  %v1517 = vpop.permute.xlu0 %1516
  %1519 = vset.pattern.permute.xlu0 6
  %1520 = vperm.xlu0 %1519, %v958
  %v1521 = vpop.permute.xlu0 %1520
  %1523 = vset.pattern.permute.xlu0 6
  %1524 = vperm.xlu0 %1523, %v959
  %v1525 = vpop.permute.xlu0 %1524
  %1527 = vset.pattern.permute.xlu0 6
  %1528 = vperm.xlu0 %1527, %v960
  %v1529 = vpop.permute.xlu0 %1528
  %1531 = vset.pattern.permute.xlu0 6
  %1532 = vperm.xlu0 %1531, %v961
  %v1533 = vpop.permute.xlu0 %1532
  %1535 = vset.pattern.permute.xlu0 6
  %1536 = vperm.xlu0 %1535, %v962
  %v1537 = vpop.permute.xlu0 %1536
  %1539 = vset.pattern.permute.xlu0 6
  %1540 = vperm.xlu0 %1539, %v963
  %v1541 = vpop.permute.xlu0 %1540
  %1543 = vset.pattern.permute.xlu0 6
  %1544 = vperm.xlu0 %1543, %v964
  %v1545 = vpop.permute.xlu0 %1544
  %1547 = vset.pattern.permute.xlu0 6
  %1548 = vperm.xlu0 %1547, %v965
  %v1549 = vpop.permute.xlu0 %1548
  %v1551 = vmul.f32 %v947, %v1517
  %v1552 = vmul.f32 %v948, %v1521
  %v1553 = vmul.f32 %v949, %v1525
  %v1554 = vmul.f32 %v950, %v1529
  %v1555 = vmul.f32 %v951, %v1533
  %v1556 = vmul.f32 %v952, %v1537
  %v1557 = vmul.f32 %v953, %v1541
  %v1558 = vmul.f32 %v954, %v1545
  %v1559 = vmul.f32 %v955, %v1549
  %1569 = vrot.lane.b32.xlu0 %v1551, 90
  %v1570 = vpop.permute.xlu0 %1569
  %1571 = vrot.lane.b32.xlu0 %v1552, 90
  %v1572 = vpop.permute.xlu0 %1571
  %1573 = vrot.lane.b32.xlu0 %v1553, 90
  %v1574 = vpop.permute.xlu0 %1573
  %1575 = vrot.lane.b32.xlu0 %v1554, 90
  %v1576 = vpop.permute.xlu0 %1575
  %1577 = vrot.lane.b32.xlu0 %v1555, 90
  %v1578 = vpop.permute.xlu0 %1577
  %1579 = vrot.lane.b32.xlu0 %v1556, 90
  %v1580 = vpop.permute.xlu0 %1579
  %1581 = vrot.lane.b32.xlu0 %v1557, 90
  %v1582 = vpop.permute.xlu0 %1581
  %1583 = vrot.lane.b32.xlu0 %v1558, 90
  %v1584 = vpop.permute.xlu0 %1583
  %1585 = vrot.lane.b32.xlu0 %v1559, 90
  %v1586 = vpop.permute.xlu0 %1585
  %v1596 = vadd.f32 %v1506, %v1570
  %v1597 = vadd.f32 %v1507, %v1572
  %v1598 = vadd.f32 %v1508, %v1574
  %v1599 = vadd.f32 %v1509, %v1576
  %v1600 = vadd.f32 %v1510, %v1578
  %v1601 = vadd.f32 %v1511, %v1580
  %v1602 = vadd.f32 %v1512, %v1582
  %v1603 = vadd.f32 %v1513, %v1584
  %v1604 = vadd.f32 %v1514, %v1586
  %1605 = vset.pattern.permute.xlu0 7
  %1606 = vperm.xlu0 %1605, %v957
  %v1607 = vpop.permute.xlu0 %1606
  %1609 = vset.pattern.permute.xlu0 7
  %1610 = vperm.xlu0 %1609, %v958
  %v1611 = vpop.permute.xlu0 %1610
  %1613 = vset.pattern.permute.xlu0 7
  %1614 = vperm.xlu0 %1613, %v959
  %v1615 = vpop.permute.xlu0 %1614
  %1617 = vset.pattern.permute.xlu0 7
  %1618 = vperm.xlu0 %1617, %v960
  %v1619 = vpop.permute.xlu0 %1618
  %1621 = vset.pattern.permute.xlu0 7
  %1622 = vperm.xlu0 %1621, %v961
  %v1623 = vpop.permute.xlu0 %1622
  %1625 = vset.pattern.permute.xlu0 7
  %1626 = vperm.xlu0 %1625, %v962
  %v1627 = vpop.permute.xlu0 %1626
  %1629 = vset.pattern.permute.xlu0 7
  %1630 = vperm.xlu0 %1629, %v963
  %v1631 = vpop.permute.xlu0 %1630
  %1633 = vset.pattern.permute.xlu0 7
  %1634 = vperm.xlu0 %1633, %v964
  %v1635 = vpop.permute.xlu0 %1634
  %1637 = vset.pattern.permute.xlu0 7
  %1638 = vperm.xlu0 %1637, %v965
  %v1639 = vpop.permute.xlu0 %1638
  %v1641 = vmul.f32 %v947, %v1607
  %v1642 = vmul.f32 %v948, %v1611
  %v1643 = vmul.f32 %v949, %v1615
  %v1644 = vmul.f32 %v950, %v1619
  %v1645 = vmul.f32 %v951, %v1623
  %v1646 = vmul.f32 %v952, %v1627
  %v1647 = vmul.f32 %v953, %v1631
  %v1648 = vmul.f32 %v954, %v1635
  %v1649 = vmul.f32 %v955, %v1639
  %1659 = vrot.lane.b32.xlu0 %v1641, 89
  %v1660 = vpop.permute.xlu0 %1659
  %1661 = vrot.lane.b32.xlu0 %v1642, 89
  %v1662 = vpop.permute.xlu0 %1661
  %1663 = vrot.lane.b32.xlu0 %v1643, 89
  %v1664 = vpop.permute.xlu0 %1663
  %1665 = vrot.lane.b32.xlu0 %v1644, 89
  %v1666 = vpop.permute.xlu0 %1665
  %1667 = vrot.lane.b32.xlu0 %v1645, 89
  %v1668 = vpop.permute.xlu0 %1667
  %1669 = vrot.lane.b32.xlu0 %v1646, 89
  %v1670 = vpop.permute.xlu0 %1669
  %1671 = vrot.lane.b32.xlu0 %v1647, 89
  %v1672 = vpop.permute.xlu0 %1671
  %1673 = vrot.lane.b32.xlu0 %v1648, 89
  %v1674 = vpop.permute.xlu0 %1673
  %1675 = vrot.lane.b32.xlu0 %v1649, 89
  %v1676 = vpop.permute.xlu0 %1675
  %v1686 = vadd.f32 %v1596, %v1660
  %v1687 = vadd.f32 %v1597, %v1662
  %v1688 = vadd.f32 %v1598, %v1664
  %v1689 = vadd.f32 %v1599, %v1666
  %v1690 = vadd.f32 %v1600, %v1668
  %v1691 = vadd.f32 %v1601, %v1670
  %v1692 = vadd.f32 %v1602, %v1672
  %v1693 = vadd.f32 %v1603, %v1674
  %v1694 = vadd.f32 %v1604, %v1676
  %1695 = vset.pattern.permute.xlu0 8
  %1696 = vperm.xlu0 %1695, %v957
  %v1697 = vpop.permute.xlu0 %1696
  %1699 = vset.pattern.permute.xlu0 8
  %1700 = vperm.xlu0 %1699, %v958
  %v1701 = vpop.permute.xlu0 %1700
  %1703 = vset.pattern.permute.xlu0 8
  %1704 = vperm.xlu0 %1703, %v959
  %v1705 = vpop.permute.xlu0 %1704
  %1707 = vset.pattern.permute.xlu0 8
  %1708 = vperm.xlu0 %1707, %v960
  %v1709 = vpop.permute.xlu0 %1708
  %1711 = vset.pattern.permute.xlu0 8
  %1712 = vperm.xlu0 %1711, %v961
  %v1713 = vpop.permute.xlu0 %1712
  %1715 = vset.pattern.permute.xlu0 8
  %1716 = vperm.xlu0 %1715, %v962
  %v1717 = vpop.permute.xlu0 %1716
  %1719 = vset.pattern.permute.xlu0 8
  %1720 = vperm.xlu0 %1719, %v963
  %v1721 = vpop.permute.xlu0 %1720
  %1723 = vset.pattern.permute.xlu0 8
  %1724 = vperm.xlu0 %1723, %v964
  %v1725 = vpop.permute.xlu0 %1724
  %1727 = vset.pattern.permute.xlu0 8
  %1728 = vperm.xlu0 %1727, %v965
  %v1729 = vpop.permute.xlu0 %1728
  %v1731 = vmul.f32 %v947, %v1697
  %v1732 = vmul.f32 %v948, %v1701
  %v1733 = vmul.f32 %v949, %v1705
  %v1734 = vmul.f32 %v950, %v1709
  %v1735 = vmul.f32 %v951, %v1713
  %v1736 = vmul.f32 %v952, %v1717
  %v1737 = vmul.f32 %v953, %v1721
  %v1738 = vmul.f32 %v954, %v1725
  %v1739 = vmul.f32 %v955, %v1729
  %1749 = vrot.lane.b32.xlu0 %v1731, 88
  %v1750 = vpop.permute.xlu0 %1749
  %1751 = vrot.lane.b32.xlu0 %v1732, 88
  %v1752 = vpop.permute.xlu0 %1751
  %1753 = vrot.lane.b32.xlu0 %v1733, 88
  %v1754 = vpop.permute.xlu0 %1753
  %1755 = vrot.lane.b32.xlu0 %v1734, 88
  %v1756 = vpop.permute.xlu0 %1755
  %1757 = vrot.lane.b32.xlu0 %v1735, 88
  %v1758 = vpop.permute.xlu0 %1757
  %1759 = vrot.lane.b32.xlu0 %v1736, 88
  %v1760 = vpop.permute.xlu0 %1759
  %1761 = vrot.lane.b32.xlu0 %v1737, 88
  %v1762 = vpop.permute.xlu0 %1761
  %1763 = vrot.lane.b32.xlu0 %v1738, 88
  %v1764 = vpop.permute.xlu0 %1763
  %1765 = vrot.lane.b32.xlu0 %v1739, 88
  %v1766 = vpop.permute.xlu0 %1765
  %v1776 = vadd.f32 %v1686, %v1750
  %v1777 = vadd.f32 %v1687, %v1752
  %v1778 = vadd.f32 %v1688, %v1754
  %v1779 = vadd.f32 %v1689, %v1756
  %v1780 = vadd.f32 %v1690, %v1758
  %v1781 = vadd.f32 %v1691, %v1760
  %v1782 = vadd.f32 %v1692, %v1762
  %v1783 = vadd.f32 %v1693, %v1764
  %v1784 = vadd.f32 %v1694, %v1766
  %v1785 = vmul.f32 %v1776, 0.5
  %v1786 = vmul.f32 %v1777, 0.5
  %v1787 = vmul.f32 %v1778, 0.5
  %v1788 = vmul.f32 %v1779, 0.5
  %v1789 = vmul.f32 %v1780, 0.5
  %v1790 = vmul.f32 %v1781, 0.5
  %v1791 = vmul.f32 %v1782, 0.5
  %v1792 = vmul.f32 %v1783, 0.5
  %v1793 = vmul.f32 %v1784, 0.5
  %v1794 = vmul.f32 %v1776, %v1776
  %v1795 = vmul.f32 %v1777, %v1777
  %v1796 = vmul.f32 %v1778, %v1778
  %v1797 = vmul.f32 %v1779, %v1779
  %v1798 = vmul.f32 %v1780, %v1780
  %v1799 = vmul.f32 %v1781, %v1781
  %v1800 = vmul.f32 %v1782, %v1782
  %v1801 = vmul.f32 %v1783, %v1783
  %v1802 = vmul.f32 %v1784, %v1784
  %v1803 = vmul.f32 %v1794, %v1776
  %v1804 = vmul.f32 %v1795, %v1777
  %v1805 = vmul.f32 %v1796, %v1778
  %v1806 = vmul.f32 %v1797, %v1779
  %v1807 = vmul.f32 %v1798, %v1780
  %v1808 = vmul.f32 %v1799, %v1781
  %v1809 = vmul.f32 %v1800, %v1782
  %v1810 = vmul.f32 %v1801, %v1783
  %v1811 = vmul.f32 %v1802, %v1784
  %v1812 = vmul.f32 %v1803, 0.044715
  %v1813 = vmul.f32 %v1804, 0.044715
  %v1814 = vmul.f32 %v1805, 0.044715
  %v1815 = vmul.f32 %v1806, 0.044715
  %v1816 = vmul.f32 %v1807, 0.044715
  %v1817 = vmul.f32 %v1808, 0.044715
  %v1818 = vmul.f32 %v1809, 0.044715
  %v1819 = vmul.f32 %v1810, 0.044715
  %v1820 = vmul.f32 %v1811, 0.044715
  %v1821 = vadd.f32 %v1776, %v1812
  %v1822 = vadd.f32 %v1777, %v1813
  %v1823 = vadd.f32 %v1778, %v1814
  %v1824 = vadd.f32 %v1779, %v1815
  %v1825 = vadd.f32 %v1780, %v1816
  %v1826 = vadd.f32 %v1781, %v1817
  %v1827 = vadd.f32 %v1782, %v1818
  %v1828 = vadd.f32 %v1783, %v1819
  %v1829 = vadd.f32 %v1784, %v1820
  %v1830 = vmul.f32 %v1821, 0.7978846
  %v1831 = vmul.f32 %v1822, 0.7978846
  %v1832 = vmul.f32 %v1823, 0.7978846
  %v1833 = vmul.f32 %v1824, 0.7978846
  %v1834 = vmul.f32 %v1825, 0.7978846
  %v1835 = vmul.f32 %v1826, 0.7978846
  %v1836 = vmul.f32 %v1827, 0.7978846
  %v1837 = vmul.f32 %v1828, 0.7978846
  %v1838 = vmul.f32 %v1829, 0.7978846
  %v1839 = vtanh.pop %v1830
  %v1840 = vtanh.pop %v1831
  %v1841 = vtanh.pop %v1832
  %v1842 = vtanh.pop %v1833
  %v1843 = vtanh.pop %v1834
  %v1844 = vtanh.pop %v1835
  %v1845 = vtanh.pop %v1836
  %v1846 = vtanh.pop %v1837
  %v1847 = vtanh.pop %v1838
  %v1848 = vadd.f32 %v1839, 1.0
  %v1849 = vadd.f32 %v1840, 1.0
  %v1850 = vadd.f32 %v1841, 1.0
  %v1851 = vadd.f32 %v1842, 1.0
  %v1852 = vadd.f32 %v1843, 1.0
  %v1853 = vadd.f32 %v1844, 1.0
  %v1854 = vadd.f32 %v1845, 1.0
  %v1855 = vadd.f32 %v1846, 1.0
  %v1856 = vadd.f32 %v1847, 1.0
  %v1857 = vmul.f32 %v1785, %v1848
  %v1858 = vmul.f32 %v1786, %v1849
  %v1859 = vmul.f32 %v1787, %v1850
  %v1860 = vmul.f32 %v1788, %v1851
  %v1861 = vmul.f32 %v1789, %v1852
  %v1862 = vmul.f32 %v1790, %v1853
  %v1863 = vmul.f32 %v1791, %v1854
  %v1864 = vmul.f32 %v1792, %v1855
  %v1865 = vmul.f32 %v1793, %v1856
  %1875 = vrot.lane.b32.xlu0 %v1857, 17
  %v1876 = vpop.permute.xlu0 %1875
  %1877 = vrot.lane.b32.xlu0 %v1858, 17
  %v1878 = vpop.permute.xlu0 %1877
  %1879 = vrot.lane.b32.xlu0 %v1859, 17
  %v1880 = vpop.permute.xlu0 %1879
  %1881 = vrot.lane.b32.xlu0 %v1860, 17
  %v1882 = vpop.permute.xlu0 %1881
  %1883 = vrot.lane.b32.xlu0 %v1861, 17
  %v1884 = vpop.permute.xlu0 %1883
  %1885 = vrot.lane.b32.xlu0 %v1862, 17
  %v1886 = vpop.permute.xlu0 %1885
  %1887 = vrot.lane.b32.xlu0 %v1863, 17
  %v1888 = vpop.permute.xlu0 %1887
  %1889 = vrot.lane.b32.xlu0 %v1864, 17
  %v1890 = vpop.permute.xlu0 %1889
  %1891 = vrot.lane.b32.xlu0 %v1865, 17
  %v1892 = vpop.permute.xlu0 %1891
  %vm1902 = vcmask 277640
  %1903 = vst.msk [vmem:[#allocation2] sm:$0xff] %vm1902, %v1876
  %1904 = vst.msk [vmem:[#allocation2 + $0x10] sm:$0xff] %vm1902, %v1878
  %1905 = vst.msk [vmem:[#allocation2 + $0x20] sm:$0xff] %vm1902, %v1880
  %1906 = vst.msk [vmem:[#allocation2 + $0x30] sm:$0xff] %vm1902, %v1882
  %1907 = vst.msk [vmem:[#allocation2 + $0x40] sm:$0xff] %vm1902, %v1884
  %1908 = vst.msk [vmem:[#allocation2 + $0x50] sm:$0xff] %vm1902, %v1886
  %1909 = vst.msk [vmem:[#allocation2 + $0x60] sm:$0xff] %vm1902, %v1888
  %1910 = vst.msk [vmem:[#allocation2 + $0x70] sm:$0xff] %vm1902, %v1890
  %vm1911 = vcmask 273544
  %1912 = vst.msk [vmem:[#allocation2 + $0x80] sm:$0xf] %vm1911, %v1892
  %s1913 = scalar_lea.vmem %s0, 144
  %v1914 = vld [vmem:[%s1913] sm:$0xff]
  %v1915 = vld [vmem:[%s1913 + $0x8] sm:$0xff]
  %v1916 = vld [vmem:[%s1913 + $0x10] sm:$0xff]
  %v1917 = vld [vmem:[%s1913 + $0x18] sm:$0xff]
  %v1918 = vld [vmem:[%s1913 + $0x20] sm:$0xff]
  %v1919 = vld [vmem:[%s1913 + $0x28] sm:$0xff]
  %v1920 = vld [vmem:[%s1913 + $0x30] sm:$0xff]
  %v1921 = vld [vmem:[%s1913 + $0x38] sm:$0xff]
  %v1922 = vld [vmem:[%s1913 + $0x40] sm:$0xf]
  %s1923 = scalar_lea.vmem %s1, 144
  %v1924 = vld [vmem:[%s1923] sm:$0xff]
  %v1925 = vld [vmem:[%s1923 + $0x8] sm:$0xff]
  %v1926 = vld [vmem:[%s1923 + $0x10] sm:$0xff]
  %v1927 = vld [vmem:[%s1923 + $0x18] sm:$0xff]
  %v1928 = vld [vmem:[%s1923 + $0x20] sm:$0xff]
  %v1929 = vld [vmem:[%s1923 + $0x28] sm:$0xff]
  %v1930 = vld [vmem:[%s1923 + $0x30] sm:$0xff]
  %v1931 = vld [vmem:[%s1923 + $0x38] sm:$0xff]
  %v1932 = vld [vmem:[%s1923 + $0x40] sm:$0xf]
  %1934 = vset.pattern.permute.xlu0 9
  %1935 = vperm.xlu0 %1934, %v1924
  %v1936 = vpop.permute.xlu0 %1935
  %1939 = vset.pattern.permute.xlu0 9
  %1940 = vperm.xlu0 %1939, %v1925
  %v1941 = vpop.permute.xlu0 %1940
  %1944 = vset.pattern.permute.xlu0 9
  %1945 = vperm.xlu0 %1944, %v1926
  %v1946 = vpop.permute.xlu0 %1945
  %1949 = vset.pattern.permute.xlu0 9
  %1950 = vperm.xlu0 %1949, %v1927
  %v1951 = vpop.permute.xlu0 %1950
  %1954 = vset.pattern.permute.xlu0 9
  %1955 = vperm.xlu0 %1954, %v1928
  %v1956 = vpop.permute.xlu0 %1955
  %1959 = vset.pattern.permute.xlu0 9
  %1960 = vperm.xlu0 %1959, %v1929
  %v1961 = vpop.permute.xlu0 %1960
  %1964 = vset.pattern.permute.xlu0 9
  %1965 = vperm.xlu0 %1964, %v1930
  %v1966 = vpop.permute.xlu0 %1965
  %1969 = vset.pattern.permute.xlu0 9
  %1970 = vperm.xlu0 %1969, %v1931
  %v1971 = vpop.permute.xlu0 %1970
  %1974 = vset.pattern.permute.xlu0 9
  %1975 = vperm.xlu0 %1974, %v1932
  %v1976 = vpop.permute.xlu0 %1975
  %1978 = vset.pattern.permute.xlu0 0
  %1979 = vperm.xlu0 %1978, %v1924
  %v1980 = vpop.permute.xlu0 %1979
  %1982 = vset.pattern.permute.xlu0 0
  %1983 = vperm.xlu0 %1982, %v1925
  %v1984 = vpop.permute.xlu0 %1983
  %1986 = vset.pattern.permute.xlu0 0
  %1987 = vperm.xlu0 %1986, %v1926
  %v1988 = vpop.permute.xlu0 %1987
  %1990 = vset.pattern.permute.xlu0 0
  %1991 = vperm.xlu0 %1990, %v1927
  %v1992 = vpop.permute.xlu0 %1991
  %1994 = vset.pattern.permute.xlu0 0
  %1995 = vperm.xlu0 %1994, %v1928
  %v1996 = vpop.permute.xlu0 %1995
  %1998 = vset.pattern.permute.xlu0 0
  %1999 = vperm.xlu0 %1998, %v1929
  %v2000 = vpop.permute.xlu0 %1999
  %2002 = vset.pattern.permute.xlu0 0
  %2003 = vperm.xlu0 %2002, %v1930
  %v2004 = vpop.permute.xlu0 %2003
  %2006 = vset.pattern.permute.xlu0 0
  %2007 = vperm.xlu0 %2006, %v1931
  %v2008 = vpop.permute.xlu0 %2007
  %2010 = vset.pattern.permute.xlu0 0
  %2011 = vperm.xlu0 %2010, %v1932
  %v2012 = vpop.permute.xlu0 %2011
  %v2014 = vmul.f32 %v1914, %v1980
  %v2015 = vmul.f32 %v1915, %v1984
  %v2016 = vmul.f32 %v1916, %v1988
  %v2017 = vmul.f32 %v1917, %v1992
  %v2018 = vmul.f32 %v1918, %v1996
  %v2019 = vmul.f32 %v1919, %v2000
  %v2020 = vmul.f32 %v1920, %v2004
  %v2021 = vmul.f32 %v1921, %v2008
  %v2022 = vmul.f32 %v1922, %v2012
  %v2023 = vadd.f32 %v1936, %v2014
  %v2024 = vadd.f32 %v1941, %v2015
  %v2025 = vadd.f32 %v1946, %v2016
  %v2026 = vadd.f32 %v1951, %v2017
  %v2027 = vadd.f32 %v1956, %v2018
  %v2028 = vadd.f32 %v1961, %v2019
  %v2029 = vadd.f32 %v1966, %v2020
  %v2030 = vadd.f32 %v1971, %v2021
  %v2031 = vadd.f32 %v1976, %v2022
  %2032 = vset.pattern.permute.xlu0 1
  %2033 = vperm.xlu0 %2032, %v1924
  %v2034 = vpop.permute.xlu0 %2033
  %2036 = vset.pattern.permute.xlu0 1
  %2037 = vperm.xlu0 %2036, %v1925
  %v2038 = vpop.permute.xlu0 %2037
  %2040 = vset.pattern.permute.xlu0 1
  %2041 = vperm.xlu0 %2040, %v1926
  %v2042 = vpop.permute.xlu0 %2041
  %2044 = vset.pattern.permute.xlu0 1
  %2045 = vperm.xlu0 %2044, %v1927
  %v2046 = vpop.permute.xlu0 %2045
  %2048 = vset.pattern.permute.xlu0 1
  %2049 = vperm.xlu0 %2048, %v1928
  %v2050 = vpop.permute.xlu0 %2049
  %2052 = vset.pattern.permute.xlu0 1
  %2053 = vperm.xlu0 %2052, %v1929
  %v2054 = vpop.permute.xlu0 %2053
  %2056 = vset.pattern.permute.xlu0 1
  %2057 = vperm.xlu0 %2056, %v1930
  %v2058 = vpop.permute.xlu0 %2057
  %2060 = vset.pattern.permute.xlu0 1
  %2061 = vperm.xlu0 %2060, %v1931
  %v2062 = vpop.permute.xlu0 %2061
  %2064 = vset.pattern.permute.xlu0 1
  %2065 = vperm.xlu0 %2064, %v1932
  %v2066 = vpop.permute.xlu0 %2065
  %v2068 = vmul.f32 %v1914, %v2034
  %v2069 = vmul.f32 %v1915, %v2038
  %v2070 = vmul.f32 %v1916, %v2042
  %v2071 = vmul.f32 %v1917, %v2046
  %v2072 = vmul.f32 %v1918, %v2050
  %v2073 = vmul.f32 %v1919, %v2054
  %v2074 = vmul.f32 %v1920, %v2058
  %v2075 = vmul.f32 %v1921, %v2062
  %v2076 = vmul.f32 %v1922, %v2066
  %2086 = vrot.lane.b32.xlu0 %v2068, 127
  %v2087 = vpop.permute.xlu0 %2086
  %2088 = vrot.lane.b32.xlu0 %v2069, 127
  %v2089 = vpop.permute.xlu0 %2088
  %2090 = vrot.lane.b32.xlu0 %v2070, 127
  %v2091 = vpop.permute.xlu0 %2090
  %2092 = vrot.lane.b32.xlu0 %v2071, 127
  %v2093 = vpop.permute.xlu0 %2092
  %2094 = vrot.lane.b32.xlu0 %v2072, 127
  %v2095 = vpop.permute.xlu0 %2094
  %2096 = vrot.lane.b32.xlu0 %v2073, 127
  %v2097 = vpop.permute.xlu0 %2096
  %2098 = vrot.lane.b32.xlu0 %v2074, 127
  %v2099 = vpop.permute.xlu0 %2098
  %2100 = vrot.lane.b32.xlu0 %v2075, 127
  %v2101 = vpop.permute.xlu0 %2100
  %2102 = vrot.lane.b32.xlu0 %v2076, 127
  %v2103 = vpop.permute.xlu0 %2102
  %v2113 = vadd.f32 %v2023, %v2087
  %v2114 = vadd.f32 %v2024, %v2089
  %v2115 = vadd.f32 %v2025, %v2091
  %v2116 = vadd.f32 %v2026, %v2093
  %v2117 = vadd.f32 %v2027, %v2095
  %v2118 = vadd.f32 %v2028, %v2097
  %v2119 = vadd.f32 %v2029, %v2099
  %v2120 = vadd.f32 %v2030, %v2101
  %v2121 = vadd.f32 %v2031, %v2103
  %2122 = vset.pattern.permute.xlu0 2
  %2123 = vperm.xlu0 %2122, %v1924
  %v2124 = vpop.permute.xlu0 %2123
  %2126 = vset.pattern.permute.xlu0 2
  %2127 = vperm.xlu0 %2126, %v1925
  %v2128 = vpop.permute.xlu0 %2127
  %2130 = vset.pattern.permute.xlu0 2
  %2131 = vperm.xlu0 %2130, %v1926
  %v2132 = vpop.permute.xlu0 %2131
  %2134 = vset.pattern.permute.xlu0 2
  %2135 = vperm.xlu0 %2134, %v1927
  %v2136 = vpop.permute.xlu0 %2135
  %2138 = vset.pattern.permute.xlu0 2
  %2139 = vperm.xlu0 %2138, %v1928
  %v2140 = vpop.permute.xlu0 %2139
  %2142 = vset.pattern.permute.xlu0 2
  %2143 = vperm.xlu0 %2142, %v1929
  %v2144 = vpop.permute.xlu0 %2143
  %2146 = vset.pattern.permute.xlu0 2
  %2147 = vperm.xlu0 %2146, %v1930
  %v2148 = vpop.permute.xlu0 %2147
  %2150 = vset.pattern.permute.xlu0 2
  %2151 = vperm.xlu0 %2150, %v1931
  %v2152 = vpop.permute.xlu0 %2151
  %2154 = vset.pattern.permute.xlu0 2
  %2155 = vperm.xlu0 %2154, %v1932
  %v2156 = vpop.permute.xlu0 %2155
  %v2158 = vmul.f32 %v1914, %v2124
  %v2159 = vmul.f32 %v1915, %v2128
  %v2160 = vmul.f32 %v1916, %v2132
  %v2161 = vmul.f32 %v1917, %v2136
  %v2162 = vmul.f32 %v1918, %v2140
  %v2163 = vmul.f32 %v1919, %v2144
  %v2164 = vmul.f32 %v1920, %v2148
  %v2165 = vmul.f32 %v1921, %v2152
  %v2166 = vmul.f32 %v1922, %v2156
  %2176 = vrot.lane.b32.xlu0 %v2158, 126
  %v2177 = vpop.permute.xlu0 %2176
  %2178 = vrot.lane.b32.xlu0 %v2159, 126
  %v2179 = vpop.permute.xlu0 %2178
  %2180 = vrot.lane.b32.xlu0 %v2160, 126
  %v2181 = vpop.permute.xlu0 %2180
  %2182 = vrot.lane.b32.xlu0 %v2161, 126
  %v2183 = vpop.permute.xlu0 %2182
  %2184 = vrot.lane.b32.xlu0 %v2162, 126
  %v2185 = vpop.permute.xlu0 %2184
  %2186 = vrot.lane.b32.xlu0 %v2163, 126
  %v2187 = vpop.permute.xlu0 %2186
  %2188 = vrot.lane.b32.xlu0 %v2164, 126
  %v2189 = vpop.permute.xlu0 %2188
  %2190 = vrot.lane.b32.xlu0 %v2165, 126
  %v2191 = vpop.permute.xlu0 %2190
  %2192 = vrot.lane.b32.xlu0 %v2166, 126
  %v2193 = vpop.permute.xlu0 %2192
  %v2203 = vadd.f32 %v2113, %v2177
  %v2204 = vadd.f32 %v2114, %v2179
  %v2205 = vadd.f32 %v2115, %v2181
  %v2206 = vadd.f32 %v2116, %v2183
  %v2207 = vadd.f32 %v2117, %v2185
  %v2208 = vadd.f32 %v2118, %v2187
  %v2209 = vadd.f32 %v2119, %v2189
  %v2210 = vadd.f32 %v2120, %v2191
  %v2211 = vadd.f32 %v2121, %v2193
  %2212 = vset.pattern.permute.xlu0 3
  %2213 = vperm.xlu0 %2212, %v1924
  %v2214 = vpop.permute.xlu0 %2213
  %2216 = vset.pattern.permute.xlu0 3
  %2217 = vperm.xlu0 %2216, %v1925
  %v2218 = vpop.permute.xlu0 %2217
  %2220 = vset.pattern.permute.xlu0 3
  %2221 = vperm.xlu0 %2220, %v1926
  %v2222 = vpop.permute.xlu0 %2221
  %2224 = vset.pattern.permute.xlu0 3
  %2225 = vperm.xlu0 %2224, %v1927
  %v2226 = vpop.permute.xlu0 %2225
  %2228 = vset.pattern.permute.xlu0 3
  %2229 = vperm.xlu0 %2228, %v1928
  %v2230 = vpop.permute.xlu0 %2229
  %2232 = vset.pattern.permute.xlu0 3
  %2233 = vperm.xlu0 %2232, %v1929
  %v2234 = vpop.permute.xlu0 %2233
  %2236 = vset.pattern.permute.xlu0 3
  %2237 = vperm.xlu0 %2236, %v1930
  %v2238 = vpop.permute.xlu0 %2237
  %2240 = vset.pattern.permute.xlu0 3
  %2241 = vperm.xlu0 %2240, %v1931
  %v2242 = vpop.permute.xlu0 %2241
  %2244 = vset.pattern.permute.xlu0 3
  %2245 = vperm.xlu0 %2244, %v1932
  %v2246 = vpop.permute.xlu0 %2245
  %v2248 = vmul.f32 %v1914, %v2214
  %v2249 = vmul.f32 %v1915, %v2218
  %v2250 = vmul.f32 %v1916, %v2222
  %v2251 = vmul.f32 %v1917, %v2226
  %v2252 = vmul.f32 %v1918, %v2230
  %v2253 = vmul.f32 %v1919, %v2234
  %v2254 = vmul.f32 %v1920, %v2238
  %v2255 = vmul.f32 %v1921, %v2242
  %v2256 = vmul.f32 %v1922, %v2246
  %2266 = vrot.lane.b32.xlu0 %v2248, 109
  %v2267 = vpop.permute.xlu0 %2266
  %2268 = vrot.lane.b32.xlu0 %v2249, 109
  %v2269 = vpop.permute.xlu0 %2268
  %2270 = vrot.lane.b32.xlu0 %v2250, 109
  %v2271 = vpop.permute.xlu0 %2270
  %2272 = vrot.lane.b32.xlu0 %v2251, 109
  %v2273 = vpop.permute.xlu0 %2272
  %2274 = vrot.lane.b32.xlu0 %v2252, 109
  %v2275 = vpop.permute.xlu0 %2274
  %2276 = vrot.lane.b32.xlu0 %v2253, 109
  %v2277 = vpop.permute.xlu0 %2276
  %2278 = vrot.lane.b32.xlu0 %v2254, 109
  %v2279 = vpop.permute.xlu0 %2278
  %2280 = vrot.lane.b32.xlu0 %v2255, 109
  %v2281 = vpop.permute.xlu0 %2280
  %2282 = vrot.lane.b32.xlu0 %v2256, 109
  %v2283 = vpop.permute.xlu0 %2282
  %v2293 = vadd.f32 %v2203, %v2267
  %v2294 = vadd.f32 %v2204, %v2269
  %v2295 = vadd.f32 %v2205, %v2271
  %v2296 = vadd.f32 %v2206, %v2273
  %v2297 = vadd.f32 %v2207, %v2275
  %v2298 = vadd.f32 %v2208, %v2277
  %v2299 = vadd.f32 %v2209, %v2279
  %v2300 = vadd.f32 %v2210, %v2281
  %v2301 = vadd.f32 %v2211, %v2283
  %2302 = vset.pattern.permute.xlu0 4
  %2303 = vperm.xlu0 %2302, %v1924
  %v2304 = vpop.permute.xlu0 %2303
  %2306 = vset.pattern.permute.xlu0 4
  %2307 = vperm.xlu0 %2306, %v1925
  %v2308 = vpop.permute.xlu0 %2307
  %2310 = vset.pattern.permute.xlu0 4
  %2311 = vperm.xlu0 %2310, %v1926
  %v2312 = vpop.permute.xlu0 %2311
  %2314 = vset.pattern.permute.xlu0 4
  %2315 = vperm.xlu0 %2314, %v1927
  %v2316 = vpop.permute.xlu0 %2315
  %2318 = vset.pattern.permute.xlu0 4
  %2319 = vperm.xlu0 %2318, %v1928
  %v2320 = vpop.permute.xlu0 %2319
  %2322 = vset.pattern.permute.xlu0 4
  %2323 = vperm.xlu0 %2322, %v1929
  %v2324 = vpop.permute.xlu0 %2323
  %2326 = vset.pattern.permute.xlu0 4
  %2327 = vperm.xlu0 %2326, %v1930
  %v2328 = vpop.permute.xlu0 %2327
  %2330 = vset.pattern.permute.xlu0 4
  %2331 = vperm.xlu0 %2330, %v1931
  %v2332 = vpop.permute.xlu0 %2331
  %2334 = vset.pattern.permute.xlu0 4
  %2335 = vperm.xlu0 %2334, %v1932
  %v2336 = vpop.permute.xlu0 %2335
  %v2338 = vmul.f32 %v1914, %v2304
  %v2339 = vmul.f32 %v1915, %v2308
  %v2340 = vmul.f32 %v1916, %v2312
  %v2341 = vmul.f32 %v1917, %v2316
  %v2342 = vmul.f32 %v1918, %v2320
  %v2343 = vmul.f32 %v1919, %v2324
  %v2344 = vmul.f32 %v1920, %v2328
  %v2345 = vmul.f32 %v1921, %v2332
  %v2346 = vmul.f32 %v1922, %v2336
  %2356 = vrot.lane.b32.xlu0 %v2338, 108
  %v2357 = vpop.permute.xlu0 %2356
  %2358 = vrot.lane.b32.xlu0 %v2339, 108
  %v2359 = vpop.permute.xlu0 %2358
  %2360 = vrot.lane.b32.xlu0 %v2340, 108
  %v2361 = vpop.permute.xlu0 %2360
  %2362 = vrot.lane.b32.xlu0 %v2341, 108
  %v2363 = vpop.permute.xlu0 %2362
  %2364 = vrot.lane.b32.xlu0 %v2342, 108
  %v2365 = vpop.permute.xlu0 %2364
  %2366 = vrot.lane.b32.xlu0 %v2343, 108
  %v2367 = vpop.permute.xlu0 %2366
  %2368 = vrot.lane.b32.xlu0 %v2344, 108
  %v2369 = vpop.permute.xlu0 %2368
  %2370 = vrot.lane.b32.xlu0 %v2345, 108
  %v2371 = vpop.permute.xlu0 %2370
  %2372 = vrot.lane.b32.xlu0 %v2346, 108
  %v2373 = vpop.permute.xlu0 %2372
  %v2383 = vadd.f32 %v2293, %v2357
  %v2384 = vadd.f32 %v2294, %v2359
  %v2385 = vadd.f32 %v2295, %v2361
  %v2386 = vadd.f32 %v2296, %v2363
  %v2387 = vadd.f32 %v2297, %v2365
  %v2388 = vadd.f32 %v2298, %v2367
  %v2389 = vadd.f32 %v2299, %v2369
  %v2390 = vadd.f32 %v2300, %v2371
  %v2391 = vadd.f32 %v2301, %v2373
  %2392 = vset.pattern.permute.xlu0 5
  %2393 = vperm.xlu0 %2392, %v1924
  %v2394 = vpop.permute.xlu0 %2393
  %2396 = vset.pattern.permute.xlu0 5
  %2397 = vperm.xlu0 %2396, %v1925
  %v2398 = vpop.permute.xlu0 %2397
  %2400 = vset.pattern.permute.xlu0 5
  %2401 = vperm.xlu0 %2400, %v1926
  %v2402 = vpop.permute.xlu0 %2401
  %2404 = vset.pattern.permute.xlu0 5
  %2405 = vperm.xlu0 %2404, %v1927
  %v2406 = vpop.permute.xlu0 %2405
  %2408 = vset.pattern.permute.xlu0 5
  %2409 = vperm.xlu0 %2408, %v1928
  %v2410 = vpop.permute.xlu0 %2409
  %2412 = vset.pattern.permute.xlu0 5
  %2413 = vperm.xlu0 %2412, %v1929
  %v2414 = vpop.permute.xlu0 %2413
  %2416 = vset.pattern.permute.xlu0 5
  %2417 = vperm.xlu0 %2416, %v1930
  %v2418 = vpop.permute.xlu0 %2417
  %2420 = vset.pattern.permute.xlu0 5
  %2421 = vperm.xlu0 %2420, %v1931
  %v2422 = vpop.permute.xlu0 %2421
  %2424 = vset.pattern.permute.xlu0 5
  %2425 = vperm.xlu0 %2424, %v1932
  %v2426 = vpop.permute.xlu0 %2425
  %v2428 = vmul.f32 %v1914, %v2394
  %v2429 = vmul.f32 %v1915, %v2398
  %v2430 = vmul.f32 %v1916, %v2402
  %v2431 = vmul.f32 %v1917, %v2406
  %v2432 = vmul.f32 %v1918, %v2410
  %v2433 = vmul.f32 %v1919, %v2414
  %v2434 = vmul.f32 %v1920, %v2418
  %v2435 = vmul.f32 %v1921, %v2422
  %v2436 = vmul.f32 %v1922, %v2426
  %2446 = vrot.lane.b32.xlu0 %v2428, 107
  %v2447 = vpop.permute.xlu0 %2446
  %2448 = vrot.lane.b32.xlu0 %v2429, 107
  %v2449 = vpop.permute.xlu0 %2448
  %2450 = vrot.lane.b32.xlu0 %v2430, 107
  %v2451 = vpop.permute.xlu0 %2450
  %2452 = vrot.lane.b32.xlu0 %v2431, 107
  %v2453 = vpop.permute.xlu0 %2452
  %2454 = vrot.lane.b32.xlu0 %v2432, 107
  %v2455 = vpop.permute.xlu0 %2454
  %2456 = vrot.lane.b32.xlu0 %v2433, 107
  %v2457 = vpop.permute.xlu0 %2456
  %2458 = vrot.lane.b32.xlu0 %v2434, 107
  %v2459 = vpop.permute.xlu0 %2458
  %2460 = vrot.lane.b32.xlu0 %v2435, 107
  %v2461 = vpop.permute.xlu0 %2460
  %2462 = vrot.lane.b32.xlu0 %v2436, 107
  %v2463 = vpop.permute.xlu0 %2462
  %v2473 = vadd.f32 %v2383, %v2447
  %v2474 = vadd.f32 %v2384, %v2449
  %v2475 = vadd.f32 %v2385, %v2451
  %v2476 = vadd.f32 %v2386, %v2453
  %v2477 = vadd.f32 %v2387, %v2455
  %v2478 = vadd.f32 %v2388, %v2457
  %v2479 = vadd.f32 %v2389, %v2459
  %v2480 = vadd.f32 %v2390, %v2461
  %v2481 = vadd.f32 %v2391, %v2463
  %2482 = vset.pattern.permute.xlu0 6
  %2483 = vperm.xlu0 %2482, %v1924
  %v2484 = vpop.permute.xlu0 %2483
  %2486 = vset.pattern.permute.xlu0 6
  %2487 = vperm.xlu0 %2486, %v1925
  %v2488 = vpop.permute.xlu0 %2487
  %2490 = vset.pattern.permute.xlu0 6
  %2491 = vperm.xlu0 %2490, %v1926
  %v2492 = vpop.permute.xlu0 %2491
  %2494 = vset.pattern.permute.xlu0 6
  %2495 = vperm.xlu0 %2494, %v1927
  %v2496 = vpop.permute.xlu0 %2495
  %2498 = vset.pattern.permute.xlu0 6
  %2499 = vperm.xlu0 %2498, %v1928
  %v2500 = vpop.permute.xlu0 %2499
  %2502 = vset.pattern.permute.xlu0 6
  %2503 = vperm.xlu0 %2502, %v1929
  %v2504 = vpop.permute.xlu0 %2503
  %2506 = vset.pattern.permute.xlu0 6
  %2507 = vperm.xlu0 %2506, %v1930
  %v2508 = vpop.permute.xlu0 %2507
  %2510 = vset.pattern.permute.xlu0 6
  %2511 = vperm.xlu0 %2510, %v1931
  %v2512 = vpop.permute.xlu0 %2511
  %2514 = vset.pattern.permute.xlu0 6
  %2515 = vperm.xlu0 %2514, %v1932
  %v2516 = vpop.permute.xlu0 %2515
  %v2518 = vmul.f32 %v1914, %v2484
  %v2519 = vmul.f32 %v1915, %v2488
  %v2520 = vmul.f32 %v1916, %v2492
  %v2521 = vmul.f32 %v1917, %v2496
  %v2522 = vmul.f32 %v1918, %v2500
  %v2523 = vmul.f32 %v1919, %v2504
  %v2524 = vmul.f32 %v1920, %v2508
  %v2525 = vmul.f32 %v1921, %v2512
  %v2526 = vmul.f32 %v1922, %v2516
  %2536 = vrot.lane.b32.xlu0 %v2518, 90
  %v2537 = vpop.permute.xlu0 %2536
  %2538 = vrot.lane.b32.xlu0 %v2519, 90
  %v2539 = vpop.permute.xlu0 %2538
  %2540 = vrot.lane.b32.xlu0 %v2520, 90
  %v2541 = vpop.permute.xlu0 %2540
  %2542 = vrot.lane.b32.xlu0 %v2521, 90
  %v2543 = vpop.permute.xlu0 %2542
  %2544 = vrot.lane.b32.xlu0 %v2522, 90
  %v2545 = vpop.permute.xlu0 %2544
  %2546 = vrot.lane.b32.xlu0 %v2523, 90
  %v2547 = vpop.permute.xlu0 %2546
  %2548 = vrot.lane.b32.xlu0 %v2524, 90
  %v2549 = vpop.permute.xlu0 %2548
  %2550 = vrot.lane.b32.xlu0 %v2525, 90
  %v2551 = vpop.permute.xlu0 %2550
  %2552 = vrot.lane.b32.xlu0 %v2526, 90
  %v2553 = vpop.permute.xlu0 %2552
  %v2563 = vadd.f32 %v2473, %v2537
  %v2564 = vadd.f32 %v2474, %v2539
  %v2565 = vadd.f32 %v2475, %v2541
  %v2566 = vadd.f32 %v2476, %v2543
  %v2567 = vadd.f32 %v2477, %v2545
  %v2568 = vadd.f32 %v2478, %v2547
  %v2569 = vadd.f32 %v2479, %v2549
  %v2570 = vadd.f32 %v2480, %v2551
  %v2571 = vadd.f32 %v2481, %v2553
  %2572 = vset.pattern.permute.xlu0 7
  %2573 = vperm.xlu0 %2572, %v1924
  %v2574 = vpop.permute.xlu0 %2573
  %2576 = vset.pattern.permute.xlu0 7
  %2577 = vperm.xlu0 %2576, %v1925
  %v2578 = vpop.permute.xlu0 %2577
  %2580 = vset.pattern.permute.xlu0 7
  %2581 = vperm.xlu0 %2580, %v1926
  %v2582 = vpop.permute.xlu0 %2581
  %2584 = vset.pattern.permute.xlu0 7
  %2585 = vperm.xlu0 %2584, %v1927
  %v2586 = vpop.permute.xlu0 %2585
  %2588 = vset.pattern.permute.xlu0 7
  %2589 = vperm.xlu0 %2588, %v1928
  %v2590 = vpop.permute.xlu0 %2589
  %2592 = vset.pattern.permute.xlu0 7
  %2593 = vperm.xlu0 %2592, %v1929
  %v2594 = vpop.permute.xlu0 %2593
  %2596 = vset.pattern.permute.xlu0 7
  %2597 = vperm.xlu0 %2596, %v1930
  %v2598 = vpop.permute.xlu0 %2597
  %2600 = vset.pattern.permute.xlu0 7
  %2601 = vperm.xlu0 %2600, %v1931
  %v2602 = vpop.permute.xlu0 %2601
  %2604 = vset.pattern.permute.xlu0 7
  %2605 = vperm.xlu0 %2604, %v1932
  %v2606 = vpop.permute.xlu0 %2605
  %v2608 = vmul.f32 %v1914, %v2574
  %v2609 = vmul.f32 %v1915, %v2578
  %v2610 = vmul.f32 %v1916, %v2582
  %v2611 = vmul.f32 %v1917, %v2586
  %v2612 = vmul.f32 %v1918, %v2590
  %v2613 = vmul.f32 %v1919, %v2594
  %v2614 = vmul.f32 %v1920, %v2598
  %v2615 = vmul.f32 %v1921, %v2602
  %v2616 = vmul.f32 %v1922, %v2606
  %2626 = vrot.lane.b32.xlu0 %v2608, 89
  %v2627 = vpop.permute.xlu0 %2626
  %2628 = vrot.lane.b32.xlu0 %v2609, 89
  %v2629 = vpop.permute.xlu0 %2628
  %2630 = vrot.lane.b32.xlu0 %v2610, 89
  %v2631 = vpop.permute.xlu0 %2630
  %2632 = vrot.lane.b32.xlu0 %v2611, 89
  %v2633 = vpop.permute.xlu0 %2632
  %2634 = vrot.lane.b32.xlu0 %v2612, 89
  %v2635 = vpop.permute.xlu0 %2634
  %2636 = vrot.lane.b32.xlu0 %v2613, 89
  %v2637 = vpop.permute.xlu0 %2636
  %2638 = vrot.lane.b32.xlu0 %v2614, 89
  %v2639 = vpop.permute.xlu0 %2638
  %2640 = vrot.lane.b32.xlu0 %v2615, 89
  %v2641 = vpop.permute.xlu0 %2640
  %2642 = vrot.lane.b32.xlu0 %v2616, 89
  %v2643 = vpop.permute.xlu0 %2642
  %v2653 = vadd.f32 %v2563, %v2627
  %v2654 = vadd.f32 %v2564, %v2629
  %v2655 = vadd.f32 %v2565, %v2631
  %v2656 = vadd.f32 %v2566, %v2633
  %v2657 = vadd.f32 %v2567, %v2635
  %v2658 = vadd.f32 %v2568, %v2637
  %v2659 = vadd.f32 %v2569, %v2639
  %v2660 = vadd.f32 %v2570, %v2641
  %v2661 = vadd.f32 %v2571, %v2643
  %2662 = vset.pattern.permute.xlu0 8
  %2663 = vperm.xlu0 %2662, %v1924
  %v2664 = vpop.permute.xlu0 %2663
  %2666 = vset.pattern.permute.xlu0 8
  %2667 = vperm.xlu0 %2666, %v1925
  %v2668 = vpop.permute.xlu0 %2667
  %2670 = vset.pattern.permute.xlu0 8
  %2671 = vperm.xlu0 %2670, %v1926
  %v2672 = vpop.permute.xlu0 %2671
  %2674 = vset.pattern.permute.xlu0 8
  %2675 = vperm.xlu0 %2674, %v1927
  %v2676 = vpop.permute.xlu0 %2675
  %2678 = vset.pattern.permute.xlu0 8
  %2679 = vperm.xlu0 %2678, %v1928
  %v2680 = vpop.permute.xlu0 %2679
  %2682 = vset.pattern.permute.xlu0 8
  %2683 = vperm.xlu0 %2682, %v1929
  %v2684 = vpop.permute.xlu0 %2683
  %2686 = vset.pattern.permute.xlu0 8
  %2687 = vperm.xlu0 %2686, %v1930
  %v2688 = vpop.permute.xlu0 %2687
  %2690 = vset.pattern.permute.xlu0 8
  %2691 = vperm.xlu0 %2690, %v1931
  %v2692 = vpop.permute.xlu0 %2691
  %2694 = vset.pattern.permute.xlu0 8
  %2695 = vperm.xlu0 %2694, %v1932
  %v2696 = vpop.permute.xlu0 %2695
  %v2698 = vmul.f32 %v1914, %v2664
  %v2699 = vmul.f32 %v1915, %v2668
  %v2700 = vmul.f32 %v1916, %v2672
  %v2701 = vmul.f32 %v1917, %v2676
  %v2702 = vmul.f32 %v1918, %v2680
  %v2703 = vmul.f32 %v1919, %v2684
  %v2704 = vmul.f32 %v1920, %v2688
  %v2705 = vmul.f32 %v1921, %v2692
  %v2706 = vmul.f32 %v1922, %v2696
  %2716 = vrot.lane.b32.xlu0 %v2698, 88
  %v2717 = vpop.permute.xlu0 %2716
  %2718 = vrot.lane.b32.xlu0 %v2699, 88
  %v2719 = vpop.permute.xlu0 %2718
  %2720 = vrot.lane.b32.xlu0 %v2700, 88
  %v2721 = vpop.permute.xlu0 %2720
  %2722 = vrot.lane.b32.xlu0 %v2701, 88
  %v2723 = vpop.permute.xlu0 %2722
  %2724 = vrot.lane.b32.xlu0 %v2702, 88
  %v2725 = vpop.permute.xlu0 %2724
  %2726 = vrot.lane.b32.xlu0 %v2703, 88
  %v2727 = vpop.permute.xlu0 %2726
  %2728 = vrot.lane.b32.xlu0 %v2704, 88
  %v2729 = vpop.permute.xlu0 %2728
  %2730 = vrot.lane.b32.xlu0 %v2705, 88
  %v2731 = vpop.permute.xlu0 %2730
  %2732 = vrot.lane.b32.xlu0 %v2706, 88
  %v2733 = vpop.permute.xlu0 %2732
  %v2743 = vadd.f32 %v2653, %v2717
  %v2744 = vadd.f32 %v2654, %v2719
  %v2745 = vadd.f32 %v2655, %v2721
  %v2746 = vadd.f32 %v2656, %v2723
  %v2747 = vadd.f32 %v2657, %v2725
  %v2748 = vadd.f32 %v2658, %v2727
  %v2749 = vadd.f32 %v2659, %v2729
  %v2750 = vadd.f32 %v2660, %v2731
  %v2751 = vadd.f32 %v2661, %v2733
  %v2752 = vmul.f32 %v2743, 0.5
  %v2753 = vmul.f32 %v2744, 0.5
  %v2754 = vmul.f32 %v2745, 0.5
  %v2755 = vmul.f32 %v2746, 0.5
  %v2756 = vmul.f32 %v2747, 0.5
  %v2757 = vmul.f32 %v2748, 0.5
  %v2758 = vmul.f32 %v2749, 0.5
  %v2759 = vmul.f32 %v2750, 0.5
  %v2760 = vmul.f32 %v2751, 0.5
  %v2761 = vmul.f32 %v2743, %v2743
  %v2762 = vmul.f32 %v2744, %v2744
  %v2763 = vmul.f32 %v2745, %v2745
  %v2764 = vmul.f32 %v2746, %v2746
  %v2765 = vmul.f32 %v2747, %v2747
  %v2766 = vmul.f32 %v2748, %v2748
  %v2767 = vmul.f32 %v2749, %v2749
  %v2768 = vmul.f32 %v2750, %v2750
  %v2769 = vmul.f32 %v2751, %v2751
  %v2770 = vmul.f32 %v2761, %v2743
  %v2771 = vmul.f32 %v2762, %v2744
  %v2772 = vmul.f32 %v2763, %v2745
  %v2773 = vmul.f32 %v2764, %v2746
  %v2774 = vmul.f32 %v2765, %v2747
  %v2775 = vmul.f32 %v2766, %v2748
  %v2776 = vmul.f32 %v2767, %v2749
  %v2777 = vmul.f32 %v2768, %v2750
  %v2778 = vmul.f32 %v2769, %v2751
  %v2779 = vmul.f32 %v2770, 0.044715
  %v2780 = vmul.f32 %v2771, 0.044715
  %v2781 = vmul.f32 %v2772, 0.044715
  %v2782 = vmul.f32 %v2773, 0.044715
  %v2783 = vmul.f32 %v2774, 0.044715
  %v2784 = vmul.f32 %v2775, 0.044715
  %v2785 = vmul.f32 %v2776, 0.044715
  %v2786 = vmul.f32 %v2777, 0.044715
  %v2787 = vmul.f32 %v2778, 0.044715
  %v2788 = vadd.f32 %v2743, %v2779
  %v2789 = vadd.f32 %v2744, %v2780
  %v2790 = vadd.f32 %v2745, %v2781
  %v2791 = vadd.f32 %v2746, %v2782
  %v2792 = vadd.f32 %v2747, %v2783
  %v2793 = vadd.f32 %v2748, %v2784
  %v2794 = vadd.f32 %v2749, %v2785
  %v2795 = vadd.f32 %v2750, %v2786
  %v2796 = vadd.f32 %v2751, %v2787
  %v2797 = vmul.f32 %v2788, 0.7978846
  %v2798 = vmul.f32 %v2789, 0.7978846
  %v2799 = vmul.f32 %v2790, 0.7978846
  %v2800 = vmul.f32 %v2791, 0.7978846
  %v2801 = vmul.f32 %v2792, 0.7978846
  %v2802 = vmul.f32 %v2793, 0.7978846
  %v2803 = vmul.f32 %v2794, 0.7978846
  %v2804 = vmul.f32 %v2795, 0.7978846
  %v2805 = vmul.f32 %v2796, 0.7978846
  %v2806 = vtanh.pop %v2797
  %v2807 = vtanh.pop %v2798
  %v2808 = vtanh.pop %v2799
  %v2809 = vtanh.pop %v2800
  %v2810 = vtanh.pop %v2801
  %v2811 = vtanh.pop %v2802
  %v2812 = vtanh.pop %v2803
  %v2813 = vtanh.pop %v2804
  %v2814 = vtanh.pop %v2805
  %v2815 = vadd.f32 %v2806, 1.0
  %v2816 = vadd.f32 %v2807, 1.0
  %v2817 = vadd.f32 %v2808, 1.0
  %v2818 = vadd.f32 %v2809, 1.0
  %v2819 = vadd.f32 %v2810, 1.0
  %v2820 = vadd.f32 %v2811, 1.0
  %v2821 = vadd.f32 %v2812, 1.0
  %v2822 = vadd.f32 %v2813, 1.0
  %v2823 = vadd.f32 %v2814, 1.0
  %v2824 = vmul.f32 %v2752, %v2815
  %v2825 = vmul.f32 %v2753, %v2816
  %v2826 = vmul.f32 %v2754, %v2817
  %v2827 = vmul.f32 %v2755, %v2818
  %v2828 = vmul.f32 %v2756, %v2819
  %v2829 = vmul.f32 %v2757, %v2820
  %v2830 = vmul.f32 %v2758, %v2821
  %v2831 = vmul.f32 %v2759, %v2822
  %v2832 = vmul.f32 %v2760, %v2823
  %2842 = vrot.lane.b32.xlu0 %v2824, 34
  %v2843 = vpop.permute.xlu0 %2842
  %2844 = vrot.lane.b32.xlu0 %v2825, 34
  %v2845 = vpop.permute.xlu0 %2844
  %2846 = vrot.lane.b32.xlu0 %v2826, 34
  %v2847 = vpop.permute.xlu0 %2846
  %2848 = vrot.lane.b32.xlu0 %v2827, 34
  %v2849 = vpop.permute.xlu0 %2848
  %2850 = vrot.lane.b32.xlu0 %v2828, 34
  %v2851 = vpop.permute.xlu0 %2850
  %2852 = vrot.lane.b32.xlu0 %v2829, 34
  %v2853 = vpop.permute.xlu0 %2852
  %2854 = vrot.lane.b32.xlu0 %v2830, 34
  %v2855 = vpop.permute.xlu0 %2854
  %2856 = vrot.lane.b32.xlu0 %v2831, 34
  %v2857 = vpop.permute.xlu0 %2856
  %2858 = vrot.lane.b32.xlu0 %v2832, 34
  %v2859 = vpop.permute.xlu0 %2858
  %vm2869 = vcmask 417040
  %2870 = vst.msk [vmem:[#allocation2] sm:$0xff] %vm2869, %v2843
  %2871 = vst.msk [vmem:[#allocation2 + $0x10] sm:$0xff] %vm2869, %v2845
  %2872 = vst.msk [vmem:[#allocation2 + $0x20] sm:$0xff] %vm2869, %v2847
  %2873 = vst.msk [vmem:[#allocation2 + $0x30] sm:$0xff] %vm2869, %v2849
  %2874 = vst.msk [vmem:[#allocation2 + $0x40] sm:$0xff] %vm2869, %v2851
  %2875 = vst.msk [vmem:[#allocation2 + $0x50] sm:$0xff] %vm2869, %v2853
  %2876 = vst.msk [vmem:[#allocation2 + $0x60] sm:$0xff] %vm2869, %v2855
  %2877 = vst.msk [vmem:[#allocation2 + $0x70] sm:$0xff] %vm2869, %v2857
  %vm2878 = vcmask 412944
  %2879 = vst.msk [vmem:[#allocation2 + $0x80] sm:$0xf] %vm2878, %v2859
  %s2880 = scalar_lea.vmem %s0, 216
  %v2881 = vld [vmem:[%s2880] sm:$0xff]
  %v2882 = vld [vmem:[%s2880 + $0x8] sm:$0xff]
  %v2883 = vld [vmem:[%s2880 + $0x10] sm:$0xff]
  %v2884 = vld [vmem:[%s2880 + $0x18] sm:$0xff]
  %v2885 = vld [vmem:[%s2880 + $0x20] sm:$0xff]
  %v2886 = vld [vmem:[%s2880 + $0x28] sm:$0xff]
  %v2887 = vld [vmem:[%s2880 + $0x30] sm:$0xff]
  %v2888 = vld [vmem:[%s2880 + $0x38] sm:$0xff]
  %v2889 = vld [vmem:[%s2880 + $0x40] sm:$0xf]
  %s2890 = scalar_lea.vmem %s1, 216
  %v2891 = vld [vmem:[%s2890] sm:$0xff]
  %v2892 = vld [vmem:[%s2890 + $0x8] sm:$0xff]
  %v2893 = vld [vmem:[%s2890 + $0x10] sm:$0xff]
  %v2894 = vld [vmem:[%s2890 + $0x18] sm:$0xff]
  %v2895 = vld [vmem:[%s2890 + $0x20] sm:$0xff]
  %v2896 = vld [vmem:[%s2890 + $0x28] sm:$0xff]
  %v2897 = vld [vmem:[%s2890 + $0x30] sm:$0xff]
  %v2898 = vld [vmem:[%s2890 + $0x38] sm:$0xff]
  %v2899 = vld [vmem:[%s2890 + $0x40] sm:$0xf]
  %2901 = vset.pattern.permute.xlu0 9
  %2902 = vperm.xlu0 %2901, %v2891
  %v2903 = vpop.permute.xlu0 %2902
  %2906 = vset.pattern.permute.xlu0 9
  %2907 = vperm.xlu0 %2906, %v2892
  %v2908 = vpop.permute.xlu0 %2907
  %2911 = vset.pattern.permute.xlu0 9
  %2912 = vperm.xlu0 %2911, %v2893
  %v2913 = vpop.permute.xlu0 %2912
  %2916 = vset.pattern.permute.xlu0 9
  %2917 = vperm.xlu0 %2916, %v2894
  %v2918 = vpop.permute.xlu0 %2917
  %2921 = vset.pattern.permute.xlu0 9
  %2922 = vperm.xlu0 %2921, %v2895
  %v2923 = vpop.permute.xlu0 %2922
  %2926 = vset.pattern.permute.xlu0 9
  %2927 = vperm.xlu0 %2926, %v2896
  %v2928 = vpop.permute.xlu0 %2927
  %2931 = vset.pattern.permute.xlu0 9
  %2932 = vperm.xlu0 %2931, %v2897
  %v2933 = vpop.permute.xlu0 %2932
  %2936 = vset.pattern.permute.xlu0 9
  %2937 = vperm.xlu0 %2936, %v2898
  %v2938 = vpop.permute.xlu0 %2937
  %2941 = vset.pattern.permute.xlu0 9
  %2942 = vperm.xlu0 %2941, %v2899
  %v2943 = vpop.permute.xlu0 %2942
  %2945 = vset.pattern.permute.xlu0 0
  %2946 = vperm.xlu0 %2945, %v2891
  %v2947 = vpop.permute.xlu0 %2946
  %2949 = vset.pattern.permute.xlu0 0
  %2950 = vperm.xlu0 %2949, %v2892
  %v2951 = vpop.permute.xlu0 %2950
  %2953 = vset.pattern.permute.xlu0 0
  %2954 = vperm.xlu0 %2953, %v2893
  %v2955 = vpop.permute.xlu0 %2954
  %2957 = vset.pattern.permute.xlu0 0
  %2958 = vperm.xlu0 %2957, %v2894
  %v2959 = vpop.permute.xlu0 %2958
  %2961 = vset.pattern.permute.xlu0 0
  %2962 = vperm.xlu0 %2961, %v2895
  %v2963 = vpop.permute.xlu0 %2962
  %2965 = vset.pattern.permute.xlu0 0
  %2966 = vperm.xlu0 %2965, %v2896
  %v2967 = vpop.permute.xlu0 %2966
  %2969 = vset.pattern.permute.xlu0 0
  %2970 = vperm.xlu0 %2969, %v2897
  %v2971 = vpop.permute.xlu0 %2970
  %2973 = vset.pattern.permute.xlu0 0
  %2974 = vperm.xlu0 %2973, %v2898
  %v2975 = vpop.permute.xlu0 %2974
  %2977 = vset.pattern.permute.xlu0 0
  %2978 = vperm.xlu0 %2977, %v2899
  %v2979 = vpop.permute.xlu0 %2978
  %v2981 = vmul.f32 %v2881, %v2947
  %v2982 = vmul.f32 %v2882, %v2951
  %v2983 = vmul.f32 %v2883, %v2955
  %v2984 = vmul.f32 %v2884, %v2959
  %v2985 = vmul.f32 %v2885, %v2963
  %v2986 = vmul.f32 %v2886, %v2967
  %v2987 = vmul.f32 %v2887, %v2971
  %v2988 = vmul.f32 %v2888, %v2975
  %v2989 = vmul.f32 %v2889, %v2979
  %v2990 = vadd.f32 %v2903, %v2981
  %v2991 = vadd.f32 %v2908, %v2982
  %v2992 = vadd.f32 %v2913, %v2983
  %v2993 = vadd.f32 %v2918, %v2984
  %v2994 = vadd.f32 %v2923, %v2985
  %v2995 = vadd.f32 %v2928, %v2986
  %v2996 = vadd.f32 %v2933, %v2987
  %v2997 = vadd.f32 %v2938, %v2988
  %v2998 = vadd.f32 %v2943, %v2989
  %2999 = vset.pattern.permute.xlu0 1
  %3000 = vperm.xlu0 %2999, %v2891
  %v3001 = vpop.permute.xlu0 %3000
  %3003 = vset.pattern.permute.xlu0 1
  %3004 = vperm.xlu0 %3003, %v2892
  %v3005 = vpop.permute.xlu0 %3004
  %3007 = vset.pattern.permute.xlu0 1
  %3008 = vperm.xlu0 %3007, %v2893
  %v3009 = vpop.permute.xlu0 %3008
  %3011 = vset.pattern.permute.xlu0 1
  %3012 = vperm.xlu0 %3011, %v2894
  %v3013 = vpop.permute.xlu0 %3012
  %3015 = vset.pattern.permute.xlu0 1
  %3016 = vperm.xlu0 %3015, %v2895
  %v3017 = vpop.permute.xlu0 %3016
  %3019 = vset.pattern.permute.xlu0 1
  %3020 = vperm.xlu0 %3019, %v2896
  %v3021 = vpop.permute.xlu0 %3020
  %3023 = vset.pattern.permute.xlu0 1
  %3024 = vperm.xlu0 %3023, %v2897
  %v3025 = vpop.permute.xlu0 %3024
  %3027 = vset.pattern.permute.xlu0 1
  %3028 = vperm.xlu0 %3027, %v2898
  %v3029 = vpop.permute.xlu0 %3028
  %3031 = vset.pattern.permute.xlu0 1
  %3032 = vperm.xlu0 %3031, %v2899
  %v3033 = vpop.permute.xlu0 %3032
  %v3035 = vmul.f32 %v2881, %v3001
  %v3036 = vmul.f32 %v2882, %v3005
  %v3037 = vmul.f32 %v2883, %v3009
  %v3038 = vmul.f32 %v2884, %v3013
  %v3039 = vmul.f32 %v2885, %v3017
  %v3040 = vmul.f32 %v2886, %v3021
  %v3041 = vmul.f32 %v2887, %v3025
  %v3042 = vmul.f32 %v2888, %v3029
  %v3043 = vmul.f32 %v2889, %v3033
  %3053 = vrot.lane.b32.xlu0 %v3035, 127
  %v3054 = vpop.permute.xlu0 %3053
  %3055 = vrot.lane.b32.xlu0 %v3036, 127
  %v3056 = vpop.permute.xlu0 %3055
  %3057 = vrot.lane.b32.xlu0 %v3037, 127
  %v3058 = vpop.permute.xlu0 %3057
  %3059 = vrot.lane.b32.xlu0 %v3038, 127
  %v3060 = vpop.permute.xlu0 %3059
  %3061 = vrot.lane.b32.xlu0 %v3039, 127
  %v3062 = vpop.permute.xlu0 %3061
  %3063 = vrot.lane.b32.xlu0 %v3040, 127
  %v3064 = vpop.permute.xlu0 %3063
  %3065 = vrot.lane.b32.xlu0 %v3041, 127
  %v3066 = vpop.permute.xlu0 %3065
  %3067 = vrot.lane.b32.xlu0 %v3042, 127
  %v3068 = vpop.permute.xlu0 %3067
  %3069 = vrot.lane.b32.xlu0 %v3043, 127
  %v3070 = vpop.permute.xlu0 %3069
  %v3080 = vadd.f32 %v2990, %v3054
  %v3081 = vadd.f32 %v2991, %v3056
  %v3082 = vadd.f32 %v2992, %v3058
  %v3083 = vadd.f32 %v2993, %v3060
  %v3084 = vadd.f32 %v2994, %v3062
  %v3085 = vadd.f32 %v2995, %v3064
  %v3086 = vadd.f32 %v2996, %v3066
  %v3087 = vadd.f32 %v2997, %v3068
  %v3088 = vadd.f32 %v2998, %v3070
  %3089 = vset.pattern.permute.xlu0 2
  %3090 = vperm.xlu0 %3089, %v2891
  %v3091 = vpop.permute.xlu0 %3090
  %3093 = vset.pattern.permute.xlu0 2
  %3094 = vperm.xlu0 %3093, %v2892
  %v3095 = vpop.permute.xlu0 %3094
  %3097 = vset.pattern.permute.xlu0 2
  %3098 = vperm.xlu0 %3097, %v2893
  %v3099 = vpop.permute.xlu0 %3098
  %3101 = vset.pattern.permute.xlu0 2
  %3102 = vperm.xlu0 %3101, %v2894
  %v3103 = vpop.permute.xlu0 %3102
  %3105 = vset.pattern.permute.xlu0 2
  %3106 = vperm.xlu0 %3105, %v2895
  %v3107 = vpop.permute.xlu0 %3106
  %3109 = vset.pattern.permute.xlu0 2
  %3110 = vperm.xlu0 %3109, %v2896
  %v3111 = vpop.permute.xlu0 %3110
  %3113 = vset.pattern.permute.xlu0 2
  %3114 = vperm.xlu0 %3113, %v2897
  %v3115 = vpop.permute.xlu0 %3114
  %3117 = vset.pattern.permute.xlu0 2
  %3118 = vperm.xlu0 %3117, %v2898
  %v3119 = vpop.permute.xlu0 %3118
  %3121 = vset.pattern.permute.xlu0 2
  %3122 = vperm.xlu0 %3121, %v2899
  %v3123 = vpop.permute.xlu0 %3122
  %v3125 = vmul.f32 %v2881, %v3091
  %v3126 = vmul.f32 %v2882, %v3095
  %v3127 = vmul.f32 %v2883, %v3099
  %v3128 = vmul.f32 %v2884, %v3103
  %v3129 = vmul.f32 %v2885, %v3107
  %v3130 = vmul.f32 %v2886, %v3111
  %v3131 = vmul.f32 %v2887, %v3115
  %v3132 = vmul.f32 %v2888, %v3119
  %v3133 = vmul.f32 %v2889, %v3123
  %3143 = vrot.lane.b32.xlu0 %v3125, 126
  %v3144 = vpop.permute.xlu0 %3143
  %3145 = vrot.lane.b32.xlu0 %v3126, 126
  %v3146 = vpop.permute.xlu0 %3145
  %3147 = vrot.lane.b32.xlu0 %v3127, 126
  %v3148 = vpop.permute.xlu0 %3147
  %3149 = vrot.lane.b32.xlu0 %v3128, 126
  %v3150 = vpop.permute.xlu0 %3149
  %3151 = vrot.lane.b32.xlu0 %v3129, 126
  %v3152 = vpop.permute.xlu0 %3151
  %3153 = vrot.lane.b32.xlu0 %v3130, 126
  %v3154 = vpop.permute.xlu0 %3153
  %3155 = vrot.lane.b32.xlu0 %v3131, 126
  %v3156 = vpop.permute.xlu0 %3155
  %3157 = vrot.lane.b32.xlu0 %v3132, 126
  %v3158 = vpop.permute.xlu0 %3157
  %3159 = vrot.lane.b32.xlu0 %v3133, 126
  %v3160 = vpop.permute.xlu0 %3159
  %v3170 = vadd.f32 %v3080, %v3144
  %v3171 = vadd.f32 %v3081, %v3146
  %v3172 = vadd.f32 %v3082, %v3148
  %v3173 = vadd.f32 %v3083, %v3150
  %v3174 = vadd.f32 %v3084, %v3152
  %v3175 = vadd.f32 %v3085, %v3154
  %v3176 = vadd.f32 %v3086, %v3156
  %v3177 = vadd.f32 %v3087, %v3158
  %v3178 = vadd.f32 %v3088, %v3160
  %3179 = vset.pattern.permute.xlu0 3
  %3180 = vperm.xlu0 %3179, %v2891
  %v3181 = vpop.permute.xlu0 %3180
  %3183 = vset.pattern.permute.xlu0 3
  %3184 = vperm.xlu0 %3183, %v2892
  %v3185 = vpop.permute.xlu0 %3184
  %3187 = vset.pattern.permute.xlu0 3
  %3188 = vperm.xlu0 %3187, %v2893
  %v3189 = vpop.permute.xlu0 %3188
  %3191 = vset.pattern.permute.xlu0 3
  %3192 = vperm.xlu0 %3191, %v2894
  %v3193 = vpop.permute.xlu0 %3192
  %3195 = vset.pattern.permute.xlu0 3
  %3196 = vperm.xlu0 %3195, %v2895
  %v3197 = vpop.permute.xlu0 %3196
  %3199 = vset.pattern.permute.xlu0 3
  %3200 = vperm.xlu0 %3199, %v2896
  %v3201 = vpop.permute.xlu0 %3200
  %3203 = vset.pattern.permute.xlu0 3
  %3204 = vperm.xlu0 %3203, %v2897
  %v3205 = vpop.permute.xlu0 %3204
  %3207 = vset.pattern.permute.xlu0 3
  %3208 = vperm.xlu0 %3207, %v2898
  %v3209 = vpop.permute.xlu0 %3208
  %3211 = vset.pattern.permute.xlu0 3
  %3212 = vperm.xlu0 %3211, %v2899
  %v3213 = vpop.permute.xlu0 %3212
  %v3215 = vmul.f32 %v2881, %v3181
  %v3216 = vmul.f32 %v2882, %v3185
  %v3217 = vmul.f32 %v2883, %v3189
  %v3218 = vmul.f32 %v2884, %v3193
  %v3219 = vmul.f32 %v2885, %v3197
  %v3220 = vmul.f32 %v2886, %v3201
  %v3221 = vmul.f32 %v2887, %v3205
  %v3222 = vmul.f32 %v2888, %v3209
  %v3223 = vmul.f32 %v2889, %v3213
  %3233 = vrot.lane.b32.xlu0 %v3215, 109
  %v3234 = vpop.permute.xlu0 %3233
  %3235 = vrot.lane.b32.xlu0 %v3216, 109
  %v3236 = vpop.permute.xlu0 %3235
  %3237 = vrot.lane.b32.xlu0 %v3217, 109
  %v3238 = vpop.permute.xlu0 %3237
  %3239 = vrot.lane.b32.xlu0 %v3218, 109
  %v3240 = vpop.permute.xlu0 %3239
  %3241 = vrot.lane.b32.xlu0 %v3219, 109
  %v3242 = vpop.permute.xlu0 %3241
  %3243 = vrot.lane.b32.xlu0 %v3220, 109
  %v3244 = vpop.permute.xlu0 %3243
  %3245 = vrot.lane.b32.xlu0 %v3221, 109
  %v3246 = vpop.permute.xlu0 %3245
  %3247 = vrot.lane.b32.xlu0 %v3222, 109
  %v3248 = vpop.permute.xlu0 %3247
  %3249 = vrot.lane.b32.xlu0 %v3223, 109
  %v3250 = vpop.permute.xlu0 %3249
  %v3260 = vadd.f32 %v3170, %v3234
  %v3261 = vadd.f32 %v3171, %v3236
  %v3262 = vadd.f32 %v3172, %v3238
  %v3263 = vadd.f32 %v3173, %v3240
  %v3264 = vadd.f32 %v3174, %v3242
  %v3265 = vadd.f32 %v3175, %v3244
  %v3266 = vadd.f32 %v3176, %v3246
  %v3267 = vadd.f32 %v3177, %v3248
  %v3268 = vadd.f32 %v3178, %v3250
  %3269 = vset.pattern.permute.xlu0 4
  %3270 = vperm.xlu0 %3269, %v2891
  %v3271 = vpop.permute.xlu0 %3270
  %3273 = vset.pattern.permute.xlu0 4
  %3274 = vperm.xlu0 %3273, %v2892
  %v3275 = vpop.permute.xlu0 %3274
  %3277 = vset.pattern.permute.xlu0 4
  %3278 = vperm.xlu0 %3277, %v2893
  %v3279 = vpop.permute.xlu0 %3278
  %3281 = vset.pattern.permute.xlu0 4
  %3282 = vperm.xlu0 %3281, %v2894
  %v3283 = vpop.permute.xlu0 %3282
  %3285 = vset.pattern.permute.xlu0 4
  %3286 = vperm.xlu0 %3285, %v2895
  %v3287 = vpop.permute.xlu0 %3286
  %3289 = vset.pattern.permute.xlu0 4
  %3290 = vperm.xlu0 %3289, %v2896
  %v3291 = vpop.permute.xlu0 %3290
  %3293 = vset.pattern.permute.xlu0 4
  %3294 = vperm.xlu0 %3293, %v2897
  %v3295 = vpop.permute.xlu0 %3294
  %3297 = vset.pattern.permute.xlu0 4
  %3298 = vperm.xlu0 %3297, %v2898
  %v3299 = vpop.permute.xlu0 %3298
  %3301 = vset.pattern.permute.xlu0 4
  %3302 = vperm.xlu0 %3301, %v2899
  %v3303 = vpop.permute.xlu0 %3302
  %v3305 = vmul.f32 %v2881, %v3271
  %v3306 = vmul.f32 %v2882, %v3275
  %v3307 = vmul.f32 %v2883, %v3279
  %v3308 = vmul.f32 %v2884, %v3283
  %v3309 = vmul.f32 %v2885, %v3287
  %v3310 = vmul.f32 %v2886, %v3291
  %v3311 = vmul.f32 %v2887, %v3295
  %v3312 = vmul.f32 %v2888, %v3299
  %v3313 = vmul.f32 %v2889, %v3303
  %3323 = vrot.lane.b32.xlu0 %v3305, 108
  %v3324 = vpop.permute.xlu0 %3323
  %3325 = vrot.lane.b32.xlu0 %v3306, 108
  %v3326 = vpop.permute.xlu0 %3325
  %3327 = vrot.lane.b32.xlu0 %v3307, 108
  %v3328 = vpop.permute.xlu0 %3327
  %3329 = vrot.lane.b32.xlu0 %v3308, 108
  %v3330 = vpop.permute.xlu0 %3329
  %3331 = vrot.lane.b32.xlu0 %v3309, 108
  %v3332 = vpop.permute.xlu0 %3331
  %3333 = vrot.lane.b32.xlu0 %v3310, 108
  %v3334 = vpop.permute.xlu0 %3333
  %3335 = vrot.lane.b32.xlu0 %v3311, 108
  %v3336 = vpop.permute.xlu0 %3335
  %3337 = vrot.lane.b32.xlu0 %v3312, 108
  %v3338 = vpop.permute.xlu0 %3337
  %3339 = vrot.lane.b32.xlu0 %v3313, 108
  %v3340 = vpop.permute.xlu0 %3339
  %v3350 = vadd.f32 %v3260, %v3324
  %v3351 = vadd.f32 %v3261, %v3326
  %v3352 = vadd.f32 %v3262, %v3328
  %v3353 = vadd.f32 %v3263, %v3330
  %v3354 = vadd.f32 %v3264, %v3332
  %v3355 = vadd.f32 %v3265, %v3334
  %v3356 = vadd.f32 %v3266, %v3336
  %v3357 = vadd.f32 %v3267, %v3338
  %v3358 = vadd.f32 %v3268, %v3340
  %3359 = vset.pattern.permute.xlu0 5
  %3360 = vperm.xlu0 %3359, %v2891
  %v3361 = vpop.permute.xlu0 %3360
  %3363 = vset.pattern.permute.xlu0 5
  %3364 = vperm.xlu0 %3363, %v2892
  %v3365 = vpop.permute.xlu0 %3364
  %3367 = vset.pattern.permute.xlu0 5
  %3368 = vperm.xlu0 %3367, %v2893
  %v3369 = vpop.permute.xlu0 %3368
  %3371 = vset.pattern.permute.xlu0 5
  %3372 = vperm.xlu0 %3371, %v2894
  %v3373 = vpop.permute.xlu0 %3372
  %3375 = vset.pattern.permute.xlu0 5
  %3376 = vperm.xlu0 %3375, %v2895
  %v3377 = vpop.permute.xlu0 %3376
  %3379 = vset.pattern.permute.xlu0 5
  %3380 = vperm.xlu0 %3379, %v2896
  %v3381 = vpop.permute.xlu0 %3380
  %3383 = vset.pattern.permute.xlu0 5
  %3384 = vperm.xlu0 %3383, %v2897
  %v3385 = vpop.permute.xlu0 %3384
  %3387 = vset.pattern.permute.xlu0 5
  %3388 = vperm.xlu0 %3387, %v2898
  %v3389 = vpop.permute.xlu0 %3388
  %3391 = vset.pattern.permute.xlu0 5
  %3392 = vperm.xlu0 %3391, %v2899
  %v3393 = vpop.permute.xlu0 %3392
  %v3395 = vmul.f32 %v2881, %v3361
  %v3396 = vmul.f32 %v2882, %v3365
  %v3397 = vmul.f32 %v2883, %v3369
  %v3398 = vmul.f32 %v2884, %v3373
  %v3399 = vmul.f32 %v2885, %v3377
  %v3400 = vmul.f32 %v2886, %v3381
  %v3401 = vmul.f32 %v2887, %v3385
  %v3402 = vmul.f32 %v2888, %v3389
  %v3403 = vmul.f32 %v2889, %v3393
  %3413 = vrot.lane.b32.xlu0 %v3395, 107
  %v3414 = vpop.permute.xlu0 %3413
  %3415 = vrot.lane.b32.xlu0 %v3396, 107
  %v3416 = vpop.permute.xlu0 %3415
  %3417 = vrot.lane.b32.xlu0 %v3397, 107
  %v3418 = vpop.permute.xlu0 %3417
  %3419 = vrot.lane.b32.xlu0 %v3398, 107
  %v3420 = vpop.permute.xlu0 %3419
  %3421 = vrot.lane.b32.xlu0 %v3399, 107
  %v3422 = vpop.permute.xlu0 %3421
  %3423 = vrot.lane.b32.xlu0 %v3400, 107
  %v3424 = vpop.permute.xlu0 %3423
  %3425 = vrot.lane.b32.xlu0 %v3401, 107
  %v3426 = vpop.permute.xlu0 %3425
  %3427 = vrot.lane.b32.xlu0 %v3402, 107
  %v3428 = vpop.permute.xlu0 %3427
  %3429 = vrot.lane.b32.xlu0 %v3403, 107
  %v3430 = vpop.permute.xlu0 %3429
  %v3440 = vadd.f32 %v3350, %v3414
  %v3441 = vadd.f32 %v3351, %v3416
  %v3442 = vadd.f32 %v3352, %v3418
  %v3443 = vadd.f32 %v3353, %v3420
  %v3444 = vadd.f32 %v3354, %v3422
  %v3445 = vadd.f32 %v3355, %v3424
  %v3446 = vadd.f32 %v3356, %v3426
  %v3447 = vadd.f32 %v3357, %v3428
  %v3448 = vadd.f32 %v3358, %v3430
  %3449 = vset.pattern.permute.xlu0 6
  %3450 = vperm.xlu0 %3449, %v2891
  %v3451 = vpop.permute.xlu0 %3450
  %3453 = vset.pattern.permute.xlu0 6
  %3454 = vperm.xlu0 %3453, %v2892
  %v3455 = vpop.permute.xlu0 %3454
  %3457 = vset.pattern.permute.xlu0 6
  %3458 = vperm.xlu0 %3457, %v2893
  %v3459 = vpop.permute.xlu0 %3458
  %3461 = vset.pattern.permute.xlu0 6
  %3462 = vperm.xlu0 %3461, %v2894
  %v3463 = vpop.permute.xlu0 %3462
  %3465 = vset.pattern.permute.xlu0 6
  %3466 = vperm.xlu0 %3465, %v2895
  %v3467 = vpop.permute.xlu0 %3466
  %3469 = vset.pattern.permute.xlu0 6
  %3470 = vperm.xlu0 %3469, %v2896
  %v3471 = vpop.permute.xlu0 %3470
  %3473 = vset.pattern.permute.xlu0 6
  %3474 = vperm.xlu0 %3473, %v2897
  %v3475 = vpop.permute.xlu0 %3474
  %3477 = vset.pattern.permute.xlu0 6
  %3478 = vperm.xlu0 %3477, %v2898
  %v3479 = vpop.permute.xlu0 %3478
  %3481 = vset.pattern.permute.xlu0 6
  %3482 = vperm.xlu0 %3481, %v2899
  %v3483 = vpop.permute.xlu0 %3482
  %v3485 = vmul.f32 %v2881, %v3451
  %v3486 = vmul.f32 %v2882, %v3455
  %v3487 = vmul.f32 %v2883, %v3459
  %v3488 = vmul.f32 %v2884, %v3463
  %v3489 = vmul.f32 %v2885, %v3467
  %v3490 = vmul.f32 %v2886, %v3471
  %v3491 = vmul.f32 %v2887, %v3475
  %v3492 = vmul.f32 %v2888, %v3479
  %v3493 = vmul.f32 %v2889, %v3483
  %3503 = vrot.lane.b32.xlu0 %v3485, 90
  %v3504 = vpop.permute.xlu0 %3503
  %3505 = vrot.lane.b32.xlu0 %v3486, 90
  %v3506 = vpop.permute.xlu0 %3505
  %3507 = vrot.lane.b32.xlu0 %v3487, 90
  %v3508 = vpop.permute.xlu0 %3507
  %3509 = vrot.lane.b32.xlu0 %v3488, 90
  %v3510 = vpop.permute.xlu0 %3509
  %3511 = vrot.lane.b32.xlu0 %v3489, 90
  %v3512 = vpop.permute.xlu0 %3511
  %3513 = vrot.lane.b32.xlu0 %v3490, 90
  %v3514 = vpop.permute.xlu0 %3513
  %3515 = vrot.lane.b32.xlu0 %v3491, 90
  %v3516 = vpop.permute.xlu0 %3515
  %3517 = vrot.lane.b32.xlu0 %v3492, 90
  %v3518 = vpop.permute.xlu0 %3517
  %3519 = vrot.lane.b32.xlu0 %v3493, 90
  %v3520 = vpop.permute.xlu0 %3519
  %v3530 = vadd.f32 %v3440, %v3504
  %v3531 = vadd.f32 %v3441, %v3506
  %v3532 = vadd.f32 %v3442, %v3508
  %v3533 = vadd.f32 %v3443, %v3510
  %v3534 = vadd.f32 %v3444, %v3512
  %v3535 = vadd.f32 %v3445, %v3514
  %v3536 = vadd.f32 %v3446, %v3516
  %v3537 = vadd.f32 %v3447, %v3518
  %v3538 = vadd.f32 %v3448, %v3520
  %3539 = vset.pattern.permute.xlu0 7
  %3540 = vperm.xlu0 %3539, %v2891
  %v3541 = vpop.permute.xlu0 %3540
  %3543 = vset.pattern.permute.xlu0 7
  %3544 = vperm.xlu0 %3543, %v2892
  %v3545 = vpop.permute.xlu0 %3544
  %3547 = vset.pattern.permute.xlu0 7
  %3548 = vperm.xlu0 %3547, %v2893
  %v3549 = vpop.permute.xlu0 %3548
  %3551 = vset.pattern.permute.xlu0 7
  %3552 = vperm.xlu0 %3551, %v2894
  %v3553 = vpop.permute.xlu0 %3552
  %3555 = vset.pattern.permute.xlu0 7
  %3556 = vperm.xlu0 %3555, %v2895
  %v3557 = vpop.permute.xlu0 %3556
  %3559 = vset.pattern.permute.xlu0 7
  %3560 = vperm.xlu0 %3559, %v2896
  %v3561 = vpop.permute.xlu0 %3560
  %3563 = vset.pattern.permute.xlu0 7
  %3564 = vperm.xlu0 %3563, %v2897
  %v3565 = vpop.permute.xlu0 %3564
  %3567 = vset.pattern.permute.xlu0 7
  %3568 = vperm.xlu0 %3567, %v2898
  %v3569 = vpop.permute.xlu0 %3568
  %3571 = vset.pattern.permute.xlu0 7
  %3572 = vperm.xlu0 %3571, %v2899
  %v3573 = vpop.permute.xlu0 %3572
  %v3575 = vmul.f32 %v2881, %v3541
  %v3576 = vmul.f32 %v2882, %v3545
  %v3577 = vmul.f32 %v2883, %v3549
  %v3578 = vmul.f32 %v2884, %v3553
  %v3579 = vmul.f32 %v2885, %v3557
  %v3580 = vmul.f32 %v2886, %v3561
  %v3581 = vmul.f32 %v2887, %v3565
  %v3582 = vmul.f32 %v2888, %v3569
  %v3583 = vmul.f32 %v2889, %v3573
  %3593 = vrot.lane.b32.xlu0 %v3575, 89
  %v3594 = vpop.permute.xlu0 %3593
  %3595 = vrot.lane.b32.xlu0 %v3576, 89
  %v3596 = vpop.permute.xlu0 %3595
  %3597 = vrot.lane.b32.xlu0 %v3577, 89
  %v3598 = vpop.permute.xlu0 %3597
  %3599 = vrot.lane.b32.xlu0 %v3578, 89
  %v3600 = vpop.permute.xlu0 %3599
  %3601 = vrot.lane.b32.xlu0 %v3579, 89
  %v3602 = vpop.permute.xlu0 %3601
  %3603 = vrot.lane.b32.xlu0 %v3580, 89
  %v3604 = vpop.permute.xlu0 %3603
  %3605 = vrot.lane.b32.xlu0 %v3581, 89
  %v3606 = vpop.permute.xlu0 %3605
  %3607 = vrot.lane.b32.xlu0 %v3582, 89
  %v3608 = vpop.permute.xlu0 %3607
  %3609 = vrot.lane.b32.xlu0 %v3583, 89
  %v3610 = vpop.permute.xlu0 %3609
  %v3620 = vadd.f32 %v3530, %v3594
  %v3621 = vadd.f32 %v3531, %v3596
  %v3622 = vadd.f32 %v3532, %v3598
  %v3623 = vadd.f32 %v3533, %v3600
  %v3624 = vadd.f32 %v3534, %v3602
  %v3625 = vadd.f32 %v3535, %v3604
  %v3626 = vadd.f32 %v3536, %v3606
  %v3627 = vadd.f32 %v3537, %v3608
  %v3628 = vadd.f32 %v3538, %v3610
  %3629 = vset.pattern.permute.xlu0 8
  %3630 = vperm.xlu0 %3629, %v2891
  %v3631 = vpop.permute.xlu0 %3630
  %3633 = vset.pattern.permute.xlu0 8
  %3634 = vperm.xlu0 %3633, %v2892
  %v3635 = vpop.permute.xlu0 %3634
  %3637 = vset.pattern.permute.xlu0 8
  %3638 = vperm.xlu0 %3637, %v2893
  %v3639 = vpop.permute.xlu0 %3638
  %3641 = vset.pattern.permute.xlu0 8
  %3642 = vperm.xlu0 %3641, %v2894
  %v3643 = vpop.permute.xlu0 %3642
  %3645 = vset.pattern.permute.xlu0 8
  %3646 = vperm.xlu0 %3645, %v2895
  %v3647 = vpop.permute.xlu0 %3646
  %3649 = vset.pattern.permute.xlu0 8
  %3650 = vperm.xlu0 %3649, %v2896
  %v3651 = vpop.permute.xlu0 %3650
  %3653 = vset.pattern.permute.xlu0 8
  %3654 = vperm.xlu0 %3653, %v2897
  %v3655 = vpop.permute.xlu0 %3654
  %3657 = vset.pattern.permute.xlu0 8
  %3658 = vperm.xlu0 %3657, %v2898
  %v3659 = vpop.permute.xlu0 %3658
  %3661 = vset.pattern.permute.xlu0 8
  %3662 = vperm.xlu0 %3661, %v2899
  %v3663 = vpop.permute.xlu0 %3662
  %v3665 = vmul.f32 %v2881, %v3631
  %v3666 = vmul.f32 %v2882, %v3635
  %v3667 = vmul.f32 %v2883, %v3639
  %v3668 = vmul.f32 %v2884, %v3643
  %v3669 = vmul.f32 %v2885, %v3647
  %v3670 = vmul.f32 %v2886, %v3651
  %v3671 = vmul.f32 %v2887, %v3655
  %v3672 = vmul.f32 %v2888, %v3659
  %v3673 = vmul.f32 %v2889, %v3663
  %3683 = vrot.lane.b32.xlu0 %v3665, 88
  %v3684 = vpop.permute.xlu0 %3683
  %3685 = vrot.lane.b32.xlu0 %v3666, 88
  %v3686 = vpop.permute.xlu0 %3685
  %3687 = vrot.lane.b32.xlu0 %v3667, 88
  %v3688 = vpop.permute.xlu0 %3687
  %3689 = vrot.lane.b32.xlu0 %v3668, 88
  %v3690 = vpop.permute.xlu0 %3689
  %3691 = vrot.lane.b32.xlu0 %v3669, 88
  %v3692 = vpop.permute.xlu0 %3691
  %3693 = vrot.lane.b32.xlu0 %v3670, 88
  %v3694 = vpop.permute.xlu0 %3693
  %3695 = vrot.lane.b32.xlu0 %v3671, 88
  %v3696 = vpop.permute.xlu0 %3695
  %3697 = vrot.lane.b32.xlu0 %v3672, 88
  %v3698 = vpop.permute.xlu0 %3697
  %3699 = vrot.lane.b32.xlu0 %v3673, 88
  %v3700 = vpop.permute.xlu0 %3699
  %v3710 = vadd.f32 %v3620, %v3684
  %v3711 = vadd.f32 %v3621, %v3686
  %v3712 = vadd.f32 %v3622, %v3688
  %v3713 = vadd.f32 %v3623, %v3690
  %v3714 = vadd.f32 %v3624, %v3692
  %v3715 = vadd.f32 %v3625, %v3694
  %v3716 = vadd.f32 %v3626, %v3696
  %v3717 = vadd.f32 %v3627, %v3698
  %v3718 = vadd.f32 %v3628, %v3700
  %v3719 = vmul.f32 %v3710, 0.5
  %v3720 = vmul.f32 %v3711, 0.5
  %v3721 = vmul.f32 %v3712, 0.5
  %v3722 = vmul.f32 %v3713, 0.5
  %v3723 = vmul.f32 %v3714, 0.5
  %v3724 = vmul.f32 %v3715, 0.5
  %v3725 = vmul.f32 %v3716, 0.5
  %v3726 = vmul.f32 %v3717, 0.5
  %v3727 = vmul.f32 %v3718, 0.5
  %v3728 = vmul.f32 %v3710, %v3710
  %v3729 = vmul.f32 %v3711, %v3711
  %v3730 = vmul.f32 %v3712, %v3712
  %v3731 = vmul.f32 %v3713, %v3713
  %v3732 = vmul.f32 %v3714, %v3714
  %v3733 = vmul.f32 %v3715, %v3715
  %v3734 = vmul.f32 %v3716, %v3716
  %v3735 = vmul.f32 %v3717, %v3717
  %v3736 = vmul.f32 %v3718, %v3718
  %v3737 = vmul.f32 %v3728, %v3710
  %v3738 = vmul.f32 %v3729, %v3711
  %v3739 = vmul.f32 %v3730, %v3712
  %v3740 = vmul.f32 %v3731, %v3713
  %v3741 = vmul.f32 %v3732, %v3714
  %v3742 = vmul.f32 %v3733, %v3715
  %v3743 = vmul.f32 %v3734, %v3716
  %v3744 = vmul.f32 %v3735, %v3717
  %v3745 = vmul.f32 %v3736, %v3718
  %v3746 = vmul.f32 %v3737, 0.044715
  %v3747 = vmul.f32 %v3738, 0.044715
  %v3748 = vmul.f32 %v3739, 0.044715
  %v3749 = vmul.f32 %v3740, 0.044715
  %v3750 = vmul.f32 %v3741, 0.044715
  %v3751 = vmul.f32 %v3742, 0.044715
  %v3752 = vmul.f32 %v3743, 0.044715
  %v3753 = vmul.f32 %v3744, 0.044715
  %v3754 = vmul.f32 %v3745, 0.044715
  %v3755 = vadd.f32 %v3710, %v3746
  %v3756 = vadd.f32 %v3711, %v3747
  %v3757 = vadd.f32 %v3712, %v3748
  %v3758 = vadd.f32 %v3713, %v3749
  %v3759 = vadd.f32 %v3714, %v3750
  %v3760 = vadd.f32 %v3715, %v3751
  %v3761 = vadd.f32 %v3716, %v3752
  %v3762 = vadd.f32 %v3717, %v3753
  %v3763 = vadd.f32 %v3718, %v3754
  %v3764 = vmul.f32 %v3755, 0.7978846
  %v3765 = vmul.f32 %v3756, 0.7978846
  %v3766 = vmul.f32 %v3757, 0.7978846
  %v3767 = vmul.f32 %v3758, 0.7978846
  %v3768 = vmul.f32 %v3759, 0.7978846
  %v3769 = vmul.f32 %v3760, 0.7978846
  %v3770 = vmul.f32 %v3761, 0.7978846
  %v3771 = vmul.f32 %v3762, 0.7978846
  %v3772 = vmul.f32 %v3763, 0.7978846
  %v3773 = vtanh.pop %v3764
  %v3774 = vtanh.pop %v3765
  %v3775 = vtanh.pop %v3766
  %v3776 = vtanh.pop %v3767
  %v3777 = vtanh.pop %v3768
  %v3778 = vtanh.pop %v3769
  %v3779 = vtanh.pop %v3770
  %v3780 = vtanh.pop %v3771
  %v3781 = vtanh.pop %v3772
  %v3782 = vadd.f32 %v3773, 1.0
  %v3783 = vadd.f32 %v3774, 1.0
  %v3784 = vadd.f32 %v3775, 1.0
  %v3785 = vadd.f32 %v3776, 1.0
  %v3786 = vadd.f32 %v3777, 1.0
  %v3787 = vadd.f32 %v3778, 1.0
  %v3788 = vadd.f32 %v3779, 1.0
  %v3789 = vadd.f32 %v3780, 1.0
  %v3790 = vadd.f32 %v3781, 1.0
  %v3791 = vmul.f32 %v3719, %v3782
  %v3792 = vmul.f32 %v3720, %v3783
  %v3793 = vmul.f32 %v3721, %v3784
  %v3794 = vmul.f32 %v3722, %v3785
  %v3795 = vmul.f32 %v3723, %v3786
  %v3796 = vmul.f32 %v3724, %v3787
  %v3797 = vmul.f32 %v3725, %v3788
  %v3798 = vmul.f32 %v3726, %v3789
  %v3799 = vmul.f32 %v3727, %v3790
  %3809 = vrot.lane.b32.xlu0 %v3791, 51
  %v3810 = vpop.permute.xlu0 %3809
  %3811 = vrot.lane.b32.xlu0 %v3792, 51
  %v3812 = vpop.permute.xlu0 %3811
  %3813 = vrot.lane.b32.xlu0 %v3793, 51
  %v3814 = vpop.permute.xlu0 %3813
  %3815 = vrot.lane.b32.xlu0 %v3794, 51
  %v3816 = vpop.permute.xlu0 %3815
  %3817 = vrot.lane.b32.xlu0 %v3795, 51
  %v3818 = vpop.permute.xlu0 %3817
  %3819 = vrot.lane.b32.xlu0 %v3796, 51
  %v3820 = vpop.permute.xlu0 %3819
  %3821 = vrot.lane.b32.xlu0 %v3797, 51
  %v3822 = vpop.permute.xlu0 %3821
  %3823 = vrot.lane.b32.xlu0 %v3798, 51
  %v3824 = vpop.permute.xlu0 %3823
  %3825 = vrot.lane.b32.xlu0 %v3799, 51
  %v3826 = vpop.permute.xlu0 %3825
  %vm3836 = vcmask 556440
  %3837 = vst.msk [vmem:[#allocation2] sm:$0xff] %vm3836, %v3810
  %3838 = vst.msk [vmem:[#allocation2 + $0x10] sm:$0xff] %vm3836, %v3812
  %3839 = vst.msk [vmem:[#allocation2 + $0x20] sm:$0xff] %vm3836, %v3814
  %3840 = vst.msk [vmem:[#allocation2 + $0x30] sm:$0xff] %vm3836, %v3816
  %3841 = vst.msk [vmem:[#allocation2 + $0x40] sm:$0xff] %vm3836, %v3818
  %3842 = vst.msk [vmem:[#allocation2 + $0x50] sm:$0xff] %vm3836, %v3820
  %3843 = vst.msk [vmem:[#allocation2 + $0x60] sm:$0xff] %vm3836, %v3822
  %3844 = vst.msk [vmem:[#allocation2 + $0x70] sm:$0xff] %vm3836, %v3824
  %vm3845 = vcmask 552344
  %3846 = vst.msk [vmem:[#allocation2 + $0x80] sm:$0xf] %vm3845, %v3826
  %s3847 = scalar_lea.vmem %s0, 288
  %v3848 = vld [vmem:[%s3847] sm:$0xff]
  %v3849 = vld [vmem:[%s3847 + $0x8] sm:$0xff]
  %v3850 = vld [vmem:[%s3847 + $0x10] sm:$0xff]
  %v3851 = vld [vmem:[%s3847 + $0x18] sm:$0xff]
  %v3852 = vld [vmem:[%s3847 + $0x20] sm:$0xff]
  %v3853 = vld [vmem:[%s3847 + $0x28] sm:$0xff]
  %v3854 = vld [vmem:[%s3847 + $0x30] sm:$0xff]
  %v3855 = vld [vmem:[%s3847 + $0x38] sm:$0xff]
  %v3856 = vld [vmem:[%s3847 + $0x40] sm:$0xf]
  %s3857 = scalar_lea.vmem %s1, 288
  %v3858 = vld [vmem:[%s3857] sm:$0xff]
  %v3859 = vld [vmem:[%s3857 + $0x8] sm:$0xff]
  %v3860 = vld [vmem:[%s3857 + $0x10] sm:$0xff]
  %v3861 = vld [vmem:[%s3857 + $0x18] sm:$0xff]
  %v3862 = vld [vmem:[%s3857 + $0x20] sm:$0xff]
  %v3863 = vld [vmem:[%s3857 + $0x28] sm:$0xff]
  %v3864 = vld [vmem:[%s3857 + $0x30] sm:$0xff]
  %v3865 = vld [vmem:[%s3857 + $0x38] sm:$0xff]
  %v3866 = vld [vmem:[%s3857 + $0x40] sm:$0xf]
  %3868 = vset.pattern.permute.xlu0 9
  %3869 = vperm.xlu0 %3868, %v3858
  %v3870 = vpop.permute.xlu0 %3869
  %3873 = vset.pattern.permute.xlu0 9
  %3874 = vperm.xlu0 %3873, %v3859
  %v3875 = vpop.permute.xlu0 %3874
  %3878 = vset.pattern.permute.xlu0 9
  %3879 = vperm.xlu0 %3878, %v3860
  %v3880 = vpop.permute.xlu0 %3879
  %3883 = vset.pattern.permute.xlu0 9
  %3884 = vperm.xlu0 %3883, %v3861
  %v3885 = vpop.permute.xlu0 %3884
  %3888 = vset.pattern.permute.xlu0 9
  %3889 = vperm.xlu0 %3888, %v3862
  %v3890 = vpop.permute.xlu0 %3889
  %3893 = vset.pattern.permute.xlu0 9
  %3894 = vperm.xlu0 %3893, %v3863
  %v3895 = vpop.permute.xlu0 %3894
  %3898 = vset.pattern.permute.xlu0 9
  %3899 = vperm.xlu0 %3898, %v3864
  %v3900 = vpop.permute.xlu0 %3899
  %3903 = vset.pattern.permute.xlu0 9
  %3904 = vperm.xlu0 %3903, %v3865
  %v3905 = vpop.permute.xlu0 %3904
  %3908 = vset.pattern.permute.xlu0 9
  %3909 = vperm.xlu0 %3908, %v3866
  %v3910 = vpop.permute.xlu0 %3909
  %3912 = vset.pattern.permute.xlu0 0
  %3913 = vperm.xlu0 %3912, %v3858
  %v3914 = vpop.permute.xlu0 %3913
  %3916 = vset.pattern.permute.xlu0 0
  %3917 = vperm.xlu0 %3916, %v3859
  %v3918 = vpop.permute.xlu0 %3917
  %3920 = vset.pattern.permute.xlu0 0
  %3921 = vperm.xlu0 %3920, %v3860
  %v3922 = vpop.permute.xlu0 %3921
  %3924 = vset.pattern.permute.xlu0 0
  %3925 = vperm.xlu0 %3924, %v3861
  %v3926 = vpop.permute.xlu0 %3925
  %3928 = vset.pattern.permute.xlu0 0
  %3929 = vperm.xlu0 %3928, %v3862
  %v3930 = vpop.permute.xlu0 %3929
  %3932 = vset.pattern.permute.xlu0 0
  %3933 = vperm.xlu0 %3932, %v3863
  %v3934 = vpop.permute.xlu0 %3933
  %3936 = vset.pattern.permute.xlu0 0
  %3937 = vperm.xlu0 %3936, %v3864
  %v3938 = vpop.permute.xlu0 %3937
  %3940 = vset.pattern.permute.xlu0 0
  %3941 = vperm.xlu0 %3940, %v3865
  %v3942 = vpop.permute.xlu0 %3941
  %3944 = vset.pattern.permute.xlu0 0
  %3945 = vperm.xlu0 %3944, %v3866
  %v3946 = vpop.permute.xlu0 %3945
  %v3948 = vmul.f32 %v3848, %v3914
  %v3949 = vmul.f32 %v3849, %v3918
  %v3950 = vmul.f32 %v3850, %v3922
  %v3951 = vmul.f32 %v3851, %v3926
  %v3952 = vmul.f32 %v3852, %v3930
  %v3953 = vmul.f32 %v3853, %v3934
  %v3954 = vmul.f32 %v3854, %v3938
  %v3955 = vmul.f32 %v3855, %v3942
  %v3956 = vmul.f32 %v3856, %v3946
  %v3957 = vadd.f32 %v3870, %v3948
  %v3958 = vadd.f32 %v3875, %v3949
  %v3959 = vadd.f32 %v3880, %v3950
  %v3960 = vadd.f32 %v3885, %v3951
  %v3961 = vadd.f32 %v3890, %v3952
  %v3962 = vadd.f32 %v3895, %v3953
  %v3963 = vadd.f32 %v3900, %v3954
  %v3964 = vadd.f32 %v3905, %v3955
  %v3965 = vadd.f32 %v3910, %v3956
  %3966 = vset.pattern.permute.xlu0 1
  %3967 = vperm.xlu0 %3966, %v3858
  %v3968 = vpop.permute.xlu0 %3967
  %3970 = vset.pattern.permute.xlu0 1
  %3971 = vperm.xlu0 %3970, %v3859
  %v3972 = vpop.permute.xlu0 %3971
  %3974 = vset.pattern.permute.xlu0 1
  %3975 = vperm.xlu0 %3974, %v3860
  %v3976 = vpop.permute.xlu0 %3975
  %3978 = vset.pattern.permute.xlu0 1
  %3979 = vperm.xlu0 %3978, %v3861
  %v3980 = vpop.permute.xlu0 %3979
  %3982 = vset.pattern.permute.xlu0 1
  %3983 = vperm.xlu0 %3982, %v3862
  %v3984 = vpop.permute.xlu0 %3983
  %3986 = vset.pattern.permute.xlu0 1
  %3987 = vperm.xlu0 %3986, %v3863
  %v3988 = vpop.permute.xlu0 %3987
  %3990 = vset.pattern.permute.xlu0 1
  %3991 = vperm.xlu0 %3990, %v3864
  %v3992 = vpop.permute.xlu0 %3991
  %3994 = vset.pattern.permute.xlu0 1
  %3995 = vperm.xlu0 %3994, %v3865
  %v3996 = vpop.permute.xlu0 %3995
  %3998 = vset.pattern.permute.xlu0 1
  %3999 = vperm.xlu0 %3998, %v3866
  %v4000 = vpop.permute.xlu0 %3999
  %v4002 = vmul.f32 %v3848, %v3968
  %v4003 = vmul.f32 %v3849, %v3972
  %v4004 = vmul.f32 %v3850, %v3976
  %v4005 = vmul.f32 %v3851, %v3980
  %v4006 = vmul.f32 %v3852, %v3984
  %v4007 = vmul.f32 %v3853, %v3988
  %v4008 = vmul.f32 %v3854, %v3992
  %v4009 = vmul.f32 %v3855, %v3996
  %v4010 = vmul.f32 %v3856, %v4000
  %4020 = vrot.lane.b32.xlu0 %v4002, 127
  %v4021 = vpop.permute.xlu0 %4020
  %4022 = vrot.lane.b32.xlu0 %v4003, 127
  %v4023 = vpop.permute.xlu0 %4022
  %4024 = vrot.lane.b32.xlu0 %v4004, 127
  %v4025 = vpop.permute.xlu0 %4024
  %4026 = vrot.lane.b32.xlu0 %v4005, 127
  %v4027 = vpop.permute.xlu0 %4026
  %4028 = vrot.lane.b32.xlu0 %v4006, 127
  %v4029 = vpop.permute.xlu0 %4028
  %4030 = vrot.lane.b32.xlu0 %v4007, 127
  %v4031 = vpop.permute.xlu0 %4030
  %4032 = vrot.lane.b32.xlu0 %v4008, 127
  %v4033 = vpop.permute.xlu0 %4032
  %4034 = vrot.lane.b32.xlu0 %v4009, 127
  %v4035 = vpop.permute.xlu0 %4034
  %4036 = vrot.lane.b32.xlu0 %v4010, 127
  %v4037 = vpop.permute.xlu0 %4036
  %v4047 = vadd.f32 %v3957, %v4021
  %v4048 = vadd.f32 %v3958, %v4023
  %v4049 = vadd.f32 %v3959, %v4025
  %v4050 = vadd.f32 %v3960, %v4027
  %v4051 = vadd.f32 %v3961, %v4029
  %v4052 = vadd.f32 %v3962, %v4031
  %v4053 = vadd.f32 %v3963, %v4033
  %v4054 = vadd.f32 %v3964, %v4035
  %v4055 = vadd.f32 %v3965, %v4037
  %4056 = vset.pattern.permute.xlu0 2
  %4057 = vperm.xlu0 %4056, %v3858
  %v4058 = vpop.permute.xlu0 %4057
  %4060 = vset.pattern.permute.xlu0 2
  %4061 = vperm.xlu0 %4060, %v3859
  %v4062 = vpop.permute.xlu0 %4061
  %4064 = vset.pattern.permute.xlu0 2
  %4065 = vperm.xlu0 %4064, %v3860
  %v4066 = vpop.permute.xlu0 %4065
  %4068 = vset.pattern.permute.xlu0 2
  %4069 = vperm.xlu0 %4068, %v3861
  %v4070 = vpop.permute.xlu0 %4069
  %4072 = vset.pattern.permute.xlu0 2
  %4073 = vperm.xlu0 %4072, %v3862
  %v4074 = vpop.permute.xlu0 %4073
  %4076 = vset.pattern.permute.xlu0 2
  %4077 = vperm.xlu0 %4076, %v3863
  %v4078 = vpop.permute.xlu0 %4077
  %4080 = vset.pattern.permute.xlu0 2
  %4081 = vperm.xlu0 %4080, %v3864
  %v4082 = vpop.permute.xlu0 %4081
  %4084 = vset.pattern.permute.xlu0 2
  %4085 = vperm.xlu0 %4084, %v3865
  %v4086 = vpop.permute.xlu0 %4085
  %4088 = vset.pattern.permute.xlu0 2
  %4089 = vperm.xlu0 %4088, %v3866
  %v4090 = vpop.permute.xlu0 %4089
  %v4092 = vmul.f32 %v3848, %v4058
  %v4093 = vmul.f32 %v3849, %v4062
  %v4094 = vmul.f32 %v3850, %v4066
  %v4095 = vmul.f32 %v3851, %v4070
  %v4096 = vmul.f32 %v3852, %v4074
  %v4097 = vmul.f32 %v3853, %v4078
  %v4098 = vmul.f32 %v3854, %v4082
  %v4099 = vmul.f32 %v3855, %v4086
  %v4100 = vmul.f32 %v3856, %v4090
  %4110 = vrot.lane.b32.xlu0 %v4092, 126
  %v4111 = vpop.permute.xlu0 %4110
  %4112 = vrot.lane.b32.xlu0 %v4093, 126
  %v4113 = vpop.permute.xlu0 %4112
  %4114 = vrot.lane.b32.xlu0 %v4094, 126
  %v4115 = vpop.permute.xlu0 %4114
  %4116 = vrot.lane.b32.xlu0 %v4095, 126
  %v4117 = vpop.permute.xlu0 %4116
  %4118 = vrot.lane.b32.xlu0 %v4096, 126
  %v4119 = vpop.permute.xlu0 %4118
  %4120 = vrot.lane.b32.xlu0 %v4097, 126
  %v4121 = vpop.permute.xlu0 %4120
  %4122 = vrot.lane.b32.xlu0 %v4098, 126
  %v4123 = vpop.permute.xlu0 %4122
  %4124 = vrot.lane.b32.xlu0 %v4099, 126
  %v4125 = vpop.permute.xlu0 %4124
  %4126 = vrot.lane.b32.xlu0 %v4100, 126
  %v4127 = vpop.permute.xlu0 %4126
  %v4137 = vadd.f32 %v4047, %v4111
  %v4138 = vadd.f32 %v4048, %v4113
  %v4139 = vadd.f32 %v4049, %v4115
  %v4140 = vadd.f32 %v4050, %v4117
  %v4141 = vadd.f32 %v4051, %v4119
  %v4142 = vadd.f32 %v4052, %v4121
  %v4143 = vadd.f32 %v4053, %v4123
  %v4144 = vadd.f32 %v4054, %v4125
  %v4145 = vadd.f32 %v4055, %v4127
  %4146 = vset.pattern.permute.xlu0 3
  %4147 = vperm.xlu0 %4146, %v3858
  %v4148 = vpop.permute.xlu0 %4147
  %4150 = vset.pattern.permute.xlu0 3
  %4151 = vperm.xlu0 %4150, %v3859
  %v4152 = vpop.permute.xlu0 %4151
  %4154 = vset.pattern.permute.xlu0 3
  %4155 = vperm.xlu0 %4154, %v3860
  %v4156 = vpop.permute.xlu0 %4155
  %4158 = vset.pattern.permute.xlu0 3
  %4159 = vperm.xlu0 %4158, %v3861
  %v4160 = vpop.permute.xlu0 %4159
  %4162 = vset.pattern.permute.xlu0 3
  %4163 = vperm.xlu0 %4162, %v3862
  %v4164 = vpop.permute.xlu0 %4163
  %4166 = vset.pattern.permute.xlu0 3
  %4167 = vperm.xlu0 %4166, %v3863
  %v4168 = vpop.permute.xlu0 %4167
  %4170 = vset.pattern.permute.xlu0 3
  %4171 = vperm.xlu0 %4170, %v3864
  %v4172 = vpop.permute.xlu0 %4171
  %4174 = vset.pattern.permute.xlu0 3
  %4175 = vperm.xlu0 %4174, %v3865
  %v4176 = vpop.permute.xlu0 %4175
  %4178 = vset.pattern.permute.xlu0 3
  %4179 = vperm.xlu0 %4178, %v3866
  %v4180 = vpop.permute.xlu0 %4179
  %v4182 = vmul.f32 %v3848, %v4148
  %v4183 = vmul.f32 %v3849, %v4152
  %v4184 = vmul.f32 %v3850, %v4156
  %v4185 = vmul.f32 %v3851, %v4160
  %v4186 = vmul.f32 %v3852, %v4164
  %v4187 = vmul.f32 %v3853, %v4168
  %v4188 = vmul.f32 %v3854, %v4172
  %v4189 = vmul.f32 %v3855, %v4176
  %v4190 = vmul.f32 %v3856, %v4180
  %4200 = vrot.lane.b32.xlu0 %v4182, 109
  %v4201 = vpop.permute.xlu0 %4200
  %4202 = vrot.lane.b32.xlu0 %v4183, 109
  %v4203 = vpop.permute.xlu0 %4202
  %4204 = vrot.lane.b32.xlu0 %v4184, 109
  %v4205 = vpop.permute.xlu0 %4204
  %4206 = vrot.lane.b32.xlu0 %v4185, 109
  %v4207 = vpop.permute.xlu0 %4206
  %4208 = vrot.lane.b32.xlu0 %v4186, 109
  %v4209 = vpop.permute.xlu0 %4208
  %4210 = vrot.lane.b32.xlu0 %v4187, 109
  %v4211 = vpop.permute.xlu0 %4210
  %4212 = vrot.lane.b32.xlu0 %v4188, 109
  %v4213 = vpop.permute.xlu0 %4212
  %4214 = vrot.lane.b32.xlu0 %v4189, 109
  %v4215 = vpop.permute.xlu0 %4214
  %4216 = vrot.lane.b32.xlu0 %v4190, 109
  %v4217 = vpop.permute.xlu0 %4216
  %v4227 = vadd.f32 %v4137, %v4201
  %v4228 = vadd.f32 %v4138, %v4203
  %v4229 = vadd.f32 %v4139, %v4205
  %v4230 = vadd.f32 %v4140, %v4207
  %v4231 = vadd.f32 %v4141, %v4209
  %v4232 = vadd.f32 %v4142, %v4211
  %v4233 = vadd.f32 %v4143, %v4213
  %v4234 = vadd.f32 %v4144, %v4215
  %v4235 = vadd.f32 %v4145, %v4217
  %4236 = vset.pattern.permute.xlu0 4
  %4237 = vperm.xlu0 %4236, %v3858
  %v4238 = vpop.permute.xlu0 %4237
  %4240 = vset.pattern.permute.xlu0 4
  %4241 = vperm.xlu0 %4240, %v3859
  %v4242 = vpop.permute.xlu0 %4241
  %4244 = vset.pattern.permute.xlu0 4
  %4245 = vperm.xlu0 %4244, %v3860
  %v4246 = vpop.permute.xlu0 %4245
  %4248 = vset.pattern.permute.xlu0 4
  %4249 = vperm.xlu0 %4248, %v3861
  %v4250 = vpop.permute.xlu0 %4249
  %4252 = vset.pattern.permute.xlu0 4
  %4253 = vperm.xlu0 %4252, %v3862
  %v4254 = vpop.permute.xlu0 %4253
  %4256 = vset.pattern.permute.xlu0 4
  %4257 = vperm.xlu0 %4256, %v3863
  %v4258 = vpop.permute.xlu0 %4257
  %4260 = vset.pattern.permute.xlu0 4
  %4261 = vperm.xlu0 %4260, %v3864
  %v4262 = vpop.permute.xlu0 %4261
  %4264 = vset.pattern.permute.xlu0 4
  %4265 = vperm.xlu0 %4264, %v3865
  %v4266 = vpop.permute.xlu0 %4265
  %4268 = vset.pattern.permute.xlu0 4
  %4269 = vperm.xlu0 %4268, %v3866
  %v4270 = vpop.permute.xlu0 %4269
  %v4272 = vmul.f32 %v3848, %v4238
  %v4273 = vmul.f32 %v3849, %v4242
  %v4274 = vmul.f32 %v3850, %v4246
  %v4275 = vmul.f32 %v3851, %v4250
  %v4276 = vmul.f32 %v3852, %v4254
  %v4277 = vmul.f32 %v3853, %v4258
  %v4278 = vmul.f32 %v3854, %v4262
  %v4279 = vmul.f32 %v3855, %v4266
  %v4280 = vmul.f32 %v3856, %v4270
  %4290 = vrot.lane.b32.xlu0 %v4272, 108
  %v4291 = vpop.permute.xlu0 %4290
  %4292 = vrot.lane.b32.xlu0 %v4273, 108
  %v4293 = vpop.permute.xlu0 %4292
  %4294 = vrot.lane.b32.xlu0 %v4274, 108
  %v4295 = vpop.permute.xlu0 %4294
  %4296 = vrot.lane.b32.xlu0 %v4275, 108
  %v4297 = vpop.permute.xlu0 %4296
  %4298 = vrot.lane.b32.xlu0 %v4276, 108
  %v4299 = vpop.permute.xlu0 %4298
  %4300 = vrot.lane.b32.xlu0 %v4277, 108
  %v4301 = vpop.permute.xlu0 %4300
  %4302 = vrot.lane.b32.xlu0 %v4278, 108
  %v4303 = vpop.permute.xlu0 %4302
  %4304 = vrot.lane.b32.xlu0 %v4279, 108
  %v4305 = vpop.permute.xlu0 %4304
  %4306 = vrot.lane.b32.xlu0 %v4280, 108
  %v4307 = vpop.permute.xlu0 %4306
  %v4317 = vadd.f32 %v4227, %v4291
  %v4318 = vadd.f32 %v4228, %v4293
  %v4319 = vadd.f32 %v4229, %v4295
  %v4320 = vadd.f32 %v4230, %v4297
  %v4321 = vadd.f32 %v4231, %v4299
  %v4322 = vadd.f32 %v4232, %v4301
  %v4323 = vadd.f32 %v4233, %v4303
  %v4324 = vadd.f32 %v4234, %v4305
  %v4325 = vadd.f32 %v4235, %v4307
  %4326 = vset.pattern.permute.xlu0 5
  %4327 = vperm.xlu0 %4326, %v3858
  %v4328 = vpop.permute.xlu0 %4327
  %4330 = vset.pattern.permute.xlu0 5
  %4331 = vperm.xlu0 %4330, %v3859
  %v4332 = vpop.permute.xlu0 %4331
  %4334 = vset.pattern.permute.xlu0 5
  %4335 = vperm.xlu0 %4334, %v3860
  %v4336 = vpop.permute.xlu0 %4335
  %4338 = vset.pattern.permute.xlu0 5
  %4339 = vperm.xlu0 %4338, %v3861
  %v4340 = vpop.permute.xlu0 %4339
  %4342 = vset.pattern.permute.xlu0 5
  %4343 = vperm.xlu0 %4342, %v3862
  %v4344 = vpop.permute.xlu0 %4343
  %4346 = vset.pattern.permute.xlu0 5
  %4347 = vperm.xlu0 %4346, %v3863
  %v4348 = vpop.permute.xlu0 %4347
  %4350 = vset.pattern.permute.xlu0 5
  %4351 = vperm.xlu0 %4350, %v3864
  %v4352 = vpop.permute.xlu0 %4351
  %4354 = vset.pattern.permute.xlu0 5
  %4355 = vperm.xlu0 %4354, %v3865
  %v4356 = vpop.permute.xlu0 %4355
  %4358 = vset.pattern.permute.xlu0 5
  %4359 = vperm.xlu0 %4358, %v3866
  %v4360 = vpop.permute.xlu0 %4359
  %v4362 = vmul.f32 %v3848, %v4328
  %v4363 = vmul.f32 %v3849, %v4332
  %v4364 = vmul.f32 %v3850, %v4336
  %v4365 = vmul.f32 %v3851, %v4340
  %v4366 = vmul.f32 %v3852, %v4344
  %v4367 = vmul.f32 %v3853, %v4348
  %v4368 = vmul.f32 %v3854, %v4352
  %v4369 = vmul.f32 %v3855, %v4356
  %v4370 = vmul.f32 %v3856, %v4360
  %4380 = vrot.lane.b32.xlu0 %v4362, 107
  %v4381 = vpop.permute.xlu0 %4380
  %4382 = vrot.lane.b32.xlu0 %v4363, 107
  %v4383 = vpop.permute.xlu0 %4382
  %4384 = vrot.lane.b32.xlu0 %v4364, 107
  %v4385 = vpop.permute.xlu0 %4384
  %4386 = vrot.lane.b32.xlu0 %v4365, 107
  %v4387 = vpop.permute.xlu0 %4386
  %4388 = vrot.lane.b32.xlu0 %v4366, 107
  %v4389 = vpop.permute.xlu0 %4388
  %4390 = vrot.lane.b32.xlu0 %v4367, 107
  %v4391 = vpop.permute.xlu0 %4390
  %4392 = vrot.lane.b32.xlu0 %v4368, 107
  %v4393 = vpop.permute.xlu0 %4392
  %4394 = vrot.lane.b32.xlu0 %v4369, 107
  %v4395 = vpop.permute.xlu0 %4394
  %4396 = vrot.lane.b32.xlu0 %v4370, 107
  %v4397 = vpop.permute.xlu0 %4396
  %v4407 = vadd.f32 %v4317, %v4381
  %v4408 = vadd.f32 %v4318, %v4383
  %v4409 = vadd.f32 %v4319, %v4385
  %v4410 = vadd.f32 %v4320, %v4387
  %v4411 = vadd.f32 %v4321, %v4389
  %v4412 = vadd.f32 %v4322, %v4391
  %v4413 = vadd.f32 %v4323, %v4393
  %v4414 = vadd.f32 %v4324, %v4395
  %v4415 = vadd.f32 %v4325, %v4397
  %4416 = vset.pattern.permute.xlu0 6
  %4417 = vperm.xlu0 %4416, %v3858
  %v4418 = vpop.permute.xlu0 %4417
  %4420 = vset.pattern.permute.xlu0 6
  %4421 = vperm.xlu0 %4420, %v3859
  %v4422 = vpop.permute.xlu0 %4421
  %4424 = vset.pattern.permute.xlu0 6
  %4425 = vperm.xlu0 %4424, %v3860
  %v4426 = vpop.permute.xlu0 %4425
  %4428 = vset.pattern.permute.xlu0 6
  %4429 = vperm.xlu0 %4428, %v3861
  %v4430 = vpop.permute.xlu0 %4429
  %4432 = vset.pattern.permute.xlu0 6
  %4433 = vperm.xlu0 %4432, %v3862
  %v4434 = vpop.permute.xlu0 %4433
  %4436 = vset.pattern.permute.xlu0 6
  %4437 = vperm.xlu0 %4436, %v3863
  %v4438 = vpop.permute.xlu0 %4437
  %4440 = vset.pattern.permute.xlu0 6
  %4441 = vperm.xlu0 %4440, %v3864
  %v4442 = vpop.permute.xlu0 %4441
  %4444 = vset.pattern.permute.xlu0 6
  %4445 = vperm.xlu0 %4444, %v3865
  %v4446 = vpop.permute.xlu0 %4445
  %4448 = vset.pattern.permute.xlu0 6
  %4449 = vperm.xlu0 %4448, %v3866
  %v4450 = vpop.permute.xlu0 %4449
  %v4452 = vmul.f32 %v3848, %v4418
  %v4453 = vmul.f32 %v3849, %v4422
  %v4454 = vmul.f32 %v3850, %v4426
  %v4455 = vmul.f32 %v3851, %v4430
  %v4456 = vmul.f32 %v3852, %v4434
  %v4457 = vmul.f32 %v3853, %v4438
  %v4458 = vmul.f32 %v3854, %v4442
  %v4459 = vmul.f32 %v3855, %v4446
  %v4460 = vmul.f32 %v3856, %v4450
  %4470 = vrot.lane.b32.xlu0 %v4452, 90
  %v4471 = vpop.permute.xlu0 %4470
  %4472 = vrot.lane.b32.xlu0 %v4453, 90
  %v4473 = vpop.permute.xlu0 %4472
  %4474 = vrot.lane.b32.xlu0 %v4454, 90
  %v4475 = vpop.permute.xlu0 %4474
  %4476 = vrot.lane.b32.xlu0 %v4455, 90
  %v4477 = vpop.permute.xlu0 %4476
  %4478 = vrot.lane.b32.xlu0 %v4456, 90
  %v4479 = vpop.permute.xlu0 %4478
  %4480 = vrot.lane.b32.xlu0 %v4457, 90
  %v4481 = vpop.permute.xlu0 %4480
  %4482 = vrot.lane.b32.xlu0 %v4458, 90
  %v4483 = vpop.permute.xlu0 %4482
  %4484 = vrot.lane.b32.xlu0 %v4459, 90
  %v4485 = vpop.permute.xlu0 %4484
  %4486 = vrot.lane.b32.xlu0 %v4460, 90
  %v4487 = vpop.permute.xlu0 %4486
  %v4497 = vadd.f32 %v4407, %v4471
  %v4498 = vadd.f32 %v4408, %v4473
  %v4499 = vadd.f32 %v4409, %v4475
  %v4500 = vadd.f32 %v4410, %v4477
  %v4501 = vadd.f32 %v4411, %v4479
  %v4502 = vadd.f32 %v4412, %v4481
  %v4503 = vadd.f32 %v4413, %v4483
  %v4504 = vadd.f32 %v4414, %v4485
  %v4505 = vadd.f32 %v4415, %v4487
  %4506 = vset.pattern.permute.xlu0 7
  %4507 = vperm.xlu0 %4506, %v3858
  %v4508 = vpop.permute.xlu0 %4507
  %4510 = vset.pattern.permute.xlu0 7
  %4511 = vperm.xlu0 %4510, %v3859
  %v4512 = vpop.permute.xlu0 %4511
  %4514 = vset.pattern.permute.xlu0 7
  %4515 = vperm.xlu0 %4514, %v3860
  %v4516 = vpop.permute.xlu0 %4515
  %4518 = vset.pattern.permute.xlu0 7
  %4519 = vperm.xlu0 %4518, %v3861
  %v4520 = vpop.permute.xlu0 %4519
  %4522 = vset.pattern.permute.xlu0 7
  %4523 = vperm.xlu0 %4522, %v3862
  %v4524 = vpop.permute.xlu0 %4523
  %4526 = vset.pattern.permute.xlu0 7
  %4527 = vperm.xlu0 %4526, %v3863
  %v4528 = vpop.permute.xlu0 %4527
  %4530 = vset.pattern.permute.xlu0 7
  %4531 = vperm.xlu0 %4530, %v3864
  %v4532 = vpop.permute.xlu0 %4531
  %4534 = vset.pattern.permute.xlu0 7
  %4535 = vperm.xlu0 %4534, %v3865
  %v4536 = vpop.permute.xlu0 %4535
  %4538 = vset.pattern.permute.xlu0 7
  %4539 = vperm.xlu0 %4538, %v3866
  %v4540 = vpop.permute.xlu0 %4539
  %v4542 = vmul.f32 %v3848, %v4508
  %v4543 = vmul.f32 %v3849, %v4512
  %v4544 = vmul.f32 %v3850, %v4516
  %v4545 = vmul.f32 %v3851, %v4520
  %v4546 = vmul.f32 %v3852, %v4524
  %v4547 = vmul.f32 %v3853, %v4528
  %v4548 = vmul.f32 %v3854, %v4532
  %v4549 = vmul.f32 %v3855, %v4536
  %v4550 = vmul.f32 %v3856, %v4540
  %4560 = vrot.lane.b32.xlu0 %v4542, 89
  %v4561 = vpop.permute.xlu0 %4560
  %4562 = vrot.lane.b32.xlu0 %v4543, 89
  %v4563 = vpop.permute.xlu0 %4562
  %4564 = vrot.lane.b32.xlu0 %v4544, 89
  %v4565 = vpop.permute.xlu0 %4564
  %4566 = vrot.lane.b32.xlu0 %v4545, 89
  %v4567 = vpop.permute.xlu0 %4566
  %4568 = vrot.lane.b32.xlu0 %v4546, 89
  %v4569 = vpop.permute.xlu0 %4568
  %4570 = vrot.lane.b32.xlu0 %v4547, 89
  %v4571 = vpop.permute.xlu0 %4570
  %4572 = vrot.lane.b32.xlu0 %v4548, 89
  %v4573 = vpop.permute.xlu0 %4572
  %4574 = vrot.lane.b32.xlu0 %v4549, 89
  %v4575 = vpop.permute.xlu0 %4574
  %4576 = vrot.lane.b32.xlu0 %v4550, 89
  %v4577 = vpop.permute.xlu0 %4576
  %v4587 = vadd.f32 %v4497, %v4561
  %v4588 = vadd.f32 %v4498, %v4563
  %v4589 = vadd.f32 %v4499, %v4565
  %v4590 = vadd.f32 %v4500, %v4567
  %v4591 = vadd.f32 %v4501, %v4569
  %v4592 = vadd.f32 %v4502, %v4571
  %v4593 = vadd.f32 %v4503, %v4573
  %v4594 = vadd.f32 %v4504, %v4575
  %v4595 = vadd.f32 %v4505, %v4577
  %4596 = vset.pattern.permute.xlu0 8
  %4597 = vperm.xlu0 %4596, %v3858
  %v4598 = vpop.permute.xlu0 %4597
  %4600 = vset.pattern.permute.xlu0 8
  %4601 = vperm.xlu0 %4600, %v3859
  %v4602 = vpop.permute.xlu0 %4601
  %4604 = vset.pattern.permute.xlu0 8
  %4605 = vperm.xlu0 %4604, %v3860
  %v4606 = vpop.permute.xlu0 %4605
  %4608 = vset.pattern.permute.xlu0 8
  %4609 = vperm.xlu0 %4608, %v3861
  %v4610 = vpop.permute.xlu0 %4609
  %4612 = vset.pattern.permute.xlu0 8
  %4613 = vperm.xlu0 %4612, %v3862
  %v4614 = vpop.permute.xlu0 %4613
  %4616 = vset.pattern.permute.xlu0 8
  %4617 = vperm.xlu0 %4616, %v3863
  %v4618 = vpop.permute.xlu0 %4617
  %4620 = vset.pattern.permute.xlu0 8
  %4621 = vperm.xlu0 %4620, %v3864
  %v4622 = vpop.permute.xlu0 %4621
  %4624 = vset.pattern.permute.xlu0 8
  %4625 = vperm.xlu0 %4624, %v3865
  %v4626 = vpop.permute.xlu0 %4625
  %4628 = vset.pattern.permute.xlu0 8
  %4629 = vperm.xlu0 %4628, %v3866
  %v4630 = vpop.permute.xlu0 %4629
  %v4632 = vmul.f32 %v3848, %v4598
  %v4633 = vmul.f32 %v3849, %v4602
  %v4634 = vmul.f32 %v3850, %v4606
  %v4635 = vmul.f32 %v3851, %v4610
  %v4636 = vmul.f32 %v3852, %v4614
  %v4637 = vmul.f32 %v3853, %v4618
  %v4638 = vmul.f32 %v3854, %v4622
  %v4639 = vmul.f32 %v3855, %v4626
  %v4640 = vmul.f32 %v3856, %v4630
  %4650 = vrot.lane.b32.xlu0 %v4632, 88
  %v4651 = vpop.permute.xlu0 %4650
  %4652 = vrot.lane.b32.xlu0 %v4633, 88
  %v4653 = vpop.permute.xlu0 %4652
  %4654 = vrot.lane.b32.xlu0 %v4634, 88
  %v4655 = vpop.permute.xlu0 %4654
  %4656 = vrot.lane.b32.xlu0 %v4635, 88
  %v4657 = vpop.permute.xlu0 %4656
  %4658 = vrot.lane.b32.xlu0 %v4636, 88
  %v4659 = vpop.permute.xlu0 %4658
  %4660 = vrot.lane.b32.xlu0 %v4637, 88
  %v4661 = vpop.permute.xlu0 %4660
  %4662 = vrot.lane.b32.xlu0 %v4638, 88
  %v4663 = vpop.permute.xlu0 %4662
  %4664 = vrot.lane.b32.xlu0 %v4639, 88
  %v4665 = vpop.permute.xlu0 %4664
  %4666 = vrot.lane.b32.xlu0 %v4640, 88
  %v4667 = vpop.permute.xlu0 %4666
  %v4677 = vadd.f32 %v4587, %v4651
  %v4678 = vadd.f32 %v4588, %v4653
  %v4679 = vadd.f32 %v4589, %v4655
  %v4680 = vadd.f32 %v4590, %v4657
  %v4681 = vadd.f32 %v4591, %v4659
  %v4682 = vadd.f32 %v4592, %v4661
  %v4683 = vadd.f32 %v4593, %v4663
  %v4684 = vadd.f32 %v4594, %v4665
  %v4685 = vadd.f32 %v4595, %v4667
  %v4686 = vmul.f32 %v4677, 0.5
  %v4687 = vmul.f32 %v4678, 0.5
  %v4688 = vmul.f32 %v4679, 0.5
  %v4689 = vmul.f32 %v4680, 0.5
  %v4690 = vmul.f32 %v4681, 0.5
  %v4691 = vmul.f32 %v4682, 0.5
  %v4692 = vmul.f32 %v4683, 0.5
  %v4693 = vmul.f32 %v4684, 0.5
  %v4694 = vmul.f32 %v4685, 0.5
  %v4695 = vmul.f32 %v4677, %v4677
  %v4696 = vmul.f32 %v4678, %v4678
  %v4697 = vmul.f32 %v4679, %v4679
  %v4698 = vmul.f32 %v4680, %v4680
  %v4699 = vmul.f32 %v4681, %v4681
  %v4700 = vmul.f32 %v4682, %v4682
  %v4701 = vmul.f32 %v4683, %v4683
  %v4702 = vmul.f32 %v4684, %v4684
  %v4703 = vmul.f32 %v4685, %v4685
  %v4704 = vmul.f32 %v4695, %v4677
  %v4705 = vmul.f32 %v4696, %v4678
  %v4706 = vmul.f32 %v4697, %v4679
  %v4707 = vmul.f32 %v4698, %v4680
  %v4708 = vmul.f32 %v4699, %v4681
  %v4709 = vmul.f32 %v4700, %v4682
  %v4710 = vmul.f32 %v4701, %v4683
  %v4711 = vmul.f32 %v4702, %v4684
  %v4712 = vmul.f32 %v4703, %v4685
  %v4713 = vmul.f32 %v4704, 0.044715
  %v4714 = vmul.f32 %v4705, 0.044715
  %v4715 = vmul.f32 %v4706, 0.044715
  %v4716 = vmul.f32 %v4707, 0.044715
  %v4717 = vmul.f32 %v4708, 0.044715
  %v4718 = vmul.f32 %v4709, 0.044715
  %v4719 = vmul.f32 %v4710, 0.044715
  %v4720 = vmul.f32 %v4711, 0.044715
  %v4721 = vmul.f32 %v4712, 0.044715
  %v4722 = vadd.f32 %v4677, %v4713
  %v4723 = vadd.f32 %v4678, %v4714
  %v4724 = vadd.f32 %v4679, %v4715
  %v4725 = vadd.f32 %v4680, %v4716
  %v4726 = vadd.f32 %v4681, %v4717
  %v4727 = vadd.f32 %v4682, %v4718
  %v4728 = vadd.f32 %v4683, %v4719
  %v4729 = vadd.f32 %v4684, %v4720
  %v4730 = vadd.f32 %v4685, %v4721
  %v4731 = vmul.f32 %v4722, 0.7978846
  %v4732 = vmul.f32 %v4723, 0.7978846
  %v4733 = vmul.f32 %v4724, 0.7978846
  %v4734 = vmul.f32 %v4725, 0.7978846
  %v4735 = vmul.f32 %v4726, 0.7978846
  %v4736 = vmul.f32 %v4727, 0.7978846
  %v4737 = vmul.f32 %v4728, 0.7978846
  %v4738 = vmul.f32 %v4729, 0.7978846
  %v4739 = vmul.f32 %v4730, 0.7978846
  %v4740 = vtanh.pop %v4731
  %v4741 = vtanh.pop %v4732
  %v4742 = vtanh.pop %v4733
  %v4743 = vtanh.pop %v4734
  %v4744 = vtanh.pop %v4735
  %v4745 = vtanh.pop %v4736
  %v4746 = vtanh.pop %v4737
  %v4747 = vtanh.pop %v4738
  %v4748 = vtanh.pop %v4739
  %v4749 = vadd.f32 %v4740, 1.0
  %v4750 = vadd.f32 %v4741, 1.0
  %v4751 = vadd.f32 %v4742, 1.0
  %v4752 = vadd.f32 %v4743, 1.0
  %v4753 = vadd.f32 %v4744, 1.0
  %v4754 = vadd.f32 %v4745, 1.0
  %v4755 = vadd.f32 %v4746, 1.0
  %v4756 = vadd.f32 %v4747, 1.0
  %v4757 = vadd.f32 %v4748, 1.0
  %v4758 = vmul.f32 %v4686, %v4749
  %v4759 = vmul.f32 %v4687, %v4750
  %v4760 = vmul.f32 %v4688, %v4751
  %v4761 = vmul.f32 %v4689, %v4752
  %v4762 = vmul.f32 %v4690, %v4753
  %v4763 = vmul.f32 %v4691, %v4754
  %v4764 = vmul.f32 %v4692, %v4755
  %v4765 = vmul.f32 %v4693, %v4756
  %v4766 = vmul.f32 %v4694, %v4757
  %4776 = vrot.lane.b32.xlu0 %v4758, 68
  %v4777 = vpop.permute.xlu0 %4776
  %4778 = vrot.lane.b32.xlu0 %v4759, 68
  %v4779 = vpop.permute.xlu0 %4778
  %4780 = vrot.lane.b32.xlu0 %v4760, 68
  %v4781 = vpop.permute.xlu0 %4780
  %4782 = vrot.lane.b32.xlu0 %v4761, 68
  %v4783 = vpop.permute.xlu0 %4782
  %4784 = vrot.lane.b32.xlu0 %v4762, 68
  %v4785 = vpop.permute.xlu0 %4784
  %4786 = vrot.lane.b32.xlu0 %v4763, 68
  %v4787 = vpop.permute.xlu0 %4786
  %4788 = vrot.lane.b32.xlu0 %v4764, 68
  %v4789 = vpop.permute.xlu0 %4788
  %4790 = vrot.lane.b32.xlu0 %v4765, 68
  %v4791 = vpop.permute.xlu0 %4790
  %4792 = vrot.lane.b32.xlu0 %v4766, 68
  %v4793 = vpop.permute.xlu0 %4792
  %vm4803 = vcmask 695840
  %4804 = vst.msk [vmem:[#allocation2] sm:$0xff] %vm4803, %v4777
  %4805 = vst.msk [vmem:[#allocation2 + $0x10] sm:$0xff] %vm4803, %v4779
  %4806 = vst.msk [vmem:[#allocation2 + $0x20] sm:$0xff] %vm4803, %v4781
  %4807 = vst.msk [vmem:[#allocation2 + $0x30] sm:$0xff] %vm4803, %v4783
  %4808 = vst.msk [vmem:[#allocation2 + $0x40] sm:$0xff] %vm4803, %v4785
  %4809 = vst.msk [vmem:[#allocation2 + $0x50] sm:$0xff] %vm4803, %v4787
  %4810 = vst.msk [vmem:[#allocation2 + $0x60] sm:$0xff] %vm4803, %v4789
  %4811 = vst.msk [vmem:[#allocation2 + $0x70] sm:$0xff] %vm4803, %v4791
  %vm4812 = vcmask 691744
  %4813 = vst.msk [vmem:[#allocation2 + $0x80] sm:$0xf] %vm4812, %v4793
  %s4814 = scalar_lea.vmem %s0, 360
  %v4815 = vld [vmem:[%s4814] sm:$0xff]
  %v4816 = vld [vmem:[%s4814 + $0x8] sm:$0xff]
  %v4817 = vld [vmem:[%s4814 + $0x10] sm:$0xff]
  %v4818 = vld [vmem:[%s4814 + $0x18] sm:$0xff]
  %v4819 = vld [vmem:[%s4814 + $0x20] sm:$0xff]
  %v4820 = vld [vmem:[%s4814 + $0x28] sm:$0xff]
  %v4821 = vld [vmem:[%s4814 + $0x30] sm:$0xff]
  %v4822 = vld [vmem:[%s4814 + $0x38] sm:$0xff]
  %v4823 = vld [vmem:[%s4814 + $0x40] sm:$0xf]
  %s4824 = scalar_lea.vmem %s1, 360
  %v4825 = vld [vmem:[%s4824] sm:$0xff]
  %v4826 = vld [vmem:[%s4824 + $0x8] sm:$0xff]
  %v4827 = vld [vmem:[%s4824 + $0x10] sm:$0xff]
  %v4828 = vld [vmem:[%s4824 + $0x18] sm:$0xff]
  %v4829 = vld [vmem:[%s4824 + $0x20] sm:$0xff]
  %v4830 = vld [vmem:[%s4824 + $0x28] sm:$0xff]
  %v4831 = vld [vmem:[%s4824 + $0x30] sm:$0xff]
  %v4832 = vld [vmem:[%s4824 + $0x38] sm:$0xff]
  %v4833 = vld [vmem:[%s4824 + $0x40] sm:$0xf]
  %4835 = vset.pattern.permute.xlu0 9
  %4836 = vperm.xlu0 %4835, %v4825
  %v4837 = vpop.permute.xlu0 %4836
  %4840 = vset.pattern.permute.xlu0 9
  %4841 = vperm.xlu0 %4840, %v4826
  %v4842 = vpop.permute.xlu0 %4841
  %4845 = vset.pattern.permute.xlu0 9
  %4846 = vperm.xlu0 %4845, %v4827
  %v4847 = vpop.permute.xlu0 %4846
  %4850 = vset.pattern.permute.xlu0 9
  %4851 = vperm.xlu0 %4850, %v4828
  %v4852 = vpop.permute.xlu0 %4851
  %4855 = vset.pattern.permute.xlu0 9
  %4856 = vperm.xlu0 %4855, %v4829
  %v4857 = vpop.permute.xlu0 %4856
  %4860 = vset.pattern.permute.xlu0 9
  %4861 = vperm.xlu0 %4860, %v4830
  %v4862 = vpop.permute.xlu0 %4861
  %4865 = vset.pattern.permute.xlu0 9
  %4866 = vperm.xlu0 %4865, %v4831
  %v4867 = vpop.permute.xlu0 %4866
  %4870 = vset.pattern.permute.xlu0 9
  %4871 = vperm.xlu0 %4870, %v4832
  %v4872 = vpop.permute.xlu0 %4871
  %4875 = vset.pattern.permute.xlu0 9
  %4876 = vperm.xlu0 %4875, %v4833
  %v4877 = vpop.permute.xlu0 %4876
  %4879 = vset.pattern.permute.xlu0 0
  %4880 = vperm.xlu0 %4879, %v4825
  %v4881 = vpop.permute.xlu0 %4880
  %4883 = vset.pattern.permute.xlu0 0
  %4884 = vperm.xlu0 %4883, %v4826
  %v4885 = vpop.permute.xlu0 %4884
  %4887 = vset.pattern.permute.xlu0 0
  %4888 = vperm.xlu0 %4887, %v4827
  %v4889 = vpop.permute.xlu0 %4888
  %4891 = vset.pattern.permute.xlu0 0
  %4892 = vperm.xlu0 %4891, %v4828
  %v4893 = vpop.permute.xlu0 %4892
  %4895 = vset.pattern.permute.xlu0 0
  %4896 = vperm.xlu0 %4895, %v4829
  %v4897 = vpop.permute.xlu0 %4896
  %4899 = vset.pattern.permute.xlu0 0
  %4900 = vperm.xlu0 %4899, %v4830
  %v4901 = vpop.permute.xlu0 %4900
  %4903 = vset.pattern.permute.xlu0 0
  %4904 = vperm.xlu0 %4903, %v4831
  %v4905 = vpop.permute.xlu0 %4904
  %4907 = vset.pattern.permute.xlu0 0
  %4908 = vperm.xlu0 %4907, %v4832
  %v4909 = vpop.permute.xlu0 %4908
  %4911 = vset.pattern.permute.xlu0 0
  %4912 = vperm.xlu0 %4911, %v4833
  %v4913 = vpop.permute.xlu0 %4912
  %v4915 = vmul.f32 %v4815, %v4881
  %v4916 = vmul.f32 %v4816, %v4885
  %v4917 = vmul.f32 %v4817, %v4889
  %v4918 = vmul.f32 %v4818, %v4893
  %v4919 = vmul.f32 %v4819, %v4897
  %v4920 = vmul.f32 %v4820, %v4901
  %v4921 = vmul.f32 %v4821, %v4905
  %v4922 = vmul.f32 %v4822, %v4909
  %v4923 = vmul.f32 %v4823, %v4913
  %v4924 = vadd.f32 %v4837, %v4915
  %v4925 = vadd.f32 %v4842, %v4916
  %v4926 = vadd.f32 %v4847, %v4917
  %v4927 = vadd.f32 %v4852, %v4918
  %v4928 = vadd.f32 %v4857, %v4919
  %v4929 = vadd.f32 %v4862, %v4920
  %v4930 = vadd.f32 %v4867, %v4921
  %v4931 = vadd.f32 %v4872, %v4922
  %v4932 = vadd.f32 %v4877, %v4923
  %4933 = vset.pattern.permute.xlu0 1
  %4934 = vperm.xlu0 %4933, %v4825
  %v4935 = vpop.permute.xlu0 %4934
  %4937 = vset.pattern.permute.xlu0 1
  %4938 = vperm.xlu0 %4937, %v4826
  %v4939 = vpop.permute.xlu0 %4938
  %4941 = vset.pattern.permute.xlu0 1
  %4942 = vperm.xlu0 %4941, %v4827
  %v4943 = vpop.permute.xlu0 %4942
  %4945 = vset.pattern.permute.xlu0 1
  %4946 = vperm.xlu0 %4945, %v4828
  %v4947 = vpop.permute.xlu0 %4946
  %4949 = vset.pattern.permute.xlu0 1
  %4950 = vperm.xlu0 %4949, %v4829
  %v4951 = vpop.permute.xlu0 %4950
  %4953 = vset.pattern.permute.xlu0 1
  %4954 = vperm.xlu0 %4953, %v4830
  %v4955 = vpop.permute.xlu0 %4954
  %4957 = vset.pattern.permute.xlu0 1
  %4958 = vperm.xlu0 %4957, %v4831
  %v4959 = vpop.permute.xlu0 %4958
  %4961 = vset.pattern.permute.xlu0 1
  %4962 = vperm.xlu0 %4961, %v4832
  %v4963 = vpop.permute.xlu0 %4962
  %4965 = vset.pattern.permute.xlu0 1
  %4966 = vperm.xlu0 %4965, %v4833
  %v4967 = vpop.permute.xlu0 %4966
  %v4969 = vmul.f32 %v4815, %v4935
  %v4970 = vmul.f32 %v4816, %v4939
  %v4971 = vmul.f32 %v4817, %v4943
  %v4972 = vmul.f32 %v4818, %v4947
  %v4973 = vmul.f32 %v4819, %v4951
  %v4974 = vmul.f32 %v4820, %v4955
  %v4975 = vmul.f32 %v4821, %v4959
  %v4976 = vmul.f32 %v4822, %v4963
  %v4977 = vmul.f32 %v4823, %v4967
  %4987 = vrot.lane.b32.xlu0 %v4969, 127
  %v4988 = vpop.permute.xlu0 %4987
  %4989 = vrot.lane.b32.xlu0 %v4970, 127
  %v4990 = vpop.permute.xlu0 %4989
  %4991 = vrot.lane.b32.xlu0 %v4971, 127
  %v4992 = vpop.permute.xlu0 %4991
  %4993 = vrot.lane.b32.xlu0 %v4972, 127
  %v4994 = vpop.permute.xlu0 %4993
  %4995 = vrot.lane.b32.xlu0 %v4973, 127
  %v4996 = vpop.permute.xlu0 %4995
  %4997 = vrot.lane.b32.xlu0 %v4974, 127
  %v4998 = vpop.permute.xlu0 %4997
  %4999 = vrot.lane.b32.xlu0 %v4975, 127
  %v5000 = vpop.permute.xlu0 %4999
  %5001 = vrot.lane.b32.xlu0 %v4976, 127
  %v5002 = vpop.permute.xlu0 %5001
  %5003 = vrot.lane.b32.xlu0 %v4977, 127
  %v5004 = vpop.permute.xlu0 %5003
  %v5014 = vadd.f32 %v4924, %v4988
  %v5015 = vadd.f32 %v4925, %v4990
  %v5016 = vadd.f32 %v4926, %v4992
  %v5017 = vadd.f32 %v4927, %v4994
  %v5018 = vadd.f32 %v4928, %v4996
  %v5019 = vadd.f32 %v4929, %v4998
  %v5020 = vadd.f32 %v4930, %v5000
  %v5021 = vadd.f32 %v4931, %v5002
  %v5022 = vadd.f32 %v4932, %v5004
  %5023 = vset.pattern.permute.xlu0 2
  %5024 = vperm.xlu0 %5023, %v4825
  %v5025 = vpop.permute.xlu0 %5024
  %5027 = vset.pattern.permute.xlu0 2
  %5028 = vperm.xlu0 %5027, %v4826
  %v5029 = vpop.permute.xlu0 %5028
  %5031 = vset.pattern.permute.xlu0 2
  %5032 = vperm.xlu0 %5031, %v4827
  %v5033 = vpop.permute.xlu0 %5032
  %5035 = vset.pattern.permute.xlu0 2
  %5036 = vperm.xlu0 %5035, %v4828
  %v5037 = vpop.permute.xlu0 %5036
  %5039 = vset.pattern.permute.xlu0 2
  %5040 = vperm.xlu0 %5039, %v4829
  %v5041 = vpop.permute.xlu0 %5040
  %5043 = vset.pattern.permute.xlu0 2
  %5044 = vperm.xlu0 %5043, %v4830
  %v5045 = vpop.permute.xlu0 %5044
  %5047 = vset.pattern.permute.xlu0 2
  %5048 = vperm.xlu0 %5047, %v4831
  %v5049 = vpop.permute.xlu0 %5048
  %5051 = vset.pattern.permute.xlu0 2
  %5052 = vperm.xlu0 %5051, %v4832
  %v5053 = vpop.permute.xlu0 %5052
  %5055 = vset.pattern.permute.xlu0 2
  %5056 = vperm.xlu0 %5055, %v4833
  %v5057 = vpop.permute.xlu0 %5056
  %v5059 = vmul.f32 %v4815, %v5025
  %v5060 = vmul.f32 %v4816, %v5029
  %v5061 = vmul.f32 %v4817, %v5033
  %v5062 = vmul.f32 %v4818, %v5037
  %v5063 = vmul.f32 %v4819, %v5041
  %v5064 = vmul.f32 %v4820, %v5045
  %v5065 = vmul.f32 %v4821, %v5049
  %v5066 = vmul.f32 %v4822, %v5053
  %v5067 = vmul.f32 %v4823, %v5057
  %5077 = vrot.lane.b32.xlu0 %v5059, 126
  %v5078 = vpop.permute.xlu0 %5077
  %5079 = vrot.lane.b32.xlu0 %v5060, 126
  %v5080 = vpop.permute.xlu0 %5079
  %5081 = vrot.lane.b32.xlu0 %v5061, 126
  %v5082 = vpop.permute.xlu0 %5081
  %5083 = vrot.lane.b32.xlu0 %v5062, 126
  %v5084 = vpop.permute.xlu0 %5083
  %5085 = vrot.lane.b32.xlu0 %v5063, 126
  %v5086 = vpop.permute.xlu0 %5085
  %5087 = vrot.lane.b32.xlu0 %v5064, 126
  %v5088 = vpop.permute.xlu0 %5087
  %5089 = vrot.lane.b32.xlu0 %v5065, 126
  %v5090 = vpop.permute.xlu0 %5089
  %5091 = vrot.lane.b32.xlu0 %v5066, 126
  %v5092 = vpop.permute.xlu0 %5091
  %5093 = vrot.lane.b32.xlu0 %v5067, 126
  %v5094 = vpop.permute.xlu0 %5093
  %v5104 = vadd.f32 %v5014, %v5078
  %v5105 = vadd.f32 %v5015, %v5080
  %v5106 = vadd.f32 %v5016, %v5082
  %v5107 = vadd.f32 %v5017, %v5084
  %v5108 = vadd.f32 %v5018, %v5086
  %v5109 = vadd.f32 %v5019, %v5088
  %v5110 = vadd.f32 %v5020, %v5090
  %v5111 = vadd.f32 %v5021, %v5092
  %v5112 = vadd.f32 %v5022, %v5094
  %5113 = vset.pattern.permute.xlu0 3
  %5114 = vperm.xlu0 %5113, %v4825
  %v5115 = vpop.permute.xlu0 %5114
  %5117 = vset.pattern.permute.xlu0 3
  %5118 = vperm.xlu0 %5117, %v4826
  %v5119 = vpop.permute.xlu0 %5118
  %5121 = vset.pattern.permute.xlu0 3
  %5122 = vperm.xlu0 %5121, %v4827
  %v5123 = vpop.permute.xlu0 %5122
  %5125 = vset.pattern.permute.xlu0 3
  %5126 = vperm.xlu0 %5125, %v4828
  %v5127 = vpop.permute.xlu0 %5126
  %5129 = vset.pattern.permute.xlu0 3
  %5130 = vperm.xlu0 %5129, %v4829
  %v5131 = vpop.permute.xlu0 %5130
  %5133 = vset.pattern.permute.xlu0 3
  %5134 = vperm.xlu0 %5133, %v4830
  %v5135 = vpop.permute.xlu0 %5134
  %5137 = vset.pattern.permute.xlu0 3
  %5138 = vperm.xlu0 %5137, %v4831
  %v5139 = vpop.permute.xlu0 %5138
  %5141 = vset.pattern.permute.xlu0 3
  %5142 = vperm.xlu0 %5141, %v4832
  %v5143 = vpop.permute.xlu0 %5142
  %5145 = vset.pattern.permute.xlu0 3
  %5146 = vperm.xlu0 %5145, %v4833
  %v5147 = vpop.permute.xlu0 %5146
  %v5149 = vmul.f32 %v4815, %v5115
  %v5150 = vmul.f32 %v4816, %v5119
  %v5151 = vmul.f32 %v4817, %v5123
  %v5152 = vmul.f32 %v4818, %v5127
  %v5153 = vmul.f32 %v4819, %v5131
  %v5154 = vmul.f32 %v4820, %v5135
  %v5155 = vmul.f32 %v4821, %v5139
  %v5156 = vmul.f32 %v4822, %v5143
  %v5157 = vmul.f32 %v4823, %v5147
  %5167 = vrot.lane.b32.xlu0 %v5149, 109
  %v5168 = vpop.permute.xlu0 %5167
  %5169 = vrot.lane.b32.xlu0 %v5150, 109
  %v5170 = vpop.permute.xlu0 %5169
  %5171 = vrot.lane.b32.xlu0 %v5151, 109
  %v5172 = vpop.permute.xlu0 %5171
  %5173 = vrot.lane.b32.xlu0 %v5152, 109
  %v5174 = vpop.permute.xlu0 %5173
  %5175 = vrot.lane.b32.xlu0 %v5153, 109
  %v5176 = vpop.permute.xlu0 %5175
  %5177 = vrot.lane.b32.xlu0 %v5154, 109
  %v5178 = vpop.permute.xlu0 %5177
  %5179 = vrot.lane.b32.xlu0 %v5155, 109
  %v5180 = vpop.permute.xlu0 %5179
  %5181 = vrot.lane.b32.xlu0 %v5156, 109
  %v5182 = vpop.permute.xlu0 %5181
  %5183 = vrot.lane.b32.xlu0 %v5157, 109
  %v5184 = vpop.permute.xlu0 %5183
  %v5194 = vadd.f32 %v5104, %v5168
  %v5195 = vadd.f32 %v5105, %v5170
  %v5196 = vadd.f32 %v5106, %v5172
  %v5197 = vadd.f32 %v5107, %v5174
  %v5198 = vadd.f32 %v5108, %v5176
  %v5199 = vadd.f32 %v5109, %v5178
  %v5200 = vadd.f32 %v5110, %v5180
  %v5201 = vadd.f32 %v5111, %v5182
  %v5202 = vadd.f32 %v5112, %v5184
  %5203 = vset.pattern.permute.xlu0 4
  %5204 = vperm.xlu0 %5203, %v4825
  %v5205 = vpop.permute.xlu0 %5204
  %5207 = vset.pattern.permute.xlu0 4
  %5208 = vperm.xlu0 %5207, %v4826
  %v5209 = vpop.permute.xlu0 %5208
  %5211 = vset.pattern.permute.xlu0 4
  %5212 = vperm.xlu0 %5211, %v4827
  %v5213 = vpop.permute.xlu0 %5212
  %5215 = vset.pattern.permute.xlu0 4
  %5216 = vperm.xlu0 %5215, %v4828
  %v5217 = vpop.permute.xlu0 %5216
  %5219 = vset.pattern.permute.xlu0 4
  %5220 = vperm.xlu0 %5219, %v4829
  %v5221 = vpop.permute.xlu0 %5220
  %5223 = vset.pattern.permute.xlu0 4
  %5224 = vperm.xlu0 %5223, %v4830
  %v5225 = vpop.permute.xlu0 %5224
  %5227 = vset.pattern.permute.xlu0 4
  %5228 = vperm.xlu0 %5227, %v4831
  %v5229 = vpop.permute.xlu0 %5228
  %5231 = vset.pattern.permute.xlu0 4
  %5232 = vperm.xlu0 %5231, %v4832
  %v5233 = vpop.permute.xlu0 %5232
  %5235 = vset.pattern.permute.xlu0 4
  %5236 = vperm.xlu0 %5235, %v4833
  %v5237 = vpop.permute.xlu0 %5236
  %v5239 = vmul.f32 %v4815, %v5205
  %v5240 = vmul.f32 %v4816, %v5209
  %v5241 = vmul.f32 %v4817, %v5213
  %v5242 = vmul.f32 %v4818, %v5217
  %v5243 = vmul.f32 %v4819, %v5221
  %v5244 = vmul.f32 %v4820, %v5225
  %v5245 = vmul.f32 %v4821, %v5229
  %v5246 = vmul.f32 %v4822, %v5233
  %v5247 = vmul.f32 %v4823, %v5237
  %5257 = vrot.lane.b32.xlu0 %v5239, 108
  %v5258 = vpop.permute.xlu0 %5257
  %5259 = vrot.lane.b32.xlu0 %v5240, 108
  %v5260 = vpop.permute.xlu0 %5259
  %5261 = vrot.lane.b32.xlu0 %v5241, 108
  %v5262 = vpop.permute.xlu0 %5261
  %5263 = vrot.lane.b32.xlu0 %v5242, 108
  %v5264 = vpop.permute.xlu0 %5263
  %5265 = vrot.lane.b32.xlu0 %v5243, 108
  %v5266 = vpop.permute.xlu0 %5265
  %5267 = vrot.lane.b32.xlu0 %v5244, 108
  %v5268 = vpop.permute.xlu0 %5267
  %5269 = vrot.lane.b32.xlu0 %v5245, 108
  %v5270 = vpop.permute.xlu0 %5269
  %5271 = vrot.lane.b32.xlu0 %v5246, 108
  %v5272 = vpop.permute.xlu0 %5271
  %5273 = vrot.lane.b32.xlu0 %v5247, 108
  %v5274 = vpop.permute.xlu0 %5273
  %v5284 = vadd.f32 %v5194, %v5258
  %v5285 = vadd.f32 %v5195, %v5260
  %v5286 = vadd.f32 %v5196, %v5262
  %v5287 = vadd.f32 %v5197, %v5264
  %v5288 = vadd.f32 %v5198, %v5266
  %v5289 = vadd.f32 %v5199, %v5268
  %v5290 = vadd.f32 %v5200, %v5270
  %v5291 = vadd.f32 %v5201, %v5272
  %v5292 = vadd.f32 %v5202, %v5274
  %5293 = vset.pattern.permute.xlu0 5
  %5294 = vperm.xlu0 %5293, %v4825
  %v5295 = vpop.permute.xlu0 %5294
  %5297 = vset.pattern.permute.xlu0 5
  %5298 = vperm.xlu0 %5297, %v4826
  %v5299 = vpop.permute.xlu0 %5298
  %5301 = vset.pattern.permute.xlu0 5
  %5302 = vperm.xlu0 %5301, %v4827
  %v5303 = vpop.permute.xlu0 %5302
  %5305 = vset.pattern.permute.xlu0 5
  %5306 = vperm.xlu0 %5305, %v4828
  %v5307 = vpop.permute.xlu0 %5306
  %5309 = vset.pattern.permute.xlu0 5
  %5310 = vperm.xlu0 %5309, %v4829
  %v5311 = vpop.permute.xlu0 %5310
  %5313 = vset.pattern.permute.xlu0 5
  %5314 = vperm.xlu0 %5313, %v4830
  %v5315 = vpop.permute.xlu0 %5314
  %5317 = vset.pattern.permute.xlu0 5
  %5318 = vperm.xlu0 %5317, %v4831
  %v5319 = vpop.permute.xlu0 %5318
  %5321 = vset.pattern.permute.xlu0 5
  %5322 = vperm.xlu0 %5321, %v4832
  %v5323 = vpop.permute.xlu0 %5322
  %5325 = vset.pattern.permute.xlu0 5
  %5326 = vperm.xlu0 %5325, %v4833
  %v5327 = vpop.permute.xlu0 %5326
  %v5329 = vmul.f32 %v4815, %v5295
  %v5330 = vmul.f32 %v4816, %v5299
  %v5331 = vmul.f32 %v4817, %v5303
  %v5332 = vmul.f32 %v4818, %v5307
  %v5333 = vmul.f32 %v4819, %v5311
  %v5334 = vmul.f32 %v4820, %v5315
  %v5335 = vmul.f32 %v4821, %v5319
  %v5336 = vmul.f32 %v4822, %v5323
  %v5337 = vmul.f32 %v4823, %v5327
  %5347 = vrot.lane.b32.xlu0 %v5329, 107
  %v5348 = vpop.permute.xlu0 %5347
  %5349 = vrot.lane.b32.xlu0 %v5330, 107
  %v5350 = vpop.permute.xlu0 %5349
  %5351 = vrot.lane.b32.xlu0 %v5331, 107
  %v5352 = vpop.permute.xlu0 %5351
  %5353 = vrot.lane.b32.xlu0 %v5332, 107
  %v5354 = vpop.permute.xlu0 %5353
  %5355 = vrot.lane.b32.xlu0 %v5333, 107
  %v5356 = vpop.permute.xlu0 %5355
  %5357 = vrot.lane.b32.xlu0 %v5334, 107
  %v5358 = vpop.permute.xlu0 %5357
  %5359 = vrot.lane.b32.xlu0 %v5335, 107
  %v5360 = vpop.permute.xlu0 %5359
  %5361 = vrot.lane.b32.xlu0 %v5336, 107
  %v5362 = vpop.permute.xlu0 %5361
  %5363 = vrot.lane.b32.xlu0 %v5337, 107
  %v5364 = vpop.permute.xlu0 %5363
  %v5374 = vadd.f32 %v5284, %v5348
  %v5375 = vadd.f32 %v5285, %v5350
  %v5376 = vadd.f32 %v5286, %v5352
  %v5377 = vadd.f32 %v5287, %v5354
  %v5378 = vadd.f32 %v5288, %v5356
  %v5379 = vadd.f32 %v5289, %v5358
  %v5380 = vadd.f32 %v5290, %v5360
  %v5381 = vadd.f32 %v5291, %v5362
  %v5382 = vadd.f32 %v5292, %v5364
  %5383 = vset.pattern.permute.xlu0 6
  %5384 = vperm.xlu0 %5383, %v4825
  %v5385 = vpop.permute.xlu0 %5384
  %5387 = vset.pattern.permute.xlu0 6
  %5388 = vperm.xlu0 %5387, %v4826
  %v5389 = vpop.permute.xlu0 %5388
  %5391 = vset.pattern.permute.xlu0 6
  %5392 = vperm.xlu0 %5391, %v4827
  %v5393 = vpop.permute.xlu0 %5392
  %5395 = vset.pattern.permute.xlu0 6
  %5396 = vperm.xlu0 %5395, %v4828
  %v5397 = vpop.permute.xlu0 %5396
  %5399 = vset.pattern.permute.xlu0 6
  %5400 = vperm.xlu0 %5399, %v4829
  %v5401 = vpop.permute.xlu0 %5400
  %5403 = vset.pattern.permute.xlu0 6
  %5404 = vperm.xlu0 %5403, %v4830
  %v5405 = vpop.permute.xlu0 %5404
  %5407 = vset.pattern.permute.xlu0 6
  %5408 = vperm.xlu0 %5407, %v4831
  %v5409 = vpop.permute.xlu0 %5408
  %5411 = vset.pattern.permute.xlu0 6
  %5412 = vperm.xlu0 %5411, %v4832
  %v5413 = vpop.permute.xlu0 %5412
  %5415 = vset.pattern.permute.xlu0 6
  %5416 = vperm.xlu0 %5415, %v4833
  %v5417 = vpop.permute.xlu0 %5416
  %v5419 = vmul.f32 %v4815, %v5385
  %v5420 = vmul.f32 %v4816, %v5389
  %v5421 = vmul.f32 %v4817, %v5393
  %v5422 = vmul.f32 %v4818, %v5397
  %v5423 = vmul.f32 %v4819, %v5401
  %v5424 = vmul.f32 %v4820, %v5405
  %v5425 = vmul.f32 %v4821, %v5409
  %v5426 = vmul.f32 %v4822, %v5413
  %v5427 = vmul.f32 %v4823, %v5417
  %5437 = vrot.lane.b32.xlu0 %v5419, 90
  %v5438 = vpop.permute.xlu0 %5437
  %5439 = vrot.lane.b32.xlu0 %v5420, 90
  %v5440 = vpop.permute.xlu0 %5439
  %5441 = vrot.lane.b32.xlu0 %v5421, 90
  %v5442 = vpop.permute.xlu0 %5441
  %5443 = vrot.lane.b32.xlu0 %v5422, 90
  %v5444 = vpop.permute.xlu0 %5443
  %5445 = vrot.lane.b32.xlu0 %v5423, 90
  %v5446 = vpop.permute.xlu0 %5445
  %5447 = vrot.lane.b32.xlu0 %v5424, 90
  %v5448 = vpop.permute.xlu0 %5447
  %5449 = vrot.lane.b32.xlu0 %v5425, 90
  %v5450 = vpop.permute.xlu0 %5449
  %5451 = vrot.lane.b32.xlu0 %v5426, 90
  %v5452 = vpop.permute.xlu0 %5451
  %5453 = vrot.lane.b32.xlu0 %v5427, 90
  %v5454 = vpop.permute.xlu0 %5453
  %v5464 = vadd.f32 %v5374, %v5438
  %v5465 = vadd.f32 %v5375, %v5440
  %v5466 = vadd.f32 %v5376, %v5442
  %v5467 = vadd.f32 %v5377, %v5444
  %v5468 = vadd.f32 %v5378, %v5446
  %v5469 = vadd.f32 %v5379, %v5448
  %v5470 = vadd.f32 %v5380, %v5450
  %v5471 = vadd.f32 %v5381, %v5452
  %v5472 = vadd.f32 %v5382, %v5454
  %5473 = vset.pattern.permute.xlu0 7
  %5474 = vperm.xlu0 %5473, %v4825
  %v5475 = vpop.permute.xlu0 %5474
  %5477 = vset.pattern.permute.xlu0 7
  %5478 = vperm.xlu0 %5477, %v4826
  %v5479 = vpop.permute.xlu0 %5478
  %5481 = vset.pattern.permute.xlu0 7
  %5482 = vperm.xlu0 %5481, %v4827
  %v5483 = vpop.permute.xlu0 %5482
  %5485 = vset.pattern.permute.xlu0 7
  %5486 = vperm.xlu0 %5485, %v4828
  %v5487 = vpop.permute.xlu0 %5486
  %5489 = vset.pattern.permute.xlu0 7
  %5490 = vperm.xlu0 %5489, %v4829
  %v5491 = vpop.permute.xlu0 %5490
  %5493 = vset.pattern.permute.xlu0 7
  %5494 = vperm.xlu0 %5493, %v4830
  %v5495 = vpop.permute.xlu0 %5494
  %5497 = vset.pattern.permute.xlu0 7
  %5498 = vperm.xlu0 %5497, %v4831
  %v5499 = vpop.permute.xlu0 %5498
  %5501 = vset.pattern.permute.xlu0 7
  %5502 = vperm.xlu0 %5501, %v4832
  %v5503 = vpop.permute.xlu0 %5502
  %5505 = vset.pattern.permute.xlu0 7
  %5506 = vperm.xlu0 %5505, %v4833
  %v5507 = vpop.permute.xlu0 %5506
  %v5509 = vmul.f32 %v4815, %v5475
  %v5510 = vmul.f32 %v4816, %v5479
  %v5511 = vmul.f32 %v4817, %v5483
  %v5512 = vmul.f32 %v4818, %v5487
  %v5513 = vmul.f32 %v4819, %v5491
  %v5514 = vmul.f32 %v4820, %v5495
  %v5515 = vmul.f32 %v4821, %v5499
  %v5516 = vmul.f32 %v4822, %v5503
  %v5517 = vmul.f32 %v4823, %v5507
  %5527 = vrot.lane.b32.xlu0 %v5509, 89
  %v5528 = vpop.permute.xlu0 %5527
  %5529 = vrot.lane.b32.xlu0 %v5510, 89
  %v5530 = vpop.permute.xlu0 %5529
  %5531 = vrot.lane.b32.xlu0 %v5511, 89
  %v5532 = vpop.permute.xlu0 %5531
  %5533 = vrot.lane.b32.xlu0 %v5512, 89
  %v5534 = vpop.permute.xlu0 %5533
  %5535 = vrot.lane.b32.xlu0 %v5513, 89
  %v5536 = vpop.permute.xlu0 %5535
  %5537 = vrot.lane.b32.xlu0 %v5514, 89
  %v5538 = vpop.permute.xlu0 %5537
  %5539 = vrot.lane.b32.xlu0 %v5515, 89
  %v5540 = vpop.permute.xlu0 %5539
  %5541 = vrot.lane.b32.xlu0 %v5516, 89
  %v5542 = vpop.permute.xlu0 %5541
  %5543 = vrot.lane.b32.xlu0 %v5517, 89
  %v5544 = vpop.permute.xlu0 %5543
  %v5554 = vadd.f32 %v5464, %v5528
  %v5555 = vadd.f32 %v5465, %v5530
  %v5556 = vadd.f32 %v5466, %v5532
  %v5557 = vadd.f32 %v5467, %v5534
  %v5558 = vadd.f32 %v5468, %v5536
  %v5559 = vadd.f32 %v5469, %v5538
  %v5560 = vadd.f32 %v5470, %v5540
  %v5561 = vadd.f32 %v5471, %v5542
  %v5562 = vadd.f32 %v5472, %v5544
  %5563 = vset.pattern.permute.xlu0 8
  %5564 = vperm.xlu0 %5563, %v4825
  %v5565 = vpop.permute.xlu0 %5564
  %5567 = vset.pattern.permute.xlu0 8
  %5568 = vperm.xlu0 %5567, %v4826
  %v5569 = vpop.permute.xlu0 %5568
  %5571 = vset.pattern.permute.xlu0 8
  %5572 = vperm.xlu0 %5571, %v4827
  %v5573 = vpop.permute.xlu0 %5572
  %5575 = vset.pattern.permute.xlu0 8
  %5576 = vperm.xlu0 %5575, %v4828
  %v5577 = vpop.permute.xlu0 %5576
  %5579 = vset.pattern.permute.xlu0 8
  %5580 = vperm.xlu0 %5579, %v4829
  %v5581 = vpop.permute.xlu0 %5580
  %5583 = vset.pattern.permute.xlu0 8
  %5584 = vperm.xlu0 %5583, %v4830
  %v5585 = vpop.permute.xlu0 %5584
  %5587 = vset.pattern.permute.xlu0 8
  %5588 = vperm.xlu0 %5587, %v4831
  %v5589 = vpop.permute.xlu0 %5588
  %5591 = vset.pattern.permute.xlu0 8
  %5592 = vperm.xlu0 %5591, %v4832
  %v5593 = vpop.permute.xlu0 %5592
  %5595 = vset.pattern.permute.xlu0 8
  %5596 = vperm.xlu0 %5595, %v4833
  %v5597 = vpop.permute.xlu0 %5596
  %v5599 = vmul.f32 %v4815, %v5565
  %v5600 = vmul.f32 %v4816, %v5569
  %v5601 = vmul.f32 %v4817, %v5573
  %v5602 = vmul.f32 %v4818, %v5577
  %v5603 = vmul.f32 %v4819, %v5581
  %v5604 = vmul.f32 %v4820, %v5585
  %v5605 = vmul.f32 %v4821, %v5589
  %v5606 = vmul.f32 %v4822, %v5593
  %v5607 = vmul.f32 %v4823, %v5597
  %5617 = vrot.lane.b32.xlu0 %v5599, 88
  %v5618 = vpop.permute.xlu0 %5617
  %5619 = vrot.lane.b32.xlu0 %v5600, 88
  %v5620 = vpop.permute.xlu0 %5619
  %5621 = vrot.lane.b32.xlu0 %v5601, 88
  %v5622 = vpop.permute.xlu0 %5621
  %5623 = vrot.lane.b32.xlu0 %v5602, 88
  %v5624 = vpop.permute.xlu0 %5623
  %5625 = vrot.lane.b32.xlu0 %v5603, 88
  %v5626 = vpop.permute.xlu0 %5625
  %5627 = vrot.lane.b32.xlu0 %v5604, 88
  %v5628 = vpop.permute.xlu0 %5627
  %5629 = vrot.lane.b32.xlu0 %v5605, 88
  %v5630 = vpop.permute.xlu0 %5629
  %5631 = vrot.lane.b32.xlu0 %v5606, 88
  %v5632 = vpop.permute.xlu0 %5631
  %5633 = vrot.lane.b32.xlu0 %v5607, 88
  %v5634 = vpop.permute.xlu0 %5633
  %v5644 = vadd.f32 %v5554, %v5618
  %v5645 = vadd.f32 %v5555, %v5620
  %v5646 = vadd.f32 %v5556, %v5622
  %v5647 = vadd.f32 %v5557, %v5624
  %v5648 = vadd.f32 %v5558, %v5626
  %v5649 = vadd.f32 %v5559, %v5628
  %v5650 = vadd.f32 %v5560, %v5630
  %v5651 = vadd.f32 %v5561, %v5632
  %v5652 = vadd.f32 %v5562, %v5634
  %v5653 = vmul.f32 %v5644, 0.5
  %v5654 = vmul.f32 %v5645, 0.5
  %v5655 = vmul.f32 %v5646, 0.5
  %v5656 = vmul.f32 %v5647, 0.5
  %v5657 = vmul.f32 %v5648, 0.5
  %v5658 = vmul.f32 %v5649, 0.5
  %v5659 = vmul.f32 %v5650, 0.5
  %v5660 = vmul.f32 %v5651, 0.5
  %v5661 = vmul.f32 %v5652, 0.5
  %v5662 = vmul.f32 %v5644, %v5644
  %v5663 = vmul.f32 %v5645, %v5645
  %v5664 = vmul.f32 %v5646, %v5646
  %v5665 = vmul.f32 %v5647, %v5647
  %v5666 = vmul.f32 %v5648, %v5648
  %v5667 = vmul.f32 %v5649, %v5649
  %v5668 = vmul.f32 %v5650, %v5650
  %v5669 = vmul.f32 %v5651, %v5651
  %v5670 = vmul.f32 %v5652, %v5652
  %v5671 = vmul.f32 %v5662, %v5644
  %v5672 = vmul.f32 %v5663, %v5645
  %v5673 = vmul.f32 %v5664, %v5646
  %v5674 = vmul.f32 %v5665, %v5647
  %v5675 = vmul.f32 %v5666, %v5648
  %v5676 = vmul.f32 %v5667, %v5649
  %v5677 = vmul.f32 %v5668, %v5650
  %v5678 = vmul.f32 %v5669, %v5651
  %v5679 = vmul.f32 %v5670, %v5652
  %v5680 = vmul.f32 %v5671, 0.044715
  %v5681 = vmul.f32 %v5672, 0.044715
  %v5682 = vmul.f32 %v5673, 0.044715
  %v5683 = vmul.f32 %v5674, 0.044715
  %v5684 = vmul.f32 %v5675, 0.044715
  %v5685 = vmul.f32 %v5676, 0.044715
  %v5686 = vmul.f32 %v5677, 0.044715
  %v5687 = vmul.f32 %v5678, 0.044715
  %v5688 = vmul.f32 %v5679, 0.044715
  %v5689 = vadd.f32 %v5644, %v5680
  %v5690 = vadd.f32 %v5645, %v5681
  %v5691 = vadd.f32 %v5646, %v5682
  %v5692 = vadd.f32 %v5647, %v5683
  %v5693 = vadd.f32 %v5648, %v5684
  %v5694 = vadd.f32 %v5649, %v5685
  %v5695 = vadd.f32 %v5650, %v5686
  %v5696 = vadd.f32 %v5651, %v5687
  %v5697 = vadd.f32 %v5652, %v5688
  %v5698 = vmul.f32 %v5689, 0.7978846
  %v5699 = vmul.f32 %v5690, 0.7978846
  %v5700 = vmul.f32 %v5691, 0.7978846
  %v5701 = vmul.f32 %v5692, 0.7978846
  %v5702 = vmul.f32 %v5693, 0.7978846
  %v5703 = vmul.f32 %v5694, 0.7978846
  %v5704 = vmul.f32 %v5695, 0.7978846
  %v5705 = vmul.f32 %v5696, 0.7978846
  %v5706 = vmul.f32 %v5697, 0.7978846
  %v5707 = vtanh.pop %v5698
  %v5708 = vtanh.pop %v5699
  %v5709 = vtanh.pop %v5700
  %v5710 = vtanh.pop %v5701
  %v5711 = vtanh.pop %v5702
  %v5712 = vtanh.pop %v5703
  %v5713 = vtanh.pop %v5704
  %v5714 = vtanh.pop %v5705
  %v5715 = vtanh.pop %v5706
  %v5716 = vadd.f32 %v5707, 1.0
  %v5717 = vadd.f32 %v5708, 1.0
  %v5718 = vadd.f32 %v5709, 1.0
  %v5719 = vadd.f32 %v5710, 1.0
  %v5720 = vadd.f32 %v5711, 1.0
  %v5721 = vadd.f32 %v5712, 1.0
  %v5722 = vadd.f32 %v5713, 1.0
  %v5723 = vadd.f32 %v5714, 1.0
  %v5724 = vadd.f32 %v5715, 1.0
  %v5725 = vmul.f32 %v5653, %v5716
  %v5726 = vmul.f32 %v5654, %v5717
  %v5727 = vmul.f32 %v5655, %v5718
  %v5728 = vmul.f32 %v5656, %v5719
  %v5729 = vmul.f32 %v5657, %v5720
  %v5730 = vmul.f32 %v5658, %v5721
  %v5731 = vmul.f32 %v5659, %v5722
  %v5732 = vmul.f32 %v5660, %v5723
  %v5733 = vmul.f32 %v5661, %v5724
  %5743 = vrot.lane.b32.xlu0 %v5725, 85
  %v5744 = vpop.permute.xlu0 %5743
  %5745 = vrot.lane.b32.xlu0 %v5726, 85
  %v5746 = vpop.permute.xlu0 %5745
  %5747 = vrot.lane.b32.xlu0 %v5727, 85
  %v5748 = vpop.permute.xlu0 %5747
  %5749 = vrot.lane.b32.xlu0 %v5728, 85
  %v5750 = vpop.permute.xlu0 %5749
  %5751 = vrot.lane.b32.xlu0 %v5729, 85
  %v5752 = vpop.permute.xlu0 %5751
  %5753 = vrot.lane.b32.xlu0 %v5730, 85
  %v5754 = vpop.permute.xlu0 %5753
  %5755 = vrot.lane.b32.xlu0 %v5731, 85
  %v5756 = vpop.permute.xlu0 %5755
  %5757 = vrot.lane.b32.xlu0 %v5732, 85
  %v5758 = vpop.permute.xlu0 %5757
  %5759 = vrot.lane.b32.xlu0 %v5733, 85
  %v5760 = vpop.permute.xlu0 %5759
  %vm5770 = vcmask 835240
  %5771 = vst.msk [vmem:[#allocation2] sm:$0xff] %vm5770, %v5744
  %5772 = vst.msk [vmem:[#allocation2 + $0x10] sm:$0xff] %vm5770, %v5746
  %5773 = vst.msk [vmem:[#allocation2 + $0x20] sm:$0xff] %vm5770, %v5748
  %5774 = vst.msk [vmem:[#allocation2 + $0x30] sm:$0xff] %vm5770, %v5750
  %5775 = vst.msk [vmem:[#allocation2 + $0x40] sm:$0xff] %vm5770, %v5752
  %5776 = vst.msk [vmem:[#allocation2 + $0x50] sm:$0xff] %vm5770, %v5754
  %5777 = vst.msk [vmem:[#allocation2 + $0x60] sm:$0xff] %vm5770, %v5756
  %5778 = vst.msk [vmem:[#allocation2 + $0x70] sm:$0xff] %vm5770, %v5758
  %vm5779 = vcmask 831144
  %5780 = vst.msk [vmem:[#allocation2 + $0x80] sm:$0xf] %vm5779, %v5760
  %s5781 = scalar_lea.vmem %s0, 432
  %v5782 = vld [vmem:[%s5781] sm:$0xff]
  %v5783 = vld [vmem:[%s5781 + $0x8] sm:$0xff]
  %v5784 = vld [vmem:[%s5781 + $0x10] sm:$0xff]
  %v5785 = vld [vmem:[%s5781 + $0x18] sm:$0xff]
  %v5786 = vld [vmem:[%s5781 + $0x20] sm:$0xff]
  %v5787 = vld [vmem:[%s5781 + $0x28] sm:$0xff]
  %v5788 = vld [vmem:[%s5781 + $0x30] sm:$0xff]
  %v5789 = vld [vmem:[%s5781 + $0x38] sm:$0xff]
  %v5790 = vld [vmem:[%s5781 + $0x40] sm:$0xf]
  %s5791 = scalar_lea.vmem %s1, 432
  %v5792 = vld [vmem:[%s5791] sm:$0xff]
  %v5793 = vld [vmem:[%s5791 + $0x8] sm:$0xff]
  %v5794 = vld [vmem:[%s5791 + $0x10] sm:$0xff]
  %v5795 = vld [vmem:[%s5791 + $0x18] sm:$0xff]
  %v5796 = vld [vmem:[%s5791 + $0x20] sm:$0xff]
  %v5797 = vld [vmem:[%s5791 + $0x28] sm:$0xff]
  %v5798 = vld [vmem:[%s5791 + $0x30] sm:$0xff]
  %v5799 = vld [vmem:[%s5791 + $0x38] sm:$0xff]
  %v5800 = vld [vmem:[%s5791 + $0x40] sm:$0xf]
  %5802 = vset.pattern.permute.xlu0 9
  %5803 = vperm.xlu0 %5802, %v5792
  %v5804 = vpop.permute.xlu0 %5803
  %5807 = vset.pattern.permute.xlu0 9
  %5808 = vperm.xlu0 %5807, %v5793
  %v5809 = vpop.permute.xlu0 %5808
  %5812 = vset.pattern.permute.xlu0 9
  %5813 = vperm.xlu0 %5812, %v5794
  %v5814 = vpop.permute.xlu0 %5813
  %5817 = vset.pattern.permute.xlu0 9
  %5818 = vperm.xlu0 %5817, %v5795
  %v5819 = vpop.permute.xlu0 %5818
  %5822 = vset.pattern.permute.xlu0 9
  %5823 = vperm.xlu0 %5822, %v5796
  %v5824 = vpop.permute.xlu0 %5823
  %5827 = vset.pattern.permute.xlu0 9
  %5828 = vperm.xlu0 %5827, %v5797
  %v5829 = vpop.permute.xlu0 %5828
  %5832 = vset.pattern.permute.xlu0 9
  %5833 = vperm.xlu0 %5832, %v5798
  %v5834 = vpop.permute.xlu0 %5833
  %5837 = vset.pattern.permute.xlu0 9
  %5838 = vperm.xlu0 %5837, %v5799
  %v5839 = vpop.permute.xlu0 %5838
  %5842 = vset.pattern.permute.xlu0 9
  %5843 = vperm.xlu0 %5842, %v5800
  %v5844 = vpop.permute.xlu0 %5843
  %5846 = vset.pattern.permute.xlu0 0
  %5847 = vperm.xlu0 %5846, %v5792
  %v5848 = vpop.permute.xlu0 %5847
  %5850 = vset.pattern.permute.xlu0 0
  %5851 = vperm.xlu0 %5850, %v5793
  %v5852 = vpop.permute.xlu0 %5851
  %5854 = vset.pattern.permute.xlu0 0
  %5855 = vperm.xlu0 %5854, %v5794
  %v5856 = vpop.permute.xlu0 %5855
  %5858 = vset.pattern.permute.xlu0 0
  %5859 = vperm.xlu0 %5858, %v5795
  %v5860 = vpop.permute.xlu0 %5859
  %5862 = vset.pattern.permute.xlu0 0
  %5863 = vperm.xlu0 %5862, %v5796
  %v5864 = vpop.permute.xlu0 %5863
  %5866 = vset.pattern.permute.xlu0 0
  %5867 = vperm.xlu0 %5866, %v5797
  %v5868 = vpop.permute.xlu0 %5867
  %5870 = vset.pattern.permute.xlu0 0
  %5871 = vperm.xlu0 %5870, %v5798
  %v5872 = vpop.permute.xlu0 %5871
  %5874 = vset.pattern.permute.xlu0 0
  %5875 = vperm.xlu0 %5874, %v5799
  %v5876 = vpop.permute.xlu0 %5875
  %5878 = vset.pattern.permute.xlu0 0
  %5879 = vperm.xlu0 %5878, %v5800
  %v5880 = vpop.permute.xlu0 %5879
  %v5882 = vmul.f32 %v5782, %v5848
  %v5883 = vmul.f32 %v5783, %v5852
  %v5884 = vmul.f32 %v5784, %v5856
  %v5885 = vmul.f32 %v5785, %v5860
  %v5886 = vmul.f32 %v5786, %v5864
  %v5887 = vmul.f32 %v5787, %v5868
  %v5888 = vmul.f32 %v5788, %v5872
  %v5889 = vmul.f32 %v5789, %v5876
  %v5890 = vmul.f32 %v5790, %v5880
  %v5891 = vadd.f32 %v5804, %v5882
  %v5892 = vadd.f32 %v5809, %v5883
  %v5893 = vadd.f32 %v5814, %v5884
  %v5894 = vadd.f32 %v5819, %v5885
  %v5895 = vadd.f32 %v5824, %v5886
  %v5896 = vadd.f32 %v5829, %v5887
  %v5897 = vadd.f32 %v5834, %v5888
  %v5898 = vadd.f32 %v5839, %v5889
  %v5899 = vadd.f32 %v5844, %v5890
  %5900 = vset.pattern.permute.xlu0 1
  %5901 = vperm.xlu0 %5900, %v5792
  %v5902 = vpop.permute.xlu0 %5901
  %5904 = vset.pattern.permute.xlu0 1
  %5905 = vperm.xlu0 %5904, %v5793
  %v5906 = vpop.permute.xlu0 %5905
  %5908 = vset.pattern.permute.xlu0 1
  %5909 = vperm.xlu0 %5908, %v5794
  %v5910 = vpop.permute.xlu0 %5909
  %5912 = vset.pattern.permute.xlu0 1
  %5913 = vperm.xlu0 %5912, %v5795
  %v5914 = vpop.permute.xlu0 %5913
  %5916 = vset.pattern.permute.xlu0 1
  %5917 = vperm.xlu0 %5916, %v5796
  %v5918 = vpop.permute.xlu0 %5917
  %5920 = vset.pattern.permute.xlu0 1
  %5921 = vperm.xlu0 %5920, %v5797
  %v5922 = vpop.permute.xlu0 %5921
  %5924 = vset.pattern.permute.xlu0 1
  %5925 = vperm.xlu0 %5924, %v5798
  %v5926 = vpop.permute.xlu0 %5925
  %5928 = vset.pattern.permute.xlu0 1
  %5929 = vperm.xlu0 %5928, %v5799
  %v5930 = vpop.permute.xlu0 %5929
  %5932 = vset.pattern.permute.xlu0 1
  %5933 = vperm.xlu0 %5932, %v5800
  %v5934 = vpop.permute.xlu0 %5933
  %v5936 = vmul.f32 %v5782, %v5902
  %v5937 = vmul.f32 %v5783, %v5906
  %v5938 = vmul.f32 %v5784, %v5910
  %v5939 = vmul.f32 %v5785, %v5914
  %v5940 = vmul.f32 %v5786, %v5918
  %v5941 = vmul.f32 %v5787, %v5922
  %v5942 = vmul.f32 %v5788, %v5926
  %v5943 = vmul.f32 %v5789, %v5930
  %v5944 = vmul.f32 %v5790, %v5934
  %5954 = vrot.lane.b32.xlu0 %v5936, 127
  %v5955 = vpop.permute.xlu0 %5954
  %5956 = vrot.lane.b32.xlu0 %v5937, 127
  %v5957 = vpop.permute.xlu0 %5956
  %5958 = vrot.lane.b32.xlu0 %v5938, 127
  %v5959 = vpop.permute.xlu0 %5958
  %5960 = vrot.lane.b32.xlu0 %v5939, 127
  %v5961 = vpop.permute.xlu0 %5960
  %5962 = vrot.lane.b32.xlu0 %v5940, 127
  %v5963 = vpop.permute.xlu0 %5962
  %5964 = vrot.lane.b32.xlu0 %v5941, 127
  %v5965 = vpop.permute.xlu0 %5964
  %5966 = vrot.lane.b32.xlu0 %v5942, 127
  %v5967 = vpop.permute.xlu0 %5966
  %5968 = vrot.lane.b32.xlu0 %v5943, 127
  %v5969 = vpop.permute.xlu0 %5968
  %5970 = vrot.lane.b32.xlu0 %v5944, 127
  %v5971 = vpop.permute.xlu0 %5970
  %v5981 = vadd.f32 %v5891, %v5955
  %v5982 = vadd.f32 %v5892, %v5957
  %v5983 = vadd.f32 %v5893, %v5959
  %v5984 = vadd.f32 %v5894, %v5961
  %v5985 = vadd.f32 %v5895, %v5963
  %v5986 = vadd.f32 %v5896, %v5965
  %v5987 = vadd.f32 %v5897, %v5967
  %v5988 = vadd.f32 %v5898, %v5969
  %v5989 = vadd.f32 %v5899, %v5971
  %5990 = vset.pattern.permute.xlu0 2
  %5991 = vperm.xlu0 %5990, %v5792
  %v5992 = vpop.permute.xlu0 %5991
  %5994 = vset.pattern.permute.xlu0 2
  %5995 = vperm.xlu0 %5994, %v5793
  %v5996 = vpop.permute.xlu0 %5995
  %5998 = vset.pattern.permute.xlu0 2
  %5999 = vperm.xlu0 %5998, %v5794
  %v6000 = vpop.permute.xlu0 %5999
  %6002 = vset.pattern.permute.xlu0 2
  %6003 = vperm.xlu0 %6002, %v5795
  %v6004 = vpop.permute.xlu0 %6003
  %6006 = vset.pattern.permute.xlu0 2
  %6007 = vperm.xlu0 %6006, %v5796
  %v6008 = vpop.permute.xlu0 %6007
  %6010 = vset.pattern.permute.xlu0 2
  %6011 = vperm.xlu0 %6010, %v5797
  %v6012 = vpop.permute.xlu0 %6011
  %6014 = vset.pattern.permute.xlu0 2
  %6015 = vperm.xlu0 %6014, %v5798
  %v6016 = vpop.permute.xlu0 %6015
  %6018 = vset.pattern.permute.xlu0 2
  %6019 = vperm.xlu0 %6018, %v5799
  %v6020 = vpop.permute.xlu0 %6019
  %6022 = vset.pattern.permute.xlu0 2
  %6023 = vperm.xlu0 %6022, %v5800
  %v6024 = vpop.permute.xlu0 %6023
  %v6026 = vmul.f32 %v5782, %v5992
  %v6027 = vmul.f32 %v5783, %v5996
  %v6028 = vmul.f32 %v5784, %v6000
  %v6029 = vmul.f32 %v5785, %v6004
  %v6030 = vmul.f32 %v5786, %v6008
  %v6031 = vmul.f32 %v5787, %v6012
  %v6032 = vmul.f32 %v5788, %v6016
  %v6033 = vmul.f32 %v5789, %v6020
  %v6034 = vmul.f32 %v5790, %v6024
  %6044 = vrot.lane.b32.xlu0 %v6026, 126
  %v6045 = vpop.permute.xlu0 %6044
  %6046 = vrot.lane.b32.xlu0 %v6027, 126
  %v6047 = vpop.permute.xlu0 %6046
  %6048 = vrot.lane.b32.xlu0 %v6028, 126
  %v6049 = vpop.permute.xlu0 %6048
  %6050 = vrot.lane.b32.xlu0 %v6029, 126
  %v6051 = vpop.permute.xlu0 %6050
  %6052 = vrot.lane.b32.xlu0 %v6030, 126
  %v6053 = vpop.permute.xlu0 %6052
  %6054 = vrot.lane.b32.xlu0 %v6031, 126
  %v6055 = vpop.permute.xlu0 %6054
  %6056 = vrot.lane.b32.xlu0 %v6032, 126
  %v6057 = vpop.permute.xlu0 %6056
  %6058 = vrot.lane.b32.xlu0 %v6033, 126
  %v6059 = vpop.permute.xlu0 %6058
  %6060 = vrot.lane.b32.xlu0 %v6034, 126
  %v6061 = vpop.permute.xlu0 %6060
  %v6071 = vadd.f32 %v5981, %v6045
  %v6072 = vadd.f32 %v5982, %v6047
  %v6073 = vadd.f32 %v5983, %v6049
  %v6074 = vadd.f32 %v5984, %v6051
  %v6075 = vadd.f32 %v5985, %v6053
  %v6076 = vadd.f32 %v5986, %v6055
  %v6077 = vadd.f32 %v5987, %v6057
  %v6078 = vadd.f32 %v5988, %v6059
  %v6079 = vadd.f32 %v5989, %v6061
  %6080 = vset.pattern.permute.xlu0 3
  %6081 = vperm.xlu0 %6080, %v5792
  %v6082 = vpop.permute.xlu0 %6081
  %6084 = vset.pattern.permute.xlu0 3
  %6085 = vperm.xlu0 %6084, %v5793
  %v6086 = vpop.permute.xlu0 %6085
  %6088 = vset.pattern.permute.xlu0 3
  %6089 = vperm.xlu0 %6088, %v5794
  %v6090 = vpop.permute.xlu0 %6089
  %6092 = vset.pattern.permute.xlu0 3
  %6093 = vperm.xlu0 %6092, %v5795
  %v6094 = vpop.permute.xlu0 %6093
  %6096 = vset.pattern.permute.xlu0 3
  %6097 = vperm.xlu0 %6096, %v5796
  %v6098 = vpop.permute.xlu0 %6097
  %6100 = vset.pattern.permute.xlu0 3
  %6101 = vperm.xlu0 %6100, %v5797
  %v6102 = vpop.permute.xlu0 %6101
  %6104 = vset.pattern.permute.xlu0 3
  %6105 = vperm.xlu0 %6104, %v5798
  %v6106 = vpop.permute.xlu0 %6105
  %6108 = vset.pattern.permute.xlu0 3
  %6109 = vperm.xlu0 %6108, %v5799
  %v6110 = vpop.permute.xlu0 %6109
  %6112 = vset.pattern.permute.xlu0 3
  %6113 = vperm.xlu0 %6112, %v5800
  %v6114 = vpop.permute.xlu0 %6113
  %v6116 = vmul.f32 %v5782, %v6082
  %v6117 = vmul.f32 %v5783, %v6086
  %v6118 = vmul.f32 %v5784, %v6090
  %v6119 = vmul.f32 %v5785, %v6094
  %v6120 = vmul.f32 %v5786, %v6098
  %v6121 = vmul.f32 %v5787, %v6102
  %v6122 = vmul.f32 %v5788, %v6106
  %v6123 = vmul.f32 %v5789, %v6110
  %v6124 = vmul.f32 %v5790, %v6114
  %6134 = vrot.lane.b32.xlu0 %v6116, 109
  %v6135 = vpop.permute.xlu0 %6134
  %6136 = vrot.lane.b32.xlu0 %v6117, 109
  %v6137 = vpop.permute.xlu0 %6136
  %6138 = vrot.lane.b32.xlu0 %v6118, 109
  %v6139 = vpop.permute.xlu0 %6138
  %6140 = vrot.lane.b32.xlu0 %v6119, 109
  %v6141 = vpop.permute.xlu0 %6140
  %6142 = vrot.lane.b32.xlu0 %v6120, 109
  %v6143 = vpop.permute.xlu0 %6142
  %6144 = vrot.lane.b32.xlu0 %v6121, 109
  %v6145 = vpop.permute.xlu0 %6144
  %6146 = vrot.lane.b32.xlu0 %v6122, 109
  %v6147 = vpop.permute.xlu0 %6146
  %6148 = vrot.lane.b32.xlu0 %v6123, 109
  %v6149 = vpop.permute.xlu0 %6148
  %6150 = vrot.lane.b32.xlu0 %v6124, 109
  %v6151 = vpop.permute.xlu0 %6150
  %v6161 = vadd.f32 %v6071, %v6135
  %v6162 = vadd.f32 %v6072, %v6137
  %v6163 = vadd.f32 %v6073, %v6139
  %v6164 = vadd.f32 %v6074, %v6141
  %v6165 = vadd.f32 %v6075, %v6143
  %v6166 = vadd.f32 %v6076, %v6145
  %v6167 = vadd.f32 %v6077, %v6147
  %v6168 = vadd.f32 %v6078, %v6149
  %v6169 = vadd.f32 %v6079, %v6151
  %6170 = vset.pattern.permute.xlu0 4
  %6171 = vperm.xlu0 %6170, %v5792
  %v6172 = vpop.permute.xlu0 %6171
  %6174 = vset.pattern.permute.xlu0 4
  %6175 = vperm.xlu0 %6174, %v5793
  %v6176 = vpop.permute.xlu0 %6175
  %6178 = vset.pattern.permute.xlu0 4
  %6179 = vperm.xlu0 %6178, %v5794
  %v6180 = vpop.permute.xlu0 %6179
  %6182 = vset.pattern.permute.xlu0 4
  %6183 = vperm.xlu0 %6182, %v5795
  %v6184 = vpop.permute.xlu0 %6183
  %6186 = vset.pattern.permute.xlu0 4
  %6187 = vperm.xlu0 %6186, %v5796
  %v6188 = vpop.permute.xlu0 %6187
  %6190 = vset.pattern.permute.xlu0 4
  %6191 = vperm.xlu0 %6190, %v5797
  %v6192 = vpop.permute.xlu0 %6191
  %6194 = vset.pattern.permute.xlu0 4
  %6195 = vperm.xlu0 %6194, %v5798
  %v6196 = vpop.permute.xlu0 %6195
  %6198 = vset.pattern.permute.xlu0 4
  %6199 = vperm.xlu0 %6198, %v5799
  %v6200 = vpop.permute.xlu0 %6199
  %6202 = vset.pattern.permute.xlu0 4
  %6203 = vperm.xlu0 %6202, %v5800
  %v6204 = vpop.permute.xlu0 %6203
  %v6206 = vmul.f32 %v5782, %v6172
  %v6207 = vmul.f32 %v5783, %v6176
  %v6208 = vmul.f32 %v5784, %v6180
  %v6209 = vmul.f32 %v5785, %v6184
  %v6210 = vmul.f32 %v5786, %v6188
  %v6211 = vmul.f32 %v5787, %v6192
  %v6212 = vmul.f32 %v5788, %v6196
  %v6213 = vmul.f32 %v5789, %v6200
  %v6214 = vmul.f32 %v5790, %v6204
  %6224 = vrot.lane.b32.xlu0 %v6206, 108
  %v6225 = vpop.permute.xlu0 %6224
  %6226 = vrot.lane.b32.xlu0 %v6207, 108
  %v6227 = vpop.permute.xlu0 %6226
  %6228 = vrot.lane.b32.xlu0 %v6208, 108
  %v6229 = vpop.permute.xlu0 %6228
  %6230 = vrot.lane.b32.xlu0 %v6209, 108
  %v6231 = vpop.permute.xlu0 %6230
  %6232 = vrot.lane.b32.xlu0 %v6210, 108
  %v6233 = vpop.permute.xlu0 %6232
  %6234 = vrot.lane.b32.xlu0 %v6211, 108
  %v6235 = vpop.permute.xlu0 %6234
  %6236 = vrot.lane.b32.xlu0 %v6212, 108
  %v6237 = vpop.permute.xlu0 %6236
  %6238 = vrot.lane.b32.xlu0 %v6213, 108
  %v6239 = vpop.permute.xlu0 %6238
  %6240 = vrot.lane.b32.xlu0 %v6214, 108
  %v6241 = vpop.permute.xlu0 %6240
  %v6251 = vadd.f32 %v6161, %v6225
  %v6252 = vadd.f32 %v6162, %v6227
  %v6253 = vadd.f32 %v6163, %v6229
  %v6254 = vadd.f32 %v6164, %v6231
  %v6255 = vadd.f32 %v6165, %v6233
  %v6256 = vadd.f32 %v6166, %v6235
  %v6257 = vadd.f32 %v6167, %v6237
  %v6258 = vadd.f32 %v6168, %v6239
  %v6259 = vadd.f32 %v6169, %v6241
  %6260 = vset.pattern.permute.xlu0 5
  %6261 = vperm.xlu0 %6260, %v5792
  %v6262 = vpop.permute.xlu0 %6261
  %6264 = vset.pattern.permute.xlu0 5
  %6265 = vperm.xlu0 %6264, %v5793
  %v6266 = vpop.permute.xlu0 %6265
  %6268 = vset.pattern.permute.xlu0 5
  %6269 = vperm.xlu0 %6268, %v5794
  %v6270 = vpop.permute.xlu0 %6269
  %6272 = vset.pattern.permute.xlu0 5
  %6273 = vperm.xlu0 %6272, %v5795
  %v6274 = vpop.permute.xlu0 %6273
  %6276 = vset.pattern.permute.xlu0 5
  %6277 = vperm.xlu0 %6276, %v5796
  %v6278 = vpop.permute.xlu0 %6277
  %6280 = vset.pattern.permute.xlu0 5
  %6281 = vperm.xlu0 %6280, %v5797
  %v6282 = vpop.permute.xlu0 %6281
  %6284 = vset.pattern.permute.xlu0 5
  %6285 = vperm.xlu0 %6284, %v5798
  %v6286 = vpop.permute.xlu0 %6285
  %6288 = vset.pattern.permute.xlu0 5
  %6289 = vperm.xlu0 %6288, %v5799
  %v6290 = vpop.permute.xlu0 %6289
  %6292 = vset.pattern.permute.xlu0 5
  %6293 = vperm.xlu0 %6292, %v5800
  %v6294 = vpop.permute.xlu0 %6293
  %v6296 = vmul.f32 %v5782, %v6262
  %v6297 = vmul.f32 %v5783, %v6266
  %v6298 = vmul.f32 %v5784, %v6270
  %v6299 = vmul.f32 %v5785, %v6274
  %v6300 = vmul.f32 %v5786, %v6278
  %v6301 = vmul.f32 %v5787, %v6282
  %v6302 = vmul.f32 %v5788, %v6286
  %v6303 = vmul.f32 %v5789, %v6290
  %v6304 = vmul.f32 %v5790, %v6294
  %6314 = vrot.lane.b32.xlu0 %v6296, 107
  %v6315 = vpop.permute.xlu0 %6314
  %6316 = vrot.lane.b32.xlu0 %v6297, 107
  %v6317 = vpop.permute.xlu0 %6316
  %6318 = vrot.lane.b32.xlu0 %v6298, 107
  %v6319 = vpop.permute.xlu0 %6318
  %6320 = vrot.lane.b32.xlu0 %v6299, 107
  %v6321 = vpop.permute.xlu0 %6320
  %6322 = vrot.lane.b32.xlu0 %v6300, 107
  %v6323 = vpop.permute.xlu0 %6322
  %6324 = vrot.lane.b32.xlu0 %v6301, 107
  %v6325 = vpop.permute.xlu0 %6324
  %6326 = vrot.lane.b32.xlu0 %v6302, 107
  %v6327 = vpop.permute.xlu0 %6326
  %6328 = vrot.lane.b32.xlu0 %v6303, 107
  %v6329 = vpop.permute.xlu0 %6328
  %6330 = vrot.lane.b32.xlu0 %v6304, 107
  %v6331 = vpop.permute.xlu0 %6330
  %v6341 = vadd.f32 %v6251, %v6315
  %v6342 = vadd.f32 %v6252, %v6317
  %v6343 = vadd.f32 %v6253, %v6319
  %v6344 = vadd.f32 %v6254, %v6321
  %v6345 = vadd.f32 %v6255, %v6323
  %v6346 = vadd.f32 %v6256, %v6325
  %v6347 = vadd.f32 %v6257, %v6327
  %v6348 = vadd.f32 %v6258, %v6329
  %v6349 = vadd.f32 %v6259, %v6331
  %6350 = vset.pattern.permute.xlu0 6
  %6351 = vperm.xlu0 %6350, %v5792
  %v6352 = vpop.permute.xlu0 %6351
  %6354 = vset.pattern.permute.xlu0 6
  %6355 = vperm.xlu0 %6354, %v5793
  %v6356 = vpop.permute.xlu0 %6355
  %6358 = vset.pattern.permute.xlu0 6
  %6359 = vperm.xlu0 %6358, %v5794
  %v6360 = vpop.permute.xlu0 %6359
  %6362 = vset.pattern.permute.xlu0 6
  %6363 = vperm.xlu0 %6362, %v5795
  %v6364 = vpop.permute.xlu0 %6363
  %6366 = vset.pattern.permute.xlu0 6
  %6367 = vperm.xlu0 %6366, %v5796
  %v6368 = vpop.permute.xlu0 %6367
  %6370 = vset.pattern.permute.xlu0 6
  %6371 = vperm.xlu0 %6370, %v5797
  %v6372 = vpop.permute.xlu0 %6371
  %6374 = vset.pattern.permute.xlu0 6
  %6375 = vperm.xlu0 %6374, %v5798
  %v6376 = vpop.permute.xlu0 %6375
  %6378 = vset.pattern.permute.xlu0 6
  %6379 = vperm.xlu0 %6378, %v5799
  %v6380 = vpop.permute.xlu0 %6379
  %6382 = vset.pattern.permute.xlu0 6
  %6383 = vperm.xlu0 %6382, %v5800
  %v6384 = vpop.permute.xlu0 %6383
  %v6386 = vmul.f32 %v5782, %v6352
  %v6387 = vmul.f32 %v5783, %v6356
  %v6388 = vmul.f32 %v5784, %v6360
  %v6389 = vmul.f32 %v5785, %v6364
  %v6390 = vmul.f32 %v5786, %v6368
  %v6391 = vmul.f32 %v5787, %v6372
  %v6392 = vmul.f32 %v5788, %v6376
  %v6393 = vmul.f32 %v5789, %v6380
  %v6394 = vmul.f32 %v5790, %v6384
  %6404 = vrot.lane.b32.xlu0 %v6386, 90
  %v6405 = vpop.permute.xlu0 %6404
  %6406 = vrot.lane.b32.xlu0 %v6387, 90
  %v6407 = vpop.permute.xlu0 %6406
  %6408 = vrot.lane.b32.xlu0 %v6388, 90
  %v6409 = vpop.permute.xlu0 %6408
  %6410 = vrot.lane.b32.xlu0 %v6389, 90
  %v6411 = vpop.permute.xlu0 %6410
  %6412 = vrot.lane.b32.xlu0 %v6390, 90
  %v6413 = vpop.permute.xlu0 %6412
  %6414 = vrot.lane.b32.xlu0 %v6391, 90
  %v6415 = vpop.permute.xlu0 %6414
  %6416 = vrot.lane.b32.xlu0 %v6392, 90
  %v6417 = vpop.permute.xlu0 %6416
  %6418 = vrot.lane.b32.xlu0 %v6393, 90
  %v6419 = vpop.permute.xlu0 %6418
  %6420 = vrot.lane.b32.xlu0 %v6394, 90
  %v6421 = vpop.permute.xlu0 %6420
  %v6431 = vadd.f32 %v6341, %v6405
  %v6432 = vadd.f32 %v6342, %v6407
  %v6433 = vadd.f32 %v6343, %v6409
  %v6434 = vadd.f32 %v6344, %v6411
  %v6435 = vadd.f32 %v6345, %v6413
  %v6436 = vadd.f32 %v6346, %v6415
  %v6437 = vadd.f32 %v6347, %v6417
  %v6438 = vadd.f32 %v6348, %v6419
  %v6439 = vadd.f32 %v6349, %v6421
  %6440 = vset.pattern.permute.xlu0 7
  %6441 = vperm.xlu0 %6440, %v5792
  %v6442 = vpop.permute.xlu0 %6441
  %6444 = vset.pattern.permute.xlu0 7
  %6445 = vperm.xlu0 %6444, %v5793
  %v6446 = vpop.permute.xlu0 %6445
  %6448 = vset.pattern.permute.xlu0 7
  %6449 = vperm.xlu0 %6448, %v5794
  %v6450 = vpop.permute.xlu0 %6449
  %6452 = vset.pattern.permute.xlu0 7
  %6453 = vperm.xlu0 %6452, %v5795
  %v6454 = vpop.permute.xlu0 %6453
  %6456 = vset.pattern.permute.xlu0 7
  %6457 = vperm.xlu0 %6456, %v5796
  %v6458 = vpop.permute.xlu0 %6457
  %6460 = vset.pattern.permute.xlu0 7
  %6461 = vperm.xlu0 %6460, %v5797
  %v6462 = vpop.permute.xlu0 %6461
  %6464 = vset.pattern.permute.xlu0 7
  %6465 = vperm.xlu0 %6464, %v5798
  %v6466 = vpop.permute.xlu0 %6465
  %6468 = vset.pattern.permute.xlu0 7
  %6469 = vperm.xlu0 %6468, %v5799
  %v6470 = vpop.permute.xlu0 %6469
  %6472 = vset.pattern.permute.xlu0 7
  %6473 = vperm.xlu0 %6472, %v5800
  %v6474 = vpop.permute.xlu0 %6473
  %v6476 = vmul.f32 %v5782, %v6442
  %v6477 = vmul.f32 %v5783, %v6446
  %v6478 = vmul.f32 %v5784, %v6450
  %v6479 = vmul.f32 %v5785, %v6454
  %v6480 = vmul.f32 %v5786, %v6458
  %v6481 = vmul.f32 %v5787, %v6462
  %v6482 = vmul.f32 %v5788, %v6466
  %v6483 = vmul.f32 %v5789, %v6470
  %v6484 = vmul.f32 %v5790, %v6474
  %6494 = vrot.lane.b32.xlu0 %v6476, 89
  %v6495 = vpop.permute.xlu0 %6494
  %6496 = vrot.lane.b32.xlu0 %v6477, 89
  %v6497 = vpop.permute.xlu0 %6496
  %6498 = vrot.lane.b32.xlu0 %v6478, 89
  %v6499 = vpop.permute.xlu0 %6498
  %6500 = vrot.lane.b32.xlu0 %v6479, 89
  %v6501 = vpop.permute.xlu0 %6500
  %6502 = vrot.lane.b32.xlu0 %v6480, 89
  %v6503 = vpop.permute.xlu0 %6502
  %6504 = vrot.lane.b32.xlu0 %v6481, 89
  %v6505 = vpop.permute.xlu0 %6504
  %6506 = vrot.lane.b32.xlu0 %v6482, 89
  %v6507 = vpop.permute.xlu0 %6506
  %6508 = vrot.lane.b32.xlu0 %v6483, 89
  %v6509 = vpop.permute.xlu0 %6508
  %6510 = vrot.lane.b32.xlu0 %v6484, 89
  %v6511 = vpop.permute.xlu0 %6510
  %v6521 = vadd.f32 %v6431, %v6495
  %v6522 = vadd.f32 %v6432, %v6497
  %v6523 = vadd.f32 %v6433, %v6499
  %v6524 = vadd.f32 %v6434, %v6501
  %v6525 = vadd.f32 %v6435, %v6503
  %v6526 = vadd.f32 %v6436, %v6505
  %v6527 = vadd.f32 %v6437, %v6507
  %v6528 = vadd.f32 %v6438, %v6509
  %v6529 = vadd.f32 %v6439, %v6511
  %6530 = vset.pattern.permute.xlu0 8
  %6531 = vperm.xlu0 %6530, %v5792
  %v6532 = vpop.permute.xlu0 %6531
  %6534 = vset.pattern.permute.xlu0 8
  %6535 = vperm.xlu0 %6534, %v5793
  %v6536 = vpop.permute.xlu0 %6535
  %6538 = vset.pattern.permute.xlu0 8
  %6539 = vperm.xlu0 %6538, %v5794
  %v6540 = vpop.permute.xlu0 %6539
  %6542 = vset.pattern.permute.xlu0 8
  %6543 = vperm.xlu0 %6542, %v5795
  %v6544 = vpop.permute.xlu0 %6543
  %6546 = vset.pattern.permute.xlu0 8
  %6547 = vperm.xlu0 %6546, %v5796
  %v6548 = vpop.permute.xlu0 %6547
  %6550 = vset.pattern.permute.xlu0 8
  %6551 = vperm.xlu0 %6550, %v5797
  %v6552 = vpop.permute.xlu0 %6551
  %6554 = vset.pattern.permute.xlu0 8
  %6555 = vperm.xlu0 %6554, %v5798
  %v6556 = vpop.permute.xlu0 %6555
  %6558 = vset.pattern.permute.xlu0 8
  %6559 = vperm.xlu0 %6558, %v5799
  %v6560 = vpop.permute.xlu0 %6559
  %6562 = vset.pattern.permute.xlu0 8
  %6563 = vperm.xlu0 %6562, %v5800
  %v6564 = vpop.permute.xlu0 %6563
  %v6566 = vmul.f32 %v5782, %v6532
  %v6567 = vmul.f32 %v5783, %v6536
  %v6568 = vmul.f32 %v5784, %v6540
  %v6569 = vmul.f32 %v5785, %v6544
  %v6570 = vmul.f32 %v5786, %v6548
  %v6571 = vmul.f32 %v5787, %v6552
  %v6572 = vmul.f32 %v5788, %v6556
  %v6573 = vmul.f32 %v5789, %v6560
  %v6574 = vmul.f32 %v5790, %v6564
  %6584 = vrot.lane.b32.xlu0 %v6566, 88
  %v6585 = vpop.permute.xlu0 %6584
  %6586 = vrot.lane.b32.xlu0 %v6567, 88
  %v6587 = vpop.permute.xlu0 %6586
  %6588 = vrot.lane.b32.xlu0 %v6568, 88
  %v6589 = vpop.permute.xlu0 %6588
  %6590 = vrot.lane.b32.xlu0 %v6569, 88
  %v6591 = vpop.permute.xlu0 %6590
  %6592 = vrot.lane.b32.xlu0 %v6570, 88
  %v6593 = vpop.permute.xlu0 %6592
  %6594 = vrot.lane.b32.xlu0 %v6571, 88
  %v6595 = vpop.permute.xlu0 %6594
  %6596 = vrot.lane.b32.xlu0 %v6572, 88
  %v6597 = vpop.permute.xlu0 %6596
  %6598 = vrot.lane.b32.xlu0 %v6573, 88
  %v6599 = vpop.permute.xlu0 %6598
  %6600 = vrot.lane.b32.xlu0 %v6574, 88
  %v6601 = vpop.permute.xlu0 %6600
  %v6611 = vadd.f32 %v6521, %v6585
  %v6612 = vadd.f32 %v6522, %v6587
  %v6613 = vadd.f32 %v6523, %v6589
  %v6614 = vadd.f32 %v6524, %v6591
  %v6615 = vadd.f32 %v6525, %v6593
  %v6616 = vadd.f32 %v6526, %v6595
  %v6617 = vadd.f32 %v6527, %v6597
  %v6618 = vadd.f32 %v6528, %v6599
  %v6619 = vadd.f32 %v6529, %v6601
  %v6620 = vmul.f32 %v6611, 0.5
  %v6621 = vmul.f32 %v6612, 0.5
  %v6622 = vmul.f32 %v6613, 0.5
  %v6623 = vmul.f32 %v6614, 0.5
  %v6624 = vmul.f32 %v6615, 0.5
  %v6625 = vmul.f32 %v6616, 0.5
  %v6626 = vmul.f32 %v6617, 0.5
  %v6627 = vmul.f32 %v6618, 0.5
  %v6628 = vmul.f32 %v6619, 0.5
  %v6629 = vmul.f32 %v6611, %v6611
  %v6630 = vmul.f32 %v6612, %v6612
  %v6631 = vmul.f32 %v6613, %v6613
  %v6632 = vmul.f32 %v6614, %v6614
  %v6633 = vmul.f32 %v6615, %v6615
  %v6634 = vmul.f32 %v6616, %v6616
  %v6635 = vmul.f32 %v6617, %v6617
  %v6636 = vmul.f32 %v6618, %v6618
  %v6637 = vmul.f32 %v6619, %v6619
  %v6638 = vmul.f32 %v6629, %v6611
  %v6639 = vmul.f32 %v6630, %v6612
  %v6640 = vmul.f32 %v6631, %v6613
  %v6641 = vmul.f32 %v6632, %v6614
  %v6642 = vmul.f32 %v6633, %v6615
  %v6643 = vmul.f32 %v6634, %v6616
  %v6644 = vmul.f32 %v6635, %v6617
  %v6645 = vmul.f32 %v6636, %v6618
  %v6646 = vmul.f32 %v6637, %v6619
  %v6647 = vmul.f32 %v6638, 0.044715
  %v6648 = vmul.f32 %v6639, 0.044715
  %v6649 = vmul.f32 %v6640, 0.044715
  %v6650 = vmul.f32 %v6641, 0.044715
  %v6651 = vmul.f32 %v6642, 0.044715
  %v6652 = vmul.f32 %v6643, 0.044715
  %v6653 = vmul.f32 %v6644, 0.044715
  %v6654 = vmul.f32 %v6645, 0.044715
  %v6655 = vmul.f32 %v6646, 0.044715
  %v6656 = vadd.f32 %v6611, %v6647
  %v6657 = vadd.f32 %v6612, %v6648
  %v6658 = vadd.f32 %v6613, %v6649
  %v6659 = vadd.f32 %v6614, %v6650
  %v6660 = vadd.f32 %v6615, %v6651
  %v6661 = vadd.f32 %v6616, %v6652
  %v6662 = vadd.f32 %v6617, %v6653
  %v6663 = vadd.f32 %v6618, %v6654
  %v6664 = vadd.f32 %v6619, %v6655
  %v6665 = vmul.f32 %v6656, 0.7978846
  %v6666 = vmul.f32 %v6657, 0.7978846
  %v6667 = vmul.f32 %v6658, 0.7978846
  %v6668 = vmul.f32 %v6659, 0.7978846
  %v6669 = vmul.f32 %v6660, 0.7978846
  %v6670 = vmul.f32 %v6661, 0.7978846
  %v6671 = vmul.f32 %v6662, 0.7978846
  %v6672 = vmul.f32 %v6663, 0.7978846
  %v6673 = vmul.f32 %v6664, 0.7978846
  %v6674 = vtanh.pop %v6665
  %v6675 = vtanh.pop %v6666
  %v6676 = vtanh.pop %v6667
  %v6677 = vtanh.pop %v6668
  %v6678 = vtanh.pop %v6669
  %v6679 = vtanh.pop %v6670
  %v6680 = vtanh.pop %v6671
  %v6681 = vtanh.pop %v6672
  %v6682 = vtanh.pop %v6673
  %v6683 = vadd.f32 %v6674, 1.0
  %v6684 = vadd.f32 %v6675, 1.0
  %v6685 = vadd.f32 %v6676, 1.0
  %v6686 = vadd.f32 %v6677, 1.0
  %v6687 = vadd.f32 %v6678, 1.0
  %v6688 = vadd.f32 %v6679, 1.0
  %v6689 = vadd.f32 %v6680, 1.0
  %v6690 = vadd.f32 %v6681, 1.0
  %v6691 = vadd.f32 %v6682, 1.0
  %v6692 = vmul.f32 %v6620, %v6683
  %v6693 = vmul.f32 %v6621, %v6684
  %v6694 = vmul.f32 %v6622, %v6685
  %v6695 = vmul.f32 %v6623, %v6686
  %v6696 = vmul.f32 %v6624, %v6687
  %v6697 = vmul.f32 %v6625, %v6688
  %v6698 = vmul.f32 %v6626, %v6689
  %v6699 = vmul.f32 %v6627, %v6690
  %v6700 = vmul.f32 %v6628, %v6691
  %6710 = vrot.lane.b32.xlu0 %v6692, 102
  %v6711 = vpop.permute.xlu0 %6710
  %6712 = vrot.lane.b32.xlu0 %v6693, 102
  %v6713 = vpop.permute.xlu0 %6712
  %6714 = vrot.lane.b32.xlu0 %v6694, 102
  %v6715 = vpop.permute.xlu0 %6714
  %6716 = vrot.lane.b32.xlu0 %v6695, 102
  %v6717 = vpop.permute.xlu0 %6716
  %6718 = vrot.lane.b32.xlu0 %v6696, 102
  %v6719 = vpop.permute.xlu0 %6718
  %6720 = vrot.lane.b32.xlu0 %v6697, 102
  %v6721 = vpop.permute.xlu0 %6720
  %6722 = vrot.lane.b32.xlu0 %v6698, 102
  %v6723 = vpop.permute.xlu0 %6722
  %6724 = vrot.lane.b32.xlu0 %v6699, 102
  %v6725 = vpop.permute.xlu0 %6724
  %6726 = vrot.lane.b32.xlu0 %v6700, 102
  %v6727 = vpop.permute.xlu0 %6726
  %vm6737 = vcmask 974640
  %6738 = vst.msk [vmem:[#allocation2] sm:$0xff] %vm6737, %v6711
  %6739 = vst.msk [vmem:[#allocation2 + $0x10] sm:$0xff] %vm6737, %v6713
  %6740 = vst.msk [vmem:[#allocation2 + $0x20] sm:$0xff] %vm6737, %v6715
  %6741 = vst.msk [vmem:[#allocation2 + $0x30] sm:$0xff] %vm6737, %v6717
  %6742 = vst.msk [vmem:[#allocation2 + $0x40] sm:$0xff] %vm6737, %v6719
  %6743 = vst.msk [vmem:[#allocation2 + $0x50] sm:$0xff] %vm6737, %v6721
  %6744 = vst.msk [vmem:[#allocation2 + $0x60] sm:$0xff] %vm6737, %v6723
  %6745 = vst.msk [vmem:[#allocation2 + $0x70] sm:$0xff] %vm6737, %v6725
  %vm6746 = vcmask 970544
  %6747 = vst.msk [vmem:[#allocation2 + $0x80] sm:$0xf] %vm6746, %v6727
  %s6748 = scalar_lea.vmem %s0, 504
  %v6749 = vld [vmem:[%s6748] sm:$0xff]
  %v6750 = vld [vmem:[%s6748 + $0x8] sm:$0xff]
  %v6751 = vld [vmem:[%s6748 + $0x10] sm:$0xff]
  %v6752 = vld [vmem:[%s6748 + $0x18] sm:$0xff]
  %v6753 = vld [vmem:[%s6748 + $0x20] sm:$0xff]
  %v6754 = vld [vmem:[%s6748 + $0x28] sm:$0xff]
  %v6755 = vld [vmem:[%s6748 + $0x30] sm:$0xff]
  %v6756 = vld [vmem:[%s6748 + $0x38] sm:$0xff]
  %v6757 = vld [vmem:[%s6748 + $0x40] sm:$0xf]
  %s6758 = scalar_lea.vmem %s1, 504
  %v6759 = vld [vmem:[%s6758] sm:$0xff]
  %v6760 = vld [vmem:[%s6758 + $0x8] sm:$0xff]
  %v6761 = vld [vmem:[%s6758 + $0x10] sm:$0xff]
  %v6762 = vld [vmem:[%s6758 + $0x18] sm:$0xff]
  %v6763 = vld [vmem:[%s6758 + $0x20] sm:$0xff]
  %v6764 = vld [vmem:[%s6758 + $0x28] sm:$0xff]
  %v6765 = vld [vmem:[%s6758 + $0x30] sm:$0xff]
  %v6766 = vld [vmem:[%s6758 + $0x38] sm:$0xff]
  %v6767 = vld [vmem:[%s6758 + $0x40] sm:$0xf]
  %6769 = vset.pattern.permute.xlu0 9
  %6770 = vperm.xlu0 %6769, %v6759
  %v6771 = vpop.permute.xlu0 %6770
  %6774 = vset.pattern.permute.xlu0 9
  %6775 = vperm.xlu0 %6774, %v6760
  %v6776 = vpop.permute.xlu0 %6775
  %6779 = vset.pattern.permute.xlu0 9
  %6780 = vperm.xlu0 %6779, %v6761
  %v6781 = vpop.permute.xlu0 %6780
  %6784 = vset.pattern.permute.xlu0 9
  %6785 = vperm.xlu0 %6784, %v6762
  %v6786 = vpop.permute.xlu0 %6785
  %6789 = vset.pattern.permute.xlu0 9
  %6790 = vperm.xlu0 %6789, %v6763
  %v6791 = vpop.permute.xlu0 %6790
  %6794 = vset.pattern.permute.xlu0 9
  %6795 = vperm.xlu0 %6794, %v6764
  %v6796 = vpop.permute.xlu0 %6795
  %6799 = vset.pattern.permute.xlu0 9
  %6800 = vperm.xlu0 %6799, %v6765
  %v6801 = vpop.permute.xlu0 %6800
  %6804 = vset.pattern.permute.xlu0 9
  %6805 = vperm.xlu0 %6804, %v6766
  %v6806 = vpop.permute.xlu0 %6805
  %6809 = vset.pattern.permute.xlu0 9
  %6810 = vperm.xlu0 %6809, %v6767
  %v6811 = vpop.permute.xlu0 %6810
  %6813 = vset.pattern.permute.xlu0 0
  %6814 = vperm.xlu0 %6813, %v6759
  %v6815 = vpop.permute.xlu0 %6814
  %6817 = vset.pattern.permute.xlu0 0
  %6818 = vperm.xlu0 %6817, %v6760
  %v6819 = vpop.permute.xlu0 %6818
  %6821 = vset.pattern.permute.xlu0 0
  %6822 = vperm.xlu0 %6821, %v6761
  %v6823 = vpop.permute.xlu0 %6822
  %6825 = vset.pattern.permute.xlu0 0
  %6826 = vperm.xlu0 %6825, %v6762
  %v6827 = vpop.permute.xlu0 %6826
  %6829 = vset.pattern.permute.xlu0 0
  %6830 = vperm.xlu0 %6829, %v6763
  %v6831 = vpop.permute.xlu0 %6830
  %6833 = vset.pattern.permute.xlu0 0
  %6834 = vperm.xlu0 %6833, %v6764
  %v6835 = vpop.permute.xlu0 %6834
  %6837 = vset.pattern.permute.xlu0 0
  %6838 = vperm.xlu0 %6837, %v6765
  %v6839 = vpop.permute.xlu0 %6838
  %6841 = vset.pattern.permute.xlu0 0
  %6842 = vperm.xlu0 %6841, %v6766
  %v6843 = vpop.permute.xlu0 %6842
  %6845 = vset.pattern.permute.xlu0 0
  %6846 = vperm.xlu0 %6845, %v6767
  %v6847 = vpop.permute.xlu0 %6846
  %v6849 = vmul.f32 %v6749, %v6815
  %v6850 = vmul.f32 %v6750, %v6819
  %v6851 = vmul.f32 %v6751, %v6823
  %v6852 = vmul.f32 %v6752, %v6827
  %v6853 = vmul.f32 %v6753, %v6831
  %v6854 = vmul.f32 %v6754, %v6835
  %v6855 = vmul.f32 %v6755, %v6839
  %v6856 = vmul.f32 %v6756, %v6843
  %v6857 = vmul.f32 %v6757, %v6847
  %v6858 = vadd.f32 %v6771, %v6849
  %v6859 = vadd.f32 %v6776, %v6850
  %v6860 = vadd.f32 %v6781, %v6851
  %v6861 = vadd.f32 %v6786, %v6852
  %v6862 = vadd.f32 %v6791, %v6853
  %v6863 = vadd.f32 %v6796, %v6854
  %v6864 = vadd.f32 %v6801, %v6855
  %v6865 = vadd.f32 %v6806, %v6856
  %v6866 = vadd.f32 %v6811, %v6857
  %6867 = vset.pattern.permute.xlu0 1
  %6868 = vperm.xlu0 %6867, %v6759
  %v6869 = vpop.permute.xlu0 %6868
  %6871 = vset.pattern.permute.xlu0 1
  %6872 = vperm.xlu0 %6871, %v6760
  %v6873 = vpop.permute.xlu0 %6872
  %6875 = vset.pattern.permute.xlu0 1
  %6876 = vperm.xlu0 %6875, %v6761
  %v6877 = vpop.permute.xlu0 %6876
  %6879 = vset.pattern.permute.xlu0 1
  %6880 = vperm.xlu0 %6879, %v6762
  %v6881 = vpop.permute.xlu0 %6880
  %6883 = vset.pattern.permute.xlu0 1
  %6884 = vperm.xlu0 %6883, %v6763
  %v6885 = vpop.permute.xlu0 %6884
  %6887 = vset.pattern.permute.xlu0 1
  %6888 = vperm.xlu0 %6887, %v6764
  %v6889 = vpop.permute.xlu0 %6888
  %6891 = vset.pattern.permute.xlu0 1
  %6892 = vperm.xlu0 %6891, %v6765
  %v6893 = vpop.permute.xlu0 %6892
  %6895 = vset.pattern.permute.xlu0 1
  %6896 = vperm.xlu0 %6895, %v6766
  %v6897 = vpop.permute.xlu0 %6896
  %6899 = vset.pattern.permute.xlu0 1
  %6900 = vperm.xlu0 %6899, %v6767
  %v6901 = vpop.permute.xlu0 %6900
  %v6903 = vmul.f32 %v6749, %v6869
  %v6904 = vmul.f32 %v6750, %v6873
  %v6905 = vmul.f32 %v6751, %v6877
  %v6906 = vmul.f32 %v6752, %v6881
  %v6907 = vmul.f32 %v6753, %v6885
  %v6908 = vmul.f32 %v6754, %v6889
  %v6909 = vmul.f32 %v6755, %v6893
  %v6910 = vmul.f32 %v6756, %v6897
  %v6911 = vmul.f32 %v6757, %v6901
  %6921 = vrot.lane.b32.xlu0 %v6903, 127
  %v6922 = vpop.permute.xlu0 %6921
  %6923 = vrot.lane.b32.xlu0 %v6904, 127
  %v6924 = vpop.permute.xlu0 %6923
  %6925 = vrot.lane.b32.xlu0 %v6905, 127
  %v6926 = vpop.permute.xlu0 %6925
  %6927 = vrot.lane.b32.xlu0 %v6906, 127
  %v6928 = vpop.permute.xlu0 %6927
  %6929 = vrot.lane.b32.xlu0 %v6907, 127
  %v6930 = vpop.permute.xlu0 %6929
  %6931 = vrot.lane.b32.xlu0 %v6908, 127
  %v6932 = vpop.permute.xlu0 %6931
  %6933 = vrot.lane.b32.xlu0 %v6909, 127
  %v6934 = vpop.permute.xlu0 %6933
  %6935 = vrot.lane.b32.xlu0 %v6910, 127
  %v6936 = vpop.permute.xlu0 %6935
  %6937 = vrot.lane.b32.xlu0 %v6911, 127
  %v6938 = vpop.permute.xlu0 %6937
  %v6948 = vadd.f32 %v6858, %v6922
  %v6949 = vadd.f32 %v6859, %v6924
  %v6950 = vadd.f32 %v6860, %v6926
  %v6951 = vadd.f32 %v6861, %v6928
  %v6952 = vadd.f32 %v6862, %v6930
  %v6953 = vadd.f32 %v6863, %v6932
  %v6954 = vadd.f32 %v6864, %v6934
  %v6955 = vadd.f32 %v6865, %v6936
  %v6956 = vadd.f32 %v6866, %v6938
  %6957 = vset.pattern.permute.xlu0 2
  %6958 = vperm.xlu0 %6957, %v6759
  %v6959 = vpop.permute.xlu0 %6958
  %6961 = vset.pattern.permute.xlu0 2
  %6962 = vperm.xlu0 %6961, %v6760
  %v6963 = vpop.permute.xlu0 %6962
  %6965 = vset.pattern.permute.xlu0 2
  %6966 = vperm.xlu0 %6965, %v6761
  %v6967 = vpop.permute.xlu0 %6966
  %6969 = vset.pattern.permute.xlu0 2
  %6970 = vperm.xlu0 %6969, %v6762
  %v6971 = vpop.permute.xlu0 %6970
  %6973 = vset.pattern.permute.xlu0 2
  %6974 = vperm.xlu0 %6973, %v6763
  %v6975 = vpop.permute.xlu0 %6974
  %6977 = vset.pattern.permute.xlu0 2
  %6978 = vperm.xlu0 %6977, %v6764
  %v6979 = vpop.permute.xlu0 %6978
  %6981 = vset.pattern.permute.xlu0 2
  %6982 = vperm.xlu0 %6981, %v6765
  %v6983 = vpop.permute.xlu0 %6982
  %6985 = vset.pattern.permute.xlu0 2
  %6986 = vperm.xlu0 %6985, %v6766
  %v6987 = vpop.permute.xlu0 %6986
  %6989 = vset.pattern.permute.xlu0 2
  %6990 = vperm.xlu0 %6989, %v6767
  %v6991 = vpop.permute.xlu0 %6990
  %v6993 = vmul.f32 %v6749, %v6959
  %v6994 = vmul.f32 %v6750, %v6963
  %v6995 = vmul.f32 %v6751, %v6967
  %v6996 = vmul.f32 %v6752, %v6971
  %v6997 = vmul.f32 %v6753, %v6975
  %v6998 = vmul.f32 %v6754, %v6979
  %v6999 = vmul.f32 %v6755, %v6983
  %v7000 = vmul.f32 %v6756, %v6987
  %v7001 = vmul.f32 %v6757, %v6991
  %7011 = vrot.lane.b32.xlu0 %v6993, 126
  %v7012 = vpop.permute.xlu0 %7011
  %7013 = vrot.lane.b32.xlu0 %v6994, 126
  %v7014 = vpop.permute.xlu0 %7013
  %7015 = vrot.lane.b32.xlu0 %v6995, 126
  %v7016 = vpop.permute.xlu0 %7015
  %7017 = vrot.lane.b32.xlu0 %v6996, 126
  %v7018 = vpop.permute.xlu0 %7017
  %7019 = vrot.lane.b32.xlu0 %v6997, 126
  %v7020 = vpop.permute.xlu0 %7019
  %7021 = vrot.lane.b32.xlu0 %v6998, 126
  %v7022 = vpop.permute.xlu0 %7021
  %7023 = vrot.lane.b32.xlu0 %v6999, 126
  %v7024 = vpop.permute.xlu0 %7023
  %7025 = vrot.lane.b32.xlu0 %v7000, 126
  %v7026 = vpop.permute.xlu0 %7025
  %7027 = vrot.lane.b32.xlu0 %v7001, 126
  %v7028 = vpop.permute.xlu0 %7027
  %v7038 = vadd.f32 %v6948, %v7012
  %v7039 = vadd.f32 %v6949, %v7014
  %v7040 = vadd.f32 %v6950, %v7016
  %v7041 = vadd.f32 %v6951, %v7018
  %v7042 = vadd.f32 %v6952, %v7020
  %v7043 = vadd.f32 %v6953, %v7022
  %v7044 = vadd.f32 %v6954, %v7024
  %v7045 = vadd.f32 %v6955, %v7026
  %v7046 = vadd.f32 %v6956, %v7028
  %7047 = vset.pattern.permute.xlu0 3
  %7048 = vperm.xlu0 %7047, %v6759
  %v7049 = vpop.permute.xlu0 %7048
  %7051 = vset.pattern.permute.xlu0 3
  %7052 = vperm.xlu0 %7051, %v6760
  %v7053 = vpop.permute.xlu0 %7052
  %7055 = vset.pattern.permute.xlu0 3
  %7056 = vperm.xlu0 %7055, %v6761
  %v7057 = vpop.permute.xlu0 %7056
  %7059 = vset.pattern.permute.xlu0 3
  %7060 = vperm.xlu0 %7059, %v6762
  %v7061 = vpop.permute.xlu0 %7060
  %7063 = vset.pattern.permute.xlu0 3
  %7064 = vperm.xlu0 %7063, %v6763
  %v7065 = vpop.permute.xlu0 %7064
  %7067 = vset.pattern.permute.xlu0 3
  %7068 = vperm.xlu0 %7067, %v6764
  %v7069 = vpop.permute.xlu0 %7068
  %7071 = vset.pattern.permute.xlu0 3
  %7072 = vperm.xlu0 %7071, %v6765
  %v7073 = vpop.permute.xlu0 %7072
  %7075 = vset.pattern.permute.xlu0 3
  %7076 = vperm.xlu0 %7075, %v6766
  %v7077 = vpop.permute.xlu0 %7076
  %7079 = vset.pattern.permute.xlu0 3
  %7080 = vperm.xlu0 %7079, %v6767
  %v7081 = vpop.permute.xlu0 %7080
  %v7083 = vmul.f32 %v6749, %v7049
  %v7084 = vmul.f32 %v6750, %v7053
  %v7085 = vmul.f32 %v6751, %v7057
  %v7086 = vmul.f32 %v6752, %v7061
  %v7087 = vmul.f32 %v6753, %v7065
  %v7088 = vmul.f32 %v6754, %v7069
  %v7089 = vmul.f32 %v6755, %v7073
  %v7090 = vmul.f32 %v6756, %v7077
  %v7091 = vmul.f32 %v6757, %v7081
  %7101 = vrot.lane.b32.xlu0 %v7083, 109
  %v7102 = vpop.permute.xlu0 %7101
  %7103 = vrot.lane.b32.xlu0 %v7084, 109
  %v7104 = vpop.permute.xlu0 %7103
  %7105 = vrot.lane.b32.xlu0 %v7085, 109
  %v7106 = vpop.permute.xlu0 %7105
  %7107 = vrot.lane.b32.xlu0 %v7086, 109
  %v7108 = vpop.permute.xlu0 %7107
  %7109 = vrot.lane.b32.xlu0 %v7087, 109
  %v7110 = vpop.permute.xlu0 %7109
  %7111 = vrot.lane.b32.xlu0 %v7088, 109
  %v7112 = vpop.permute.xlu0 %7111
  %7113 = vrot.lane.b32.xlu0 %v7089, 109
  %v7114 = vpop.permute.xlu0 %7113
  %7115 = vrot.lane.b32.xlu0 %v7090, 109
  %v7116 = vpop.permute.xlu0 %7115
  %7117 = vrot.lane.b32.xlu0 %v7091, 109
  %v7118 = vpop.permute.xlu0 %7117
  %v7128 = vadd.f32 %v7038, %v7102
  %v7129 = vadd.f32 %v7039, %v7104
  %v7130 = vadd.f32 %v7040, %v7106
  %v7131 = vadd.f32 %v7041, %v7108
  %v7132 = vadd.f32 %v7042, %v7110
  %v7133 = vadd.f32 %v7043, %v7112
  %v7134 = vadd.f32 %v7044, %v7114
  %v7135 = vadd.f32 %v7045, %v7116
  %v7136 = vadd.f32 %v7046, %v7118
  %7137 = vset.pattern.permute.xlu0 4
  %7138 = vperm.xlu0 %7137, %v6759
  %v7139 = vpop.permute.xlu0 %7138
  %7141 = vset.pattern.permute.xlu0 4
  %7142 = vperm.xlu0 %7141, %v6760
  %v7143 = vpop.permute.xlu0 %7142
  %7145 = vset.pattern.permute.xlu0 4
  %7146 = vperm.xlu0 %7145, %v6761
  %v7147 = vpop.permute.xlu0 %7146
  %7149 = vset.pattern.permute.xlu0 4
  %7150 = vperm.xlu0 %7149, %v6762
  %v7151 = vpop.permute.xlu0 %7150
  %7153 = vset.pattern.permute.xlu0 4
  %7154 = vperm.xlu0 %7153, %v6763
  %v7155 = vpop.permute.xlu0 %7154
  %7157 = vset.pattern.permute.xlu0 4
  %7158 = vperm.xlu0 %7157, %v6764
  %v7159 = vpop.permute.xlu0 %7158
  %7161 = vset.pattern.permute.xlu0 4
  %7162 = vperm.xlu0 %7161, %v6765
  %v7163 = vpop.permute.xlu0 %7162
  %7165 = vset.pattern.permute.xlu0 4
  %7166 = vperm.xlu0 %7165, %v6766
  %v7167 = vpop.permute.xlu0 %7166
  %7169 = vset.pattern.permute.xlu0 4
  %7170 = vperm.xlu0 %7169, %v6767
  %v7171 = vpop.permute.xlu0 %7170
  %v7173 = vmul.f32 %v6749, %v7139
  %v7174 = vmul.f32 %v6750, %v7143
  %v7175 = vmul.f32 %v6751, %v7147
  %v7176 = vmul.f32 %v6752, %v7151
  %v7177 = vmul.f32 %v6753, %v7155
  %v7178 = vmul.f32 %v6754, %v7159
  %v7179 = vmul.f32 %v6755, %v7163
  %v7180 = vmul.f32 %v6756, %v7167
  %v7181 = vmul.f32 %v6757, %v7171
  %7191 = vrot.lane.b32.xlu0 %v7173, 108
  %v7192 = vpop.permute.xlu0 %7191
  %7193 = vrot.lane.b32.xlu0 %v7174, 108
  %v7194 = vpop.permute.xlu0 %7193
  %7195 = vrot.lane.b32.xlu0 %v7175, 108
  %v7196 = vpop.permute.xlu0 %7195
  %7197 = vrot.lane.b32.xlu0 %v7176, 108
  %v7198 = vpop.permute.xlu0 %7197
  %7199 = vrot.lane.b32.xlu0 %v7177, 108
  %v7200 = vpop.permute.xlu0 %7199
  %7201 = vrot.lane.b32.xlu0 %v7178, 108
  %v7202 = vpop.permute.xlu0 %7201
  %7203 = vrot.lane.b32.xlu0 %v7179, 108
  %v7204 = vpop.permute.xlu0 %7203
  %7205 = vrot.lane.b32.xlu0 %v7180, 108
  %v7206 = vpop.permute.xlu0 %7205
  %7207 = vrot.lane.b32.xlu0 %v7181, 108
  %v7208 = vpop.permute.xlu0 %7207
  %v7218 = vadd.f32 %v7128, %v7192
  %v7219 = vadd.f32 %v7129, %v7194
  %v7220 = vadd.f32 %v7130, %v7196
  %v7221 = vadd.f32 %v7131, %v7198
  %v7222 = vadd.f32 %v7132, %v7200
  %v7223 = vadd.f32 %v7133, %v7202
  %v7224 = vadd.f32 %v7134, %v7204
  %v7225 = vadd.f32 %v7135, %v7206
  %v7226 = vadd.f32 %v7136, %v7208
  %7227 = vset.pattern.permute.xlu0 5
  %7228 = vperm.xlu0 %7227, %v6759
  %v7229 = vpop.permute.xlu0 %7228
  %7231 = vset.pattern.permute.xlu0 5
  %7232 = vperm.xlu0 %7231, %v6760
  %v7233 = vpop.permute.xlu0 %7232
  %7235 = vset.pattern.permute.xlu0 5
  %7236 = vperm.xlu0 %7235, %v6761
  %v7237 = vpop.permute.xlu0 %7236
  %7239 = vset.pattern.permute.xlu0 5
  %7240 = vperm.xlu0 %7239, %v6762
  %v7241 = vpop.permute.xlu0 %7240
  %7243 = vset.pattern.permute.xlu0 5
  %7244 = vperm.xlu0 %7243, %v6763
  %v7245 = vpop.permute.xlu0 %7244
  %7247 = vset.pattern.permute.xlu0 5
  %7248 = vperm.xlu0 %7247, %v6764
  %v7249 = vpop.permute.xlu0 %7248
  %7251 = vset.pattern.permute.xlu0 5
  %7252 = vperm.xlu0 %7251, %v6765
  %v7253 = vpop.permute.xlu0 %7252
  %7255 = vset.pattern.permute.xlu0 5
  %7256 = vperm.xlu0 %7255, %v6766
  %v7257 = vpop.permute.xlu0 %7256
  %7259 = vset.pattern.permute.xlu0 5
  %7260 = vperm.xlu0 %7259, %v6767
  %v7261 = vpop.permute.xlu0 %7260
  %v7263 = vmul.f32 %v6749, %v7229
  %v7264 = vmul.f32 %v6750, %v7233
  %v7265 = vmul.f32 %v6751, %v7237
  %v7266 = vmul.f32 %v6752, %v7241
  %v7267 = vmul.f32 %v6753, %v7245
  %v7268 = vmul.f32 %v6754, %v7249
  %v7269 = vmul.f32 %v6755, %v7253
  %v7270 = vmul.f32 %v6756, %v7257
  %v7271 = vmul.f32 %v6757, %v7261
  %7281 = vrot.lane.b32.xlu0 %v7263, 107
  %v7282 = vpop.permute.xlu0 %7281
  %7283 = vrot.lane.b32.xlu0 %v7264, 107
  %v7284 = vpop.permute.xlu0 %7283
  %7285 = vrot.lane.b32.xlu0 %v7265, 107
  %v7286 = vpop.permute.xlu0 %7285
  %7287 = vrot.lane.b32.xlu0 %v7266, 107
  %v7288 = vpop.permute.xlu0 %7287
  %7289 = vrot.lane.b32.xlu0 %v7267, 107
  %v7290 = vpop.permute.xlu0 %7289
  %7291 = vrot.lane.b32.xlu0 %v7268, 107
  %v7292 = vpop.permute.xlu0 %7291
  %7293 = vrot.lane.b32.xlu0 %v7269, 107
  %v7294 = vpop.permute.xlu0 %7293
  %7295 = vrot.lane.b32.xlu0 %v7270, 107
  %v7296 = vpop.permute.xlu0 %7295
  %7297 = vrot.lane.b32.xlu0 %v7271, 107
  %v7298 = vpop.permute.xlu0 %7297
  %v7308 = vadd.f32 %v7218, %v7282
  %v7309 = vadd.f32 %v7219, %v7284
  %v7310 = vadd.f32 %v7220, %v7286
  %v7311 = vadd.f32 %v7221, %v7288
  %v7312 = vadd.f32 %v7222, %v7290
  %v7313 = vadd.f32 %v7223, %v7292
  %v7314 = vadd.f32 %v7224, %v7294
  %v7315 = vadd.f32 %v7225, %v7296
  %v7316 = vadd.f32 %v7226, %v7298
  %7317 = vset.pattern.permute.xlu0 6
  %7318 = vperm.xlu0 %7317, %v6759
  %v7319 = vpop.permute.xlu0 %7318
  %7321 = vset.pattern.permute.xlu0 6
  %7322 = vperm.xlu0 %7321, %v6760
  %v7323 = vpop.permute.xlu0 %7322
  %7325 = vset.pattern.permute.xlu0 6
  %7326 = vperm.xlu0 %7325, %v6761
  %v7327 = vpop.permute.xlu0 %7326
  %7329 = vset.pattern.permute.xlu0 6
  %7330 = vperm.xlu0 %7329, %v6762
  %v7331 = vpop.permute.xlu0 %7330
  %7333 = vset.pattern.permute.xlu0 6
  %7334 = vperm.xlu0 %7333, %v6763
  %v7335 = vpop.permute.xlu0 %7334
  %7337 = vset.pattern.permute.xlu0 6
  %7338 = vperm.xlu0 %7337, %v6764
  %v7339 = vpop.permute.xlu0 %7338
  %7341 = vset.pattern.permute.xlu0 6
  %7342 = vperm.xlu0 %7341, %v6765
  %v7343 = vpop.permute.xlu0 %7342
  %7345 = vset.pattern.permute.xlu0 6
  %7346 = vperm.xlu0 %7345, %v6766
  %v7347 = vpop.permute.xlu0 %7346
  %7349 = vset.pattern.permute.xlu0 6
  %7350 = vperm.xlu0 %7349, %v6767
  %v7351 = vpop.permute.xlu0 %7350
  %v7353 = vmul.f32 %v6749, %v7319
  %v7354 = vmul.f32 %v6750, %v7323
  %v7355 = vmul.f32 %v6751, %v7327
  %v7356 = vmul.f32 %v6752, %v7331
  %v7357 = vmul.f32 %v6753, %v7335
  %v7358 = vmul.f32 %v6754, %v7339
  %v7359 = vmul.f32 %v6755, %v7343
  %v7360 = vmul.f32 %v6756, %v7347
  %v7361 = vmul.f32 %v6757, %v7351
  %7371 = vrot.lane.b32.xlu0 %v7353, 90
  %v7372 = vpop.permute.xlu0 %7371
  %7373 = vrot.lane.b32.xlu0 %v7354, 90
  %v7374 = vpop.permute.xlu0 %7373
  %7375 = vrot.lane.b32.xlu0 %v7355, 90
  %v7376 = vpop.permute.xlu0 %7375
  %7377 = vrot.lane.b32.xlu0 %v7356, 90
  %v7378 = vpop.permute.xlu0 %7377
  %7379 = vrot.lane.b32.xlu0 %v7357, 90
  %v7380 = vpop.permute.xlu0 %7379
  %7381 = vrot.lane.b32.xlu0 %v7358, 90
  %v7382 = vpop.permute.xlu0 %7381
  %7383 = vrot.lane.b32.xlu0 %v7359, 90
  %v7384 = vpop.permute.xlu0 %7383
  %7385 = vrot.lane.b32.xlu0 %v7360, 90
  %v7386 = vpop.permute.xlu0 %7385
  %7387 = vrot.lane.b32.xlu0 %v7361, 90
  %v7388 = vpop.permute.xlu0 %7387
  %v7398 = vadd.f32 %v7308, %v7372
  %v7399 = vadd.f32 %v7309, %v7374
  %v7400 = vadd.f32 %v7310, %v7376
  %v7401 = vadd.f32 %v7311, %v7378
  %v7402 = vadd.f32 %v7312, %v7380
  %v7403 = vadd.f32 %v7313, %v7382
  %v7404 = vadd.f32 %v7314, %v7384
  %v7405 = vadd.f32 %v7315, %v7386
  %v7406 = vadd.f32 %v7316, %v7388
  %7407 = vset.pattern.permute.xlu0 7
  %7408 = vperm.xlu0 %7407, %v6759
  %v7409 = vpop.permute.xlu0 %7408
  %7411 = vset.pattern.permute.xlu0 7
  %7412 = vperm.xlu0 %7411, %v6760
  %v7413 = vpop.permute.xlu0 %7412
  %7415 = vset.pattern.permute.xlu0 7
  %7416 = vperm.xlu0 %7415, %v6761
  %v7417 = vpop.permute.xlu0 %7416
  %7419 = vset.pattern.permute.xlu0 7
  %7420 = vperm.xlu0 %7419, %v6762
  %v7421 = vpop.permute.xlu0 %7420
  %7423 = vset.pattern.permute.xlu0 7
  %7424 = vperm.xlu0 %7423, %v6763
  %v7425 = vpop.permute.xlu0 %7424
  %7427 = vset.pattern.permute.xlu0 7
  %7428 = vperm.xlu0 %7427, %v6764
  %v7429 = vpop.permute.xlu0 %7428
  %7431 = vset.pattern.permute.xlu0 7
  %7432 = vperm.xlu0 %7431, %v6765
  %v7433 = vpop.permute.xlu0 %7432
  %7435 = vset.pattern.permute.xlu0 7
  %7436 = vperm.xlu0 %7435, %v6766
  %v7437 = vpop.permute.xlu0 %7436
  %7439 = vset.pattern.permute.xlu0 7
  %7440 = vperm.xlu0 %7439, %v6767
  %v7441 = vpop.permute.xlu0 %7440
  %v7443 = vmul.f32 %v6749, %v7409
  %v7444 = vmul.f32 %v6750, %v7413
  %v7445 = vmul.f32 %v6751, %v7417
  %v7446 = vmul.f32 %v6752, %v7421
  %v7447 = vmul.f32 %v6753, %v7425
  %v7448 = vmul.f32 %v6754, %v7429
  %v7449 = vmul.f32 %v6755, %v7433
  %v7450 = vmul.f32 %v6756, %v7437
  %v7451 = vmul.f32 %v6757, %v7441
  %7461 = vrot.lane.b32.xlu0 %v7443, 89
  %v7462 = vpop.permute.xlu0 %7461
  %7463 = vrot.lane.b32.xlu0 %v7444, 89
  %v7464 = vpop.permute.xlu0 %7463
  %7465 = vrot.lane.b32.xlu0 %v7445, 89
  %v7466 = vpop.permute.xlu0 %7465
  %7467 = vrot.lane.b32.xlu0 %v7446, 89
  %v7468 = vpop.permute.xlu0 %7467
  %7469 = vrot.lane.b32.xlu0 %v7447, 89
  %v7470 = vpop.permute.xlu0 %7469
  %7471 = vrot.lane.b32.xlu0 %v7448, 89
  %v7472 = vpop.permute.xlu0 %7471
  %7473 = vrot.lane.b32.xlu0 %v7449, 89
  %v7474 = vpop.permute.xlu0 %7473
  %7475 = vrot.lane.b32.xlu0 %v7450, 89
  %v7476 = vpop.permute.xlu0 %7475
  %7477 = vrot.lane.b32.xlu0 %v7451, 89
  %v7478 = vpop.permute.xlu0 %7477
  %v7488 = vadd.f32 %v7398, %v7462
  %v7489 = vadd.f32 %v7399, %v7464
  %v7490 = vadd.f32 %v7400, %v7466
  %v7491 = vadd.f32 %v7401, %v7468
  %v7492 = vadd.f32 %v7402, %v7470
  %v7493 = vadd.f32 %v7403, %v7472
  %v7494 = vadd.f32 %v7404, %v7474
  %v7495 = vadd.f32 %v7405, %v7476
  %v7496 = vadd.f32 %v7406, %v7478
  %7497 = vset.pattern.permute.xlu0 8
  %7498 = vperm.xlu0 %7497, %v6759
  %v7499 = vpop.permute.xlu0 %7498
  %7501 = vset.pattern.permute.xlu0 8
  %7502 = vperm.xlu0 %7501, %v6760
  %v7503 = vpop.permute.xlu0 %7502
  %7505 = vset.pattern.permute.xlu0 8
  %7506 = vperm.xlu0 %7505, %v6761
  %v7507 = vpop.permute.xlu0 %7506
  %7509 = vset.pattern.permute.xlu0 8
  %7510 = vperm.xlu0 %7509, %v6762
  %v7511 = vpop.permute.xlu0 %7510
  %7513 = vset.pattern.permute.xlu0 8
  %7514 = vperm.xlu0 %7513, %v6763
  %v7515 = vpop.permute.xlu0 %7514
  %7517 = vset.pattern.permute.xlu0 8
  %7518 = vperm.xlu0 %7517, %v6764
  %v7519 = vpop.permute.xlu0 %7518
  %7521 = vset.pattern.permute.xlu0 8
  %7522 = vperm.xlu0 %7521, %v6765
  %v7523 = vpop.permute.xlu0 %7522
  %7525 = vset.pattern.permute.xlu0 8
  %7526 = vperm.xlu0 %7525, %v6766
  %v7527 = vpop.permute.xlu0 %7526
  %7529 = vset.pattern.permute.xlu0 8
  %7530 = vperm.xlu0 %7529, %v6767
  %v7531 = vpop.permute.xlu0 %7530
  %v7533 = vmul.f32 %v6749, %v7499
  %v7534 = vmul.f32 %v6750, %v7503
  %v7535 = vmul.f32 %v6751, %v7507
  %v7536 = vmul.f32 %v6752, %v7511
  %v7537 = vmul.f32 %v6753, %v7515
  %v7538 = vmul.f32 %v6754, %v7519
  %v7539 = vmul.f32 %v6755, %v7523
  %v7540 = vmul.f32 %v6756, %v7527
  %v7541 = vmul.f32 %v6757, %v7531
  %7551 = vrot.lane.b32.xlu0 %v7533, 88
  %v7552 = vpop.permute.xlu0 %7551
  %7553 = vrot.lane.b32.xlu0 %v7534, 88
  %v7554 = vpop.permute.xlu0 %7553
  %7555 = vrot.lane.b32.xlu0 %v7535, 88
  %v7556 = vpop.permute.xlu0 %7555
  %7557 = vrot.lane.b32.xlu0 %v7536, 88
  %v7558 = vpop.permute.xlu0 %7557
  %7559 = vrot.lane.b32.xlu0 %v7537, 88
  %v7560 = vpop.permute.xlu0 %7559
  %7561 = vrot.lane.b32.xlu0 %v7538, 88
  %v7562 = vpop.permute.xlu0 %7561
  %7563 = vrot.lane.b32.xlu0 %v7539, 88
  %v7564 = vpop.permute.xlu0 %7563
  %7565 = vrot.lane.b32.xlu0 %v7540, 88
  %v7566 = vpop.permute.xlu0 %7565
  %7567 = vrot.lane.b32.xlu0 %v7541, 88
  %v7568 = vpop.permute.xlu0 %7567
  %v7578 = vadd.f32 %v7488, %v7552
  %v7579 = vadd.f32 %v7489, %v7554
  %v7580 = vadd.f32 %v7490, %v7556
  %v7581 = vadd.f32 %v7491, %v7558
  %v7582 = vadd.f32 %v7492, %v7560
  %v7583 = vadd.f32 %v7493, %v7562
  %v7584 = vadd.f32 %v7494, %v7564
  %v7585 = vadd.f32 %v7495, %v7566
  %v7586 = vadd.f32 %v7496, %v7568
  %v7587 = vmul.f32 %v7578, 0.5
  %v7588 = vmul.f32 %v7579, 0.5
  %v7589 = vmul.f32 %v7580, 0.5
  %v7590 = vmul.f32 %v7581, 0.5
  %v7591 = vmul.f32 %v7582, 0.5
  %v7592 = vmul.f32 %v7583, 0.5
  %v7593 = vmul.f32 %v7584, 0.5
  %v7594 = vmul.f32 %v7585, 0.5
  %v7595 = vmul.f32 %v7586, 0.5
  %v7596 = vmul.f32 %v7578, %v7578
  %v7597 = vmul.f32 %v7579, %v7579
  %v7598 = vmul.f32 %v7580, %v7580
  %v7599 = vmul.f32 %v7581, %v7581
  %v7600 = vmul.f32 %v7582, %v7582
  %v7601 = vmul.f32 %v7583, %v7583
  %v7602 = vmul.f32 %v7584, %v7584
  %v7603 = vmul.f32 %v7585, %v7585
  %v7604 = vmul.f32 %v7586, %v7586
  %v7605 = vmul.f32 %v7596, %v7578
  %v7606 = vmul.f32 %v7597, %v7579
  %v7607 = vmul.f32 %v7598, %v7580
  %v7608 = vmul.f32 %v7599, %v7581
  %v7609 = vmul.f32 %v7600, %v7582
  %v7610 = vmul.f32 %v7601, %v7583
  %v7611 = vmul.f32 %v7602, %v7584
  %v7612 = vmul.f32 %v7603, %v7585
  %v7613 = vmul.f32 %v7604, %v7586
  %v7614 = vmul.f32 %v7605, 0.044715
  %v7615 = vmul.f32 %v7606, 0.044715
  %v7616 = vmul.f32 %v7607, 0.044715
  %v7617 = vmul.f32 %v7608, 0.044715
  %v7618 = vmul.f32 %v7609, 0.044715
  %v7619 = vmul.f32 %v7610, 0.044715
  %v7620 = vmul.f32 %v7611, 0.044715
  %v7621 = vmul.f32 %v7612, 0.044715
  %v7622 = vmul.f32 %v7613, 0.044715
  %v7623 = vadd.f32 %v7578, %v7614
  %v7624 = vadd.f32 %v7579, %v7615
  %v7625 = vadd.f32 %v7580, %v7616
  %v7626 = vadd.f32 %v7581, %v7617
  %v7627 = vadd.f32 %v7582, %v7618
  %v7628 = vadd.f32 %v7583, %v7619
  %v7629 = vadd.f32 %v7584, %v7620
  %v7630 = vadd.f32 %v7585, %v7621
  %v7631 = vadd.f32 %v7586, %v7622
  %v7632 = vmul.f32 %v7623, 0.7978846
  %v7633 = vmul.f32 %v7624, 0.7978846
  %v7634 = vmul.f32 %v7625, 0.7978846
  %v7635 = vmul.f32 %v7626, 0.7978846
  %v7636 = vmul.f32 %v7627, 0.7978846
  %v7637 = vmul.f32 %v7628, 0.7978846
  %v7638 = vmul.f32 %v7629, 0.7978846
  %v7639 = vmul.f32 %v7630, 0.7978846
  %v7640 = vmul.f32 %v7631, 0.7978846
  %v7641 = vtanh.pop %v7632
  %v7642 = vtanh.pop %v7633
  %v7643 = vtanh.pop %v7634
  %v7644 = vtanh.pop %v7635
  %v7645 = vtanh.pop %v7636
  %v7646 = vtanh.pop %v7637
  %v7647 = vtanh.pop %v7638
  %v7648 = vtanh.pop %v7639
  %v7649 = vtanh.pop %v7640
  %v7650 = vadd.f32 %v7641, 1.0
  %v7651 = vadd.f32 %v7642, 1.0
  %v7652 = vadd.f32 %v7643, 1.0
  %v7653 = vadd.f32 %v7644, 1.0
  %v7654 = vadd.f32 %v7645, 1.0
  %v7655 = vadd.f32 %v7646, 1.0
  %v7656 = vadd.f32 %v7647, 1.0
  %v7657 = vadd.f32 %v7648, 1.0
  %v7658 = vadd.f32 %v7649, 1.0
  %v7659 = vmul.f32 %v7587, %v7650
  %v7660 = vmul.f32 %v7588, %v7651
  %v7661 = vmul.f32 %v7589, %v7652
  %v7662 = vmul.f32 %v7590, %v7653
  %v7663 = vmul.f32 %v7591, %v7654
  %v7664 = vmul.f32 %v7592, %v7655
  %v7665 = vmul.f32 %v7593, %v7656
  %v7666 = vmul.f32 %v7594, %v7657
  %v7667 = vmul.f32 %v7595, %v7658
  %7677 = vrot.lane.b32.xlu0 %v7659, 119
  %v7678 = vpop.permute.xlu0 %7677
  %7679 = vrot.lane.b32.xlu0 %v7660, 119
  %v7680 = vpop.permute.xlu0 %7679
  %7681 = vrot.lane.b32.xlu0 %v7661, 119
  %v7682 = vpop.permute.xlu0 %7681
  %7683 = vrot.lane.b32.xlu0 %v7662, 119
  %v7684 = vpop.permute.xlu0 %7683
  %7685 = vrot.lane.b32.xlu0 %v7663, 119
  %v7686 = vpop.permute.xlu0 %7685
  %7687 = vrot.lane.b32.xlu0 %v7664, 119
  %v7688 = vpop.permute.xlu0 %7687
  %7689 = vrot.lane.b32.xlu0 %v7665, 119
  %v7690 = vpop.permute.xlu0 %7689
  %7691 = vrot.lane.b32.xlu0 %v7666, 119
  %v7692 = vpop.permute.xlu0 %7691
  %7693 = vrot.lane.b32.xlu0 %v7667, 119
  %v7694 = vpop.permute.xlu0 %7693
  %vm7704 = vcmask 1048504
  %7705 = vst.msk [vmem:[#allocation2] sm:$0xff] %vm7704, %v7678
  %vm7706 = vcmask 64512
  %7707 = vst.msk [vmem:[#allocation2 + $0x8] sm:$0xff] %vm7706, %v7678
  %7708 = vst.msk [vmem:[#allocation2 + $0x10] sm:$0xff] %vm7704, %v7680
  %7709 = vst.msk [vmem:[#allocation2 + $0x18] sm:$0xff] %vm7706, %v7680
  %7710 = vst.msk [vmem:[#allocation2 + $0x20] sm:$0xff] %vm7704, %v7682
  %7711 = vst.msk [vmem:[#allocation2 + $0x28] sm:$0xff] %vm7706, %v7682
  %7712 = vst.msk [vmem:[#allocation2 + $0x30] sm:$0xff] %vm7704, %v7684
  %7713 = vst.msk [vmem:[#allocation2 + $0x38] sm:$0xff] %vm7706, %v7684
  %7714 = vst.msk [vmem:[#allocation2 + $0x40] sm:$0xff] %vm7704, %v7686
  %7715 = vst.msk [vmem:[#allocation2 + $0x48] sm:$0xff] %vm7706, %v7686
  %7716 = vst.msk [vmem:[#allocation2 + $0x50] sm:$0xff] %vm7704, %v7688
  %7717 = vst.msk [vmem:[#allocation2 + $0x58] sm:$0xff] %vm7706, %v7688
  %7718 = vst.msk [vmem:[#allocation2 + $0x60] sm:$0xff] %vm7704, %v7690
  %7719 = vst.msk [vmem:[#allocation2 + $0x68] sm:$0xff] %vm7706, %v7690
  %7720 = vst.msk [vmem:[#allocation2 + $0x70] sm:$0xff] %vm7704, %v7692
  %7721 = vst.msk [vmem:[#allocation2 + $0x78] sm:$0xff] %vm7706, %v7692
  %vm7722 = vcmask 1044408
  %7723 = vst.msk [vmem:[#allocation2 + $0x80] sm:$0xf] %vm7722, %v7694
  %vm7724 = vcmask 60416
  %7725 = vst.msk [vmem:[#allocation2 + $0x88] sm:$0xf] %vm7724, %v7694
  %s7726 = scalar_lea.vmem %s0, 576
  %v7727 = vld [vmem:[%s7726] sm:$0xff]
  %v7728 = vld [vmem:[%s7726 + $0x8] sm:$0xff]
  %v7729 = vld [vmem:[%s7726 + $0x10] sm:$0xff]
  %v7730 = vld [vmem:[%s7726 + $0x18] sm:$0xff]
  %v7731 = vld [vmem:[%s7726 + $0x20] sm:$0xff]
  %v7732 = vld [vmem:[%s7726 + $0x28] sm:$0xff]
  %v7733 = vld [vmem:[%s7726 + $0x30] sm:$0xff]
  %v7734 = vld [vmem:[%s7726 + $0x38] sm:$0xff]
  %v7735 = vld [vmem:[%s7726 + $0x40] sm:$0xf]
  %s7736 = scalar_lea.vmem %s1, 576
  %v7737 = vld [vmem:[%s7736] sm:$0xff]
  %v7738 = vld [vmem:[%s7736 + $0x8] sm:$0xff]
  %v7739 = vld [vmem:[%s7736 + $0x10] sm:$0xff]
  %v7740 = vld [vmem:[%s7736 + $0x18] sm:$0xff]
  %v7741 = vld [vmem:[%s7736 + $0x20] sm:$0xff]
  %v7742 = vld [vmem:[%s7736 + $0x28] sm:$0xff]
  %v7743 = vld [vmem:[%s7736 + $0x30] sm:$0xff]
  %v7744 = vld [vmem:[%s7736 + $0x38] sm:$0xff]
  %v7745 = vld [vmem:[%s7736 + $0x40] sm:$0xf]
  %7747 = vset.pattern.permute.xlu0 9
  %7748 = vperm.xlu0 %7747, %v7737
  %v7749 = vpop.permute.xlu0 %7748
  %7752 = vset.pattern.permute.xlu0 9
  %7753 = vperm.xlu0 %7752, %v7738
  %v7754 = vpop.permute.xlu0 %7753
  %7757 = vset.pattern.permute.xlu0 9
  %7758 = vperm.xlu0 %7757, %v7739
  %v7759 = vpop.permute.xlu0 %7758
  %7762 = vset.pattern.permute.xlu0 9
  %7763 = vperm.xlu0 %7762, %v7740
  %v7764 = vpop.permute.xlu0 %7763
  %7767 = vset.pattern.permute.xlu0 9
  %7768 = vperm.xlu0 %7767, %v7741
  %v7769 = vpop.permute.xlu0 %7768
  %7772 = vset.pattern.permute.xlu0 9
  %7773 = vperm.xlu0 %7772, %v7742
  %v7774 = vpop.permute.xlu0 %7773
  %7777 = vset.pattern.permute.xlu0 9
  %7778 = vperm.xlu0 %7777, %v7743
  %v7779 = vpop.permute.xlu0 %7778
  %7782 = vset.pattern.permute.xlu0 9
  %7783 = vperm.xlu0 %7782, %v7744
  %v7784 = vpop.permute.xlu0 %7783
  %7787 = vset.pattern.permute.xlu0 9
  %7788 = vperm.xlu0 %7787, %v7745
  %v7789 = vpop.permute.xlu0 %7788
  %7791 = vset.pattern.permute.xlu0 0
  %7792 = vperm.xlu0 %7791, %v7737
  %v7793 = vpop.permute.xlu0 %7792
  %7795 = vset.pattern.permute.xlu0 0
  %7796 = vperm.xlu0 %7795, %v7738
  %v7797 = vpop.permute.xlu0 %7796
  %7799 = vset.pattern.permute.xlu0 0
  %7800 = vperm.xlu0 %7799, %v7739
  %v7801 = vpop.permute.xlu0 %7800
  %7803 = vset.pattern.permute.xlu0 0
  %7804 = vperm.xlu0 %7803, %v7740
  %v7805 = vpop.permute.xlu0 %7804
  %7807 = vset.pattern.permute.xlu0 0
  %7808 = vperm.xlu0 %7807, %v7741
  %v7809 = vpop.permute.xlu0 %7808
  %7811 = vset.pattern.permute.xlu0 0
  %7812 = vperm.xlu0 %7811, %v7742
  %v7813 = vpop.permute.xlu0 %7812
  %7815 = vset.pattern.permute.xlu0 0
  %7816 = vperm.xlu0 %7815, %v7743
  %v7817 = vpop.permute.xlu0 %7816
  %7819 = vset.pattern.permute.xlu0 0
  %7820 = vperm.xlu0 %7819, %v7744
  %v7821 = vpop.permute.xlu0 %7820
  %7823 = vset.pattern.permute.xlu0 0
  %7824 = vperm.xlu0 %7823, %v7745
  %v7825 = vpop.permute.xlu0 %7824
  %v7827 = vmul.f32 %v7727, %v7793
  %v7828 = vmul.f32 %v7728, %v7797
  %v7829 = vmul.f32 %v7729, %v7801
  %v7830 = vmul.f32 %v7730, %v7805
  %v7831 = vmul.f32 %v7731, %v7809
  %v7832 = vmul.f32 %v7732, %v7813
  %v7833 = vmul.f32 %v7733, %v7817
  %v7834 = vmul.f32 %v7734, %v7821
  %v7835 = vmul.f32 %v7735, %v7825
  %v7836 = vadd.f32 %v7749, %v7827
  %v7837 = vadd.f32 %v7754, %v7828
  %v7838 = vadd.f32 %v7759, %v7829
  %v7839 = vadd.f32 %v7764, %v7830
  %v7840 = vadd.f32 %v7769, %v7831
  %v7841 = vadd.f32 %v7774, %v7832
  %v7842 = vadd.f32 %v7779, %v7833
  %v7843 = vadd.f32 %v7784, %v7834
  %v7844 = vadd.f32 %v7789, %v7835
  %7845 = vset.pattern.permute.xlu0 1
  %7846 = vperm.xlu0 %7845, %v7737
  %v7847 = vpop.permute.xlu0 %7846
  %7849 = vset.pattern.permute.xlu0 1
  %7850 = vperm.xlu0 %7849, %v7738
  %v7851 = vpop.permute.xlu0 %7850
  %7853 = vset.pattern.permute.xlu0 1
  %7854 = vperm.xlu0 %7853, %v7739
  %v7855 = vpop.permute.xlu0 %7854
  %7857 = vset.pattern.permute.xlu0 1
  %7858 = vperm.xlu0 %7857, %v7740
  %v7859 = vpop.permute.xlu0 %7858
  %7861 = vset.pattern.permute.xlu0 1
  %7862 = vperm.xlu0 %7861, %v7741
  %v7863 = vpop.permute.xlu0 %7862
  %7865 = vset.pattern.permute.xlu0 1
  %7866 = vperm.xlu0 %7865, %v7742
  %v7867 = vpop.permute.xlu0 %7866
  %7869 = vset.pattern.permute.xlu0 1
  %7870 = vperm.xlu0 %7869, %v7743
  %v7871 = vpop.permute.xlu0 %7870
  %7873 = vset.pattern.permute.xlu0 1
  %7874 = vperm.xlu0 %7873, %v7744
  %v7875 = vpop.permute.xlu0 %7874
  %7877 = vset.pattern.permute.xlu0 1
  %7878 = vperm.xlu0 %7877, %v7745
  %v7879 = vpop.permute.xlu0 %7878
  %v7881 = vmul.f32 %v7727, %v7847
  %v7882 = vmul.f32 %v7728, %v7851
  %v7883 = vmul.f32 %v7729, %v7855
  %v7884 = vmul.f32 %v7730, %v7859
  %v7885 = vmul.f32 %v7731, %v7863
  %v7886 = vmul.f32 %v7732, %v7867
  %v7887 = vmul.f32 %v7733, %v7871
  %v7888 = vmul.f32 %v7734, %v7875
  %v7889 = vmul.f32 %v7735, %v7879
  %7899 = vrot.lane.b32.xlu0 %v7881, 127
  %v7900 = vpop.permute.xlu0 %7899
  %7901 = vrot.lane.b32.xlu0 %v7882, 127
  %v7902 = vpop.permute.xlu0 %7901
  %7903 = vrot.lane.b32.xlu0 %v7883, 127
  %v7904 = vpop.permute.xlu0 %7903
  %7905 = vrot.lane.b32.xlu0 %v7884, 127
  %v7906 = vpop.permute.xlu0 %7905
  %7907 = vrot.lane.b32.xlu0 %v7885, 127
  %v7908 = vpop.permute.xlu0 %7907
  %7909 = vrot.lane.b32.xlu0 %v7886, 127
  %v7910 = vpop.permute.xlu0 %7909
  %7911 = vrot.lane.b32.xlu0 %v7887, 127
  %v7912 = vpop.permute.xlu0 %7911
  %7913 = vrot.lane.b32.xlu0 %v7888, 127
  %v7914 = vpop.permute.xlu0 %7913
  %7915 = vrot.lane.b32.xlu0 %v7889, 127
  %v7916 = vpop.permute.xlu0 %7915
  %v7926 = vadd.f32 %v7836, %v7900
  %v7927 = vadd.f32 %v7837, %v7902
  %v7928 = vadd.f32 %v7838, %v7904
  %v7929 = vadd.f32 %v7839, %v7906
  %v7930 = vadd.f32 %v7840, %v7908
  %v7931 = vadd.f32 %v7841, %v7910
  %v7932 = vadd.f32 %v7842, %v7912
  %v7933 = vadd.f32 %v7843, %v7914
  %v7934 = vadd.f32 %v7844, %v7916
  %7935 = vset.pattern.permute.xlu0 2
  %7936 = vperm.xlu0 %7935, %v7737
  %v7937 = vpop.permute.xlu0 %7936
  %7939 = vset.pattern.permute.xlu0 2
  %7940 = vperm.xlu0 %7939, %v7738
  %v7941 = vpop.permute.xlu0 %7940
  %7943 = vset.pattern.permute.xlu0 2
  %7944 = vperm.xlu0 %7943, %v7739
  %v7945 = vpop.permute.xlu0 %7944
  %7947 = vset.pattern.permute.xlu0 2
  %7948 = vperm.xlu0 %7947, %v7740
  %v7949 = vpop.permute.xlu0 %7948
  %7951 = vset.pattern.permute.xlu0 2
  %7952 = vperm.xlu0 %7951, %v7741
  %v7953 = vpop.permute.xlu0 %7952
  %7955 = vset.pattern.permute.xlu0 2
  %7956 = vperm.xlu0 %7955, %v7742
  %v7957 = vpop.permute.xlu0 %7956
  %7959 = vset.pattern.permute.xlu0 2
  %7960 = vperm.xlu0 %7959, %v7743
  %v7961 = vpop.permute.xlu0 %7960
  %7963 = vset.pattern.permute.xlu0 2
  %7964 = vperm.xlu0 %7963, %v7744
  %v7965 = vpop.permute.xlu0 %7964
  %7967 = vset.pattern.permute.xlu0 2
  %7968 = vperm.xlu0 %7967, %v7745
  %v7969 = vpop.permute.xlu0 %7968
  %v7971 = vmul.f32 %v7727, %v7937
  %v7972 = vmul.f32 %v7728, %v7941
  %v7973 = vmul.f32 %v7729, %v7945
  %v7974 = vmul.f32 %v7730, %v7949
  %v7975 = vmul.f32 %v7731, %v7953
  %v7976 = vmul.f32 %v7732, %v7957
  %v7977 = vmul.f32 %v7733, %v7961
  %v7978 = vmul.f32 %v7734, %v7965
  %v7979 = vmul.f32 %v7735, %v7969
  %7989 = vrot.lane.b32.xlu0 %v7971, 126
  %v7990 = vpop.permute.xlu0 %7989
  %7991 = vrot.lane.b32.xlu0 %v7972, 126
  %v7992 = vpop.permute.xlu0 %7991
  %7993 = vrot.lane.b32.xlu0 %v7973, 126
  %v7994 = vpop.permute.xlu0 %7993
  %7995 = vrot.lane.b32.xlu0 %v7974, 126
  %v7996 = vpop.permute.xlu0 %7995
  %7997 = vrot.lane.b32.xlu0 %v7975, 126
  %v7998 = vpop.permute.xlu0 %7997
  %7999 = vrot.lane.b32.xlu0 %v7976, 126
  %v8000 = vpop.permute.xlu0 %7999
  %8001 = vrot.lane.b32.xlu0 %v7977, 126
  %v8002 = vpop.permute.xlu0 %8001
  %8003 = vrot.lane.b32.xlu0 %v7978, 126
  %v8004 = vpop.permute.xlu0 %8003
  %8005 = vrot.lane.b32.xlu0 %v7979, 126
  %v8006 = vpop.permute.xlu0 %8005
  %v8016 = vadd.f32 %v7926, %v7990
  %v8017 = vadd.f32 %v7927, %v7992
  %v8018 = vadd.f32 %v7928, %v7994
  %v8019 = vadd.f32 %v7929, %v7996
  %v8020 = vadd.f32 %v7930, %v7998
  %v8021 = vadd.f32 %v7931, %v8000
  %v8022 = vadd.f32 %v7932, %v8002
  %v8023 = vadd.f32 %v7933, %v8004
  %v8024 = vadd.f32 %v7934, %v8006
  %8025 = vset.pattern.permute.xlu0 3
  %8026 = vperm.xlu0 %8025, %v7737
  %v8027 = vpop.permute.xlu0 %8026
  %8029 = vset.pattern.permute.xlu0 3
  %8030 = vperm.xlu0 %8029, %v7738
  %v8031 = vpop.permute.xlu0 %8030
  %8033 = vset.pattern.permute.xlu0 3
  %8034 = vperm.xlu0 %8033, %v7739
  %v8035 = vpop.permute.xlu0 %8034
  %8037 = vset.pattern.permute.xlu0 3
  %8038 = vperm.xlu0 %8037, %v7740
  %v8039 = vpop.permute.xlu0 %8038
  %8041 = vset.pattern.permute.xlu0 3
  %8042 = vperm.xlu0 %8041, %v7741
  %v8043 = vpop.permute.xlu0 %8042
  %8045 = vset.pattern.permute.xlu0 3
  %8046 = vperm.xlu0 %8045, %v7742
  %v8047 = vpop.permute.xlu0 %8046
  %8049 = vset.pattern.permute.xlu0 3
  %8050 = vperm.xlu0 %8049, %v7743
  %v8051 = vpop.permute.xlu0 %8050
  %8053 = vset.pattern.permute.xlu0 3
  %8054 = vperm.xlu0 %8053, %v7744
  %v8055 = vpop.permute.xlu0 %8054
  %8057 = vset.pattern.permute.xlu0 3
  %8058 = vperm.xlu0 %8057, %v7745
  %v8059 = vpop.permute.xlu0 %8058
  %v8061 = vmul.f32 %v7727, %v8027
  %v8062 = vmul.f32 %v7728, %v8031
  %v8063 = vmul.f32 %v7729, %v8035
  %v8064 = vmul.f32 %v7730, %v8039
  %v8065 = vmul.f32 %v7731, %v8043
  %v8066 = vmul.f32 %v7732, %v8047
  %v8067 = vmul.f32 %v7733, %v8051
  %v8068 = vmul.f32 %v7734, %v8055
  %v8069 = vmul.f32 %v7735, %v8059
  %8079 = vrot.lane.b32.xlu0 %v8061, 109
  %v8080 = vpop.permute.xlu0 %8079
  %8081 = vrot.lane.b32.xlu0 %v8062, 109
  %v8082 = vpop.permute.xlu0 %8081
  %8083 = vrot.lane.b32.xlu0 %v8063, 109
  %v8084 = vpop.permute.xlu0 %8083
  %8085 = vrot.lane.b32.xlu0 %v8064, 109
  %v8086 = vpop.permute.xlu0 %8085
  %8087 = vrot.lane.b32.xlu0 %v8065, 109
  %v8088 = vpop.permute.xlu0 %8087
  %8089 = vrot.lane.b32.xlu0 %v8066, 109
  %v8090 = vpop.permute.xlu0 %8089
  %8091 = vrot.lane.b32.xlu0 %v8067, 109
  %v8092 = vpop.permute.xlu0 %8091
  %8093 = vrot.lane.b32.xlu0 %v8068, 109
  %v8094 = vpop.permute.xlu0 %8093
  %8095 = vrot.lane.b32.xlu0 %v8069, 109
  %v8096 = vpop.permute.xlu0 %8095
  %v8106 = vadd.f32 %v8016, %v8080
  %v8107 = vadd.f32 %v8017, %v8082
  %v8108 = vadd.f32 %v8018, %v8084
  %v8109 = vadd.f32 %v8019, %v8086
  %v8110 = vadd.f32 %v8020, %v8088
  %v8111 = vadd.f32 %v8021, %v8090
  %v8112 = vadd.f32 %v8022, %v8092
  %v8113 = vadd.f32 %v8023, %v8094
  %v8114 = vadd.f32 %v8024, %v8096
  %8115 = vset.pattern.permute.xlu0 4
  %8116 = vperm.xlu0 %8115, %v7737
  %v8117 = vpop.permute.xlu0 %8116
  %8119 = vset.pattern.permute.xlu0 4
  %8120 = vperm.xlu0 %8119, %v7738
  %v8121 = vpop.permute.xlu0 %8120
  %8123 = vset.pattern.permute.xlu0 4
  %8124 = vperm.xlu0 %8123, %v7739
  %v8125 = vpop.permute.xlu0 %8124
  %8127 = vset.pattern.permute.xlu0 4
  %8128 = vperm.xlu0 %8127, %v7740
  %v8129 = vpop.permute.xlu0 %8128
  %8131 = vset.pattern.permute.xlu0 4
  %8132 = vperm.xlu0 %8131, %v7741
  %v8133 = vpop.permute.xlu0 %8132
  %8135 = vset.pattern.permute.xlu0 4
  %8136 = vperm.xlu0 %8135, %v7742
  %v8137 = vpop.permute.xlu0 %8136
  %8139 = vset.pattern.permute.xlu0 4
  %8140 = vperm.xlu0 %8139, %v7743
  %v8141 = vpop.permute.xlu0 %8140
  %8143 = vset.pattern.permute.xlu0 4
  %8144 = vperm.xlu0 %8143, %v7744
  %v8145 = vpop.permute.xlu0 %8144
  %8147 = vset.pattern.permute.xlu0 4
  %8148 = vperm.xlu0 %8147, %v7745
  %v8149 = vpop.permute.xlu0 %8148
  %v8151 = vmul.f32 %v7727, %v8117
  %v8152 = vmul.f32 %v7728, %v8121
  %v8153 = vmul.f32 %v7729, %v8125
  %v8154 = vmul.f32 %v7730, %v8129
  %v8155 = vmul.f32 %v7731, %v8133
  %v8156 = vmul.f32 %v7732, %v8137
  %v8157 = vmul.f32 %v7733, %v8141
  %v8158 = vmul.f32 %v7734, %v8145
  %v8159 = vmul.f32 %v7735, %v8149
  %8169 = vrot.lane.b32.xlu0 %v8151, 108
  %v8170 = vpop.permute.xlu0 %8169
  %8171 = vrot.lane.b32.xlu0 %v8152, 108
  %v8172 = vpop.permute.xlu0 %8171
  %8173 = vrot.lane.b32.xlu0 %v8153, 108
  %v8174 = vpop.permute.xlu0 %8173
  %8175 = vrot.lane.b32.xlu0 %v8154, 108
  %v8176 = vpop.permute.xlu0 %8175
  %8177 = vrot.lane.b32.xlu0 %v8155, 108
  %v8178 = vpop.permute.xlu0 %8177
  %8179 = vrot.lane.b32.xlu0 %v8156, 108
  %v8180 = vpop.permute.xlu0 %8179
  %8181 = vrot.lane.b32.xlu0 %v8157, 108
  %v8182 = vpop.permute.xlu0 %8181
  %8183 = vrot.lane.b32.xlu0 %v8158, 108
  %v8184 = vpop.permute.xlu0 %8183
  %8185 = vrot.lane.b32.xlu0 %v8159, 108
  %v8186 = vpop.permute.xlu0 %8185
  %v8196 = vadd.f32 %v8106, %v8170
  %v8197 = vadd.f32 %v8107, %v8172
  %v8198 = vadd.f32 %v8108, %v8174
  %v8199 = vadd.f32 %v8109, %v8176
  %v8200 = vadd.f32 %v8110, %v8178
  %v8201 = vadd.f32 %v8111, %v8180
  %v8202 = vadd.f32 %v8112, %v8182
  %v8203 = vadd.f32 %v8113, %v8184
  %v8204 = vadd.f32 %v8114, %v8186
  %8205 = vset.pattern.permute.xlu0 5
  %8206 = vperm.xlu0 %8205, %v7737
  %v8207 = vpop.permute.xlu0 %8206
  %8209 = vset.pattern.permute.xlu0 5
  %8210 = vperm.xlu0 %8209, %v7738
  %v8211 = vpop.permute.xlu0 %8210
  %8213 = vset.pattern.permute.xlu0 5
  %8214 = vperm.xlu0 %8213, %v7739
  %v8215 = vpop.permute.xlu0 %8214
  %8217 = vset.pattern.permute.xlu0 5
  %8218 = vperm.xlu0 %8217, %v7740
  %v8219 = vpop.permute.xlu0 %8218
  %8221 = vset.pattern.permute.xlu0 5
  %8222 = vperm.xlu0 %8221, %v7741
  %v8223 = vpop.permute.xlu0 %8222
  %8225 = vset.pattern.permute.xlu0 5
  %8226 = vperm.xlu0 %8225, %v7742
  %v8227 = vpop.permute.xlu0 %8226
  %8229 = vset.pattern.permute.xlu0 5
  %8230 = vperm.xlu0 %8229, %v7743
  %v8231 = vpop.permute.xlu0 %8230
  %8233 = vset.pattern.permute.xlu0 5
  %8234 = vperm.xlu0 %8233, %v7744
  %v8235 = vpop.permute.xlu0 %8234
  %8237 = vset.pattern.permute.xlu0 5
  %8238 = vperm.xlu0 %8237, %v7745
  %v8239 = vpop.permute.xlu0 %8238
  %v8241 = vmul.f32 %v7727, %v8207
  %v8242 = vmul.f32 %v7728, %v8211
  %v8243 = vmul.f32 %v7729, %v8215
  %v8244 = vmul.f32 %v7730, %v8219
  %v8245 = vmul.f32 %v7731, %v8223
  %v8246 = vmul.f32 %v7732, %v8227
  %v8247 = vmul.f32 %v7733, %v8231
  %v8248 = vmul.f32 %v7734, %v8235
  %v8249 = vmul.f32 %v7735, %v8239
  %8259 = vrot.lane.b32.xlu0 %v8241, 107
  %v8260 = vpop.permute.xlu0 %8259
  %8261 = vrot.lane.b32.xlu0 %v8242, 107
  %v8262 = vpop.permute.xlu0 %8261
  %8263 = vrot.lane.b32.xlu0 %v8243, 107
  %v8264 = vpop.permute.xlu0 %8263
  %8265 = vrot.lane.b32.xlu0 %v8244, 107
  %v8266 = vpop.permute.xlu0 %8265
  %8267 = vrot.lane.b32.xlu0 %v8245, 107
  %v8268 = vpop.permute.xlu0 %8267
  %8269 = vrot.lane.b32.xlu0 %v8246, 107
  %v8270 = vpop.permute.xlu0 %8269
  %8271 = vrot.lane.b32.xlu0 %v8247, 107
  %v8272 = vpop.permute.xlu0 %8271
  %8273 = vrot.lane.b32.xlu0 %v8248, 107
  %v8274 = vpop.permute.xlu0 %8273
  %8275 = vrot.lane.b32.xlu0 %v8249, 107
  %v8276 = vpop.permute.xlu0 %8275
  %v8286 = vadd.f32 %v8196, %v8260
  %v8287 = vadd.f32 %v8197, %v8262
  %v8288 = vadd.f32 %v8198, %v8264
  %v8289 = vadd.f32 %v8199, %v8266
  %v8290 = vadd.f32 %v8200, %v8268
  %v8291 = vadd.f32 %v8201, %v8270
  %v8292 = vadd.f32 %v8202, %v8272
  %v8293 = vadd.f32 %v8203, %v8274
  %v8294 = vadd.f32 %v8204, %v8276
  %8295 = vset.pattern.permute.xlu0 6
  %8296 = vperm.xlu0 %8295, %v7737
  %v8297 = vpop.permute.xlu0 %8296
  %8299 = vset.pattern.permute.xlu0 6
  %8300 = vperm.xlu0 %8299, %v7738
  %v8301 = vpop.permute.xlu0 %8300
  %8303 = vset.pattern.permute.xlu0 6
  %8304 = vperm.xlu0 %8303, %v7739
  %v8305 = vpop.permute.xlu0 %8304
  %8307 = vset.pattern.permute.xlu0 6
  %8308 = vperm.xlu0 %8307, %v7740
  %v8309 = vpop.permute.xlu0 %8308
  %8311 = vset.pattern.permute.xlu0 6
  %8312 = vperm.xlu0 %8311, %v7741
  %v8313 = vpop.permute.xlu0 %8312
  %8315 = vset.pattern.permute.xlu0 6
  %8316 = vperm.xlu0 %8315, %v7742
  %v8317 = vpop.permute.xlu0 %8316
  %8319 = vset.pattern.permute.xlu0 6
  %8320 = vperm.xlu0 %8319, %v7743
  %v8321 = vpop.permute.xlu0 %8320
  %8323 = vset.pattern.permute.xlu0 6
  %8324 = vperm.xlu0 %8323, %v7744
  %v8325 = vpop.permute.xlu0 %8324
  %8327 = vset.pattern.permute.xlu0 6
  %8328 = vperm.xlu0 %8327, %v7745
  %v8329 = vpop.permute.xlu0 %8328
  %v8331 = vmul.f32 %v7727, %v8297
  %v8332 = vmul.f32 %v7728, %v8301
  %v8333 = vmul.f32 %v7729, %v8305
  %v8334 = vmul.f32 %v7730, %v8309
  %v8335 = vmul.f32 %v7731, %v8313
  %v8336 = vmul.f32 %v7732, %v8317
  %v8337 = vmul.f32 %v7733, %v8321
  %v8338 = vmul.f32 %v7734, %v8325
  %v8339 = vmul.f32 %v7735, %v8329
  %8349 = vrot.lane.b32.xlu0 %v8331, 90
  %v8350 = vpop.permute.xlu0 %8349
  %8351 = vrot.lane.b32.xlu0 %v8332, 90
  %v8352 = vpop.permute.xlu0 %8351
  %8353 = vrot.lane.b32.xlu0 %v8333, 90
  %v8354 = vpop.permute.xlu0 %8353
  %8355 = vrot.lane.b32.xlu0 %v8334, 90
  %v8356 = vpop.permute.xlu0 %8355
  %8357 = vrot.lane.b32.xlu0 %v8335, 90
  %v8358 = vpop.permute.xlu0 %8357
  %8359 = vrot.lane.b32.xlu0 %v8336, 90
  %v8360 = vpop.permute.xlu0 %8359
  %8361 = vrot.lane.b32.xlu0 %v8337, 90
  %v8362 = vpop.permute.xlu0 %8361
  %8363 = vrot.lane.b32.xlu0 %v8338, 90
  %v8364 = vpop.permute.xlu0 %8363
  %8365 = vrot.lane.b32.xlu0 %v8339, 90
  %v8366 = vpop.permute.xlu0 %8365
  %v8376 = vadd.f32 %v8286, %v8350
  %v8377 = vadd.f32 %v8287, %v8352
  %v8378 = vadd.f32 %v8288, %v8354
  %v8379 = vadd.f32 %v8289, %v8356
  %v8380 = vadd.f32 %v8290, %v8358
  %v8381 = vadd.f32 %v8291, %v8360
  %v8382 = vadd.f32 %v8292, %v8362
  %v8383 = vadd.f32 %v8293, %v8364
  %v8384 = vadd.f32 %v8294, %v8366
  %8385 = vset.pattern.permute.xlu0 7
  %8386 = vperm.xlu0 %8385, %v7737
  %v8387 = vpop.permute.xlu0 %8386
  %8389 = vset.pattern.permute.xlu0 7
  %8390 = vperm.xlu0 %8389, %v7738
  %v8391 = vpop.permute.xlu0 %8390
  %8393 = vset.pattern.permute.xlu0 7
  %8394 = vperm.xlu0 %8393, %v7739
  %v8395 = vpop.permute.xlu0 %8394
  %8397 = vset.pattern.permute.xlu0 7
  %8398 = vperm.xlu0 %8397, %v7740
  %v8399 = vpop.permute.xlu0 %8398
  %8401 = vset.pattern.permute.xlu0 7
  %8402 = vperm.xlu0 %8401, %v7741
  %v8403 = vpop.permute.xlu0 %8402
  %8405 = vset.pattern.permute.xlu0 7
  %8406 = vperm.xlu0 %8405, %v7742
  %v8407 = vpop.permute.xlu0 %8406
  %8409 = vset.pattern.permute.xlu0 7
  %8410 = vperm.xlu0 %8409, %v7743
  %v8411 = vpop.permute.xlu0 %8410
  %8413 = vset.pattern.permute.xlu0 7
  %8414 = vperm.xlu0 %8413, %v7744
  %v8415 = vpop.permute.xlu0 %8414
  %8417 = vset.pattern.permute.xlu0 7
  %8418 = vperm.xlu0 %8417, %v7745
  %v8419 = vpop.permute.xlu0 %8418
  %v8421 = vmul.f32 %v7727, %v8387
  %v8422 = vmul.f32 %v7728, %v8391
  %v8423 = vmul.f32 %v7729, %v8395
  %v8424 = vmul.f32 %v7730, %v8399
  %v8425 = vmul.f32 %v7731, %v8403
  %v8426 = vmul.f32 %v7732, %v8407
  %v8427 = vmul.f32 %v7733, %v8411
  %v8428 = vmul.f32 %v7734, %v8415
  %v8429 = vmul.f32 %v7735, %v8419
  %8439 = vrot.lane.b32.xlu0 %v8421, 89
  %v8440 = vpop.permute.xlu0 %8439
  %8441 = vrot.lane.b32.xlu0 %v8422, 89
  %v8442 = vpop.permute.xlu0 %8441
  %8443 = vrot.lane.b32.xlu0 %v8423, 89
  %v8444 = vpop.permute.xlu0 %8443
  %8445 = vrot.lane.b32.xlu0 %v8424, 89
  %v8446 = vpop.permute.xlu0 %8445
  %8447 = vrot.lane.b32.xlu0 %v8425, 89
  %v8448 = vpop.permute.xlu0 %8447
  %8449 = vrot.lane.b32.xlu0 %v8426, 89
  %v8450 = vpop.permute.xlu0 %8449
  %8451 = vrot.lane.b32.xlu0 %v8427, 89
  %v8452 = vpop.permute.xlu0 %8451
  %8453 = vrot.lane.b32.xlu0 %v8428, 89
  %v8454 = vpop.permute.xlu0 %8453
  %8455 = vrot.lane.b32.xlu0 %v8429, 89
  %v8456 = vpop.permute.xlu0 %8455
  %v8466 = vadd.f32 %v8376, %v8440
  %v8467 = vadd.f32 %v8377, %v8442
  %v8468 = vadd.f32 %v8378, %v8444
  %v8469 = vadd.f32 %v8379, %v8446
  %v8470 = vadd.f32 %v8380, %v8448
  %v8471 = vadd.f32 %v8381, %v8450
  %v8472 = vadd.f32 %v8382, %v8452
  %v8473 = vadd.f32 %v8383, %v8454
  %v8474 = vadd.f32 %v8384, %v8456
  %8475 = vset.pattern.permute.xlu0 8
  %8476 = vperm.xlu0 %8475, %v7737
  %v8477 = vpop.permute.xlu0 %8476
  %8479 = vset.pattern.permute.xlu0 8
  %8480 = vperm.xlu0 %8479, %v7738
  %v8481 = vpop.permute.xlu0 %8480
  %8483 = vset.pattern.permute.xlu0 8
  %8484 = vperm.xlu0 %8483, %v7739
  %v8485 = vpop.permute.xlu0 %8484
  %8487 = vset.pattern.permute.xlu0 8
  %8488 = vperm.xlu0 %8487, %v7740
  %v8489 = vpop.permute.xlu0 %8488
  %8491 = vset.pattern.permute.xlu0 8
  %8492 = vperm.xlu0 %8491, %v7741
  %v8493 = vpop.permute.xlu0 %8492
  %8495 = vset.pattern.permute.xlu0 8
  %8496 = vperm.xlu0 %8495, %v7742
  %v8497 = vpop.permute.xlu0 %8496
  %8499 = vset.pattern.permute.xlu0 8
  %8500 = vperm.xlu0 %8499, %v7743
  %v8501 = vpop.permute.xlu0 %8500
  %8503 = vset.pattern.permute.xlu0 8
  %8504 = vperm.xlu0 %8503, %v7744
  %v8505 = vpop.permute.xlu0 %8504
  %8507 = vset.pattern.permute.xlu0 8
  %8508 = vperm.xlu0 %8507, %v7745
  %v8509 = vpop.permute.xlu0 %8508
  %v8511 = vmul.f32 %v7727, %v8477
  %v8512 = vmul.f32 %v7728, %v8481
  %v8513 = vmul.f32 %v7729, %v8485
  %v8514 = vmul.f32 %v7730, %v8489
  %v8515 = vmul.f32 %v7731, %v8493
  %v8516 = vmul.f32 %v7732, %v8497
  %v8517 = vmul.f32 %v7733, %v8501
  %v8518 = vmul.f32 %v7734, %v8505
  %v8519 = vmul.f32 %v7735, %v8509
  %8529 = vrot.lane.b32.xlu0 %v8511, 88
  %v8530 = vpop.permute.xlu0 %8529
  %8531 = vrot.lane.b32.xlu0 %v8512, 88
  %v8532 = vpop.permute.xlu0 %8531
  %8533 = vrot.lane.b32.xlu0 %v8513, 88
  %v8534 = vpop.permute.xlu0 %8533
  %8535 = vrot.lane.b32.xlu0 %v8514, 88
  %v8536 = vpop.permute.xlu0 %8535
  %8537 = vrot.lane.b32.xlu0 %v8515, 88
  %v8538 = vpop.permute.xlu0 %8537
  %8539 = vrot.lane.b32.xlu0 %v8516, 88
  %v8540 = vpop.permute.xlu0 %8539
  %8541 = vrot.lane.b32.xlu0 %v8517, 88
  %v8542 = vpop.permute.xlu0 %8541
  %8543 = vrot.lane.b32.xlu0 %v8518, 88
  %v8544 = vpop.permute.xlu0 %8543
  %8545 = vrot.lane.b32.xlu0 %v8519, 88
  %v8546 = vpop.permute.xlu0 %8545
  %v8556 = vadd.f32 %v8466, %v8530
  %v8557 = vadd.f32 %v8467, %v8532
  %v8558 = vadd.f32 %v8468, %v8534
  %v8559 = vadd.f32 %v8469, %v8536
  %v8560 = vadd.f32 %v8470, %v8538
  %v8561 = vadd.f32 %v8471, %v8540
  %v8562 = vadd.f32 %v8472, %v8542
  %v8563 = vadd.f32 %v8473, %v8544
  %v8564 = vadd.f32 %v8474, %v8546
  %v8565 = vmul.f32 %v8556, 0.5
  %v8566 = vmul.f32 %v8557, 0.5
  %v8567 = vmul.f32 %v8558, 0.5
  %v8568 = vmul.f32 %v8559, 0.5
  %v8569 = vmul.f32 %v8560, 0.5
  %v8570 = vmul.f32 %v8561, 0.5
  %v8571 = vmul.f32 %v8562, 0.5
  %v8572 = vmul.f32 %v8563, 0.5
  %v8573 = vmul.f32 %v8564, 0.5
  %v8574 = vmul.f32 %v8556, %v8556
  %v8575 = vmul.f32 %v8557, %v8557
  %v8576 = vmul.f32 %v8558, %v8558
  %v8577 = vmul.f32 %v8559, %v8559
  %v8578 = vmul.f32 %v8560, %v8560
  %v8579 = vmul.f32 %v8561, %v8561
  %v8580 = vmul.f32 %v8562, %v8562
  %v8581 = vmul.f32 %v8563, %v8563
  %v8582 = vmul.f32 %v8564, %v8564
  %v8583 = vmul.f32 %v8574, %v8556
  %v8584 = vmul.f32 %v8575, %v8557
  %v8585 = vmul.f32 %v8576, %v8558
  %v8586 = vmul.f32 %v8577, %v8559
  %v8587 = vmul.f32 %v8578, %v8560
  %v8588 = vmul.f32 %v8579, %v8561
  %v8589 = vmul.f32 %v8580, %v8562
  %v8590 = vmul.f32 %v8581, %v8563
  %v8591 = vmul.f32 %v8582, %v8564
  %v8592 = vmul.f32 %v8583, 0.044715
  %v8593 = vmul.f32 %v8584, 0.044715
  %v8594 = vmul.f32 %v8585, 0.044715
  %v8595 = vmul.f32 %v8586, 0.044715
  %v8596 = vmul.f32 %v8587, 0.044715
  %v8597 = vmul.f32 %v8588, 0.044715
  %v8598 = vmul.f32 %v8589, 0.044715
  %v8599 = vmul.f32 %v8590, 0.044715
  %v8600 = vmul.f32 %v8591, 0.044715
  %v8601 = vadd.f32 %v8556, %v8592
  %v8602 = vadd.f32 %v8557, %v8593
  %v8603 = vadd.f32 %v8558, %v8594
  %v8604 = vadd.f32 %v8559, %v8595
  %v8605 = vadd.f32 %v8560, %v8596
  %v8606 = vadd.f32 %v8561, %v8597
  %v8607 = vadd.f32 %v8562, %v8598
  %v8608 = vadd.f32 %v8563, %v8599
  %v8609 = vadd.f32 %v8564, %v8600
  %v8610 = vmul.f32 %v8601, 0.7978846
  %v8611 = vmul.f32 %v8602, 0.7978846
  %v8612 = vmul.f32 %v8603, 0.7978846
  %v8613 = vmul.f32 %v8604, 0.7978846
  %v8614 = vmul.f32 %v8605, 0.7978846
  %v8615 = vmul.f32 %v8606, 0.7978846
  %v8616 = vmul.f32 %v8607, 0.7978846
  %v8617 = vmul.f32 %v8608, 0.7978846
  %v8618 = vmul.f32 %v8609, 0.7978846
  %v8619 = vtanh.pop %v8610
  %v8620 = vtanh.pop %v8611
  %v8621 = vtanh.pop %v8612
  %v8622 = vtanh.pop %v8613
  %v8623 = vtanh.pop %v8614
  %v8624 = vtanh.pop %v8615
  %v8625 = vtanh.pop %v8616
  %v8626 = vtanh.pop %v8617
  %v8627 = vtanh.pop %v8618
  %v8628 = vadd.f32 %v8619, 1.0
  %v8629 = vadd.f32 %v8620, 1.0
  %v8630 = vadd.f32 %v8621, 1.0
  %v8631 = vadd.f32 %v8622, 1.0
  %v8632 = vadd.f32 %v8623, 1.0
  %v8633 = vadd.f32 %v8624, 1.0
  %v8634 = vadd.f32 %v8625, 1.0
  %v8635 = vadd.f32 %v8626, 1.0
  %v8636 = vadd.f32 %v8627, 1.0
  %v8637 = vmul.f32 %v8565, %v8628
  %v8638 = vmul.f32 %v8566, %v8629
  %v8639 = vmul.f32 %v8567, %v8630
  %v8640 = vmul.f32 %v8568, %v8631
  %v8641 = vmul.f32 %v8569, %v8632
  %v8642 = vmul.f32 %v8570, %v8633
  %v8643 = vmul.f32 %v8571, %v8634
  %v8644 = vmul.f32 %v8572, %v8635
  %v8645 = vmul.f32 %v8573, %v8636
  %8655 = vrot.lane.b32.xlu0 %v8637, 8
  %v8656 = vpop.permute.xlu0 %8655
  %8657 = vrot.lane.b32.xlu0 %v8638, 8
  %v8658 = vpop.permute.xlu0 %8657
  %8659 = vrot.lane.b32.xlu0 %v8639, 8
  %v8660 = vpop.permute.xlu0 %8659
  %8661 = vrot.lane.b32.xlu0 %v8640, 8
  %v8662 = vpop.permute.xlu0 %8661
  %8663 = vrot.lane.b32.xlu0 %v8641, 8
  %v8664 = vpop.permute.xlu0 %8663
  %8665 = vrot.lane.b32.xlu0 %v8642, 8
  %v8666 = vpop.permute.xlu0 %8665
  %8667 = vrot.lane.b32.xlu0 %v8643, 8
  %v8668 = vpop.permute.xlu0 %8667
  %8669 = vrot.lane.b32.xlu0 %v8644, 8
  %v8670 = vpop.permute.xlu0 %8669
  %8671 = vrot.lane.b32.xlu0 %v8645, 8
  %v8672 = vpop.permute.xlu0 %8671
  %vm8682 = vcmask 203840
  %8683 = vst.msk [vmem:[#allocation2 + $0x8] sm:$0xff] %vm8682, %v8656
  %8684 = vst.msk [vmem:[#allocation2 + $0x18] sm:$0xff] %vm8682, %v8658
  %8685 = vst.msk [vmem:[#allocation2 + $0x28] sm:$0xff] %vm8682, %v8660
  %8686 = vst.msk [vmem:[#allocation2 + $0x38] sm:$0xff] %vm8682, %v8662
  %8687 = vst.msk [vmem:[#allocation2 + $0x48] sm:$0xff] %vm8682, %v8664
  %8688 = vst.msk [vmem:[#allocation2 + $0x58] sm:$0xff] %vm8682, %v8666
  %8689 = vst.msk [vmem:[#allocation2 + $0x68] sm:$0xff] %vm8682, %v8668
  %8690 = vst.msk [vmem:[#allocation2 + $0x78] sm:$0xff] %vm8682, %v8670
  %vm8691 = vcmask 199744
  %8692 = vst.msk [vmem:[#allocation2 + $0x88] sm:$0xf] %vm8691, %v8672
  %v8693 = vld [vmem:[#allocation2] sm:$0xff]
  %v8694 = vld [vmem:[#allocation2 + $0x8] sm:$0xff]
  %v8695 = vld [vmem:[#allocation2 + $0x10] sm:$0xff]
  %v8696 = vld [vmem:[#allocation2 + $0x18] sm:$0xff]
  %v8697 = vld [vmem:[#allocation2 + $0x20] sm:$0xff]
  %v8698 = vld [vmem:[#allocation2 + $0x28] sm:$0xff]
  %v8699 = vld [vmem:[#allocation2 + $0x30] sm:$0xff]
  %v8700 = vld [vmem:[#allocation2 + $0x38] sm:$0xff]
  %v8701 = vld [vmem:[#allocation2 + $0x40] sm:$0xff]
  %v8702 = vld [vmem:[#allocation2 + $0x48] sm:$0xff]
  %v8703 = vld [vmem:[#allocation2 + $0x50] sm:$0xff]
  %v8704 = vld [vmem:[#allocation2 + $0x58] sm:$0xff]
  %v8705 = vld [vmem:[#allocation2 + $0x60] sm:$0xff]
  %v8706 = vld [vmem:[#allocation2 + $0x68] sm:$0xff]
  %v8707 = vld [vmem:[#allocation2 + $0x70] sm:$0xff]
  %v8708 = vld [vmem:[#allocation2 + $0x78] sm:$0xff]
  %v8709 = vld [vmem:[#allocation2 + $0x80] sm:$0xf]
  %v8710 = vld [vmem:[#allocation2 + $0x88] sm:$0xf]
  %v8711 = vld [vmem:[%s2] sm:$0xff]
  %v8712 = vld [vmem:[%s2 + $0x8] sm:$0xff]
  %v8713 = vld [vmem:[%s2 + $0x10] sm:$0xff]
  %v8714 = vld [vmem:[%s2 + $0x18] sm:$0x7f]
  %vm8715 = vcmask 556032
  %v8717 = vsel %vm8715, %v8711, 0
  %v8720 = vsel %vm8715, %v8712, 0
  %v8723 = vsel %vm8715, %v8713, 0
  %v8726 = vsel %vm8715, %v8714, 0
  %vm8728 = vcmask 1043456
  %v8730 = vsel %vm8728, %v8709, 0
  %v8733 = vsel %vm8728, %v8710, 0
  %8735 = vmatprep.subr.mxu0 %v8694
  %8736 = vmatpush1.msra.mxu0 %v8693
  %8737 = vmatprep.subr.mxu0 %v8696
  %8738 = vmatpush1.msra.mxu0 %v8695
  %8739 = vmatprep.subr.mxu0 %v8698
  %8740 = vmatpush1.msra.mxu0 %v8697
  %8741 = vmatprep.subr.mxu0 %v8700
  %8742 = vmatpush1.msra.mxu0 %v8699
  %8743 = vmatprep.subr.mxu0 %v8702
  %8744 = vmatpush1.msra.mxu0 %v8701
  %8745 = vmatprep.subr.mxu0 %v8704
  %8746 = vmatpush1.msra.mxu0 %v8703
  %8747 = vmatprep.subr.mxu0 %v8706
  %8748 = vmatpush1.msra.mxu0 %v8705
  %8749 = vmatprep.subr.mxu0 %v8708
  %8750 = vmatpush1.msra.mxu0 %v8707
  %8751 = vmatprep.subr.mxu0 %v8733
  %8752 = vmatpush1.msra.mxu0 %v8730
  %8753 = vmatprep.subr.mxu0 0.0
  %8754 = vmatpush1.msra.mxu0 0.0
  %8755 = vmatprep.subr.mxu0 0.0
  %8756 = vmatpush1.msra.mxu0 0.0
  %8757 = vmatprep.subr.mxu0 0.0
  %8758 = vmatpush1.msra.mxu0 0.0
  %8759 = vmatprep.subr.mxu0 0.0
  %8760 = vmatpush1.msra.mxu0 0.0
  %8761 = vmatprep.subr.mxu0 0.0
  %8762 = vmatpush1.msra.mxu0 0.0
  %8763 = vmatprep.subr.mxu0 0.0
  %8764 = vmatpush1.msra.mxu0 0.0
  %8765 = vmatprep.subr.mxu0 0.0
  %8766 = vmatpush1.msra.mxu0 0.0
  %8767 = vmatprep.subr.mxu0 0.0
  %8768 = vmatpush1.msra.mxu0 0.0
  %8769 = vmatprep.subr.mxu0 0.0
  %8770 = vmatpush1.msra.mxu0 0.0
  %8771 = vmatprep.subr.mxu0 0.0
  %8772 = vmatpush1.msra.mxu0 0.0
  %8773 = vmatprep.subr.mxu0 0.0
  %8774 = vmatpush1.msra.mxu0 0.0
  %8775 = vmatprep.subr.mxu0 0.0
  %8776 = vmatpush1.msra.mxu0 0.0
  %8777 = vmatprep.subr.mxu0 0.0
  %8778 = vmatpush1.msra.mxu0 0.0
  %8779 = vmatprep.subr.mxu0 0.0
  %8780 = vmatpush1.msra.mxu0 0.0
  %8781 = vmatprep.subr.mxu0 0.0
  %8782 = vmatpush1.msra.mxu0 0.0
  %8783 = vmatprep.subr.mxu0 0.0
  %8784 = vmatpush1.msra.mxu0 0.0
  %8785 = vmatprep.subr.mxu0 0.0
  %8786 = vmatpush1.msra.mxu0 0.0
  %8787 = vmatprep.subr.mxu0 0.0
  %8788 = vmatpush1.msra.mxu0 0.0
  %8789 = vmatprep.subr.mxu0 0.0
  %8790 = vmatpush1.msra.mxu0 0.0
  %8791 = vmatprep.subr.mxu0 0.0
  %8792 = vmatpush1.msra.mxu0 0.0
  %8793 = vmatprep.subr.mxu0 0.0
  %8794 = vmatpush1.msra.mxu0 0.0
  %8795 = vmatprep.subr.mxu0 0.0
  %8796 = vmatpush1.msra.mxu0 0.0
  %8797 = vmatprep.subr.mxu0 0.0
  %8798 = vmatpush1.msra.mxu0 0.0
  %8799 = vmatprep.mubr.f32.mxu0 0.0
  %8800 = vmatmul.mubr.f32.gmra.mrb[0].mxu0 %v8717
  %v8801 = vpop.f32.mrb[0].mxu0
  %v8802 = vadd.f32 0.0, %v8801
  %v8803 = vpop.f32.mrb[0].mxu0
  %v8804 = vadd.f32 0.0, %v8803
  %8805 = vmatprep.mubr.f32.mxu0 0.0
  %8806 = vmatmul.mubr.f32.gmra.mrb[0].mxu0 %v8720
  %v8807 = vpop.f32.mrb[0].mxu0
  %v8808 = vadd.f32 0.0, %v8807
  %v8809 = vpop.f32.mrb[0].mxu0
  %v8810 = vadd.f32 0.0, %v8809
  %8811 = vmatprep.mubr.f32.mxu0 0.0
  %8812 = vmatmul.mubr.f32.gmra.mrb[0].mxu0 %v8723
  %v8813 = vpop.f32.mrb[0].mxu0
  %v8814 = vadd.f32 0.0, %v8813
  %v8815 = vpop.f32.mrb[0].mxu0
  %v8816 = vadd.f32 0.0, %v8815
  %8817 = vmatprep.mubr.f32.mxu0 0.0
  %8818 = vmatmul.mubr.f32.gmra.mrb[0].mxu0 %v8726
  %v8819 = vpop.f32.mrb[0].mxu0
  %v8820 = vadd.f32 0.0, %v8819
  %v8821 = vpop.f32.mrb[0].mxu0
  %v8822 = vadd.f32 0.0, %v8821
  %8823 = vdwg.mxu0
  %s8824 = scalar_lea.vmem %s2, 32
  %v8825 = vld [vmem:[%s8824] sm:$0xff]
  %v8826 = vld [vmem:[%s8824 + $0x8] sm:$0xff]
  %v8827 = vld [vmem:[%s8824 + $0x10] sm:$0xff]
  %v8828 = vld [vmem:[%s8824 + $0x18] sm:$0x7f]
  %v8830 = vsel %vm8715, %v8825, 0
  %v8833 = vsel %vm8715, %v8826, 0
  %v8836 = vsel %vm8715, %v8827, 0
  %v8839 = vsel %vm8715, %v8828, 0
  %8841 = vmatprep.subr.mxu0 %v8694
  %8842 = vmatpush1.msra.mxu0 %v8693
  %8843 = vmatprep.subr.mxu0 %v8696
  %8844 = vmatpush1.msra.mxu0 %v8695
  %8845 = vmatprep.subr.mxu0 %v8698
  %8846 = vmatpush1.msra.mxu0 %v8697
  %8847 = vmatprep.subr.mxu0 %v8700
  %8848 = vmatpush1.msra.mxu0 %v8699
  %8849 = vmatprep.subr.mxu0 %v8702
  %8850 = vmatpush1.msra.mxu0 %v8701
  %8851 = vmatprep.subr.mxu0 %v8704
  %8852 = vmatpush1.msra.mxu0 %v8703
  %8853 = vmatprep.subr.mxu0 %v8706
  %8854 = vmatpush1.msra.mxu0 %v8705
  %8855 = vmatprep.subr.mxu0 %v8708
  %8856 = vmatpush1.msra.mxu0 %v8707
  %8857 = vmatprep.subr.mxu0 %v8733
  %8858 = vmatpush1.msra.mxu0 %v8730
  %8859 = vmatprep.subr.mxu0 0.0
  %8860 = vmatpush1.msra.mxu0 0.0
  %8861 = vmatprep.subr.mxu0 0.0
  %8862 = vmatpush1.msra.mxu0 0.0
  %8863 = vmatprep.subr.mxu0 0.0
  %8864 = vmatpush1.msra.mxu0 0.0
  %8865 = vmatprep.subr.mxu0 0.0
  %8866 = vmatpush1.msra.mxu0 0.0
  %8867 = vmatprep.subr.mxu0 0.0
  %8868 = vmatpush1.msra.mxu0 0.0
  %8869 = vmatprep.subr.mxu0 0.0
  %8870 = vmatpush1.msra.mxu0 0.0
  %8871 = vmatprep.subr.mxu0 0.0
  %8872 = vmatpush1.msra.mxu0 0.0
  %8873 = vmatprep.subr.mxu0 0.0
  %8874 = vmatpush1.msra.mxu0 0.0
  %8875 = vmatprep.subr.mxu0 0.0
  %8876 = vmatpush1.msra.mxu0 0.0
  %8877 = vmatprep.subr.mxu0 0.0
  %8878 = vmatpush1.msra.mxu0 0.0
  %8879 = vmatprep.subr.mxu0 0.0
  %8880 = vmatpush1.msra.mxu0 0.0
  %8881 = vmatprep.subr.mxu0 0.0
  %8882 = vmatpush1.msra.mxu0 0.0
  %8883 = vmatprep.subr.mxu0 0.0
  %8884 = vmatpush1.msra.mxu0 0.0
  %8885 = vmatprep.subr.mxu0 0.0
  %8886 = vmatpush1.msra.mxu0 0.0
  %8887 = vmatprep.subr.mxu0 0.0
  %8888 = vmatpush1.msra.mxu0 0.0
  %8889 = vmatprep.subr.mxu0 0.0
  %8890 = vmatpush1.msra.mxu0 0.0
  %8891 = vmatprep.subr.mxu0 0.0
  %8892 = vmatpush1.msra.mxu0 0.0
  %8893 = vmatprep.subr.mxu0 0.0
  %8894 = vmatpush1.msra.mxu0 0.0
  %8895 = vmatprep.subr.mxu0 0.0
  %8896 = vmatpush1.msra.mxu0 0.0
  %8897 = vmatprep.subr.mxu0 0.0
  %8898 = vmatpush1.msra.mxu0 0.0
  %8899 = vmatprep.subr.mxu0 0.0
  %8900 = vmatpush1.msra.mxu0 0.0
  %8901 = vmatprep.subr.mxu0 0.0
  %8902 = vmatpush1.msra.mxu0 0.0
  %8903 = vmatprep.subr.mxu0 0.0
  %8904 = vmatpush1.msra.mxu0 0.0
  %8905 = vmatprep.mubr.f32.mxu0 0.0
  %8906 = vmatmul.mubr.f32.gmra.mrb[0].mxu0 %v8830
  %v8907 = vpop.f32.mrb[0].mxu0
  %v8908 = vadd.f32 0.0, %v8907
  %v8909 = vpop.f32.mrb[0].mxu0
  %v8910 = vadd.f32 0.0, %v8909
  %8911 = vmatprep.mubr.f32.mxu0 0.0
  %8912 = vmatmul.mubr.f32.gmra.mrb[0].mxu0 %v8833
  %v8913 = vpop.f32.mrb[0].mxu0
  %v8914 = vadd.f32 0.0, %v8913
  %v8915 = vpop.f32.mrb[0].mxu0
  %v8916 = vadd.f32 0.0, %v8915
  %8917 = vmatprep.mubr.f32.mxu0 0.0
  %8918 = vmatmul.mubr.f32.gmra.mrb[0].mxu0 %v8836
  %v8919 = vpop.f32.mrb[0].mxu0
  %v8920 = vadd.f32 0.0, %v8919
  %v8921 = vpop.f32.mrb[0].mxu0
  %v8922 = vadd.f32 0.0, %v8921
  %8923 = vmatprep.mubr.f32.mxu0 0.0
  %8924 = vmatmul.mubr.f32.gmra.mrb[0].mxu0 %v8839
  %v8925 = vpop.f32.mrb[0].mxu0
  %v8926 = vadd.f32 0.0, %v8925
  %v8927 = vpop.f32.mrb[0].mxu0
  %v8928 = vadd.f32 0.0, %v8927
  %8929 = vdwg.mxu0
  %s8930 = scalar_lea.vmem %s2, 64
  %v8931 = vld [vmem:[%s8930] sm:$0xff]
  %v8932 = vld [vmem:[%s8930 + $0x8] sm:$0xff]
  %v8933 = vld [vmem:[%s8930 + $0x10] sm:$0xff]
  %v8934 = vld [vmem:[%s8930 + $0x18] sm:$0x7f]
  %v8936 = vsel %vm8715, %v8931, 0
  %v8939 = vsel %vm8715, %v8932, 0
  %v8942 = vsel %vm8715, %v8933, 0
  %v8945 = vsel %vm8715, %v8934, 0
  %8947 = vmatprep.subr.mxu0 %v8694
  %8948 = vmatpush1.msra.mxu0 %v8693
  %8949 = vmatprep.subr.mxu0 %v8696
  %8950 = vmatpush1.msra.mxu0 %v8695
  %8951 = vmatprep.subr.mxu0 %v8698
  %8952 = vmatpush1.msra.mxu0 %v8697
  %8953 = vmatprep.subr.mxu0 %v8700
  %8954 = vmatpush1.msra.mxu0 %v8699
  %8955 = vmatprep.subr.mxu0 %v8702
  %8956 = vmatpush1.msra.mxu0 %v8701
  %8957 = vmatprep.subr.mxu0 %v8704
  %8958 = vmatpush1.msra.mxu0 %v8703
  %8959 = vmatprep.subr.mxu0 %v8706
  %8960 = vmatpush1.msra.mxu0 %v8705
  %8961 = vmatprep.subr.mxu0 %v8708
  %8962 = vmatpush1.msra.mxu0 %v8707
  %8963 = vmatprep.subr.mxu0 %v8733
  %8964 = vmatpush1.msra.mxu0 %v8730
  %8965 = vmatprep.subr.mxu0 0.0
  %8966 = vmatpush1.msra.mxu0 0.0
  %8967 = vmatprep.subr.mxu0 0.0
  %8968 = vmatpush1.msra.mxu0 0.0
  %8969 = vmatprep.subr.mxu0 0.0
  %8970 = vmatpush1.msra.mxu0 0.0
  %8971 = vmatprep.subr.mxu0 0.0
  %8972 = vmatpush1.msra.mxu0 0.0
  %8973 = vmatprep.subr.mxu0 0.0
  %8974 = vmatpush1.msra.mxu0 0.0
  %8975 = vmatprep.subr.mxu0 0.0
  %8976 = vmatpush1.msra.mxu0 0.0
  %8977 = vmatprep.subr.mxu0 0.0
  %8978 = vmatpush1.msra.mxu0 0.0
  %8979 = vmatprep.subr.mxu0 0.0
  %8980 = vmatpush1.msra.mxu0 0.0
  %8981 = vmatprep.subr.mxu0 0.0
  %8982 = vmatpush1.msra.mxu0 0.0
  %8983 = vmatprep.subr.mxu0 0.0
  %8984 = vmatpush1.msra.mxu0 0.0
  %8985 = vmatprep.subr.mxu0 0.0
  %8986 = vmatpush1.msra.mxu0 0.0
  %8987 = vmatprep.subr.mxu0 0.0
  %8988 = vmatpush1.msra.mxu0 0.0
  %8989 = vmatprep.subr.mxu0 0.0
  %8990 = vmatpush1.msra.mxu0 0.0
  %8991 = vmatprep.subr.mxu0 0.0
  %8992 = vmatpush1.msra.mxu0 0.0
  %8993 = vmatprep.subr.mxu0 0.0
  %8994 = vmatpush1.msra.mxu0 0.0
  %8995 = vmatprep.subr.mxu0 0.0
  %8996 = vmatpush1.msra.mxu0 0.0
  %8997 = vmatprep.subr.mxu0 0.0
  %8998 = vmatpush1.msra.mxu0 0.0
  %8999 = vmatprep.subr.mxu0 0.0
  %9000 = vmatpush1.msra.mxu0 0.0
  %9001 = vmatprep.subr.mxu0 0.0
  %9002 = vmatpush1.msra.mxu0 0.0
  %9003 = vmatprep.subr.mxu0 0.0
  %9004 = vmatpush1.msra.mxu0 0.0
  %9005 = vmatprep.subr.mxu0 0.0
  %9006 = vmatpush1.msra.mxu0 0.0
  %9007 = vmatprep.subr.mxu0 0.0
  %9008 = vmatpush1.msra.mxu0 0.0
  %9009 = vmatprep.subr.mxu0 0.0
  %9010 = vmatpush1.msra.mxu0 0.0
  %9011 = vmatprep.mubr.f32.mxu0 0.0
  %9012 = vmatmul.mubr.f32.gmra.mrb[0].mxu0 %v8936
  %v9013 = vpop.f32.mrb[0].mxu0
  %v9014 = vadd.f32 0.0, %v9013
  %v9015 = vpop.f32.mrb[0].mxu0
  %v9016 = vadd.f32 0.0, %v9015
  %9017 = vmatprep.mubr.f32.mxu0 0.0
  %9018 = vmatmul.mubr.f32.gmra.mrb[0].mxu0 %v8939
  %v9019 = vpop.f32.mrb[0].mxu0
  %v9020 = vadd.f32 0.0, %v9019
  %v9021 = vpop.f32.mrb[0].mxu0
  %v9022 = vadd.f32 0.0, %v9021
  %9023 = vmatprep.mubr.f32.mxu0 0.0
  %9024 = vmatmul.mubr.f32.gmra.mrb[0].mxu0 %v8942
  %v9025 = vpop.f32.mrb[0].mxu0
  %v9026 = vadd.f32 0.0, %v9025
  %v9027 = vpop.f32.mrb[0].mxu0
  %v9028 = vadd.f32 0.0, %v9027
  %9029 = vmatprep.mubr.f32.mxu0 0.0
  %9030 = vmatmul.mubr.f32.gmra.mrb[0].mxu0 %v8945
  %v9031 = vpop.f32.mrb[0].mxu0
  %v9032 = vadd.f32 0.0, %v9031
  %v9033 = vpop.f32.mrb[0].mxu0
  %v9034 = vadd.f32 0.0, %v9033
  %9035 = vdwg.mxu0
  %s9036 = scalar_lea.vmem %s2, 96
  %v9037 = vld [vmem:[%s9036] sm:$0xff]
  %v9038 = vld [vmem:[%s9036 + $0x8] sm:$0xff]
  %v9039 = vld [vmem:[%s9036 + $0x10] sm:$0xff]
  %v9040 = vld [vmem:[%s9036 + $0x18] sm:$0x7f]
  %v9042 = vsel %vm8715, %v9037, 0
  %v9045 = vsel %vm8715, %v9038, 0
  %v9048 = vsel %vm8715, %v9039, 0
  %v9051 = vsel %vm8715, %v9040, 0
  %9053 = vmatprep.subr.mxu0 %v8694
  %9054 = vmatpush1.msra.mxu0 %v8693
  %9055 = vmatprep.subr.mxu0 %v8696
  %9056 = vmatpush1.msra.mxu0 %v8695
  %9057 = vmatprep.subr.mxu0 %v8698
  %9058 = vmatpush1.msra.mxu0 %v8697
  %9059 = vmatprep.subr.mxu0 %v8700
  %9060 = vmatpush1.msra.mxu0 %v8699
  %9061 = vmatprep.subr.mxu0 %v8702
  %9062 = vmatpush1.msra.mxu0 %v8701
  %9063 = vmatprep.subr.mxu0 %v8704
  %9064 = vmatpush1.msra.mxu0 %v8703
  %9065 = vmatprep.subr.mxu0 %v8706
  %9066 = vmatpush1.msra.mxu0 %v8705
  %9067 = vmatprep.subr.mxu0 %v8708
  %9068 = vmatpush1.msra.mxu0 %v8707
  %9069 = vmatprep.subr.mxu0 %v8733
  %9070 = vmatpush1.msra.mxu0 %v8730
  %9071 = vmatprep.subr.mxu0 0.0
  %9072 = vmatpush1.msra.mxu0 0.0
  %9073 = vmatprep.subr.mxu0 0.0
  %9074 = vmatpush1.msra.mxu0 0.0
  %9075 = vmatprep.subr.mxu0 0.0
  %9076 = vmatpush1.msra.mxu0 0.0
  %9077 = vmatprep.subr.mxu0 0.0
  %9078 = vmatpush1.msra.mxu0 0.0
  %9079 = vmatprep.subr.mxu0 0.0
  %9080 = vmatpush1.msra.mxu0 0.0
  %9081 = vmatprep.subr.mxu0 0.0
  %9082 = vmatpush1.msra.mxu0 0.0
  %9083 = vmatprep.subr.mxu0 0.0
  %9084 = vmatpush1.msra.mxu0 0.0
  %9085 = vmatprep.subr.mxu0 0.0
  %9086 = vmatpush1.msra.mxu0 0.0
  %9087 = vmatprep.subr.mxu0 0.0
  %9088 = vmatpush1.msra.mxu0 0.0
  %9089 = vmatprep.subr.mxu0 0.0
  %9090 = vmatpush1.msra.mxu0 0.0
  %9091 = vmatprep.subr.mxu0 0.0
  %9092 = vmatpush1.msra.mxu0 0.0
  %9093 = vmatprep.subr.mxu0 0.0
  %9094 = vmatpush1.msra.mxu0 0.0
  %9095 = vmatprep.subr.mxu0 0.0
  %9096 = vmatpush1.msra.mxu0 0.0
  %9097 = vmatprep.subr.mxu0 0.0
  %9098 = vmatpush1.msra.mxu0 0.0
  %9099 = vmatprep.subr.mxu0 0.0
  %9100 = vmatpush1.msra.mxu0 0.0
  %9101 = vmatprep.subr.mxu0 0.0
  %9102 = vmatpush1.msra.mxu0 0.0
  %9103 = vmatprep.subr.mxu0 0.0
  %9104 = vmatpush1.msra.mxu0 0.0
  %9105 = vmatprep.subr.mxu0 0.0
  %9106 = vmatpush1.msra.mxu0 0.0
  %9107 = vmatprep.subr.mxu0 0.0
  %9108 = vmatpush1.msra.mxu0 0.0
  %9109 = vmatprep.subr.mxu0 0.0
  %9110 = vmatpush1.msra.mxu0 0.0
  %9111 = vmatprep.subr.mxu0 0.0
  %9112 = vmatpush1.msra.mxu0 0.0
  %9113 = vmatprep.subr.mxu0 0.0
  %9114 = vmatpush1.msra.mxu0 0.0
  %9115 = vmatprep.subr.mxu0 0.0
  %9116 = vmatpush1.msra.mxu0 0.0
  %9117 = vmatprep.mubr.f32.mxu0 0.0
  %9118 = vmatmul.mubr.f32.gmra.mrb[0].mxu0 %v9042
  %v9119 = vpop.f32.mrb[0].mxu0
  %v9120 = vadd.f32 0.0, %v9119
  %v9121 = vpop.f32.mrb[0].mxu0
  %v9122 = vadd.f32 0.0, %v9121
  %9123 = vmatprep.mubr.f32.mxu0 0.0
  %9124 = vmatmul.mubr.f32.gmra.mrb[0].mxu0 %v9045
  %v9125 = vpop.f32.mrb[0].mxu0
  %v9126 = vadd.f32 0.0, %v9125
  %v9127 = vpop.f32.mrb[0].mxu0
  %v9128 = vadd.f32 0.0, %v9127
  %9129 = vmatprep.mubr.f32.mxu0 0.0
  %9130 = vmatmul.mubr.f32.gmra.mrb[0].mxu0 %v9048
  %v9131 = vpop.f32.mrb[0].mxu0
  %v9132 = vadd.f32 0.0, %v9131
  %v9133 = vpop.f32.mrb[0].mxu0
  %v9134 = vadd.f32 0.0, %v9133
  %9135 = vmatprep.mubr.f32.mxu0 0.0
  %9136 = vmatmul.mubr.f32.gmra.mrb[0].mxu0 %v9051
  %v9137 = vpop.f32.mrb[0].mxu0
  %v9138 = vadd.f32 0.0, %v9137
  %v9139 = vpop.f32.mrb[0].mxu0
  %v9140 = vadd.f32 0.0, %v9139
  %9141 = vdwg.mxu0
  %v9142 = vld [vmem:[%s3] sm:$0xff]
  %v9143 = vld [vmem:[%s3 + $0x8] sm:$0xff]
  %v9144 = vld [vmem:[%s3 + $0x10] sm:$0xff]
  %v9145 = vld [vmem:[%s3 + $0x18] sm:$0x7f]
  %9147 = vset.pattern.permute.xlu0 0
  %9148 = vperm.xlu0 %9147, %v9142
  %v9149 = vpop.permute.xlu0 %9148
  %9152 = vset.pattern.permute.xlu0 0
  %9153 = vperm.xlu0 %9152, %v9143
  %v9154 = vpop.permute.xlu0 %9153
  %9157 = vset.pattern.permute.xlu0 0
  %9158 = vperm.xlu0 %9157, %v9144
  %v9159 = vpop.permute.xlu0 %9158
  %9162 = vset.pattern.permute.xlu0 0
  %9163 = vperm.xlu0 %9162, %v9145
  %v9164 = vpop.permute.xlu0 %9163
  %9166 = vst [vmem:[%s4] sm:$0xff] %v9149
  %vm9167 = vcmask 277504
  %9168 = vst.msk [vmem:[%s4 + $0x8] sm:$0xff] %vm9167, %v9149
  %9169 = vst [vmem:[%s4 + $0x10] sm:$0xff] %v9154
  %9170 = vst.msk [vmem:[%s4 + $0x18] sm:$0xff] %vm9167, %v9154
  %9171 = vst [vmem:[%s4 + $0x20] sm:$0xff] %v9159
  %9172 = vst.msk [vmem:[%s4 + $0x28] sm:$0xff] %vm9167, %v9159
  %9173 = vst [vmem:[%s4 + $0x30] sm:$0x7f] %v9164
  %vm9174 = vcmask 276480
  %9175 = vst.msk [vmem:[%s4 + $0x38] sm:$0x7f] %vm9174, %v9164
  %s9176 = scalar_lea.vmem %s4, 64
  %9177 = vst [vmem:[%s9176] sm:$0xff] %v9149
  %9178 = vst.msk [vmem:[%s9176 + $0x8] sm:$0xff] %vm9167, %v9149
  %9179 = vst [vmem:[%s9176 + $0x10] sm:$0xff] %v9154
  %9180 = vst.msk [vmem:[%s9176 + $0x18] sm:$0xff] %vm9167, %v9154
  %9181 = vst [vmem:[%s9176 + $0x20] sm:$0xff] %v9159
  %9182 = vst.msk [vmem:[%s9176 + $0x28] sm:$0xff] %vm9167, %v9159
  %9183 = vst [vmem:[%s9176 + $0x30] sm:$0x7f] %v9164
  %9184 = vst.msk [vmem:[%s9176 + $0x38] sm:$0x7f] %vm9174, %v9164
  %v9185 = vld [vmem:[%s4] sm:$0xff]
  %v9186 = vld [vmem:[%s4 + $0x8] sm:$0xff]
  %v9187 = vld [vmem:[%s4 + $0x10] sm:$0xff]
  %v9188 = vld [vmem:[%s4 + $0x18] sm:$0xff]
  %v9189 = vld [vmem:[%s4 + $0x20] sm:$0xff]
  %v9190 = vld [vmem:[%s4 + $0x28] sm:$0xff]
  %v9191 = vld [vmem:[%s4 + $0x30] sm:$0x7f]
  %v9192 = vld [vmem:[%s4 + $0x38] sm:$0x7f]
  %v9193 = vadd.f32 %v9185, %v8802
  %v9194 = vadd.f32 %v9186, %v8804
  %v9195 = vadd.f32 %v9187, %v8808
  %v9196 = vadd.f32 %v9188, %v8810
  %v9197 = vadd.f32 %v9189, %v8814
  %v9198 = vadd.f32 %v9190, %v8816
  %v9199 = vadd.f32 %v9191, %v8820
  %v9200 = vadd.f32 %v9192, %v8822
  %9201 = vst [vmem:[%s4] sm:$0xff] %v9193
  %vm9202 = vcmask 203776
  %9203 = vst.msk [vmem:[%s4 + $0x8] sm:$0xff] %vm9202, %v9194
  %9204 = vst [vmem:[%s4 + $0x10] sm:$0xff] %v9195
  %9205 = vst.msk [vmem:[%s4 + $0x18] sm:$0xff] %vm9202, %v9196
  %9206 = vst [vmem:[%s4 + $0x20] sm:$0xff] %v9197
  %9207 = vst.msk [vmem:[%s4 + $0x28] sm:$0xff] %vm9202, %v9198
  %9208 = vst [vmem:[%s4 + $0x30] sm:$0x7f] %v9199
  %vm9209 = vcmask 202752
  %9210 = vst.msk [vmem:[%s4 + $0x38] sm:$0x7f] %vm9209, %v9200
  %v9211 = vld [vmem:[%s4] sm:$0xff]
  %v9212 = vld [vmem:[%s4 + $0x8] sm:$0xff]
  %v9213 = vld [vmem:[%s4 + $0x10] sm:$0xff]
  %v9214 = vld [vmem:[%s4 + $0x18] sm:$0xff]
  %v9215 = vld [vmem:[%s4 + $0x20] sm:$0xff]
  %v9216 = vld [vmem:[%s4 + $0x28] sm:$0xff]
  %v9217 = vld [vmem:[%s4 + $0x30] sm:$0x7f]
  %v9218 = vld [vmem:[%s4 + $0x38] sm:$0x7f]
  %9227 = vrot.lane.b32.xlu0 %v9014, 9
  %v9228 = vpop.permute.xlu0 %9227
  %9229 = vrot.lane.b32.xlu0 %v9016, 9
  %v9230 = vpop.permute.xlu0 %9229
  %9231 = vrot.lane.b32.xlu0 %v9020, 9
  %v9232 = vpop.permute.xlu0 %9231
  %9233 = vrot.lane.b32.xlu0 %v9022, 9
  %v9234 = vpop.permute.xlu0 %9233
  %9235 = vrot.lane.b32.xlu0 %v9026, 9
  %v9236 = vpop.permute.xlu0 %9235
  %9237 = vrot.lane.b32.xlu0 %v9028, 9
  %v9238 = vpop.permute.xlu0 %9237
  %9239 = vrot.lane.b32.xlu0 %v9032, 9
  %v9240 = vpop.permute.xlu0 %9239
  %9241 = vrot.lane.b32.xlu0 %v9034, 9
  %v9242 = vpop.permute.xlu0 %9241
  %vm9243 = vcmask 72704
  %v9244 = vsel %vm9243, %v9228, %v9230
  %v9245 = vsel %vm9243, %v9232, %v9234
  %v9246 = vsel %vm9243, %v9236, %v9238
  %v9247 = vsel %vm9243, %v9240, %v9242
  %v9256 = vadd.f32 %v9211, %v9228
  %v9257 = vadd.f32 %v9212, %v9244
  %v9258 = vadd.f32 %v9213, %v9232
  %v9259 = vadd.f32 %v9214, %v9245
  %v9260 = vadd.f32 %v9215, %v9236
  %v9261 = vadd.f32 %v9216, %v9246
  %v9262 = vadd.f32 %v9217, %v9240
  %v9263 = vadd.f32 %v9218, %v9247
  %vm9264 = vcmask 1047624
  %9265 = vst.msk [vmem:[%s4] sm:$0xff] %vm9264, %v9256
  %9266 = vst.msk [vmem:[%s4 + $0x8] sm:$0xff] %vm9167, %v9257
  %9267 = vst.msk [vmem:[%s4 + $0x10] sm:$0xff] %vm9264, %v9258
  %9268 = vst.msk [vmem:[%s4 + $0x18] sm:$0xff] %vm9167, %v9259
  %9269 = vst.msk [vmem:[%s4 + $0x20] sm:$0xff] %vm9264, %v9260
  %9270 = vst.msk [vmem:[%s4 + $0x28] sm:$0xff] %vm9167, %v9261
  %vm9271 = vcmask 1046600
  %9272 = vst.msk [vmem:[%s4 + $0x30] sm:$0x7f] %vm9271, %v9262
  %9273 = vst.msk [vmem:[%s4 + $0x38] sm:$0x7f] %vm9174, %v9263
  %v9274 = vld [vmem:[%s9176] sm:$0xff]
  %v9275 = vld [vmem:[%s9176 + $0x8] sm:$0xff]
  %v9276 = vld [vmem:[%s9176 + $0x10] sm:$0xff]
  %v9277 = vld [vmem:[%s9176 + $0x18] sm:$0xff]
  %v9278 = vld [vmem:[%s9176 + $0x20] sm:$0xff]
  %v9279 = vld [vmem:[%s9176 + $0x28] sm:$0xff]
  %v9280 = vld [vmem:[%s9176 + $0x30] sm:$0x7f]
  %v9281 = vld [vmem:[%s9176 + $0x38] sm:$0x7f]
  %v9282 = vadd.f32 %v9274, %v8908
  %v9283 = vadd.f32 %v9275, %v8910
  %v9284 = vadd.f32 %v9276, %v8914
  %v9285 = vadd.f32 %v9277, %v8916
  %v9286 = vadd.f32 %v9278, %v8920
  %v9287 = vadd.f32 %v9279, %v8922
  %v9288 = vadd.f32 %v9280, %v8926
  %v9289 = vadd.f32 %v9281, %v8928
  %9290 = vst [vmem:[%s9176] sm:$0xff] %v9282
  %9291 = vst.msk [vmem:[%s9176 + $0x8] sm:$0xff] %vm9202, %v9283
  %9292 = vst [vmem:[%s9176 + $0x10] sm:$0xff] %v9284
  %9293 = vst.msk [vmem:[%s9176 + $0x18] sm:$0xff] %vm9202, %v9285
  %9294 = vst [vmem:[%s9176 + $0x20] sm:$0xff] %v9286
  %9295 = vst.msk [vmem:[%s9176 + $0x28] sm:$0xff] %vm9202, %v9287
  %9296 = vst [vmem:[%s9176 + $0x30] sm:$0x7f] %v9288
  %9297 = vst.msk [vmem:[%s9176 + $0x38] sm:$0x7f] %vm9209, %v9289
  %v9298 = vld [vmem:[%s9176] sm:$0xff]
  %v9299 = vld [vmem:[%s9176 + $0x8] sm:$0xff]
  %v9300 = vld [vmem:[%s9176 + $0x10] sm:$0xff]
  %v9301 = vld [vmem:[%s9176 + $0x18] sm:$0xff]
  %v9302 = vld [vmem:[%s9176 + $0x20] sm:$0xff]
  %v9303 = vld [vmem:[%s9176 + $0x28] sm:$0xff]
  %v9304 = vld [vmem:[%s9176 + $0x30] sm:$0x7f]
  %v9305 = vld [vmem:[%s9176 + $0x38] sm:$0x7f]
  %9314 = vrot.lane.b32.xlu0 %v9120, 9
  %v9315 = vpop.permute.xlu0 %9314
  %9316 = vrot.lane.b32.xlu0 %v9122, 9
  %v9317 = vpop.permute.xlu0 %9316
  %9318 = vrot.lane.b32.xlu0 %v9126, 9
  %v9319 = vpop.permute.xlu0 %9318
  %9320 = vrot.lane.b32.xlu0 %v9128, 9
  %v9321 = vpop.permute.xlu0 %9320
  %9322 = vrot.lane.b32.xlu0 %v9132, 9
  %v9323 = vpop.permute.xlu0 %9322
  %9324 = vrot.lane.b32.xlu0 %v9134, 9
  %v9325 = vpop.permute.xlu0 %9324
  %9326 = vrot.lane.b32.xlu0 %v9138, 9
  %v9327 = vpop.permute.xlu0 %9326
  %9328 = vrot.lane.b32.xlu0 %v9140, 9
  %v9329 = vpop.permute.xlu0 %9328
  %v9330 = vsel %vm9243, %v9315, %v9317
  %v9331 = vsel %vm9243, %v9319, %v9321
  %v9332 = vsel %vm9243, %v9323, %v9325
  %v9333 = vsel %vm9243, %v9327, %v9329
  %v9342 = vadd.f32 %v9298, %v9315
  %v9343 = vadd.f32 %v9299, %v9330
  %v9344 = vadd.f32 %v9300, %v9319
  %v9345 = vadd.f32 %v9301, %v9331
  %v9346 = vadd.f32 %v9302, %v9323
  %v9347 = vadd.f32 %v9303, %v9332
  %v9348 = vadd.f32 %v9304, %v9327
  %v9349 = vadd.f32 %v9305, %v9333
  %9350 = vst.msk [vmem:[%s9176] sm:$0xff] %vm9264, %v9342
  %9351 = vst.msk [vmem:[%s9176 + $0x8] sm:$0xff] %vm9167, %v9343
  %9352 = vst.msk [vmem:[%s9176 + $0x10] sm:$0xff] %vm9264, %v9344
  %9353 = vst.msk [vmem:[%s9176 + $0x18] sm:$0xff] %vm9167, %v9345
  %9354 = vst.msk [vmem:[%s9176 + $0x20] sm:$0xff] %vm9264, %v9346
  %9355 = vst.msk [vmem:[%s9176 + $0x28] sm:$0xff] %vm9167, %v9347
  %9356 = vst.msk [vmem:[%s9176 + $0x30] sm:$0x7f] %vm9271, %v9348
  %9357 = vst.msk [vmem:[%s9176 + $0x38] sm:$0x7f] %vm9174, %v9349
  // Predicated region
  $region18: #{model_forward.1} parent=0 // pred_check
    _
  $region19: #{model_forward.1} parent=0 // pred_check_branch
    %9359 = sbr.rel (0) target = $region21
  $region20: #{model_forward.1} parent=0 // pred_region
    _
  $region21: #{model_forward.1} parent=0 // pred_fallthru
    _
  // Predicated region
  $region22: #{model_forward.1} parent=0 // pred_check
    _
  $region23: #{model_forward.1} parent=0 // pred_check_branch
    %9361 = sbr.rel (0) target = $region25
  $region24: #{model_forward.1} parent=0 // pred_region
    _
  $region25: #{model_forward.1} parent=0 // pred_fallthru
    _

</llo_original>
